<compile_context>
chip_gen: v5e
topology: v5e:2x2
jax: 0.10.0
libtpu: 0.0.40
codegen_flags: <defaults>
</compile_context>

<pallas_src>
import functools

import jax
import jax.numpy as jnp
import numpy as np
from jax import lax
from jax.experimental import pallas as pl
from jax.experimental.pallas import tpu as pltpu

NODE_NUM = 100        # module default (linear2 expects 100 * 10 = 1000)
NODE_FEAT = 27
EMBED = 128
N_EDGES = 300

N_PAD = 128           # padded node axis
F_PAD = 128           # padded input-feature axis
OUT1 = 10             # true linear1 output width
OUT1_PAD = 128        # padded linear1 output (10 -> 128)
E_PAD = 512           # padded edge axis (self loops handled analytically)
BN_EPS = 1e-5

_BF16 = jnp.bfloat16


# ------------------------------ Pallas kernel -------------------------------

def _encoder_kernel(dst_row_ref, src_row_ref, src_col_ref, w_row_ref, x_ref,
                    w1_ref, b1_ref, w2_ref, b2_ref, w3_ref, b3_ref,
                    g_ref, beta_ref, wl1_ref, bl1_ref, wl2r_ref, bl2_ref,
                    o_ref, *, n_valid):
    f32 = jnp.float32

    # ---- densified GCN gcn_norm adjacency (replaces the XLA scatter) ----
    node_i = lax.broadcasted_iota(jnp.int32, (N_PAD, E_PAD), 0)
    dt = (node_i == dst_row_ref[...]).astype(f32)       # [N_PAD, E_PAD] one-hot(dst)
    st = (node_i == src_row_ref[...]).astype(f32)       # [N_PAD, E_PAD] one-hot(src)
    s = (lax.broadcasted_iota(jnp.int32, (E_PAD, N_PAD), 1)
         == src_col_ref[...]).astype(f32)               # [E_PAD, N_PAD] one-hot(src)

    w_row = w_row_ref[...]                              # [1, E_PAD], 0 on padded edges
    valid = (lax.broadcasted_iota(jnp.int32, (N_PAD, 1), 0)
             < n_valid).astype(f32)                     # [N_PAD, 1]
    deg = jnp.sum(dt * w_row, axis=1, keepdims=True) + valid   # + self-loop weight 1
    dinv = jnp.where(deg > 0.0, lax.rsqrt(deg), 0.0)            # [N_PAD, 1]
    dinv_dst = jnp.sum(dt * dinv, axis=0, keepdims=True)        # [1, E_PAD]
    dinv_src = jnp.sum(st * dinv, axis=0, keepdims=True)        # [1, E_PAD]
    norm = dinv_dst * w_row * dinv_src                          # [1, E_PAD]

    # A[i, j] = sum_{e: dst=i, src=j} norm[e]   (exact-precision build)
    a = jnp.dot(dt * norm, s, preferred_element_type=f32,
                precision=jax.lax.Precision.HIGHEST)            # [N_PAD, N_PAD]
    eye = (lax.broadcasted_iota(jnp.int32, (N_PAD, N_PAD), 0)
           == lax.broadcasted_iota(jnp.int32, (N_PAD, N_PAD), 1)).astype(f32)
    a = a + eye * (dinv * dinv)                                 # self loops

    a16 = a.astype(_BF16)

    # ---- 3x GCN + ReLU (bf16 MXU operands, f32 accumulate) ----
    def gcn(h, w_ref, b_ref):
        hw = jnp.dot(h.astype(_BF16), w_ref[...], preferred_element_type=f32)
        return jnp.maximum(
            jnp.dot(a16, hw.astype(_BF16), preferred_element_type=f32)
            + b_ref[...], 0.0)

    h = gcn(x_ref[...], w1_ref, b1_ref)
    h = gcn(h, w2_ref, b2_ref)
    h = gcn(h, w3_ref, b3_ref)

    # ---- BatchNorm1d (training batch stats over the valid nodes, f32 VPU) ----
    inv_n = 1.0 / float(n_valid)
    hm = h * valid                                   # mask padded node rows
    mean = jnp.sum(hm, axis=0, keepdims=True) * inv_n
    var = jnp.sum(hm * h, axis=0, keepdims=True) * inv_n - mean * mean
    scale = g_ref[...] * lax.rsqrt(var + BN_EPS)
    shift = beta_ref[...] - mean * scale
    hbn = h * scale + shift                          # padded rows excluded downstream

    # torch_scatter.scatter_max(x, arange(node_num), dim=0) is an identity -> no-op.

    # ---- linear1 + ReLU ----
    h4 = jnp.maximum(
        jnp.dot(hbn.astype(_BF16), wl1_ref[...], preferred_element_type=f32)
        + bl1_ref[...], 0.0)                         # [N_PAD, OUT1_PAD], cols>=10 are 0

    # ---- flatten + linear2 fused as a (node, channel) contraction ----
    # out[e] = sum_{n, c} h4[n, c] * wl2r[c, n, e]; wl2r node rows >= n_valid are 0,
    # so padded BN rows never contribute.
    tmp = h4[:, 0:1] * wl2r_ref[0]
    for c in range(1, OUT1):
        tmp = tmp + h4[:, c:c + 1] * wl2r_ref[c]
    o_ref[...] = jnp.sum(tmp, axis=0, keepdims=True) + bl2_ref[...]


# ------------------------------ wrapper / glue -------------------------------

def prepare_params(p):
    """One-time static padding / layout prep (hoisted out of the per-call path)."""
    wl2r = jnp.transpose(p["wl2"].reshape(NODE_NUM, OUT1, EMBED), (1, 0, 2))
    wl2r = jnp.zeros((OUT1, N_PAD, EMBED), jnp.float32).at[:, :NODE_NUM, :].set(wl2r)
    return dict(
        w1=jnp.zeros((F_PAD, 64), jnp.float32).at[:NODE_FEAT, :]
            .set(p["w1"]).astype(_BF16),
        b1=p["b1"].reshape(1, 64).astype(jnp.float32),
        w2=p["w2"].astype(_BF16),
        b2=p["b2"].reshape(1, 128).astype(jnp.float32),
        w3=p["w3"].astype(_BF16),
        b3=p["b3"].reshape(1, 256).astype(jnp.float32),
        gamma=p["gamma"].reshape(1, 256).astype(jnp.float32),
        beta=p["beta"].reshape(1, 256).astype(jnp.float32),
        wl1=jnp.zeros((256, OUT1_PAD), jnp.float32).at[:, :OUT1]
            .set(p["wl1"]).astype(_BF16),
        bl1=jnp.zeros((1, OUT1_PAD), jnp.float32).at[0, :OUT1].set(p["bl1"]),
        wl2r=wl2r,                                     # [10, N_PAD, 128], rows>=100 zero
        bl2=p["bl2"].reshape(1, EMBED).astype(jnp.float32),
    )


@jax.jit
def graph_encoder_forward(x, edge_index, edge_attr, pp):
    """x: [node_num, node_feat], edge_index: [2, E], edge_attr: [E] -> [128]."""
    src = edge_index[0].astype(jnp.int32)
    dst = edge_index[1].astype(jnp.int32)
    w = edge_attr.astype(jnp.float32)
    e = src.shape[0]

    dst_row = jnp.zeros((1, E_PAD), jnp.int32).at[0, :e].set(dst)
    src_row = jnp.zeros((1, E_PAD), jnp.int32).at[0, :e].set(src)
    src_col = jnp.zeros((E_PAD, 1), jnp.int32).at[:e, 0].set(src)
    w_row = jnp.zeros((1, E_PAD), jnp.float32).at[0, :e].set(w)
    x_pad = jnp.zeros((N_PAD, F_PAD), jnp.float32).at[:NODE_NUM, :NODE_FEAT].set(
        x.reshape(NODE_NUM, -1).astype(jnp.float32))

    kern = functools.partial(_encoder_kernel, n_valid=NODE_NUM)
    out = pl.pallas_call(
        kern,
        out_shape=jax.ShapeDtypeStruct((1, EMBED), jnp.float32),
        in_specs=[pl.BlockSpec(memory_space=pltpu.MemorySpace.VMEM)] * 17,
        out_specs=pl.BlockSpec(memory_space=pltpu.MemorySpace.VMEM),
    )(dst_row, src_row, src_col, w_row, x_pad,
      pp["w1"], pp["b1"], pp["w2"], pp["b2"], pp["w3"], pp["b3"],
      pp["gamma"], pp["beta"], pp["wl1"], pp["bl1"], pp["wl2r"], pp["bl2"])
    return out[0]


# ----------------------------- pure-JAX reference ----------------------------

def _mxu_dot(a, b):
    # Same precision as the in-kernel dots: bf16 operands, f32 accumulation.
    return jnp.dot(a.astype(_BF16), b.astype(_BF16),
                   preferred_element_type=jnp.float32)


def reference_forward(x, edge_index, edge_attr, p):
    n = NODE_NUM
    src, dst = edge_index[0], edge_index[1]
    loop = jnp.arange(n, dtype=src.dtype)
    src_all = jnp.concatenate([src, loop])
    dst_all = jnp.concatenate([dst, loop])
    w_all = jnp.concatenate([edge_attr.astype(jnp.float32),
                             jnp.ones((n,), jnp.float32)])
    deg = jnp.zeros((n,), jnp.float32).at[dst_all].add(w_all)
    dinv = jnp.where(deg > 0, lax.rsqrt(deg), 0.0)
    norm = dinv[dst_all] * w_all * dinv[src_all]
    a_hat = jnp.zeros((n, n), jnp.float32).at[dst_all, src_all].add(norm)

    h = x.reshape(n, -1).astype(jnp.float32)
    h = jax.nn.relu(_mxu_dot(a_hat, _mxu_dot(h, p["w1"])) + p["b1"])
    h = jax.nn.relu(_mxu_dot(a_hat, _mxu_dot(h, p["w2"])) + p["b2"])
    h = jax.nn.relu(_mxu_dot(a_hat, _mxu_dot(h, p["w3"])) + p["b3"])
    mean = h.mean(axis=0, keepdims=True)
    var = ((h - mean) ** 2).mean(axis=0, keepdims=True)
    h = (h - mean) * lax.rsqrt(var + BN_EPS) * p["gamma"] + p["beta"]
    # scatter_max over arange(node_num) is an identity permutation.
    h = jax.nn.relu((_mxu_dot(h, p["wl1"]) + p["bl1"]).reshape(-1))
    return jnp.dot(h, p["wl2"],
                   precision=jax.lax.Precision.HIGHEST) + p["bl2"]


# -------------------------------- parameters ---------------------------------

def init_params(key):
    ks = jax.random.split(key, 10)
    rnd = lambda k, shape, s: jax.random.normal(k, shape, jnp.float32) * s
    return dict(
        # GCNConv weights stored transposed: [in, out]
        w1=rnd(ks[0], (NODE_FEAT, 64), 0.20), b1=rnd(ks[1], (64,), 0.05),
        w2=rnd(ks[2], (64, 128), 0.15),       b2=rnd(ks[3], (128,), 0.05),
        w3=rnd(ks[4], (128, 256), 0.10),      b3=rnd(ks[5], (256,), 0.05),
        gamma=jnp.ones((256,), jnp.float32),  beta=jnp.zeros((256,), jnp.float32),
        wl1=rnd(ks[6], (256, 10), 0.10),      bl1=rnd(ks[7], (10,), 0.05),
        wl2=rnd(ks[8], (1000, EMBED), 0.05),  bl2=rnd(ks[9], (EMBED,), 0.05),
    )


if __name__ == "__main__":
    key = jax.random.PRNGKey(0)
    k_x, k_ei, k_ea, k_p = jax.random.split(key, 4)

    # inputs mimic Data(x=[1, N, F], edge_index=[1, 2, E], edge_attr=[1, E])
    data_x = jax.random.normal(k_x, (1, NODE_NUM, NODE_FEAT), jnp.float32)
    edge_index = jax.random.randint(k_ei, (1, 2, N_EDGES), 0, NODE_NUM,
                                    dtype=jnp.int32)
    edge_attr = jax.random.uniform(k_ea, (1, N_EDGES), jnp.float32, 0.5, 1.5)
    params = init_params(k_p)
    prepped = prepare_params(params)          # static padding done once

    out = graph_encoder_forward(data_x[0], edge_index[0], edge_attr[0], prepped)
    out = jax.block_until_ready(out)
    assert out.shape == (EMBED,)

    ref = reference_forward(data_x[0], edge_index[0], edge_attr[0], params)
    np.testing.assert_allclose(np.asarray(out), np.asarray(ref),
                               rtol=2e-2, atol=2e-2)
    print("KERNEL_OK")
</pallas_src>

<mosaic_0001>
module attributes {stable_mosaic.version = 11 : i64} {
  func.func @_encoder_kernel(%arg0: memref<1x512xi32, #tpu.memory_space<vmem>>, %arg1: memref<1x512xi32, #tpu.memory_space<vmem>>, %arg2: memref<512x1xi32, #tpu.memory_space<vmem>>, %arg3: memref<1x512xf32, #tpu.memory_space<vmem>>, %arg4: memref<128x128xf32, #tpu.memory_space<vmem>>, %arg5: memref<128x64xbf16, #tpu.memory_space<vmem>>, %arg6: memref<1x64xf32, #tpu.memory_space<vmem>>, %arg7: memref<64x128xbf16, #tpu.memory_space<vmem>>, %arg8: memref<1x128xf32, #tpu.memory_space<vmem>>, %arg9: memref<128x256xbf16, #tpu.memory_space<vmem>>, %arg10: memref<1x256xf32, #tpu.memory_space<vmem>>, %arg11: memref<1x256xf32, #tpu.memory_space<vmem>>, %arg12: memref<1x256xf32, #tpu.memory_space<vmem>>, %arg13: memref<256x128xbf16, #tpu.memory_space<vmem>>, %arg14: memref<1x128xf32, #tpu.memory_space<vmem>>, %arg15: memref<10x128x128xf32, #tpu.memory_space<vmem>>, %arg16: memref<1x128xf32, #tpu.memory_space<vmem>>, %arg17: memref<1x128xf32, #tpu.memory_space<vmem>>) attributes {dimension_semantics = [], scalar_prefetch = 0 : i64, scratch_operands = 0 : i64, tpu.core_type = #tpu.core_type<tc>} {
    %0 = tpu.iota {dimensions = array<i32: 0>} : vector<128x512xi32>
    %c0 = arith.constant 0 : index
    %c0_0 = arith.constant 0 : index
    %1 = vector.load %arg0[%c0, %c0_0] : memref<1x512xi32, #tpu.memory_space<vmem>>, vector<1x512xi32>
    %2 = vector.broadcast %1 : vector<1x512xi32> to vector<128x512xi32>
    %3 = arith.cmpi eq, %0, %2 : vector<128x512xi32>
    %4 = arith.extui %3 : vector<128x512xi1> to vector<128x512xi32>
    %5 = arith.sitofp %4 : vector<128x512xi32> to vector<128x512xf32>
    %c0_1 = arith.constant 0 : index
    %c0_2 = arith.constant 0 : index
    %6 = vector.load %arg1[%c0_1, %c0_2] : memref<1x512xi32, #tpu.memory_space<vmem>>, vector<1x512xi32>
    %7 = vector.broadcast %6 : vector<1x512xi32> to vector<128x512xi32>
    %8 = arith.cmpi eq, %0, %7 : vector<128x512xi32>
    %9 = arith.extui %8 : vector<128x512xi1> to vector<128x512xi32>
    %10 = arith.sitofp %9 : vector<128x512xi32> to vector<128x512xf32>
    %11 = tpu.iota {dimensions = array<i32: 1>} : vector<512x128xi32>
    %c0_3 = arith.constant 0 : index
    %c0_4 = arith.constant 0 : index
    %12 = vector.load %arg2[%c0_3, %c0_4] : memref<512x1xi32, #tpu.memory_space<vmem>>, vector<512x1xi32>
    %13 = vector.broadcast %12 : vector<512x1xi32> to vector<512x128xi32>
    %14 = arith.cmpi eq, %11, %13 : vector<512x128xi32>
    %15 = arith.extui %14 : vector<512x128xi1> to vector<512x128xi32>
    %16 = arith.sitofp %15 : vector<512x128xi32> to vector<512x128xf32>
    %c0_5 = arith.constant 0 : index
    %c0_6 = arith.constant 0 : index
    %17 = vector.load %arg3[%c0_5, %c0_6] : memref<1x512xf32, #tpu.memory_space<vmem>>, vector<1x512xf32>
    %18 = tpu.iota {dimensions = array<i32: 0>} : vector<128x1xi32>
    %c100_i32 = arith.constant 100 : i32
    %19 = vector.broadcast %c100_i32 : i32 to vector<128x1xi32>
    %20 = arith.cmpi slt, %18, %19 : vector<128x1xi32>
    %21 = arith.extui %20 : vector<128x1xi1> to vector<128x1xi32>
    %22 = arith.sitofp %21 : vector<128x1xi32> to vector<128x1xf32>
    %23 = vector.broadcast %17 : vector<1x512xf32> to vector<128x512xf32>
    %24 = arith.mulf %5, %23 : vector<128x512xf32>
    %cst = arith.constant dense<0.000000e+00> : vector<128xf32>
    %25 = vector.multi_reduction <add>, %24, %cst [1] : vector<128x512xf32> to vector<128xf32>
    %26 = vector.shape_cast %25 : vector<128xf32> to vector<128x1xf32>
    %27 = arith.addf %26, %22 : vector<128x1xf32>
    %cst_7 = arith.constant 0.000000e+00 : f32
    %28 = vector.broadcast %cst_7 : f32 to vector<128x1xf32>
    %29 = arith.cmpf ogt, %27, %28 : vector<128x1xf32>
    %30 = math.rsqrt %27 : vector<128x1xf32>
    %cst_8 = arith.constant 0.000000e+00 : f32
    %31 = vector.broadcast %cst_8 : f32 to vector<128x1xf32>
    %32 = arith.select %29, %30, %31 : vector<128x1xi1>, vector<128x1xf32>
    %33 = vector.broadcast %32 : vector<128x1xf32> to vector<128x512xf32>
    %34 = arith.mulf %5, %33 : vector<128x512xf32>
    %cst_9 = arith.constant dense<0.000000e+00> : vector<512xf32>
    %35 = vector.multi_reduction <add>, %34, %cst_9 [0] : vector<128x512xf32> to vector<512xf32>
    %36 = vector.shape_cast %35 : vector<512xf32> to vector<1x512xf32>
    %37 = vector.broadcast %32 : vector<128x1xf32> to vector<128x512xf32>
    %38 = arith.mulf %10, %37 : vector<128x512xf32>
    %cst_10 = arith.constant dense<0.000000e+00> : vector<512xf32>
    %39 = vector.multi_reduction <add>, %38, %cst_10 [0] : vector<128x512xf32> to vector<512xf32>
    %40 = vector.shape_cast %39 : vector<512xf32> to vector<1x512xf32>
    %41 = arith.mulf %36, %17 : vector<1x512xf32>
    %42 = arith.mulf %41, %40 : vector<1x512xf32>
    %43 = vector.broadcast %42 : vector<1x512xf32> to vector<128x512xf32>
    %44 = arith.mulf %5, %43 : vector<128x512xf32>
    %cst_11 = arith.constant dense<0.000000e+00> : vector<128x128xf32>
    %45 = tpu.matmul %44, %16, %cst_11 {dimension_numbers = #tpu.dot_dimension_numbers<[1], [0], [0], [1], [0, 0, 1, 1], [], []>, precision = #tpu.contract_precision<fp32>} : vector<128x512xf32>, vector<512x128xf32>, vector<128x128xf32> -> vector<128x128xf32>
    %46 = tpu.iota {dimensions = array<i32: 0>} : vector<128x128xi32>
    %47 = tpu.iota {dimensions = array<i32: 1>} : vector<128x128xi32>
    %48 = arith.cmpi eq, %46, %47 : vector<128x128xi32>
    %49 = arith.extui %48 : vector<128x128xi1> to vector<128x128xi32>
    %50 = arith.sitofp %49 : vector<128x128xi32> to vector<128x128xf32>
    %51 = arith.mulf %32, %32 : vector<128x1xf32>
    %52 = vector.broadcast %51 : vector<128x1xf32> to vector<128x128xf32>
    %53 = arith.mulf %50, %52 : vector<128x128xf32>
    %54 = arith.addf %45, %53 : vector<128x128xf32>
    %55 = arith.truncf %54 : vector<128x128xf32> to vector<128x128xbf16>
    %c0_12 = arith.constant 0 : index
    %c0_13 = arith.constant 0 : index
    %56 = vector.load %arg4[%c0_12, %c0_13] : memref<128x128xf32, #tpu.memory_space<vmem>>, vector<128x128xf32>
    %57 = arith.truncf %56 : vector<128x128xf32> to vector<128x128xbf16>
    %c0_14 = arith.constant 0 : index
    %c0_15 = arith.constant 0 : index
    %58 = vector.load %arg5[%c0_14, %c0_15] : memref<128x64xbf16, #tpu.memory_space<vmem>>, vector<128x64xbf16>
    %cst_16 = arith.constant dense<0.000000e+00> : vector<128x64xf32>
    %59 = tpu.matmul %57, %58, %cst_16 {dimension_numbers = #tpu.dot_dimension_numbers<[1], [0], [0], [1], [0, 0, 1, 1], [], []>} : vector<128x128xbf16>, vector<128x64xbf16>, vector<128x64xf32> -> vector<128x64xf32>
    %60 = arith.truncf %59 : vector<128x64xf32> to vector<128x64xbf16>
    %cst_17 = arith.constant dense<0.000000e+00> : vector<128x64xf32>
    %61 = tpu.matmul %55, %60, %cst_17 {dimension_numbers = #tpu.dot_dimension_numbers<[1], [0], [0], [1], [0, 0, 1, 1], [], []>} : vector<128x128xbf16>, vector<128x64xbf16>, vector<128x64xf32> -> vector<128x64xf32>
    %c0_18 = arith.constant 0 : index
    %c0_19 = arith.constant 0 : index
    %62 = vector.load %arg6[%c0_18, %c0_19] : memref<1x64xf32, #tpu.memory_space<vmem>>, vector<1x64xf32>
    %63 = vector.broadcast %62 : vector<1x64xf32> to vector<128x64xf32>
    %64 = arith.addf %61, %63 : vector<128x64xf32>
    %cst_20 = arith.constant 0.000000e+00 : f32
    %65 = vector.broadcast %cst_20 : f32 to vector<128x64xf32>
    %66 = arith.maximumf %64, %65 : vector<128x64xf32>
    %67 = arith.truncf %66 : vector<128x64xf32> to vector<128x64xbf16>
    %c0_21 = arith.constant 0 : index
    %c0_22 = arith.constant 0 : index
    %68 = vector.load %arg7[%c0_21, %c0_22] : memref<64x128xbf16, #tpu.memory_space<vmem>>, vector<64x128xbf16>
    %cst_23 = arith.constant dense<0.000000e+00> : vector<128x128xf32>
    %69 = tpu.matmul %67, %68, %cst_23 {dimension_numbers = #tpu.dot_dimension_numbers<[1], [0], [0], [1], [0, 0, 1, 1], [], []>} : vector<128x64xbf16>, vector<64x128xbf16>, vector<128x128xf32> -> vector<128x128xf32>
    %70 = arith.truncf %69 : vector<128x128xf32> to vector<128x128xbf16>
    %cst_24 = arith.constant dense<0.000000e+00> : vector<128x128xf32>
    %71 = tpu.matmul %55, %70, %cst_24 {dimension_numbers = #tpu.dot_dimension_numbers<[1], [0], [0], [1], [0, 0, 1, 1], [], []>} : vector<128x128xbf16>, vector<128x128xbf16>, vector<128x128xf32> -> vector<128x128xf32>
    %c0_25 = arith.constant 0 : index
    %c0_26 = arith.constant 0 : index
    %72 = vector.load %arg8[%c0_25, %c0_26] : memref<1x128xf32, #tpu.memory_space<vmem>>, vector<1x128xf32>
    %73 = vector.broadcast %72 : vector<1x128xf32> to vector<128x128xf32>
    %74 = arith.addf %71, %73 : vector<128x128xf32>
    %cst_27 = arith.constant 0.000000e+00 : f32
    %75 = vector.broadcast %cst_27 : f32 to vector<128x128xf32>
    %76 = arith.maximumf %74, %75 : vector<128x128xf32>
    %77 = arith.truncf %76 : vector<128x128xf32> to vector<128x128xbf16>
    %c0_28 = arith.constant 0 : index
    %c0_29 = arith.constant 0 : index
    %78 = vector.load %arg9[%c0_28, %c0_29] : memref<128x256xbf16, #tpu.memory_space<vmem>>, vector<128x256xbf16>
    %cst_30 = arith.constant dense<0.000000e+00> : vector<128x256xf32>
    %79 = tpu.matmul %77, %78, %cst_30 {dimension_numbers = #tpu.dot_dimension_numbers<[1], [0], [0], [1], [0, 0, 1, 1], [], []>} : vector<128x128xbf16>, vector<128x256xbf16>, vector<128x256xf32> -> vector<128x256xf32>
    %80 = arith.truncf %79 : vector<128x256xf32> to vector<128x256xbf16>
    %cst_31 = arith.constant dense<0.000000e+00> : vector<128x256xf32>
    %81 = tpu.matmul %55, %80, %cst_31 {dimension_numbers = #tpu.dot_dimension_numbers<[1], [0], [0], [1], [0, 0, 1, 1], [], []>} : vector<128x128xbf16>, vector<128x256xbf16>, vector<128x256xf32> -> vector<128x256xf32>
    %c0_32 = arith.constant 0 : index
    %c0_33 = arith.constant 0 : index
    %82 = vector.load %arg10[%c0_32, %c0_33] : memref<1x256xf32, #tpu.memory_space<vmem>>, vector<1x256xf32>
    %83 = vector.broadcast %82 : vector<1x256xf32> to vector<128x256xf32>
    %84 = arith.addf %81, %83 : vector<128x256xf32>
    %cst_34 = arith.constant 0.000000e+00 : f32
    %85 = vector.broadcast %cst_34 : f32 to vector<128x256xf32>
    %86 = arith.maximumf %84, %85 : vector<128x256xf32>
    %87 = vector.broadcast %22 : vector<128x1xf32> to vector<128x256xf32>
    %88 = arith.mulf %86, %87 : vector<128x256xf32>
    %cst_35 = arith.constant dense<0.000000e+00> : vector<256xf32>
    %89 = vector.multi_reduction <add>, %88, %cst_35 [0] : vector<128x256xf32> to vector<256xf32>
    %90 = vector.shape_cast %89 : vector<256xf32> to vector<1x256xf32>
    %cst_36 = arith.constant 0.00999999977 : f32
    %91 = vector.broadcast %cst_36 : f32 to vector<1x256xf32>
    %92 = arith.mulf %90, %91 : vector<1x256xf32>
    %93 = arith.mulf %88, %86 : vector<128x256xf32>
    %cst_37 = arith.constant dense<0.000000e+00> : vector<256xf32>
    %94 = vector.multi_reduction <add>, %93, %cst_37 [0] : vector<128x256xf32> to vector<256xf32>
    %95 = vector.shape_cast %94 : vector<256xf32> to vector<1x256xf32>
    %cst_38 = arith.constant 0.00999999977 : f32
    %96 = vector.broadcast %cst_38 : f32 to vector<1x256xf32>
    %97 = arith.mulf %95, %96 : vector<1x256xf32>
    %98 = arith.mulf %92, %92 : vector<1x256xf32>
    %99 = arith.subf %97, %98 : vector<1x256xf32>
    %c0_39 = arith.constant 0 : index
    %c0_40 = arith.constant 0 : index
    %100 = vector.load %arg11[%c0_39, %c0_40] : memref<1x256xf32, #tpu.memory_space<vmem>>, vector<1x256xf32>
    %cst_41 = arith.constant 9.99999974E-6 : f32
    %101 = vector.broadcast %cst_41 : f32 to vector<1x256xf32>
    %102 = arith.addf %99, %101 : vector<1x256xf32>
    %103 = math.rsqrt %102 : vector<1x256xf32>
    %104 = arith.mulf %100, %103 : vector<1x256xf32>
    %c0_42 = arith.constant 0 : index
    %c0_43 = arith.constant 0 : index
    %105 = vector.load %arg12[%c0_42, %c0_43] : memref<1x256xf32, #tpu.memory_space<vmem>>, vector<1x256xf32>
    %106 = arith.mulf %92, %104 : vector<1x256xf32>
    %107 = arith.subf %105, %106 : vector<1x256xf32>
    %108 = vector.broadcast %104 : vector<1x256xf32> to vector<128x256xf32>
    %109 = arith.mulf %86, %108 : vector<128x256xf32>
    %110 = vector.broadcast %107 : vector<1x256xf32> to vector<128x256xf32>
    %111 = arith.addf %109, %110 : vector<128x256xf32>
    %112 = arith.truncf %111 : vector<128x256xf32> to vector<128x256xbf16>
    %c0_44 = arith.constant 0 : index
    %c0_45 = arith.constant 0 : index
    %113 = vector.load %arg13[%c0_44, %c0_45] : memref<256x128xbf16, #tpu.memory_space<vmem>>, vector<256x128xbf16>
    %cst_46 = arith.constant dense<0.000000e+00> : vector<128x128xf32>
    %114 = tpu.matmul %112, %113, %cst_46 {dimension_numbers = #tpu.dot_dimension_numbers<[1], [0], [0], [1], [0, 0, 1, 1], [], []>} : vector<128x256xbf16>, vector<256x128xbf16>, vector<128x128xf32> -> vector<128x128xf32>
    %c0_47 = arith.constant 0 : index
    %c0_48 = arith.constant 0 : index
    %115 = vector.load %arg14[%c0_47, %c0_48] : memref<1x128xf32, #tpu.memory_space<vmem>>, vector<1x128xf32>
    %116 = vector.broadcast %115 : vector<1x128xf32> to vector<128x128xf32>
    %117 = arith.addf %114, %116 : vector<128x128xf32>
    %cst_49 = arith.constant 0.000000e+00 : f32
    %118 = vector.broadcast %cst_49 : f32 to vector<128x128xf32>
    %119 = arith.maximumf %117, %118 : vector<128x128xf32>
    %120 = vector.extract_strided_slice %119 {offsets = [0, 0], sizes = [128, 1], strides = [1, 1]} : vector<128x128xf32> to vector<128x1xf32>
    %c0_50 = arith.constant 0 : index
    %c0_51 = arith.constant 0 : index
    %c0_52 = arith.constant 0 : index
    %121 = vector.load %arg15[%c0_50, %c0_51, %c0_52] : memref<10x128x128xf32, #tpu.memory_space<vmem>>, vector<1x128x128xf32>
    %122 = vector.shape_cast %121 : vector<1x128x128xf32> to vector<128x128xf32>
    %123 = vector.broadcast %120 : vector<128x1xf32> to vector<128x128xf32>
    %124 = arith.mulf %123, %122 : vector<128x128xf32>
    %125 = vector.extract_strided_slice %119 {offsets = [0, 1], sizes = [128, 1], strides = [1, 1]} : vector<128x128xf32> to vector<128x1xf32>
    %c1 = arith.constant 1 : index
    %c0_53 = arith.constant 0 : index
    %c0_54 = arith.constant 0 : index
    %126 = vector.load %arg15[%c1, %c0_53, %c0_54] : memref<10x128x128xf32, #tpu.memory_space<vmem>>, vector<1x128x128xf32>
    %127 = vector.shape_cast %126 : vector<1x128x128xf32> to vector<128x128xf32>
    %128 = vector.broadcast %125 : vector<128x1xf32> to vector<128x128xf32>
    %129 = arith.mulf %128, %127 : vector<128x128xf32>
    %130 = arith.addf %124, %129 : vector<128x128xf32>
    %131 = vector.extract_strided_slice %119 {offsets = [0, 2], sizes = [128, 1], strides = [1, 1]} : vector<128x128xf32> to vector<128x1xf32>
    %c2 = arith.constant 2 : index
    %c0_55 = arith.constant 0 : index
    %c0_56 = arith.constant 0 : index
    %132 = vector.load %arg15[%c2, %c0_55, %c0_56] : memref<10x128x128xf32, #tpu.memory_space<vmem>>, vector<1x128x128xf32>
    %133 = vector.shape_cast %132 : vector<1x128x128xf32> to vector<128x128xf32>
    %134 = vector.broadcast %131 : vector<128x1xf32> to vector<128x128xf32>
    %135 = arith.mulf %134, %133 : vector<128x128xf32>
    %136 = arith.addf %130, %135 : vector<128x128xf32>
    %137 = vector.extract_strided_slice %119 {offsets = [0, 3], sizes = [128, 1], strides = [1, 1]} : vector<128x128xf32> to vector<128x1xf32>
    %c3 = arith.constant 3 : index
    %c0_57 = arith.constant 0 : index
    %c0_58 = arith.constant 0 : index
    %138 = vector.load %arg15[%c3, %c0_57, %c0_58] : memref<10x128x128xf32, #tpu.memory_space<vmem>>, vector<1x128x128xf32>
    %139 = vector.shape_cast %138 : vector<1x128x128xf32> to vector<128x128xf32>
    %140 = vector.broadcast %137 : vector<128x1xf32> to vector<128x128xf32>
    %141 = arith.mulf %140, %139 : vector<128x128xf32>
    %142 = arith.addf %136, %141 : vector<128x128xf32>
    %143 = vector.extract_strided_slice %119 {offsets = [0, 4], sizes = [128, 1], strides = [1, 1]} : vector<128x128xf32> to vector<128x1xf32>
    %c4 = arith.constant 4 : index
    %c0_59 = arith.constant 0 : index
    %c0_60 = arith.constant 0 : index
    %144 = vector.load %arg15[%c4, %c0_59, %c0_60] : memref<10x128x128xf32, #tpu.memory_space<vmem>>, vector<1x128x128xf32>
    %145 = vector.shape_cast %144 : vector<1x128x128xf32> to vector<128x128xf32>
    %146 = vector.broadcast %143 : vector<128x1xf32> to vector<128x128xf32>
    %147 = arith.mulf %146, %145 : vector<128x128xf32>
    %148 = arith.addf %142, %147 : vector<128x128xf32>
    %149 = vector.extract_strided_slice %119 {offsets = [0, 5], sizes = [128, 1], strides = [1, 1]} : vector<128x128xf32> to vector<128x1xf32>
    %c5 = arith.constant 5 : index
    %c0_61 = arith.constant 0 : index
    %c0_62 = arith.constant 0 : index
    %150 = vector.load %arg15[%c5, %c0_61, %c0_62] : memref<10x128x128xf32, #tpu.memory_space<vmem>>, vector<1x128x128xf32>
    %151 = vector.shape_cast %150 : vector<1x128x128xf32> to vector<128x128xf32>
    %152 = vector.broadcast %149 : vector<128x1xf32> to vector<128x128xf32>
    %153 = arith.mulf %152, %151 : vector<128x128xf32>
    %154 = arith.addf %148, %153 : vector<128x128xf32>
    %155 = vector.extract_strided_slice %119 {offsets = [0, 6], sizes = [128, 1], strides = [1, 1]} : vector<128x128xf32> to vector<128x1xf32>
    %c6 = arith.constant 6 : index
    %c0_63 = arith.constant 0 : index
    %c0_64 = arith.constant 0 : index
    %156 = vector.load %arg15[%c6, %c0_63, %c0_64] : memref<10x128x128xf32, #tpu.memory_space<vmem>>, vector<1x128x128xf32>
    %157 = vector.shape_cast %156 : vector<1x128x128xf32> to vector<128x128xf32>
    %158 = vector.broadcast %155 : vector<128x1xf32> to vector<128x128xf32>
    %159 = arith.mulf %158, %157 : vector<128x128xf32>
    %160 = arith.addf %154, %159 : vector<128x128xf32>
    %161 = vector.extract_strided_slice %119 {offsets = [0, 7], sizes = [128, 1], strides = [1, 1]} : vector<128x128xf32> to vector<128x1xf32>
    %c7 = arith.constant 7 : index
    %c0_65 = arith.constant 0 : index
    %c0_66 = arith.constant 0 : index
    %162 = vector.load %arg15[%c7, %c0_65, %c0_66] : memref<10x128x128xf32, #tpu.memory_space<vmem>>, vector<1x128x128xf32>
    %163 = vector.shape_cast %162 : vector<1x128x128xf32> to vector<128x128xf32>
    %164 = vector.broadcast %161 : vector<128x1xf32> to vector<128x128xf32>
    %165 = arith.mulf %164, %163 : vector<128x128xf32>
    %166 = arith.addf %160, %165 : vector<128x128xf32>
    %167 = vector.extract_strided_slice %119 {offsets = [0, 8], sizes = [128, 1], strides = [1, 1]} : vector<128x128xf32> to vector<128x1xf32>
    %c8 = arith.constant 8 : index
    %c0_67 = arith.constant 0 : index
    %c0_68 = arith.constant 0 : index
    %168 = vector.load %arg15[%c8, %c0_67, %c0_68] : memref<10x128x128xf32, #tpu.memory_space<vmem>>, vector<1x128x128xf32>
    %169 = vector.shape_cast %168 : vector<1x128x128xf32> to vector<128x128xf32>
    %170 = vector.broadcast %167 : vector<128x1xf32> to vector<128x128xf32>
    %171 = arith.mulf %170, %169 : vector<128x128xf32>
    %172 = arith.addf %166, %171 : vector<128x128xf32>
    %173 = vector.extract_strided_slice %119 {offsets = [0, 9], sizes = [128, 1], strides = [1, 1]} : vector<128x128xf32> to vector<128x1xf32>
    %c9 = arith.constant 9 : index
    %c0_69 = arith.constant 0 : index
    %c0_70 = arith.constant 0 : index
    %174 = vector.load %arg15[%c9, %c0_69, %c0_70] : memref<10x128x128xf32, #tpu.memory_space<vmem>>, vector<1x128x128xf32>
    %175 = vector.shape_cast %174 : vector<1x128x128xf32> to vector<128x128xf32>
    %176 = vector.broadcast %173 : vector<128x1xf32> to vector<128x128xf32>
    %177 = arith.mulf %176, %175 : vector<128x128xf32>
    %178 = arith.addf %172, %177 : vector<128x128xf32>
    %cst_71 = arith.constant dense<0.000000e+00> : vector<128xf32>
    %179 = vector.multi_reduction <add>, %178, %cst_71 [0] : vector<128x128xf32> to vector<128xf32>
    %180 = vector.shape_cast %179 : vector<128xf32> to vector<1x128xf32>
    %c0_72 = arith.constant 0 : index
    %c0_73 = arith.constant 0 : index
    %181 = vector.load %arg16[%c0_72, %c0_73] : memref<1x128xf32, #tpu.memory_space<vmem>>, vector<1x128xf32>
    %182 = arith.addf %180, %181 : vector<1x128xf32>
    %c0_74 = arith.constant 0 : index
    %c0_75 = arith.constant 0 : index
    %183 = vector.load %arg17[%c0_74, %c0_75] : memref<1x128xf32, #tpu.memory_space<vmem>>, vector<1x128xf32>
    tpu.vector_store %arg17[%c0_74, %c0_75], %182 {strides = array<i32>} : memref<1x128xf32, #tpu.memory_space<vmem>>, vector<1x128xf32>,
    return
  }
}

</mosaic_0001>

<llo_original>
// kernel: graph_encoder_forward.1
$region0: #{graph_encoder_forward.1}
  #allocation0 [shape = 'u32[]', space=smem, size = 0x4, offset = 0x4, fixed_abs, tag = 'smem constant byte address 0x4 - core index']
  #allocation1 [shape = 'u32[72,128]{1,0:T(1,128)}', space=vmem, size = 0x9000, scoped, tag = 'internal scratch']
  %s0 = inlined_call_operand.vmem [shape: s32[1,512], index: 0, kind: input, shape index: {}]
  %s1 = inlined_call_operand.vmem [shape: s32[1,512], index: 1, kind: input, shape index: {}]
  %s2 = inlined_call_operand.vmem [shape: s32[512,1], index: 2, kind: input, shape index: {}]
  %s3 = inlined_call_operand.vmem [shape: f32[1,512], index: 3, kind: input, shape index: {}]
  %s4 = inlined_call_operand.vmem [shape: f32[128,128], index: 4, kind: input, shape index: {}]
  %s5 = inlined_call_operand.vmem [shape: bf16[128,64], index: 5, kind: input, shape index: {}]
  %s6 = inlined_call_operand.vmem [shape: f32[1,64], index: 6, kind: input, shape index: {}]
  %s7 = inlined_call_operand.vmem [shape: bf16[64,128], index: 7, kind: input, shape index: {}]
  %s8 = inlined_call_operand.vmem [shape: f32[1,128], index: 8, kind: input, shape index: {}]
  %s9 = inlined_call_operand.vmem [shape: bf16[128,256], index: 9, kind: input, shape index: {}]
  %s10 = inlined_call_operand.vmem [shape: f32[1,256], index: 10, kind: input, shape index: {}]
  %s11 = inlined_call_operand.vmem [shape: f32[1,256], index: 11, kind: input, shape index: {}]
  %s12 = inlined_call_operand.vmem [shape: f32[1,256], index: 12, kind: input, shape index: {}]
  %s13 = inlined_call_operand.vmem [shape: bf16[256,128], index: 13, kind: input, shape index: {}]
  %s14 = inlined_call_operand.vmem [shape: f32[1,128], index: 14, kind: input, shape index: {}]
  %s15 = inlined_call_operand.hbm [shape: f32[10,128,128], index: 15, kind: input, shape index: {}]
  %s16 = inlined_call_operand.vmem [shape: f32[1,128], index: 16, kind: input, shape index: {}]
  %s17 = inlined_call_operand.hbm [shape: f32[1,128], index: 17, kind: output, shape index: {}]
  %s18 = sld [smem:[#allocation0]]
  $region82: #{graph_encoder_forward.1} parent=0
    _
  %s20 = ssub.s32 1, %s18
  %s21 = scalar_select 0, %s20, %s18
  $region1: #{graph_encoder_forward.1} parent=0
    #allocation2 [shape = 'u8[655360]{0}', space=vmem, size = 0xa0000, scoped, tag = 'input window, operand 15, single buffered']
    #allocation3 [shape = 's32[1]{0}', space=sflag, size = 0x4, scoped, tag = 'scoped memory for graph_encoder_forward.1']
    #allocation4 [shape = 's32[1]{0}', space=sflag, size = 0x4, scoped, tag = 'scoped memory for graph_encoder_forward.1']
    #allocation5 [shape = 'u8[512]{0}', space=vmem, size = 0x400, scoped, tag = 'output window, operand 0, single buffered']
    %22 = vsyncpa [#allocation3], 0
    %23 = vsyncpa [#allocation4], 0
    // Predicated region
    $region2: #{graph_encoder_forward.1} parent=1 // pred_check
      _
    $region3: #{graph_encoder_forward.1} parent=1 // pred_check_branch
      %25 = sbr.rel (0) target = $region5
    $region4: #{graph_encoder_forward.1} parent=1 // pred_region
      _
    $region5: #{graph_encoder_forward.1} parent=1 // pred_fallthru
      _
    // Predicated region
    $region6: #{graph_encoder_forward.1} parent=1 // pred_check
      _
    $region7: #{graph_encoder_forward.1} parent=1 // pred_check_branch
      %27 = sbr.rel (0) target = $region9
    $region8: #{graph_encoder_forward.1} parent=1 // pred_region
      _
    $region9: #{graph_encoder_forward.1} parent=1 // pred_fallthru
      _
    // Predicated region
    $region10: #{graph_encoder_forward.1} parent=1 // pred_check
      _
    $region11: #{graph_encoder_forward.1} parent=1 // pred_check_branch
      %29 = sbr.rel (0) target = $region13
    $region12: #{graph_encoder_forward.1} parent=1 // pred_region
      _
    $region13: #{graph_encoder_forward.1} parent=1 // pred_fallthru
      _
    // Predicated region
    $region14: #{graph_encoder_forward.1} parent=1 // pred_check
      _
    $region15: #{graph_encoder_forward.1} parent=1 // pred_check_branch
      %31 = sbr.rel (0) target = $region17
    $region16: #{graph_encoder_forward.1} parent=1 // pred_region
      _
    $region17: #{graph_encoder_forward.1} parent=1 // pred_fallthru
      _
    // Predicated region
    $region18: #{graph_encoder_forward.1} parent=1 // pred_check
      _
    $region19: #{graph_encoder_forward.1} parent=1 // pred_check_branch
      %33 = sbr.rel (0) target = $region21
    $region20: #{graph_encoder_forward.1} parent=1 // pred_region
      _
    $region21: #{graph_encoder_forward.1} parent=1 // pred_fallthru
      _
    // Predicated region
    $region22: #{graph_encoder_forward.1} parent=1 // pred_check
      _
    $region23: #{graph_encoder_forward.1} parent=1 // pred_check_branch
      %35 = sbr.rel (0) target = $region25
    $region24: #{graph_encoder_forward.1} parent=1 // pred_region
      _
    $region25: #{graph_encoder_forward.1} parent=1 // pred_fallthru
      _
    // Predicated region
    $region26: #{graph_encoder_forward.1} parent=1 // pred_check
      _
    $region27: #{graph_encoder_forward.1} parent=1 // pred_check_branch
      %37 = sbr.rel (0) target = $region29
    $region28: #{graph_encoder_forward.1} parent=1 // pred_region
      _
    $region29: #{graph_encoder_forward.1} parent=1 // pred_fallthru
      _
    // Predicated region
    $region30: #{graph_encoder_forward.1} parent=1 // pred_check
      _
    $region31: #{graph_encoder_forward.1} parent=1 // pred_check_branch
      %39 = sbr.rel (0) target = $region33
    $region32: #{graph_encoder_forward.1} parent=1 // pred_region
      _
    $region33: #{graph_encoder_forward.1} parent=1 // pred_fallthru
      _
    // Predicated region
    $region34: #{graph_encoder_forward.1} parent=1 // pred_check
      _
    $region35: #{graph_encoder_forward.1} parent=1 // pred_check_branch
      %41 = sbr.rel (0) target = $region37
    $region36: #{graph_encoder_forward.1} parent=1 // pred_region
      _
    $region37: #{graph_encoder_forward.1} parent=1 // pred_fallthru
      _
    // Predicated region
    $region38: #{graph_encoder_forward.1} parent=1 // pred_check
      _
    $region39: #{graph_encoder_forward.1} parent=1 // pred_check_branch
      %43 = sbr.rel (0) target = $region41
    $region40: #{graph_encoder_forward.1} parent=1 // pred_region
      _
    $region41: #{graph_encoder_forward.1} parent=1 // pred_fallthru
      _
    // Predicated region
    $region42: #{graph_encoder_forward.1} parent=1 // pred_check
      _
    $region43: #{graph_encoder_forward.1} parent=1 // pred_check_branch
      %45 = sbr.rel (0) target = $region45
    $region44: #{graph_encoder_forward.1} parent=1 // pred_region
      _
    $region45: #{graph_encoder_forward.1} parent=1 // pred_fallthru
      _
    // Predicated region
    $region46: #{graph_encoder_forward.1} parent=1 // pred_check
      _
    $region47: #{graph_encoder_forward.1} parent=1 // pred_check_branch
      %47 = sbr.rel (0) target = $region49
    $region48: #{graph_encoder_forward.1} parent=1 // pred_region
      _
    $region49: #{graph_encoder_forward.1} parent=1 // pred_fallthru
      _
    // Predicated region
    $region50: #{graph_encoder_forward.1} parent=1 // pred_check
      _
    $region51: #{graph_encoder_forward.1} parent=1 // pred_check_branch
      %49 = sbr.rel (0) target = $region53
    $region52: #{graph_encoder_forward.1} parent=1 // pred_region
      _
    $region53: #{graph_encoder_forward.1} parent=1 // pred_fallthru
      _
    // Predicated region
    $region54: #{graph_encoder_forward.1} parent=1 // pred_check
      _
    $region55: #{graph_encoder_forward.1} parent=1 // pred_check_branch
      %51 = sbr.rel (0) target = $region57
    $region56: #{graph_encoder_forward.1} parent=1 // pred_region
      _
    $region57: #{graph_encoder_forward.1} parent=1 // pred_fallthru
      _
    // Predicated region
    $region58: #{graph_encoder_forward.1} parent=1 // pred_check
      _
    $region59: #{graph_encoder_forward.1} parent=1 // pred_check_branch
      %53 = sbr.rel (0) target = $region61
    $region60: #{graph_encoder_forward.1} parent=1 // pred_region
      _
    $region61: #{graph_encoder_forward.1} parent=1 // pred_fallthru
      _
    // Predicated region
    $region62: #{graph_encoder_forward.1} parent=1 // pred_check
      _
    $region63: #{graph_encoder_forward.1} parent=1 // pred_check_branch
      %55 = sbr.rel (0) target = $region65
    $region64: #{graph_encoder_forward.1} parent=1 // pred_region
      %57 = vsyncadd [#allocation3], 0
      %s58 = sshll.u32 %s15, 4
      %s59 = int_to_ptr.hbm [resolvable:$true] %s58
      %s60 = sshll.u32 [#allocation2], 4
      %s61 = int_to_ptr.vmem [resolvable:$true] %s60
      %66 = dma.hbm_to_vmem [thread:$0]  %s59, 20480, %s61, [#allocation3], 128, 128, 8
    $region65: #{graph_encoder_forward.1} parent=1 // pred_fallthru
      _
    // Predicated region
    $region66: #{graph_encoder_forward.1} parent=1 // pred_check
      _
    $region67: #{graph_encoder_forward.1} parent=1 // pred_check_branch
      %68 = sbr.rel (0) target = $region69
    $region68: #{graph_encoder_forward.1} parent=1 // pred_region
      _
    $region69: #{graph_encoder_forward.1} parent=1 // pred_fallthru
      _
    // Predicated region
    $region70: #{graph_encoder_forward.1} parent=1 // pred_check
      _
    $region71: #{graph_encoder_forward.1} parent=1 // pred_check_branch
      %70 = sbr.rel (0) target = $region73
    $region72: #{graph_encoder_forward.1} parent=1 // pred_region
      %72 = dma.done [#allocation3], 20480
    $region73: #{graph_encoder_forward.1} parent=1 // pred_fallthru
      _
    %v74 = vlaneseq
    %v75 = vshrl.u32 %v74, 7
    %v76 = vadd.s32 %v75, 8
    %v77 = vadd.s32 %v75, 16
    %v78 = vadd.s32 %v75, 24
    %v79 = vadd.s32 %v75, 32
    %v80 = vadd.s32 %v75, 40
    %v81 = vadd.s32 %v75, 48
    %v82 = vadd.s32 %v75, 56
    %v83 = vadd.s32 %v75, 64
    %v84 = vadd.s32 %v75, 72
    %v85 = vadd.s32 %v75, 80
    %v86 = vadd.s32 %v75, 88
    %v87 = vadd.s32 %v75, 96
    %v88 = vadd.s32 %v75, 104
    %v89 = vadd.s32 %v75, 112
    %v90 = vadd.s32 %v75, 120
    %v91 = vld [vmem:[%s0] sm:$0xf]
    %v92 = vperm.slane %v91, 0
    %v93 = vperm.slane %v91, 1
    %v94 = vperm.slane %v91, 2
    %v95 = vperm.slane %v91, 3
    %vm96 = vcmp.eq.s32.totalorder %v75, %v92
    %vm97 = vcmp.eq.s32.totalorder %v75, %v93
    %vm98 = vcmp.eq.s32.totalorder %v75, %v94
    %vm99 = vcmp.eq.s32.totalorder %v75, %v95
    %vm100 = vcmp.eq.s32.totalorder %v76, %v92
    %vm101 = vcmp.eq.s32.totalorder %v76, %v93
    %vm102 = vcmp.eq.s32.totalorder %v76, %v94
    %vm103 = vcmp.eq.s32.totalorder %v76, %v95
    %vm104 = vcmp.eq.s32.totalorder %v77, %v92
    %vm105 = vcmp.eq.s32.totalorder %v77, %v93
    %vm106 = vcmp.eq.s32.totalorder %v77, %v94
    %vm107 = vcmp.eq.s32.totalorder %v77, %v95
    %vm108 = vcmp.eq.s32.totalorder %v78, %v92
    %vm109 = vcmp.eq.s32.totalorder %v78, %v93
    %vm110 = vcmp.eq.s32.totalorder %v78, %v94
    %vm111 = vcmp.eq.s32.totalorder %v78, %v95
    %vm112 = vcmp.eq.s32.totalorder %v79, %v92
    %vm113 = vcmp.eq.s32.totalorder %v79, %v93
    %vm114 = vcmp.eq.s32.totalorder %v79, %v94
    %vm115 = vcmp.eq.s32.totalorder %v79, %v95
    %vm116 = vcmp.eq.s32.totalorder %v80, %v92
    %vm117 = vcmp.eq.s32.totalorder %v80, %v93
    %vm118 = vcmp.eq.s32.totalorder %v80, %v94
    %vm119 = vcmp.eq.s32.totalorder %v80, %v95
    %vm120 = vcmp.eq.s32.totalorder %v81, %v92
    %vm121 = vcmp.eq.s32.totalorder %v81, %v93
    %vm122 = vcmp.eq.s32.totalorder %v81, %v94
    %vm123 = vcmp.eq.s32.totalorder %v81, %v95
    %vm124 = vcmp.eq.s32.totalorder %v82, %v92
    %vm125 = vcmp.eq.s32.totalorder %v82, %v93
    %vm126 = vcmp.eq.s32.totalorder %v82, %v94
    %vm127 = vcmp.eq.s32.totalorder %v82, %v95
    %vm128 = vcmp.eq.s32.totalorder %v83, %v92
    %vm129 = vcmp.eq.s32.totalorder %v83, %v93
    %vm130 = vcmp.eq.s32.totalorder %v83, %v94
    %vm131 = vcmp.eq.s32.totalorder %v83, %v95
    %vm132 = vcmp.eq.s32.totalorder %v84, %v92
    %vm133 = vcmp.eq.s32.totalorder %v84, %v93
    %vm134 = vcmp.eq.s32.totalorder %v84, %v94
    %vm135 = vcmp.eq.s32.totalorder %v84, %v95
    %vm136 = vcmp.eq.s32.totalorder %v85, %v92
    %vm137 = vcmp.eq.s32.totalorder %v85, %v93
    %vm138 = vcmp.eq.s32.totalorder %v85, %v94
    %vm139 = vcmp.eq.s32.totalorder %v85, %v95
    %vm140 = vcmp.eq.s32.totalorder %v86, %v92
    %vm141 = vcmp.eq.s32.totalorder %v86, %v93
    %vm142 = vcmp.eq.s32.totalorder %v86, %v94
    %vm143 = vcmp.eq.s32.totalorder %v86, %v95
    %vm144 = vcmp.eq.s32.totalorder %v87, %v92
    %vm145 = vcmp.eq.s32.totalorder %v87, %v93
    %vm146 = vcmp.eq.s32.totalorder %v87, %v94
    %vm147 = vcmp.eq.s32.totalorder %v87, %v95
    %vm148 = vcmp.eq.s32.totalorder %v88, %v92
    %vm149 = vcmp.eq.s32.totalorder %v88, %v93
    %vm150 = vcmp.eq.s32.totalorder %v88, %v94
    %vm151 = vcmp.eq.s32.totalorder %v88, %v95
    %vm152 = vcmp.eq.s32.totalorder %v89, %v92
    %vm153 = vcmp.eq.s32.totalorder %v89, %v93
    %vm154 = vcmp.eq.s32.totalorder %v89, %v94
    %vm155 = vcmp.eq.s32.totalorder %v89, %v95
    %vm156 = vcmp.eq.s32.totalorder %v90, %v92
    %vm157 = vcmp.eq.s32.totalorder %v90, %v93
    %vm158 = vcmp.eq.s32.totalorder %v90, %v94
    %vm159 = vcmp.eq.s32.totalorder %v90, %v95
    %v160 = vsel %vm96, 1, 0
    %v161 = vsel %vm97, 1, 0
    %v162 = vsel %vm98, 1, 0
    %v163 = vsel %vm99, 1, 0
    %v164 = vsel %vm100, 1, 0
    %v165 = vsel %vm101, 1, 0
    %v166 = vsel %vm102, 1, 0
    %v167 = vsel %vm103, 1, 0
    %v168 = vsel %vm104, 1, 0
    %v169 = vsel %vm105, 1, 0
    %v170 = vsel %vm106, 1, 0
    %v171 = vsel %vm107, 1, 0
    %v172 = vsel %vm108, 1, 0
    %v173 = vsel %vm109, 1, 0
    %v174 = vsel %vm110, 1, 0
    %v175 = vsel %vm111, 1, 0
    %v176 = vsel %vm112, 1, 0
    %v177 = vsel %vm113, 1, 0
    %v178 = vsel %vm114, 1, 0
    %v179 = vsel %vm115, 1, 0
    %v180 = vsel %vm116, 1, 0
    %v181 = vsel %vm117, 1, 0
    %v182 = vsel %vm118, 1, 0
    %v183 = vsel %vm119, 1, 0
    %v184 = vsel %vm120, 1, 0
    %v185 = vsel %vm121, 1, 0
    %v186 = vsel %vm122, 1, 0
    %v187 = vsel %vm123, 1, 0
    %v188 = vsel %vm124, 1, 0
    %v189 = vsel %vm125, 1, 0
    %v190 = vsel %vm126, 1, 0
    %v191 = vsel %vm127, 1, 0
    %v192 = vsel %vm128, 1, 0
    %v193 = vsel %vm129, 1, 0
    %v194 = vsel %vm130, 1, 0
    %v195 = vsel %vm131, 1, 0
    %v196 = vsel %vm132, 1, 0
    %v197 = vsel %vm133, 1, 0
    %v198 = vsel %vm134, 1, 0
    %v199 = vsel %vm135, 1, 0
    %v200 = vsel %vm136, 1, 0
    %v201 = vsel %vm137, 1, 0
    %v202 = vsel %vm138, 1, 0
    %v203 = vsel %vm139, 1, 0
    %v204 = vsel %vm140, 1, 0
    %v205 = vsel %vm141, 1, 0
    %v206 = vsel %vm142, 1, 0
    %v207 = vsel %vm143, 1, 0
    %v208 = vsel %vm144, 1, 0
    %v209 = vsel %vm145, 1, 0
    %v210 = vsel %vm146, 1, 0
    %v211 = vsel %vm147, 1, 0
    %v212 = vsel %vm148, 1, 0
    %v213 = vsel %vm149, 1, 0
    %v214 = vsel %vm150, 1, 0
    %v215 = vsel %vm151, 1, 0
    %v216 = vsel %vm152, 1, 0
    %v217 = vsel %vm153, 1, 0
    %v218 = vsel %vm154, 1, 0
    %v219 = vsel %vm155, 1, 0
    %v220 = vsel %vm156, 1, 0
    %v221 = vsel %vm157, 1, 0
    %v222 = vsel %vm158, 1, 0
    %v223 = vsel %vm159, 1, 0
    %v224 = vcvt.s32.f32 %v160
    %v225 = vcvt.s32.f32 %v161
    %v226 = vcvt.s32.f32 %v162
    %v227 = vcvt.s32.f32 %v163
    %v228 = vcvt.s32.f32 %v164
    %v229 = vcvt.s32.f32 %v165
    %v230 = vcvt.s32.f32 %v166
    %v231 = vcvt.s32.f32 %v167
    %v232 = vcvt.s32.f32 %v168
    %v233 = vcvt.s32.f32 %v169
    %v234 = vcvt.s32.f32 %v170
    %v235 = vcvt.s32.f32 %v171
    %v236 = vcvt.s32.f32 %v172
    %v237 = vcvt.s32.f32 %v173
    %v238 = vcvt.s32.f32 %v174
    %v239 = vcvt.s32.f32 %v175
    %v240 = vcvt.s32.f32 %v176
    %v241 = vcvt.s32.f32 %v177
    %v242 = vcvt.s32.f32 %v178
    %v243 = vcvt.s32.f32 %v179
    %v244 = vcvt.s32.f32 %v180
    %v245 = vcvt.s32.f32 %v181
    %v246 = vcvt.s32.f32 %v182
    %v247 = vcvt.s32.f32 %v183
    %v248 = vcvt.s32.f32 %v184
    %v249 = vcvt.s32.f32 %v185
    %v250 = vcvt.s32.f32 %v186
    %v251 = vcvt.s32.f32 %v187
    %v252 = vcvt.s32.f32 %v188
    %v253 = vcvt.s32.f32 %v189
    %v254 = vcvt.s32.f32 %v190
    %v255 = vcvt.s32.f32 %v191
    %v256 = vcvt.s32.f32 %v192
    %v257 = vcvt.s32.f32 %v193
    %v258 = vcvt.s32.f32 %v194
    %v259 = vcvt.s32.f32 %v195
    %v260 = vcvt.s32.f32 %v196
    %v261 = vcvt.s32.f32 %v197
    %v262 = vcvt.s32.f32 %v198
    %v263 = vcvt.s32.f32 %v199
    %v264 = vcvt.s32.f32 %v200
    %v265 = vcvt.s32.f32 %v201
    %v266 = vcvt.s32.f32 %v202
    %v267 = vcvt.s32.f32 %v203
    %v268 = vcvt.s32.f32 %v204
    %v269 = vcvt.s32.f32 %v205
    %v270 = vcvt.s32.f32 %v206
    %v271 = vcvt.s32.f32 %v207
    %v272 = vcvt.s32.f32 %v208
    %v273 = vcvt.s32.f32 %v209
    %v274 = vcvt.s32.f32 %v210
    %v275 = vcvt.s32.f32 %v211
    %v276 = vcvt.s32.f32 %v212
    %v277 = vcvt.s32.f32 %v213
    %v278 = vcvt.s32.f32 %v214
    %v279 = vcvt.s32.f32 %v215
    %v280 = vcvt.s32.f32 %v216
    %v281 = vcvt.s32.f32 %v217
    %v282 = vcvt.s32.f32 %v218
    %v283 = vcvt.s32.f32 %v219
    %v284 = vcvt.s32.f32 %v220
    %v285 = vcvt.s32.f32 %v221
    %v286 = vcvt.s32.f32 %v222
    %v287 = vcvt.s32.f32 %v223
    %v288 = vld [vmem:[%s1] sm:$0xf]
    %v289 = vperm.slane %v288, 0
    %v290 = vperm.slane %v288, 1
    %v291 = vperm.slane %v288, 2
    %v292 = vperm.slane %v288, 3
    %vm293 = vcmp.eq.s32.totalorder %v75, %v289
    %vm294 = vcmp.eq.s32.totalorder %v75, %v290
    %vm295 = vcmp.eq.s32.totalorder %v75, %v291
    %vm296 = vcmp.eq.s32.totalorder %v75, %v292
    %vm297 = vcmp.eq.s32.totalorder %v76, %v289
    %vm298 = vcmp.eq.s32.totalorder %v76, %v290
    %vm299 = vcmp.eq.s32.totalorder %v76, %v291
    %vm300 = vcmp.eq.s32.totalorder %v76, %v292
    %vm301 = vcmp.eq.s32.totalorder %v77, %v289
    %vm302 = vcmp.eq.s32.totalorder %v77, %v290
    %vm303 = vcmp.eq.s32.totalorder %v77, %v291
    %vm304 = vcmp.eq.s32.totalorder %v77, %v292
    %vm305 = vcmp.eq.s32.totalorder %v78, %v289
    %vm306 = vcmp.eq.s32.totalorder %v78, %v290
    %vm307 = vcmp.eq.s32.totalorder %v78, %v291
    %vm308 = vcmp.eq.s32.totalorder %v78, %v292
    %vm309 = vcmp.eq.s32.totalorder %v79, %v289
    %vm310 = vcmp.eq.s32.totalorder %v79, %v290
    %vm311 = vcmp.eq.s32.totalorder %v79, %v291
    %vm312 = vcmp.eq.s32.totalorder %v79, %v292
    %vm313 = vcmp.eq.s32.totalorder %v80, %v289
    %vm314 = vcmp.eq.s32.totalorder %v80, %v290
    %vm315 = vcmp.eq.s32.totalorder %v80, %v291
    %vm316 = vcmp.eq.s32.totalorder %v80, %v292
    %vm317 = vcmp.eq.s32.totalorder %v81, %v289
    %vm318 = vcmp.eq.s32.totalorder %v81, %v290
    %vm319 = vcmp.eq.s32.totalorder %v81, %v291
    %vm320 = vcmp.eq.s32.totalorder %v81, %v292
    %vm321 = vcmp.eq.s32.totalorder %v82, %v289
    %vm322 = vcmp.eq.s32.totalorder %v82, %v290
    %vm323 = vcmp.eq.s32.totalorder %v82, %v291
    %vm324 = vcmp.eq.s32.totalorder %v82, %v292
    %vm325 = vcmp.eq.s32.totalorder %v83, %v289
    %vm326 = vcmp.eq.s32.totalorder %v83, %v290
    %vm327 = vcmp.eq.s32.totalorder %v83, %v291
    %vm328 = vcmp.eq.s32.totalorder %v83, %v292
    %vm329 = vcmp.eq.s32.totalorder %v84, %v289
    %vm330 = vcmp.eq.s32.totalorder %v84, %v290
    %vm331 = vcmp.eq.s32.totalorder %v84, %v291
    %vm332 = vcmp.eq.s32.totalorder %v84, %v292
    %vm333 = vcmp.eq.s32.totalorder %v85, %v289
    %vm334 = vcmp.eq.s32.totalorder %v85, %v290
    %vm335 = vcmp.eq.s32.totalorder %v85, %v291
    %vm336 = vcmp.eq.s32.totalorder %v85, %v292
    %vm337 = vcmp.eq.s32.totalorder %v86, %v289
    %vm338 = vcmp.eq.s32.totalorder %v86, %v290
    %vm339 = vcmp.eq.s32.totalorder %v86, %v291
    %vm340 = vcmp.eq.s32.totalorder %v86, %v292
    %vm341 = vcmp.eq.s32.totalorder %v87, %v289
    %vm342 = vcmp.eq.s32.totalorder %v87, %v290
    %vm343 = vcmp.eq.s32.totalorder %v87, %v291
    %vm344 = vcmp.eq.s32.totalorder %v87, %v292
    %vm345 = vcmp.eq.s32.totalorder %v88, %v289
    %vm346 = vcmp.eq.s32.totalorder %v88, %v290
    %vm347 = vcmp.eq.s32.totalorder %v88, %v291
    %vm348 = vcmp.eq.s32.totalorder %v88, %v292
    %vm349 = vcmp.eq.s32.totalorder %v89, %v289
    %vm350 = vcmp.eq.s32.totalorder %v89, %v290
    %vm351 = vcmp.eq.s32.totalorder %v89, %v291
    %vm352 = vcmp.eq.s32.totalorder %v89, %v292
    %vm353 = vcmp.eq.s32.totalorder %v90, %v289
    %vm354 = vcmp.eq.s32.totalorder %v90, %v290
    %vm355 = vcmp.eq.s32.totalorder %v90, %v291
    %vm356 = vcmp.eq.s32.totalorder %v90, %v292
    %v357 = vsel %vm293, 1, 0
    %v358 = vsel %vm294, 1, 0
    %v359 = vsel %vm295, 1, 0
    %v360 = vsel %vm296, 1, 0
    %v361 = vsel %vm297, 1, 0
    %v362 = vsel %vm298, 1, 0
    %v363 = vsel %vm299, 1, 0
    %v364 = vsel %vm300, 1, 0
    %v365 = vsel %vm301, 1, 0
    %v366 = vsel %vm302, 1, 0
    %v367 = vsel %vm303, 1, 0
    %v368 = vsel %vm304, 1, 0
    %v369 = vsel %vm305, 1, 0
    %v370 = vsel %vm306, 1, 0
    %v371 = vsel %vm307, 1, 0
    %v372 = vsel %vm308, 1, 0
    %v373 = vsel %vm309, 1, 0
    %v374 = vsel %vm310, 1, 0
    %v375 = vsel %vm311, 1, 0
    %v376 = vsel %vm312, 1, 0
    %v377 = vsel %vm313, 1, 0
    %v378 = vsel %vm314, 1, 0
    %v379 = vsel %vm315, 1, 0
    %v380 = vsel %vm316, 1, 0
    %v381 = vsel %vm317, 1, 0
    %v382 = vsel %vm318, 1, 0
    %v383 = vsel %vm319, 1, 0
    %v384 = vsel %vm320, 1, 0
    %v385 = vsel %vm321, 1, 0
    %v386 = vsel %vm322, 1, 0
    %v387 = vsel %vm323, 1, 0
    %v388 = vsel %vm324, 1, 0
    %v389 = vsel %vm325, 1, 0
    %v390 = vsel %vm326, 1, 0
    %v391 = vsel %vm327, 1, 0
    %v392 = vsel %vm328, 1, 0
    %v393 = vsel %vm329, 1, 0
    %v394 = vsel %vm330, 1, 0
    %v395 = vsel %vm331, 1, 0
    %v396 = vsel %vm332, 1, 0
    %v397 = vsel %vm333, 1, 0
    %v398 = vsel %vm334, 1, 0
    %v399 = vsel %vm335, 1, 0
    %v400 = vsel %vm336, 1, 0
    %v401 = vsel %vm337, 1, 0
    %v402 = vsel %vm338, 1, 0
    %v403 = vsel %vm339, 1, 0
    %v404 = vsel %vm340, 1, 0
    %v405 = vsel %vm341, 1, 0
    %v406 = vsel %vm342, 1, 0
    %v407 = vsel %vm343, 1, 0
    %v408 = vsel %vm344, 1, 0
    %v409 = vsel %vm345, 1, 0
    %v410 = vsel %vm346, 1, 0
    %v411 = vsel %vm347, 1, 0
    %v412 = vsel %vm348, 1, 0
    %v413 = vsel %vm349, 1, 0
    %v414 = vsel %vm350, 1, 0
    %v415 = vsel %vm351, 1, 0
    %v416 = vsel %vm352, 1, 0
    %v417 = vsel %vm353, 1, 0
    %v418 = vsel %vm354, 1, 0
    %v419 = vsel %vm355, 1, 0
    %v420 = vsel %vm356, 1, 0
    %v421 = vcvt.s32.f32 %v357
    %v422 = vcvt.s32.f32 %v358
    %v423 = vcvt.s32.f32 %v359
    %v424 = vcvt.s32.f32 %v360
    %v425 = vcvt.s32.f32 %v361
    %v426 = vcvt.s32.f32 %v362
    %v427 = vcvt.s32.f32 %v363
    %v428 = vcvt.s32.f32 %v364
    %v429 = vcvt.s32.f32 %v365
    %v430 = vcvt.s32.f32 %v366
    %v431 = vcvt.s32.f32 %v367
    %v432 = vcvt.s32.f32 %v368
    %v433 = vcvt.s32.f32 %v369
    %v434 = vcvt.s32.f32 %v370
    %v435 = vcvt.s32.f32 %v371
    %v436 = vcvt.s32.f32 %v372
    %v437 = vcvt.s32.f32 %v373
    %v438 = vcvt.s32.f32 %v374
    %v439 = vcvt.s32.f32 %v375
    %v440 = vcvt.s32.f32 %v376
    %v441 = vcvt.s32.f32 %v377
    %v442 = vcvt.s32.f32 %v378
    %v443 = vcvt.s32.f32 %v379
    %v444 = vcvt.s32.f32 %v380
    %v445 = vcvt.s32.f32 %v381
    %v446 = vcvt.s32.f32 %v382
    %v447 = vcvt.s32.f32 %v383
    %v448 = vcvt.s32.f32 %v384
    %v449 = vcvt.s32.f32 %v385
    %v450 = vcvt.s32.f32 %v386
    %v451 = vcvt.s32.f32 %v387
    %v452 = vcvt.s32.f32 %v388
    %v453 = vcvt.s32.f32 %v389
    %v454 = vcvt.s32.f32 %v390
    %v455 = vcvt.s32.f32 %v391
    %v456 = vcvt.s32.f32 %v392
    %v457 = vcvt.s32.f32 %v393
    %v458 = vcvt.s32.f32 %v394
    %v459 = vcvt.s32.f32 %v395
    %v460 = vcvt.s32.f32 %v396
    %v461 = vcvt.s32.f32 %v397
    %v462 = vcvt.s32.f32 %v398
    %v463 = vcvt.s32.f32 %v399
    %v464 = vcvt.s32.f32 %v400
    %v465 = vcvt.s32.f32 %v401
    %v466 = vcvt.s32.f32 %v402
    %v467 = vcvt.s32.f32 %v403
    %v468 = vcvt.s32.f32 %v404
    %v469 = vcvt.s32.f32 %v405
    %v470 = vcvt.s32.f32 %v406
    %v471 = vcvt.s32.f32 %v407
    %v472 = vcvt.s32.f32 %v408
    %v473 = vcvt.s32.f32 %v409
    %v474 = vcvt.s32.f32 %v410
    %v475 = vcvt.s32.f32 %v411
    %v476 = vcvt.s32.f32 %v412
    %v477 = vcvt.s32.f32 %v413
    %v478 = vcvt.s32.f32 %v414
    %v479 = vcvt.s32.f32 %v415
    %v480 = vcvt.s32.f32 %v416
    %v481 = vcvt.s32.f32 %v417
    %v482 = vcvt.s32.f32 %v418
    %v483 = vcvt.s32.f32 %v419
    %v484 = vcvt.s32.f32 %v420
    %v485 = vlaneseq
    %v486 = vand.u32 %v485, 127
    %v487 = vld [vmem:[%s2] sm:$0xff]
    %v488 = vld [vmem:[%s2 + $0x8] sm:$0xff]
    %v489 = vld [vmem:[%s2 + $0x10] sm:$0xff]
    %v490 = vld [vmem:[%s2 + $0x18] sm:$0xff]
    %v491 = vld [vmem:[%s2 + $0x20] sm:$0xff]
    %v492 = vld [vmem:[%s2 + $0x28] sm:$0xff]
    %v493 = vld [vmem:[%s2 + $0x30] sm:$0xff]
    %v494 = vld [vmem:[%s2 + $0x38] sm:$0xff]
    %v495 = vld [vmem:[%s2 + $0x40] sm:$0xff]
    %v496 = vld [vmem:[%s2 + $0x48] sm:$0xff]
    %v497 = vld [vmem:[%s2 + $0x50] sm:$0xff]
    %v498 = vld [vmem:[%s2 + $0x58] sm:$0xff]
    %v499 = vld [vmem:[%s2 + $0x60] sm:$0xff]
    %v500 = vld [vmem:[%s2 + $0x68] sm:$0xff]
    %v501 = vld [vmem:[%s2 + $0x70] sm:$0xff]
    %v502 = vld [vmem:[%s2 + $0x78] sm:$0xff]
    %v503 = vld [vmem:[%s2 + $0x80] sm:$0xff]
    %v504 = vld [vmem:[%s2 + $0x88] sm:$0xff]
    %v505 = vld [vmem:[%s2 + $0x90] sm:$0xff]
    %v506 = vld [vmem:[%s2 + $0x98] sm:$0xff]
    %v507 = vld [vmem:[%s2 + $0xa0] sm:$0xff]
    %v508 = vld [vmem:[%s2 + $0xa8] sm:$0xff]
    %v509 = vld [vmem:[%s2 + $0xb0] sm:$0xff]
    %v510 = vld [vmem:[%s2 + $0xb8] sm:$0xff]
    %v511 = vld [vmem:[%s2 + $0xc0] sm:$0xff]
    %v512 = vld [vmem:[%s2 + $0xc8] sm:$0xff]
    %v513 = vld [vmem:[%s2 + $0xd0] sm:$0xff]
    %v514 = vld [vmem:[%s2 + $0xd8] sm:$0xff]
    %v515 = vld [vmem:[%s2 + $0xe0] sm:$0xff]
    %v516 = vld [vmem:[%s2 + $0xe8] sm:$0xff]
    %v517 = vld [vmem:[%s2 + $0xf0] sm:$0xff]
    %v518 = vld [vmem:[%s2 + $0xf8] sm:$0xff]
    %v519 = vld [vmem:[%s2 + $0x100] sm:$0xff]
    %v520 = vld [vmem:[%s2 + $0x108] sm:$0xff]
    %v521 = vld [vmem:[%s2 + $0x110] sm:$0xff]
    %v522 = vld [vmem:[%s2 + $0x118] sm:$0xff]
    %v523 = vld [vmem:[%s2 + $0x120] sm:$0xff]
    %v524 = vld [vmem:[%s2 + $0x128] sm:$0xff]
    %v525 = vld [vmem:[%s2 + $0x130] sm:$0xff]
    %v526 = vld [vmem:[%s2 + $0x138] sm:$0xff]
    %v527 = vld [vmem:[%s2 + $0x140] sm:$0xff]
    %v528 = vld [vmem:[%s2 + $0x148] sm:$0xff]
    %v529 = vld [vmem:[%s2 + $0x150] sm:$0xff]
    %v530 = vld [vmem:[%s2 + $0x158] sm:$0xff]
    %v531 = vld [vmem:[%s2 + $0x160] sm:$0xff]
    %v532 = vld [vmem:[%s2 + $0x168] sm:$0xff]
    %v533 = vld [vmem:[%s2 + $0x170] sm:$0xff]
    %v534 = vld [vmem:[%s2 + $0x178] sm:$0xff]
    %v535 = vld [vmem:[%s2 + $0x180] sm:$0xff]
    %v536 = vld [vmem:[%s2 + $0x188] sm:$0xff]
    %v537 = vld [vmem:[%s2 + $0x190] sm:$0xff]
    %v538 = vld [vmem:[%s2 + $0x198] sm:$0xff]
    %v539 = vld [vmem:[%s2 + $0x1a0] sm:$0xff]
    %v540 = vld [vmem:[%s2 + $0x1a8] sm:$0xff]
    %v541 = vld [vmem:[%s2 + $0x1b0] sm:$0xff]
    %v542 = vld [vmem:[%s2 + $0x1b8] sm:$0xff]
    %v543 = vld [vmem:[%s2 + $0x1c0] sm:$0xff]
    %v544 = vld [vmem:[%s2 + $0x1c8] sm:$0xff]
    %v545 = vld [vmem:[%s2 + $0x1d0] sm:$0xff]
    %v546 = vld [vmem:[%s2 + $0x1d8] sm:$0xff]
    %v547 = vld [vmem:[%s2 + $0x1e0] sm:$0xff]
    %v548 = vld [vmem:[%s2 + $0x1e8] sm:$0xff]
    %v549 = vld [vmem:[%s2 + $0x1f0] sm:$0xff]
    %v550 = vld [vmem:[%s2 + $0x1f8] sm:$0xff]
    %551 = vset.pattern.permute.xlu0 0
    %552 = vperm.xlu0 %551, %v487
    %v553 = vpop.permute.xlu0 %552
    %554 = vset.pattern.permute.xlu0 0
    %555 = vperm.xlu0 %554, %v488
    %v556 = vpop.permute.xlu0 %555
    %557 = vset.pattern.permute.xlu0 0
    %558 = vperm.xlu0 %557, %v489
    %v559 = vpop.permute.xlu0 %558
    %560 = vset.pattern.permute.xlu0 0
    %561 = vperm.xlu0 %560, %v490
    %v562 = vpop.permute.xlu0 %561
    %563 = vset.pattern.permute.xlu0 0
    %564 = vperm.xlu0 %563, %v491
    %v565 = vpop.permute.xlu0 %564
    %566 = vset.pattern.permute.xlu0 0
    %567 = vperm.xlu0 %566, %v492
    %v568 = vpop.permute.xlu0 %567
    %569 = vset.pattern.permute.xlu0 0
    %570 = vperm.xlu0 %569, %v493
    %v571 = vpop.permute.xlu0 %570
    %572 = vset.pattern.permute.xlu0 0
    %573 = vperm.xlu0 %572, %v494
    %v574 = vpop.permute.xlu0 %573
    %575 = vset.pattern.permute.xlu0 0
    %576 = vperm.xlu0 %575, %v495
    %v577 = vpop.permute.xlu0 %576
    %578 = vset.pattern.permute.xlu0 0
    %579 = vperm.xlu0 %578, %v496
    %v580 = vpop.permute.xlu0 %579
    %581 = vset.pattern.permute.xlu0 0
    %582 = vperm.xlu0 %581, %v497
    %v583 = vpop.permute.xlu0 %582
    %584 = vset.pattern.permute.xlu0 0
    %585 = vperm.xlu0 %584, %v498
    %v586 = vpop.permute.xlu0 %585
    %587 = vset.pattern.permute.xlu0 0
    %588 = vperm.xlu0 %587, %v499
    %v589 = vpop.permute.xlu0 %588
    %590 = vset.pattern.permute.xlu0 0
    %591 = vperm.xlu0 %590, %v500
    %v592 = vpop.permute.xlu0 %591
    %593 = vset.pattern.permute.xlu0 0
    %594 = vperm.xlu0 %593, %v501
    %v595 = vpop.permute.xlu0 %594
    %596 = vset.pattern.permute.xlu0 0
    %597 = vperm.xlu0 %596, %v502
    %v598 = vpop.permute.xlu0 %597
    %599 = vset.pattern.permute.xlu0 0
    %600 = vperm.xlu0 %599, %v503
    %v601 = vpop.permute.xlu0 %600
    %602 = vset.pattern.permute.xlu0 0
    %603 = vperm.xlu0 %602, %v504
    %v604 = vpop.permute.xlu0 %603
    %605 = vset.pattern.permute.xlu0 0
    %606 = vperm.xlu0 %605, %v505
    %v607 = vpop.permute.xlu0 %606
    %608 = vset.pattern.permute.xlu0 0
    %609 = vperm.xlu0 %608, %v506
    %v610 = vpop.permute.xlu0 %609
    %611 = vset.pattern.permute.xlu0 0
    %612 = vperm.xlu0 %611, %v507
    %v613 = vpop.permute.xlu0 %612
    %614 = vset.pattern.permute.xlu0 0
    %615 = vperm.xlu0 %614, %v508
    %v616 = vpop.permute.xlu0 %615
    %617 = vset.pattern.permute.xlu0 0
    %618 = vperm.xlu0 %617, %v509
    %v619 = vpop.permute.xlu0 %618
    %620 = vset.pattern.permute.xlu0 0
    %621 = vperm.xlu0 %620, %v510
    %v622 = vpop.permute.xlu0 %621
    %623 = vset.pattern.permute.xlu0 0
    %624 = vperm.xlu0 %623, %v511
    %v625 = vpop.permute.xlu0 %624
    %626 = vset.pattern.permute.xlu0 0
    %627 = vperm.xlu0 %626, %v512
    %v628 = vpop.permute.xlu0 %627
    %629 = vset.pattern.permute.xlu0 0
    %630 = vperm.xlu0 %629, %v513
    %v631 = vpop.permute.xlu0 %630
    %632 = vset.pattern.permute.xlu0 0
    %633 = vperm.xlu0 %632, %v514
    %v634 = vpop.permute.xlu0 %633
    %635 = vset.pattern.permute.xlu0 0
    %636 = vperm.xlu0 %635, %v515
    %v637 = vpop.permute.xlu0 %636
    %638 = vset.pattern.permute.xlu0 0
    %639 = vperm.xlu0 %638, %v516
    %v640 = vpop.permute.xlu0 %639
    %641 = vset.pattern.permute.xlu0 0
    %642 = vperm.xlu0 %641, %v517
    %v643 = vpop.permute.xlu0 %642
    %644 = vset.pattern.permute.xlu0 0
    %645 = vperm.xlu0 %644, %v518
    %v646 = vpop.permute.xlu0 %645
    %647 = vset.pattern.permute.xlu0 0
    %648 = vperm.xlu0 %647, %v519
    %v649 = vpop.permute.xlu0 %648
    %650 = vset.pattern.permute.xlu0 0
    %651 = vperm.xlu0 %650, %v520
    %v652 = vpop.permute.xlu0 %651
    %653 = vset.pattern.permute.xlu0 0
    %654 = vperm.xlu0 %653, %v521
    %v655 = vpop.permute.xlu0 %654
    %656 = vset.pattern.permute.xlu0 0
    %657 = vperm.xlu0 %656, %v522
    %v658 = vpop.permute.xlu0 %657
    %659 = vset.pattern.permute.xlu0 0
    %660 = vperm.xlu0 %659, %v523
    %v661 = vpop.permute.xlu0 %660
    %662 = vset.pattern.permute.xlu0 0
    %663 = vperm.xlu0 %662, %v524
    %v664 = vpop.permute.xlu0 %663
    %665 = vset.pattern.permute.xlu0 0
    %666 = vperm.xlu0 %665, %v525
    %v667 = vpop.permute.xlu0 %666
    %668 = vset.pattern.permute.xlu0 0
    %669 = vperm.xlu0 %668, %v526
    %v670 = vpop.permute.xlu0 %669
    %671 = vset.pattern.permute.xlu0 0
    %672 = vperm.xlu0 %671, %v527
    %v673 = vpop.permute.xlu0 %672
    %674 = vset.pattern.permute.xlu0 0
    %675 = vperm.xlu0 %674, %v528
    %v676 = vpop.permute.xlu0 %675
    %677 = vset.pattern.permute.xlu0 0
    %678 = vperm.xlu0 %677, %v529
    %v679 = vpop.permute.xlu0 %678
    %680 = vset.pattern.permute.xlu0 0
    %681 = vperm.xlu0 %680, %v530
    %v682 = vpop.permute.xlu0 %681
    %683 = vset.pattern.permute.xlu0 0
    %684 = vperm.xlu0 %683, %v531
    %v685 = vpop.permute.xlu0 %684
    %686 = vset.pattern.permute.xlu0 0
    %687 = vperm.xlu0 %686, %v532
    %v688 = vpop.permute.xlu0 %687
    %689 = vset.pattern.permute.xlu0 0
    %690 = vperm.xlu0 %689, %v533
    %v691 = vpop.permute.xlu0 %690
    %692 = vset.pattern.permute.xlu0 0
    %693 = vperm.xlu0 %692, %v534
    %v694 = vpop.permute.xlu0 %693
    %695 = vset.pattern.permute.xlu0 0
    %696 = vperm.xlu0 %695, %v535
    %v697 = vpop.permute.xlu0 %696
    %698 = vset.pattern.permute.xlu0 0
    %699 = vperm.xlu0 %698, %v536
    %v700 = vpop.permute.xlu0 %699
    %701 = vset.pattern.permute.xlu0 0
    %702 = vperm.xlu0 %701, %v537
    %v703 = vpop.permute.xlu0 %702
    %704 = vset.pattern.permute.xlu0 0
    %705 = vperm.xlu0 %704, %v538
    %v706 = vpop.permute.xlu0 %705
    %707 = vset.pattern.permute.xlu0 0
    %708 = vperm.xlu0 %707, %v539
    %v709 = vpop.permute.xlu0 %708
    %710 = vset.pattern.permute.xlu0 0
    %711 = vperm.xlu0 %710, %v540
    %v712 = vpop.permute.xlu0 %711
    %713 = vset.pattern.permute.xlu0 0
    %714 = vperm.xlu0 %713, %v541
    %v715 = vpop.permute.xlu0 %714
    %716 = vset.pattern.permute.xlu0 0
    %717 = vperm.xlu0 %716, %v542
    %v718 = vpop.permute.xlu0 %717
    %719 = vset.pattern.permute.xlu0 0
    %720 = vperm.xlu0 %719, %v543
    %v721 = vpop.permute.xlu0 %720
    %722 = vset.pattern.permute.xlu0 0
    %723 = vperm.xlu0 %722, %v544
    %v724 = vpop.permute.xlu0 %723
    %725 = vset.pattern.permute.xlu0 0
    %726 = vperm.xlu0 %725, %v545
    %v727 = vpop.permute.xlu0 %726
    %728 = vset.pattern.permute.xlu0 0
    %729 = vperm.xlu0 %728, %v546
    %v730 = vpop.permute.xlu0 %729
    %731 = vset.pattern.permute.xlu0 0
    %732 = vperm.xlu0 %731, %v547
    %v733 = vpop.permute.xlu0 %732
    %734 = vset.pattern.permute.xlu0 0
    %735 = vperm.xlu0 %734, %v548
    %v736 = vpop.permute.xlu0 %735
    %737 = vset.pattern.permute.xlu0 0
    %738 = vperm.xlu0 %737, %v549
    %v739 = vpop.permute.xlu0 %738
    %740 = vset.pattern.permute.xlu0 0
    %741 = vperm.xlu0 %740, %v550
    %v742 = vpop.permute.xlu0 %741
    %vm743 = vcmp.eq.s32.totalorder %v486, %v553
    %vm744 = vcmp.eq.s32.totalorder %v486, %v556
    %vm745 = vcmp.eq.s32.totalorder %v486, %v559
    %vm746 = vcmp.eq.s32.totalorder %v486, %v562
    %vm747 = vcmp.eq.s32.totalorder %v486, %v565
    %vm748 = vcmp.eq.s32.totalorder %v486, %v568
    %vm749 = vcmp.eq.s32.totalorder %v486, %v571
    %vm750 = vcmp.eq.s32.totalorder %v486, %v574
    %vm751 = vcmp.eq.s32.totalorder %v486, %v577
    %vm752 = vcmp.eq.s32.totalorder %v486, %v580
    %vm753 = vcmp.eq.s32.totalorder %v486, %v583
    %vm754 = vcmp.eq.s32.totalorder %v486, %v586
    %vm755 = vcmp.eq.s32.totalorder %v486, %v589
    %vm756 = vcmp.eq.s32.totalorder %v486, %v592
    %vm757 = vcmp.eq.s32.totalorder %v486, %v595
    %vm758 = vcmp.eq.s32.totalorder %v486, %v598
    %vm759 = vcmp.eq.s32.totalorder %v486, %v601
    %vm760 = vcmp.eq.s32.totalorder %v486, %v604
    %vm761 = vcmp.eq.s32.totalorder %v486, %v607
    %vm762 = vcmp.eq.s32.totalorder %v486, %v610
    %vm763 = vcmp.eq.s32.totalorder %v486, %v613
    %vm764 = vcmp.eq.s32.totalorder %v486, %v616
    %vm765 = vcmp.eq.s32.totalorder %v486, %v619
    %vm766 = vcmp.eq.s32.totalorder %v486, %v622
    %vm767 = vcmp.eq.s32.totalorder %v486, %v625
    %vm768 = vcmp.eq.s32.totalorder %v486, %v628
    %vm769 = vcmp.eq.s32.totalorder %v486, %v631
    %vm770 = vcmp.eq.s32.totalorder %v486, %v634
    %vm771 = vcmp.eq.s32.totalorder %v486, %v637
    %vm772 = vcmp.eq.s32.totalorder %v486, %v640
    %vm773 = vcmp.eq.s32.totalorder %v486, %v643
    %vm774 = vcmp.eq.s32.totalorder %v486, %v646
    %vm775 = vcmp.eq.s32.totalorder %v486, %v649
    %vm776 = vcmp.eq.s32.totalorder %v486, %v652
    %vm777 = vcmp.eq.s32.totalorder %v486, %v655
    %vm778 = vcmp.eq.s32.totalorder %v486, %v658
    %vm779 = vcmp.eq.s32.totalorder %v486, %v661
    %vm780 = vcmp.eq.s32.totalorder %v486, %v664
    %vm781 = vcmp.eq.s32.totalorder %v486, %v667
    %vm782 = vcmp.eq.s32.totalorder %v486, %v670
    %vm783 = vcmp.eq.s32.totalorder %v486, %v673
    %vm784 = vcmp.eq.s32.totalorder %v486, %v676
    %vm785 = vcmp.eq.s32.totalorder %v486, %v679
    %vm786 = vcmp.eq.s32.totalorder %v486, %v682
    %vm787 = vcmp.eq.s32.totalorder %v486, %v685
    %vm788 = vcmp.eq.s32.totalorder %v486, %v688
    %vm789 = vcmp.eq.s32.totalorder %v486, %v691
    %vm790 = vcmp.eq.s32.totalorder %v486, %v694
    %vm791 = vcmp.eq.s32.totalorder %v486, %v697
    %vm792 = vcmp.eq.s32.totalorder %v486, %v700
    %vm793 = vcmp.eq.s32.totalorder %v486, %v703
    %vm794 = vcmp.eq.s32.totalorder %v486, %v706
    %vm795 = vcmp.eq.s32.totalorder %v486, %v709
    %vm796 = vcmp.eq.s32.totalorder %v486, %v712
    %vm797 = vcmp.eq.s32.totalorder %v486, %v715
    %vm798 = vcmp.eq.s32.totalorder %v486, %v718
    %vm799 = vcmp.eq.s32.totalorder %v486, %v721
    %vm800 = vcmp.eq.s32.totalorder %v486, %v724
    %vm801 = vcmp.eq.s32.totalorder %v486, %v727
    %vm802 = vcmp.eq.s32.totalorder %v486, %v730
    %vm803 = vcmp.eq.s32.totalorder %v486, %v733
    %vm804 = vcmp.eq.s32.totalorder %v486, %v736
    %vm805 = vcmp.eq.s32.totalorder %v486, %v739
    %vm806 = vcmp.eq.s32.totalorder %v486, %v742
    %v807 = vsel %vm743, 1, 0
    %v808 = vsel %vm744, 1, 0
    %v809 = vsel %vm745, 1, 0
    %v810 = vsel %vm746, 1, 0
    %v811 = vsel %vm747, 1, 0
    %v812 = vsel %vm748, 1, 0
    %v813 = vsel %vm749, 1, 0
    %v814 = vsel %vm750, 1, 0
    %v815 = vsel %vm751, 1, 0
    %v816 = vsel %vm752, 1, 0
    %v817 = vsel %vm753, 1, 0
    %v818 = vsel %vm754, 1, 0
    %v819 = vsel %vm755, 1, 0
    %v820 = vsel %vm756, 1, 0
    %v821 = vsel %vm757, 1, 0
    %v822 = vsel %vm758, 1, 0
    %v823 = vsel %vm759, 1, 0
    %v824 = vsel %vm760, 1, 0
    %v825 = vsel %vm761, 1, 0
    %v826 = vsel %vm762, 1, 0
    %v827 = vsel %vm763, 1, 0
    %v828 = vsel %vm764, 1, 0
    %v829 = vsel %vm765, 1, 0
    %v830 = vsel %vm766, 1, 0
    %v831 = vsel %vm767, 1, 0
    %v832 = vsel %vm768, 1, 0
    %v833 = vsel %vm769, 1, 0
    %v834 = vsel %vm770, 1, 0
    %v835 = vsel %vm771, 1, 0
    %v836 = vsel %vm772, 1, 0
    %v837 = vsel %vm773, 1, 0
    %v838 = vsel %vm774, 1, 0
    %v839 = vsel %vm775, 1, 0
    %v840 = vsel %vm776, 1, 0
    %v841 = vsel %vm777, 1, 0
    %v842 = vsel %vm778, 1, 0
    %v843 = vsel %vm779, 1, 0
    %v844 = vsel %vm780, 1, 0
    %v845 = vsel %vm781, 1, 0
    %v846 = vsel %vm782, 1, 0
    %v847 = vsel %vm783, 1, 0
    %v848 = vsel %vm784, 1, 0
    %v849 = vsel %vm785, 1, 0
    %v850 = vsel %vm786, 1, 0
    %v851 = vsel %vm787, 1, 0
    %v852 = vsel %vm788, 1, 0
    %v853 = vsel %vm789, 1, 0
    %v854 = vsel %vm790, 1, 0
    %v855 = vsel %vm791, 1, 0
    %v856 = vsel %vm792, 1, 0
    %v857 = vsel %vm793, 1, 0
    %v858 = vsel %vm794, 1, 0
    %v859 = vsel %vm795, 1, 0
    %v860 = vsel %vm796, 1, 0
    %v861 = vsel %vm797, 1, 0
    %v862 = vsel %vm798, 1, 0
    %v863 = vsel %vm799, 1, 0
    %v864 = vsel %vm800, 1, 0
    %v865 = vsel %vm801, 1, 0
    %v866 = vsel %vm802, 1, 0
    %v867 = vsel %vm803, 1, 0
    %v868 = vsel %vm804, 1, 0
    %v869 = vsel %vm805, 1, 0
    %v870 = vsel %vm806, 1, 0
    %v871 = vcvt.s32.f32 %v807
    %v872 = vcvt.s32.f32 %v808
    %v873 = vcvt.s32.f32 %v809
    %v874 = vcvt.s32.f32 %v810
    %v875 = vcvt.s32.f32 %v811
    %v876 = vcvt.s32.f32 %v812
    %v877 = vcvt.s32.f32 %v813
    %v878 = vcvt.s32.f32 %v814
    %v879 = vcvt.s32.f32 %v815
    %v880 = vcvt.s32.f32 %v816
    %v881 = vcvt.s32.f32 %v817
    %v882 = vcvt.s32.f32 %v818
    %v883 = vcvt.s32.f32 %v819
    %v884 = vcvt.s32.f32 %v820
    %v885 = vcvt.s32.f32 %v821
    %v886 = vcvt.s32.f32 %v822
    %v887 = vcvt.s32.f32 %v823
    %v888 = vcvt.s32.f32 %v824
    %v889 = vcvt.s32.f32 %v825
    %v890 = vcvt.s32.f32 %v826
    %v891 = vcvt.s32.f32 %v827
    %v892 = vcvt.s32.f32 %v828
    %v893 = vcvt.s32.f32 %v829
    %v894 = vcvt.s32.f32 %v830
    %v895 = vcvt.s32.f32 %v831
    %v896 = vcvt.s32.f32 %v832
    %v897 = vcvt.s32.f32 %v833
    %v898 = vcvt.s32.f32 %v834
    %v899 = vcvt.s32.f32 %v835
    %v900 = vcvt.s32.f32 %v836
    %v901 = vcvt.s32.f32 %v837
    %v902 = vcvt.s32.f32 %v838
    %v903 = vcvt.s32.f32 %v839
    %v904 = vcvt.s32.f32 %v840
    %v905 = vcvt.s32.f32 %v841
    %v906 = vcvt.s32.f32 %v842
    %v907 = vcvt.s32.f32 %v843
    %v908 = vcvt.s32.f32 %v844
    %v909 = vcvt.s32.f32 %v845
    %v910 = vcvt.s32.f32 %v846
    %v911 = vcvt.s32.f32 %v847
    %v912 = vcvt.s32.f32 %v848
    %v913 = vcvt.s32.f32 %v849
    %v914 = vcvt.s32.f32 %v850
    %v915 = vcvt.s32.f32 %v851
    %v916 = vcvt.s32.f32 %v852
    %v917 = vcvt.s32.f32 %v853
    %v918 = vcvt.s32.f32 %v854
    %v919 = vcvt.s32.f32 %v855
    %v920 = vcvt.s32.f32 %v856
    %v921 = vcvt.s32.f32 %v857
    %v922 = vcvt.s32.f32 %v858
    %v923 = vcvt.s32.f32 %v859
    %v924 = vcvt.s32.f32 %v860
    %v925 = vcvt.s32.f32 %v861
    %v926 = vcvt.s32.f32 %v862
    %v927 = vcvt.s32.f32 %v863
    %v928 = vcvt.s32.f32 %v864
    %v929 = vcvt.s32.f32 %v865
    %v930 = vcvt.s32.f32 %v866
    %v931 = vcvt.s32.f32 %v867
    %v932 = vcvt.s32.f32 %v868
    %v933 = vcvt.s32.f32 %v869
    %v934 = vcvt.s32.f32 %v870
    %v935 = vld [vmem:[%s3] sm:$0xf]
    %vm936 = vcmp.lt.s32.totalorder %v75, 100
    %vm937 = vcmp.lt.s32.totalorder %v76, 100
    %vm938 = vcmp.lt.s32.totalorder %v77, 100
    %vm939 = vcmp.lt.s32.totalorder %v78, 100
    %vm940 = vcmp.lt.s32.totalorder %v79, 100
    %vm941 = vcmp.lt.s32.totalorder %v80, 100
    %vm942 = vcmp.lt.s32.totalorder %v81, 100
    %vm943 = vcmp.lt.s32.totalorder %v82, 100
    %vm944 = vcmp.lt.s32.totalorder %v83, 100
    %vm945 = vcmp.lt.s32.totalorder %v84, 100
    %vm946 = vcmp.lt.s32.totalorder %v85, 100
    %vm947 = vcmp.lt.s32.totalorder %v86, 100
    %vm948 = vcmp.lt.s32.totalorder %v87, 100
    %vm949 = vcmp.lt.s32.totalorder %v88, 100
    %vm950 = vcmp.lt.s32.totalorder %v89, 100
    %vm951 = vcmp.lt.s32.totalorder %v90, 100
    %v952 = vsel %vm936, 1, 0
    %v953 = vsel %vm937, 1, 0
    %v954 = vsel %vm938, 1, 0
    %v955 = vsel %vm939, 1, 0
    %v956 = vsel %vm940, 1, 0
    %v957 = vsel %vm941, 1, 0
    %v958 = vsel %vm942, 1, 0
    %v959 = vsel %vm943, 1, 0
    %v960 = vsel %vm944, 1, 0
    %v961 = vsel %vm945, 1, 0
    %v962 = vsel %vm946, 1, 0
    %v963 = vsel %vm947, 1, 0
    %v964 = vsel %vm948, 1, 0
    %v965 = vsel %vm949, 1, 0
    %v966 = vsel %vm950, 1, 0
    %v967 = vsel %vm951, 1, 0
    %v968 = vcvt.s32.f32 %v952
    %v969 = vcvt.s32.f32 %v953
    %v970 = vcvt.s32.f32 %v954
    %v971 = vcvt.s32.f32 %v955
    %v972 = vcvt.s32.f32 %v956
    %v973 = vcvt.s32.f32 %v957
    %v974 = vcvt.s32.f32 %v958
    %v975 = vcvt.s32.f32 %v959
    %v976 = vcvt.s32.f32 %v960
    %v977 = vcvt.s32.f32 %v961
    %v978 = vcvt.s32.f32 %v962
    %v979 = vcvt.s32.f32 %v963
    %v980 = vcvt.s32.f32 %v964
    %v981 = vcvt.s32.f32 %v965
    %v982 = vcvt.s32.f32 %v966
    %v983 = vcvt.s32.f32 %v967
    %v985 = vperm.slane %v935, 0
    %v986 = vperm.slane %v935, 1
    %v987 = vperm.slane %v935, 2
    %v988 = vperm.slane %v935, 3
    %v993 = vmul.f32 %v224, %v985
    %v994 = vmul.f32 %v225, %v986
    %v995 = vmul.f32 %v226, %v987
    %v996 = vmul.f32 %v227, %v988
    %v997 = vmul.f32 %v228, %v985
    %v998 = vmul.f32 %v229, %v986
    %v999 = vmul.f32 %v230, %v987
    %v1000 = vmul.f32 %v231, %v988
    %v1001 = vmul.f32 %v232, %v985
    %v1002 = vmul.f32 %v233, %v986
    %v1003 = vmul.f32 %v234, %v987
    %v1004 = vmul.f32 %v235, %v988
    %v1005 = vmul.f32 %v236, %v985
    %v1006 = vmul.f32 %v237, %v986
    %v1007 = vmul.f32 %v238, %v987
    %v1008 = vmul.f32 %v239, %v988
    %v1009 = vmul.f32 %v240, %v985
    %v1010 = vmul.f32 %v241, %v986
    %v1011 = vmul.f32 %v242, %v987
    %v1012 = vmul.f32 %v243, %v988
    %v1013 = vmul.f32 %v244, %v985
    %v1014 = vmul.f32 %v245, %v986
    %v1015 = vmul.f32 %v246, %v987
    %v1016 = vmul.f32 %v247, %v988
    %v1017 = vmul.f32 %v248, %v985
    %v1018 = vmul.f32 %v249, %v986
    %v1019 = vmul.f32 %v250, %v987
    %v1020 = vmul.f32 %v251, %v988
    %v1021 = vmul.f32 %v252, %v985
    %v1022 = vmul.f32 %v253, %v986
    %v1023 = vmul.f32 %v254, %v987
    %v1024 = vmul.f32 %v255, %v988
    %v1025 = vmul.f32 %v256, %v985
    %v1026 = vmul.f32 %v257, %v986
    %v1027 = vmul.f32 %v258, %v987
    %v1028 = vmul.f32 %v259, %v988
    %v1029 = vmul.f32 %v260, %v985
    %v1030 = vmul.f32 %v261, %v986
    %v1031 = vmul.f32 %v262, %v987
    %v1032 = vmul.f32 %v263, %v988
    %v1033 = vmul.f32 %v264, %v985
    %v1034 = vmul.f32 %v265, %v986
    %v1035 = vmul.f32 %v266, %v987
    %v1036 = vmul.f32 %v267, %v988
    %v1037 = vmul.f32 %v268, %v985
    %v1038 = vmul.f32 %v269, %v986
    %v1039 = vmul.f32 %v270, %v987
    %v1040 = vmul.f32 %v271, %v988
    %v1041 = vmul.f32 %v272, %v985
    %v1042 = vmul.f32 %v273, %v986
    %v1043 = vmul.f32 %v274, %v987
    %v1044 = vmul.f32 %v275, %v988
    %v1045 = vmul.f32 %v276, %v985
    %v1046 = vmul.f32 %v277, %v986
    %v1047 = vmul.f32 %v278, %v987
    %v1048 = vmul.f32 %v279, %v988
    %v1049 = vmul.f32 %v280, %v985
    %v1050 = vmul.f32 %v281, %v986
    %v1051 = vmul.f32 %v282, %v987
    %v1052 = vmul.f32 %v283, %v988
    %v1053 = vmul.f32 %v284, %v985
    %v1054 = vmul.f32 %v285, %v986
    %v1055 = vmul.f32 %v286, %v987
    %v1056 = vmul.f32 %v287, %v988
    %v1057 = vadd.f32 %v993, %v994
    %v1058 = vadd.f32 %v1057, %v995
    %v1059 = vadd.f32 %v1058, %v996
    %1060 = vadd.xlane.f32.xlu0 %v1059
    %v1061 = vpop.xlane.xlu0 %1060
    %v1062 = vadd.f32 %v997, %v998
    %v1063 = vadd.f32 %v1062, %v999
    %v1064 = vadd.f32 %v1063, %v1000
    %1065 = vadd.xlane.f32.xlu0 %v1064
    %v1066 = vpop.xlane.xlu0 %1065
    %v1067 = vadd.f32 %v1001, %v1002
    %v1068 = vadd.f32 %v1067, %v1003
    %v1069 = vadd.f32 %v1068, %v1004
    %1070 = vadd.xlane.f32.xlu0 %v1069
    %v1071 = vpop.xlane.xlu0 %1070
    %v1072 = vadd.f32 %v1005, %v1006
    %v1073 = vadd.f32 %v1072, %v1007
    %v1074 = vadd.f32 %v1073, %v1008
    %1075 = vadd.xlane.f32.xlu0 %v1074
    %v1076 = vpop.xlane.xlu0 %1075
    %v1077 = vadd.f32 %v1009, %v1010
    %v1078 = vadd.f32 %v1077, %v1011
    %v1079 = vadd.f32 %v1078, %v1012
    %1080 = vadd.xlane.f32.xlu0 %v1079
    %v1081 = vpop.xlane.xlu0 %1080
    %v1082 = vadd.f32 %v1013, %v1014
    %v1083 = vadd.f32 %v1082, %v1015
    %v1084 = vadd.f32 %v1083, %v1016
    %1085 = vadd.xlane.f32.xlu0 %v1084
    %v1086 = vpop.xlane.xlu0 %1085
    %v1087 = vadd.f32 %v1017, %v1018
    %v1088 = vadd.f32 %v1087, %v1019
    %v1089 = vadd.f32 %v1088, %v1020
    %1090 = vadd.xlane.f32.xlu0 %v1089
    %v1091 = vpop.xlane.xlu0 %1090
    %v1092 = vadd.f32 %v1021, %v1022
    %v1093 = vadd.f32 %v1092, %v1023
    %v1094 = vadd.f32 %v1093, %v1024
    %1095 = vadd.xlane.f32.xlu0 %v1094
    %v1096 = vpop.xlane.xlu0 %1095
    %v1097 = vadd.f32 %v1025, %v1026
    %v1098 = vadd.f32 %v1097, %v1027
    %v1099 = vadd.f32 %v1098, %v1028
    %1100 = vadd.xlane.f32.xlu0 %v1099
    %v1101 = vpop.xlane.xlu0 %1100
    %v1102 = vadd.f32 %v1029, %v1030
    %v1103 = vadd.f32 %v1102, %v1031
    %v1104 = vadd.f32 %v1103, %v1032
    %1105 = vadd.xlane.f32.xlu0 %v1104
    %v1106 = vpop.xlane.xlu0 %1105
    %v1107 = vadd.f32 %v1033, %v1034
    %v1108 = vadd.f32 %v1107, %v1035
    %v1109 = vadd.f32 %v1108, %v1036
    %1110 = vadd.xlane.f32.xlu0 %v1109
    %v1111 = vpop.xlane.xlu0 %1110
    %v1112 = vadd.f32 %v1037, %v1038
    %v1113 = vadd.f32 %v1112, %v1039
    %v1114 = vadd.f32 %v1113, %v1040
    %1115 = vadd.xlane.f32.xlu0 %v1114
    %v1116 = vpop.xlane.xlu0 %1115
    %v1117 = vadd.f32 %v1041, %v1042
    %v1118 = vadd.f32 %v1117, %v1043
    %v1119 = vadd.f32 %v1118, %v1044
    %1120 = vadd.xlane.f32.xlu0 %v1119
    %v1121 = vpop.xlane.xlu0 %1120
    %v1122 = vadd.f32 %v1045, %v1046
    %v1123 = vadd.f32 %v1122, %v1047
    %v1124 = vadd.f32 %v1123, %v1048
    %1125 = vadd.xlane.f32.xlu0 %v1124
    %v1126 = vpop.xlane.xlu0 %1125
    %v1127 = vadd.f32 %v1049, %v1050
    %v1128 = vadd.f32 %v1127, %v1051
    %v1129 = vadd.f32 %v1128, %v1052
    %1130 = vadd.xlane.f32.xlu0 %v1129
    %v1131 = vpop.xlane.xlu0 %1130
    %v1132 = vadd.f32 %v1053, %v1054
    %v1133 = vadd.f32 %v1132, %v1055
    %v1134 = vadd.f32 %v1133, %v1056
    %1135 = vadd.xlane.f32.xlu0 %v1134
    %v1136 = vpop.xlane.xlu0 %1135
    %v1137 = vadd.f32 %v1061, %v968
    %v1138 = vadd.f32 %v1066, %v969
    %v1139 = vadd.f32 %v1071, %v970
    %v1140 = vadd.f32 %v1076, %v971
    %v1141 = vadd.f32 %v1081, %v972
    %v1142 = vadd.f32 %v1086, %v973
    %v1143 = vadd.f32 %v1091, %v974
    %v1144 = vadd.f32 %v1096, %v975
    %v1145 = vadd.f32 %v1101, %v976
    %v1146 = vadd.f32 %v1106, %v977
    %v1147 = vadd.f32 %v1111, %v978
    %v1148 = vadd.f32 %v1116, %v979
    %v1149 = vadd.f32 %v1121, %v980
    %v1150 = vadd.f32 %v1126, %v981
    %v1151 = vadd.f32 %v1131, %v982
    %v1152 = vadd.f32 %v1136, %v983
    %vm1153 = vcmp.gt.f32.partialorder %v1137, 0.0
    %vm1154 = vcmp.gt.f32.partialorder %v1138, 0.0
    %vm1155 = vcmp.gt.f32.partialorder %v1139, 0.0
    %vm1156 = vcmp.gt.f32.partialorder %v1140, 0.0
    %vm1157 = vcmp.gt.f32.partialorder %v1141, 0.0
    %vm1158 = vcmp.gt.f32.partialorder %v1142, 0.0
    %vm1159 = vcmp.gt.f32.partialorder %v1143, 0.0
    %vm1160 = vcmp.gt.f32.partialorder %v1144, 0.0
    %vm1161 = vcmp.gt.f32.partialorder %v1145, 0.0
    %vm1162 = vcmp.gt.f32.partialorder %v1146, 0.0
    %vm1163 = vcmp.gt.f32.partialorder %v1147, 0.0
    %vm1164 = vcmp.gt.f32.partialorder %v1148, 0.0
    %vm1165 = vcmp.gt.f32.partialorder %v1149, 0.0
    %vm1166 = vcmp.gt.f32.partialorder %v1150, 0.0
    %vm1167 = vcmp.gt.f32.partialorder %v1151, 0.0
    %vm1168 = vcmp.gt.f32.partialorder %v1152, 0.0
    %v1169 = vrsqrt.pop %v1137
    %v1170 = vmul.f32 %v1169, %v1137
    %v1171 = vmul.f32 %v1170, %v1169
    %v1172 = vmul.f32 0.5, %v1171
    %v1173 = vsub.f32 1.5, %v1172
    %v1174 = vmul.f32 %v1169, %v1173
    %vm1175 = vweird.f32 %v1137
    %vm1176 = vweird.f32 %v1169
    %vm1177 = vmor %vm1175, %vm1176
    %v1178 = vsel %vm1177, %v1169, %v1174
    %v1179 = vrsqrt.pop %v1138
    %v1180 = vmul.f32 %v1179, %v1138
    %v1181 = vmul.f32 %v1180, %v1179
    %v1182 = vmul.f32 0.5, %v1181
    %v1183 = vsub.f32 1.5, %v1182
    %v1184 = vmul.f32 %v1179, %v1183
    %vm1185 = vweird.f32 %v1138
    %vm1186 = vweird.f32 %v1179
    %vm1187 = vmor %vm1185, %vm1186
    %v1188 = vsel %vm1187, %v1179, %v1184
    %v1189 = vrsqrt.pop %v1139
    %v1190 = vmul.f32 %v1189, %v1139
    %v1191 = vmul.f32 %v1190, %v1189
    %v1192 = vmul.f32 0.5, %v1191
    %v1193 = vsub.f32 1.5, %v1192
    %v1194 = vmul.f32 %v1189, %v1193
    %vm1195 = vweird.f32 %v1139
    %vm1196 = vweird.f32 %v1189
    %vm1197 = vmor %vm1195, %vm1196
    %v1198 = vsel %vm1197, %v1189, %v1194
    %v1199 = vrsqrt.pop %v1140
    %v1200 = vmul.f32 %v1199, %v1140
    %v1201 = vmul.f32 %v1200, %v1199
    %v1202 = vmul.f32 0.5, %v1201
    %v1203 = vsub.f32 1.5, %v1202
    %v1204 = vmul.f32 %v1199, %v1203
    %vm1205 = vweird.f32 %v1140
    %vm1206 = vweird.f32 %v1199
    %vm1207 = vmor %vm1205, %vm1206
    %v1208 = vsel %vm1207, %v1199, %v1204
    %v1209 = vrsqrt.pop %v1141
    %v1210 = vmul.f32 %v1209, %v1141
    %v1211 = vmul.f32 %v1210, %v1209
    %v1212 = vmul.f32 0.5, %v1211
    %v1213 = vsub.f32 1.5, %v1212
    %v1214 = vmul.f32 %v1209, %v1213
    %vm1215 = vweird.f32 %v1141
    %vm1216 = vweird.f32 %v1209
    %vm1217 = vmor %vm1215, %vm1216
    %v1218 = vsel %vm1217, %v1209, %v1214
    %v1219 = vrsqrt.pop %v1142
    %v1220 = vmul.f32 %v1219, %v1142
    %v1221 = vmul.f32 %v1220, %v1219
    %v1222 = vmul.f32 0.5, %v1221
    %v1223 = vsub.f32 1.5, %v1222
    %v1224 = vmul.f32 %v1219, %v1223
    %vm1225 = vweird.f32 %v1142
    %vm1226 = vweird.f32 %v1219
    %vm1227 = vmor %vm1225, %vm1226
    %v1228 = vsel %vm1227, %v1219, %v1224
    %v1229 = vrsqrt.pop %v1143
    %v1230 = vmul.f32 %v1229, %v1143
    %v1231 = vmul.f32 %v1230, %v1229
    %v1232 = vmul.f32 0.5, %v1231
    %v1233 = vsub.f32 1.5, %v1232
    %v1234 = vmul.f32 %v1229, %v1233
    %vm1235 = vweird.f32 %v1143
    %vm1236 = vweird.f32 %v1229
    %vm1237 = vmor %vm1235, %vm1236
    %v1238 = vsel %vm1237, %v1229, %v1234
    %v1239 = vrsqrt.pop %v1144
    %v1240 = vmul.f32 %v1239, %v1144
    %v1241 = vmul.f32 %v1240, %v1239
    %v1242 = vmul.f32 0.5, %v1241
    %v1243 = vsub.f32 1.5, %v1242
    %v1244 = vmul.f32 %v1239, %v1243
    %vm1245 = vweird.f32 %v1144
    %vm1246 = vweird.f32 %v1239
    %vm1247 = vmor %vm1245, %vm1246
    %v1248 = vsel %vm1247, %v1239, %v1244
    %v1249 = vrsqrt.pop %v1145
    %v1250 = vmul.f32 %v1249, %v1145
    %v1251 = vmul.f32 %v1250, %v1249
    %v1252 = vmul.f32 0.5, %v1251
    %v1253 = vsub.f32 1.5, %v1252
    %v1254 = vmul.f32 %v1249, %v1253
    %vm1255 = vweird.f32 %v1145
    %vm1256 = vweird.f32 %v1249
    %vm1257 = vmor %vm1255, %vm1256
    %v1258 = vsel %vm1257, %v1249, %v1254
    %v1259 = vrsqrt.pop %v1146
    %v1260 = vmul.f32 %v1259, %v1146
    %v1261 = vmul.f32 %v1260, %v1259
    %v1262 = vmul.f32 0.5, %v1261
    %v1263 = vsub.f32 1.5, %v1262
    %v1264 = vmul.f32 %v1259, %v1263
    %vm1265 = vweird.f32 %v1146
    %vm1266 = vweird.f32 %v1259
    %vm1267 = vmor %vm1265, %vm1266
    %v1268 = vsel %vm1267, %v1259, %v1264
    %v1269 = vrsqrt.pop %v1147
    %v1270 = vmul.f32 %v1269, %v1147
    %v1271 = vmul.f32 %v1270, %v1269
    %v1272 = vmul.f32 0.5, %v1271
    %v1273 = vsub.f32 1.5, %v1272
    %v1274 = vmul.f32 %v1269, %v1273
    %vm1275 = vweird.f32 %v1147
    %vm1276 = vweird.f32 %v1269
    %vm1277 = vmor %vm1275, %vm1276
    %v1278 = vsel %vm1277, %v1269, %v1274
    %v1279 = vrsqrt.pop %v1148
    %v1280 = vmul.f32 %v1279, %v1148
    %v1281 = vmul.f32 %v1280, %v1279
    %v1282 = vmul.f32 0.5, %v1281
    %v1283 = vsub.f32 1.5, %v1282
    %v1284 = vmul.f32 %v1279, %v1283
    %vm1285 = vweird.f32 %v1148
    %vm1286 = vweird.f32 %v1279
    %vm1287 = vmor %vm1285, %vm1286
    %v1288 = vsel %vm1287, %v1279, %v1284
    %v1289 = vrsqrt.pop %v1149
    %v1290 = vmul.f32 %v1289, %v1149
    %v1291 = vmul.f32 %v1290, %v1289
    %v1292 = vmul.f32 0.5, %v1291
    %v1293 = vsub.f32 1.5, %v1292
    %v1294 = vmul.f32 %v1289, %v1293
    %vm1295 = vweird.f32 %v1149
    %vm1296 = vweird.f32 %v1289
    %vm1297 = vmor %vm1295, %vm1296
    %v1298 = vsel %vm1297, %v1289, %v1294
    %v1299 = vrsqrt.pop %v1150
    %v1300 = vmul.f32 %v1299, %v1150
    %v1301 = vmul.f32 %v1300, %v1299
    %v1302 = vmul.f32 0.5, %v1301
    %v1303 = vsub.f32 1.5, %v1302
    %v1304 = vmul.f32 %v1299, %v1303
    %vm1305 = vweird.f32 %v1150
    %vm1306 = vweird.f32 %v1299
    %vm1307 = vmor %vm1305, %vm1306
    %v1308 = vsel %vm1307, %v1299, %v1304
    %v1309 = vrsqrt.pop %v1151
    %v1310 = vmul.f32 %v1309, %v1151
    %v1311 = vmul.f32 %v1310, %v1309
    %v1312 = vmul.f32 0.5, %v1311
    %v1313 = vsub.f32 1.5, %v1312
    %v1314 = vmul.f32 %v1309, %v1313
    %vm1315 = vweird.f32 %v1151
    %vm1316 = vweird.f32 %v1309
    %vm1317 = vmor %vm1315, %vm1316
    %v1318 = vsel %vm1317, %v1309, %v1314
    %v1319 = vrsqrt.pop %v1152
    %v1320 = vmul.f32 %v1319, %v1152
    %v1321 = vmul.f32 %v1320, %v1319
    %v1322 = vmul.f32 0.5, %v1321
    %v1323 = vsub.f32 1.5, %v1322
    %v1324 = vmul.f32 %v1319, %v1323
    %vm1325 = vweird.f32 %v1152
    %vm1326 = vweird.f32 %v1319
    %vm1327 = vmor %vm1325, %vm1326
    %v1328 = vsel %vm1327, %v1319, %v1324
    %v1329 = vsel %vm1153, %v1178, 0.0
    %v1330 = vsel %vm1154, %v1188, 0.0
    %v1331 = vsel %vm1155, %v1198, 0.0
    %v1332 = vsel %vm1156, %v1208, 0.0
    %v1333 = vsel %vm1157, %v1218, 0.0
    %v1334 = vsel %vm1158, %v1228, 0.0
    %v1335 = vsel %vm1159, %v1238, 0.0
    %v1336 = vsel %vm1160, %v1248, 0.0
    %v1337 = vsel %vm1161, %v1258, 0.0
    %v1338 = vsel %vm1162, %v1268, 0.0
    %v1339 = vsel %vm1163, %v1278, 0.0
    %v1340 = vsel %vm1164, %v1288, 0.0
    %v1341 = vsel %vm1165, %v1298, 0.0
    %v1342 = vsel %vm1166, %v1308, 0.0
    %v1343 = vsel %vm1167, %v1318, 0.0
    %v1344 = vsel %vm1168, %v1328, 0.0
    %v1345 = vmul.f32 %v224, %v1329
    %v1346 = vmul.f32 %v225, %v1329
    %v1347 = vmul.f32 %v226, %v1329
    %v1348 = vmul.f32 %v227, %v1329
    %v1349 = vmul.f32 %v228, %v1330
    %v1350 = vmul.f32 %v229, %v1330
    %v1351 = vmul.f32 %v230, %v1330
    %v1352 = vmul.f32 %v231, %v1330
    %v1353 = vmul.f32 %v232, %v1331
    %v1354 = vmul.f32 %v233, %v1331
    %v1355 = vmul.f32 %v234, %v1331
    %v1356 = vmul.f32 %v235, %v1331
    %v1357 = vmul.f32 %v236, %v1332
    %v1358 = vmul.f32 %v237, %v1332
    %v1359 = vmul.f32 %v238, %v1332
    %v1360 = vmul.f32 %v239, %v1332
    %v1361 = vmul.f32 %v240, %v1333
    %v1362 = vmul.f32 %v241, %v1333
    %v1363 = vmul.f32 %v242, %v1333
    %v1364 = vmul.f32 %v243, %v1333
    %v1365 = vmul.f32 %v244, %v1334
    %v1366 = vmul.f32 %v245, %v1334
    %v1367 = vmul.f32 %v246, %v1334
    %v1368 = vmul.f32 %v247, %v1334
    %v1369 = vmul.f32 %v248, %v1335
    %v1370 = vmul.f32 %v249, %v1335
    %v1371 = vmul.f32 %v250, %v1335
    %v1372 = vmul.f32 %v251, %v1335
    %v1373 = vmul.f32 %v252, %v1336
    %v1374 = vmul.f32 %v253, %v1336
    %v1375 = vmul.f32 %v254, %v1336
    %v1376 = vmul.f32 %v255, %v1336
    %v1377 = vmul.f32 %v256, %v1337
    %v1378 = vmul.f32 %v257, %v1337
    %v1379 = vmul.f32 %v258, %v1337
    %v1380 = vmul.f32 %v259, %v1337
    %v1381 = vmul.f32 %v260, %v1338
    %v1382 = vmul.f32 %v261, %v1338
    %v1383 = vmul.f32 %v262, %v1338
    %v1384 = vmul.f32 %v263, %v1338
    %v1385 = vmul.f32 %v264, %v1339
    %v1386 = vmul.f32 %v265, %v1339
    %v1387 = vmul.f32 %v266, %v1339
    %v1388 = vmul.f32 %v267, %v1339
    %v1389 = vmul.f32 %v268, %v1340
    %v1390 = vmul.f32 %v269, %v1340
    %v1391 = vmul.f32 %v270, %v1340
    %v1392 = vmul.f32 %v271, %v1340
    %v1393 = vmul.f32 %v272, %v1341
    %v1394 = vmul.f32 %v273, %v1341
    %v1395 = vmul.f32 %v274, %v1341
    %v1396 = vmul.f32 %v275, %v1341
    %v1397 = vmul.f32 %v276, %v1342
    %v1398 = vmul.f32 %v277, %v1342
    %v1399 = vmul.f32 %v278, %v1342
    %v1400 = vmul.f32 %v279, %v1342
    %v1401 = vmul.f32 %v280, %v1343
    %v1402 = vmul.f32 %v281, %v1343
    %v1403 = vmul.f32 %v282, %v1343
    %v1404 = vmul.f32 %v283, %v1343
    %v1405 = vmul.f32 %v284, %v1344
    %v1406 = vmul.f32 %v285, %v1344
    %v1407 = vmul.f32 %v286, %v1344
    %v1408 = vmul.f32 %v287, %v1344
    %v1409 = vadd.f32 %v1345, %v1349
    %v1410 = vadd.f32 %v1409, %v1353
    %v1411 = vadd.f32 %v1410, %v1357
    %v1412 = vadd.f32 %v1411, %v1361
    %v1413 = vadd.f32 %v1412, %v1365
    %v1414 = vadd.f32 %v1413, %v1369
    %v1415 = vadd.f32 %v1414, %v1373
    %v1416 = vadd.f32 %v1415, %v1377
    %v1417 = vadd.f32 %v1416, %v1381
    %v1418 = vadd.f32 %v1417, %v1385
    %v1419 = vadd.f32 %v1418, %v1389
    %v1420 = vadd.f32 %v1419, %v1393
    %v1421 = vadd.f32 %v1420, %v1397
    %v1422 = vadd.f32 %v1421, %v1401
    %v1423 = vadd.f32 %v1422, %v1405
    %v1424 = vrot.slane %v1423, 4
    %v1425 = vadd.f32 %v1423, %v1424
    %v1426 = vrot.slane %v1425, 2
    %v1427 = vadd.f32 %v1425, %v1426
    %v1428 = vrot.slane %v1427, 1
    %v1429 = vadd.f32 %v1427, %v1428
    %v1430 = vadd.f32 %v1346, %v1350
    %v1431 = vadd.f32 %v1430, %v1354
    %v1432 = vadd.f32 %v1431, %v1358
    %v1433 = vadd.f32 %v1432, %v1362
    %v1434 = vadd.f32 %v1433, %v1366
    %v1435 = vadd.f32 %v1434, %v1370
    %v1436 = vadd.f32 %v1435, %v1374
    %v1437 = vadd.f32 %v1436, %v1378
    %v1438 = vadd.f32 %v1437, %v1382
    %v1439 = vadd.f32 %v1438, %v1386
    %v1440 = vadd.f32 %v1439, %v1390
    %v1441 = vadd.f32 %v1440, %v1394
    %v1442 = vadd.f32 %v1441, %v1398
    %v1443 = vadd.f32 %v1442, %v1402
    %v1444 = vadd.f32 %v1443, %v1406
    %v1445 = vrot.slane %v1444, 4
    %v1446 = vadd.f32 %v1444, %v1445
    %v1447 = vrot.slane %v1446, 2
    %v1448 = vadd.f32 %v1446, %v1447
    %v1449 = vrot.slane %v1448, 1
    %v1450 = vadd.f32 %v1448, %v1449
    %v1451 = vadd.f32 %v1347, %v1351
    %v1452 = vadd.f32 %v1451, %v1355
    %v1453 = vadd.f32 %v1452, %v1359
    %v1454 = vadd.f32 %v1453, %v1363
    %v1455 = vadd.f32 %v1454, %v1367
    %v1456 = vadd.f32 %v1455, %v1371
    %v1457 = vadd.f32 %v1456, %v1375
    %v1458 = vadd.f32 %v1457, %v1379
    %v1459 = vadd.f32 %v1458, %v1383
    %v1460 = vadd.f32 %v1459, %v1387
    %v1461 = vadd.f32 %v1460, %v1391
    %v1462 = vadd.f32 %v1461, %v1395
    %v1463 = vadd.f32 %v1462, %v1399
    %v1464 = vadd.f32 %v1463, %v1403
    %v1465 = vadd.f32 %v1464, %v1407
    %v1466 = vrot.slane %v1465, 4
    %v1467 = vadd.f32 %v1465, %v1466
    %v1468 = vrot.slane %v1467, 2
    %v1469 = vadd.f32 %v1467, %v1468
    %v1470 = vrot.slane %v1469, 1
    %v1471 = vadd.f32 %v1469, %v1470
    %v1472 = vadd.f32 %v1348, %v1352
    %v1473 = vadd.f32 %v1472, %v1356
    %v1474 = vadd.f32 %v1473, %v1360
    %v1475 = vadd.f32 %v1474, %v1364
    %v1476 = vadd.f32 %v1475, %v1368
    %v1477 = vadd.f32 %v1476, %v1372
    %v1478 = vadd.f32 %v1477, %v1376
    %v1479 = vadd.f32 %v1478, %v1380
    %v1480 = vadd.f32 %v1479, %v1384
    %v1481 = vadd.f32 %v1480, %v1388
    %v1482 = vadd.f32 %v1481, %v1392
    %v1483 = vadd.f32 %v1482, %v1396
    %v1484 = vadd.f32 %v1483, %v1400
    %v1485 = vadd.f32 %v1484, %v1404
    %v1486 = vadd.f32 %v1485, %v1408
    %v1487 = vrot.slane %v1486, 4
    %v1488 = vadd.f32 %v1486, %v1487
    %v1489 = vrot.slane %v1488, 2
    %v1490 = vadd.f32 %v1488, %v1489
    %v1491 = vrot.slane %v1490, 1
    %v1492 = vadd.f32 %v1490, %v1491
    %v1493 = vmul.f32 %v421, %v1329
    %v1494 = vmul.f32 %v422, %v1329
    %v1495 = vmul.f32 %v423, %v1329
    %v1496 = vmul.f32 %v424, %v1329
    %v1497 = vmul.f32 %v425, %v1330
    %v1498 = vmul.f32 %v426, %v1330
    %v1499 = vmul.f32 %v427, %v1330
    %v1500 = vmul.f32 %v428, %v1330
    %v1501 = vmul.f32 %v429, %v1331
    %v1502 = vmul.f32 %v430, %v1331
    %v1503 = vmul.f32 %v431, %v1331
    %v1504 = vmul.f32 %v432, %v1331
    %v1505 = vmul.f32 %v433, %v1332
    %v1506 = vmul.f32 %v434, %v1332
    %v1507 = vmul.f32 %v435, %v1332
    %v1508 = vmul.f32 %v436, %v1332
    %v1509 = vmul.f32 %v437, %v1333
    %v1510 = vmul.f32 %v438, %v1333
    %v1511 = vmul.f32 %v439, %v1333
    %v1512 = vmul.f32 %v440, %v1333
    %v1513 = vmul.f32 %v441, %v1334
    %v1514 = vmul.f32 %v442, %v1334
    %v1515 = vmul.f32 %v443, %v1334
    %v1516 = vmul.f32 %v444, %v1334
    %v1517 = vmul.f32 %v445, %v1335
    %v1518 = vmul.f32 %v446, %v1335
    %v1519 = vmul.f32 %v447, %v1335
    %v1520 = vmul.f32 %v448, %v1335
    %v1521 = vmul.f32 %v449, %v1336
    %v1522 = vmul.f32 %v450, %v1336
    %v1523 = vmul.f32 %v451, %v1336
    %v1524 = vmul.f32 %v452, %v1336
    %v1525 = vmul.f32 %v453, %v1337
    %v1526 = vmul.f32 %v454, %v1337
    %v1527 = vmul.f32 %v455, %v1337
    %v1528 = vmul.f32 %v456, %v1337
    %v1529 = vmul.f32 %v457, %v1338
    %v1530 = vmul.f32 %v458, %v1338
    %v1531 = vmul.f32 %v459, %v1338
    %v1532 = vmul.f32 %v460, %v1338
    %v1533 = vmul.f32 %v461, %v1339
    %v1534 = vmul.f32 %v462, %v1339
    %v1535 = vmul.f32 %v463, %v1339
    %v1536 = vmul.f32 %v464, %v1339
    %v1537 = vmul.f32 %v465, %v1340
    %v1538 = vmul.f32 %v466, %v1340
    %v1539 = vmul.f32 %v467, %v1340
    %v1540 = vmul.f32 %v468, %v1340
    %v1541 = vmul.f32 %v469, %v1341
    %v1542 = vmul.f32 %v470, %v1341
    %v1543 = vmul.f32 %v471, %v1341
    %v1544 = vmul.f32 %v472, %v1341
    %v1545 = vmul.f32 %v473, %v1342
    %v1546 = vmul.f32 %v474, %v1342
    %v1547 = vmul.f32 %v475, %v1342
    %v1548 = vmul.f32 %v476, %v1342
    %v1549 = vmul.f32 %v477, %v1343
    %v1550 = vmul.f32 %v478, %v1343
    %v1551 = vmul.f32 %v479, %v1343
    %v1552 = vmul.f32 %v480, %v1343
    %v1553 = vmul.f32 %v481, %v1344
    %v1554 = vmul.f32 %v482, %v1344
    %v1555 = vmul.f32 %v483, %v1344
    %v1556 = vmul.f32 %v484, %v1344
    %v1557 = vadd.f32 %v1493, %v1497
    %v1558 = vadd.f32 %v1557, %v1501
    %v1559 = vadd.f32 %v1558, %v1505
    %v1560 = vadd.f32 %v1559, %v1509
    %v1561 = vadd.f32 %v1560, %v1513
    %v1562 = vadd.f32 %v1561, %v1517
    %v1563 = vadd.f32 %v1562, %v1521
    %v1564 = vadd.f32 %v1563, %v1525
    %v1565 = vadd.f32 %v1564, %v1529
    %v1566 = vadd.f32 %v1565, %v1533
    %v1567 = vadd.f32 %v1566, %v1537
    %v1568 = vadd.f32 %v1567, %v1541
    %v1569 = vadd.f32 %v1568, %v1545
    %v1570 = vadd.f32 %v1569, %v1549
    %v1571 = vadd.f32 %v1570, %v1553
    %v1572 = vrot.slane %v1571, 4
    %v1573 = vadd.f32 %v1571, %v1572
    %v1574 = vrot.slane %v1573, 2
    %v1575 = vadd.f32 %v1573, %v1574
    %v1576 = vrot.slane %v1575, 1
    %v1577 = vadd.f32 %v1575, %v1576
    %v1578 = vadd.f32 %v1494, %v1498
    %v1579 = vadd.f32 %v1578, %v1502
    %v1580 = vadd.f32 %v1579, %v1506
    %v1581 = vadd.f32 %v1580, %v1510
    %v1582 = vadd.f32 %v1581, %v1514
    %v1583 = vadd.f32 %v1582, %v1518
    %v1584 = vadd.f32 %v1583, %v1522
    %v1585 = vadd.f32 %v1584, %v1526
    %v1586 = vadd.f32 %v1585, %v1530
    %v1587 = vadd.f32 %v1586, %v1534
    %v1588 = vadd.f32 %v1587, %v1538
    %v1589 = vadd.f32 %v1588, %v1542
    %v1590 = vadd.f32 %v1589, %v1546
    %v1591 = vadd.f32 %v1590, %v1550
    %v1592 = vadd.f32 %v1591, %v1554
    %v1593 = vrot.slane %v1592, 4
    %v1594 = vadd.f32 %v1592, %v1593
    %v1595 = vrot.slane %v1594, 2
    %v1596 = vadd.f32 %v1594, %v1595
    %v1597 = vrot.slane %v1596, 1
    %v1598 = vadd.f32 %v1596, %v1597
    %v1599 = vadd.f32 %v1495, %v1499
    %v1600 = vadd.f32 %v1599, %v1503
    %v1601 = vadd.f32 %v1600, %v1507
    %v1602 = vadd.f32 %v1601, %v1511
    %v1603 = vadd.f32 %v1602, %v1515
    %v1604 = vadd.f32 %v1603, %v1519
    %v1605 = vadd.f32 %v1604, %v1523
    %v1606 = vadd.f32 %v1605, %v1527
    %v1607 = vadd.f32 %v1606, %v1531
    %v1608 = vadd.f32 %v1607, %v1535
    %v1609 = vadd.f32 %v1608, %v1539
    %v1610 = vadd.f32 %v1609, %v1543
    %v1611 = vadd.f32 %v1610, %v1547
    %v1612 = vadd.f32 %v1611, %v1551
    %v1613 = vadd.f32 %v1612, %v1555
    %v1614 = vrot.slane %v1613, 4
    %v1615 = vadd.f32 %v1613, %v1614
    %v1616 = vrot.slane %v1615, 2
    %v1617 = vadd.f32 %v1615, %v1616
    %v1618 = vrot.slane %v1617, 1
    %v1619 = vadd.f32 %v1617, %v1618
    %v1620 = vadd.f32 %v1496, %v1500
    %v1621 = vadd.f32 %v1620, %v1504
    %v1622 = vadd.f32 %v1621, %v1508
    %v1623 = vadd.f32 %v1622, %v1512
    %v1624 = vadd.f32 %v1623, %v1516
    %v1625 = vadd.f32 %v1624, %v1520
    %v1626 = vadd.f32 %v1625, %v1524
    %v1627 = vadd.f32 %v1626, %v1528
    %v1628 = vadd.f32 %v1627, %v1532
    %v1629 = vadd.f32 %v1628, %v1536
    %v1630 = vadd.f32 %v1629, %v1540
    %v1631 = vadd.f32 %v1630, %v1544
    %v1632 = vadd.f32 %v1631, %v1548
    %v1633 = vadd.f32 %v1632, %v1552
    %v1634 = vadd.f32 %v1633, %v1556
    %v1635 = vrot.slane %v1634, 4
    %v1636 = vadd.f32 %v1634, %v1635
    %v1637 = vrot.slane %v1636, 2
    %v1638 = vadd.f32 %v1636, %v1637
    %v1639 = vrot.slane %v1638, 1
    %v1640 = vadd.f32 %v1638, %v1639
    %v1641 = vmul.f32 %v1429, %v985
    %v1642 = vmul.f32 %v1450, %v986
    %v1643 = vmul.f32 %v1471, %v987
    %v1644 = vmul.f32 %v1492, %v988
    %v1645 = vmul.f32 %v1641, %v1577
    %v1646 = vmul.f32 %v1642, %v1598
    %v1647 = vmul.f32 %v1643, %v1619
    %v1648 = vmul.f32 %v1644, %v1640
    %v1649 = vperm.slane %v1645, 0
    %v1650 = vperm.slane %v1646, 0
    %v1651 = vperm.slane %v1647, 0
    %v1652 = vperm.slane %v1648, 0
    %v1653 = vmul.f32 %v224, %v1649
    %v1654 = vmul.f32 %v225, %v1650
    %v1655 = vmul.f32 %v226, %v1651
    %v1656 = vmul.f32 %v227, %v1652
    %v1657 = vmul.f32 %v228, %v1649
    %v1658 = vmul.f32 %v229, %v1650
    %v1659 = vmul.f32 %v230, %v1651
    %v1660 = vmul.f32 %v231, %v1652
    %v1661 = vmul.f32 %v232, %v1649
    %v1662 = vmul.f32 %v233, %v1650
    %v1663 = vmul.f32 %v234, %v1651
    %v1664 = vmul.f32 %v235, %v1652
    %v1665 = vmul.f32 %v236, %v1649
    %v1666 = vmul.f32 %v237, %v1650
    %v1667 = vmul.f32 %v238, %v1651
    %v1668 = vmul.f32 %v239, %v1652
    %v1669 = vmul.f32 %v240, %v1649
    %v1670 = vmul.f32 %v241, %v1650
    %v1671 = vmul.f32 %v242, %v1651
    %v1672 = vmul.f32 %v243, %v1652
    %v1673 = vmul.f32 %v244, %v1649
    %v1674 = vmul.f32 %v245, %v1650
    %v1675 = vmul.f32 %v246, %v1651
    %v1676 = vmul.f32 %v247, %v1652
    %v1677 = vmul.f32 %v248, %v1649
    %v1678 = vmul.f32 %v249, %v1650
    %v1679 = vmul.f32 %v250, %v1651
    %v1680 = vmul.f32 %v251, %v1652
    %v1681 = vmul.f32 %v252, %v1649
    %v1682 = vmul.f32 %v253, %v1650
    %v1683 = vmul.f32 %v254, %v1651
    %v1684 = vmul.f32 %v255, %v1652
    %v1685 = vmul.f32 %v256, %v1649
    %v1686 = vmul.f32 %v257, %v1650
    %v1687 = vmul.f32 %v258, %v1651
    %v1688 = vmul.f32 %v259, %v1652
    %v1689 = vmul.f32 %v260, %v1649
    %v1690 = vmul.f32 %v261, %v1650
    %v1691 = vmul.f32 %v262, %v1651
    %v1692 = vmul.f32 %v263, %v1652
    %v1693 = vmul.f32 %v264, %v1649
    %v1694 = vmul.f32 %v265, %v1650
    %v1695 = vmul.f32 %v266, %v1651
    %v1696 = vmul.f32 %v267, %v1652
    %v1697 = vmul.f32 %v268, %v1649
    %v1698 = vmul.f32 %v269, %v1650
    %v1699 = vmul.f32 %v270, %v1651
    %v1700 = vmul.f32 %v271, %v1652
    %v1701 = vmul.f32 %v272, %v1649
    %v1702 = vmul.f32 %v273, %v1650
    %v1703 = vmul.f32 %v274, %v1651
    %v1704 = vmul.f32 %v275, %v1652
    %v1705 = vmul.f32 %v276, %v1649
    %v1706 = vmul.f32 %v277, %v1650
    %v1707 = vmul.f32 %v278, %v1651
    %v1708 = vmul.f32 %v279, %v1652
    %v1709 = vmul.f32 %v280, %v1649
    %v1710 = vmul.f32 %v281, %v1650
    %v1711 = vmul.f32 %v282, %v1651
    %v1712 = vmul.f32 %v283, %v1652
    %v1713 = vmul.f32 %v284, %v1649
    %v1714 = vmul.f32 %v285, %v1650
    %v1715 = vmul.f32 %v286, %v1651
    %v1716 = vmul.f32 %v287, %v1652
    %vm1717 = vcmp.eq.s32.totalorder %v75, %v486
    %vm1718 = vcmp.eq.s32.totalorder %v76, %v486
    %vm1719 = vcmp.eq.s32.totalorder %v77, %v486
    %vm1720 = vcmp.eq.s32.totalorder %v78, %v486
    %vm1721 = vcmp.eq.s32.totalorder %v79, %v486
    %vm1722 = vcmp.eq.s32.totalorder %v80, %v486
    %vm1723 = vcmp.eq.s32.totalorder %v81, %v486
    %vm1724 = vcmp.eq.s32.totalorder %v82, %v486
    %vm1725 = vcmp.eq.s32.totalorder %v83, %v486
    %vm1726 = vcmp.eq.s32.totalorder %v84, %v486
    %vm1727 = vcmp.eq.s32.totalorder %v85, %v486
    %vm1728 = vcmp.eq.s32.totalorder %v86, %v486
    %vm1729 = vcmp.eq.s32.totalorder %v87, %v486
    %vm1730 = vcmp.eq.s32.totalorder %v88, %v486
    %vm1731 = vcmp.eq.s32.totalorder %v89, %v486
    %vm1732 = vcmp.eq.s32.totalorder %v90, %v486
    %v1733 = vsel %vm1717, 1, 0
    %v1734 = vsel %vm1718, 1, 0
    %v1735 = vsel %vm1719, 1, 0
    %v1736 = vsel %vm1720, 1, 0
    %v1737 = vsel %vm1721, 1, 0
    %v1738 = vsel %vm1722, 1, 0
    %v1739 = vsel %vm1723, 1, 0
    %v1740 = vsel %vm1724, 1, 0
    %v1741 = vsel %vm1725, 1, 0
    %v1742 = vsel %vm1726, 1, 0
    %v1743 = vsel %vm1727, 1, 0
    %v1744 = vsel %vm1728, 1, 0
    %v1745 = vsel %vm1729, 1, 0
    %v1746 = vsel %vm1730, 1, 0
    %v1747 = vsel %vm1731, 1, 0
    %v1748 = vsel %vm1732, 1, 0
    %v1749 = vcvt.s32.f32 %v1733
    %v1750 = vcvt.s32.f32 %v1734
    %v1751 = vcvt.s32.f32 %v1735
    %v1752 = vcvt.s32.f32 %v1736
    %v1753 = vcvt.s32.f32 %v1737
    %v1754 = vcvt.s32.f32 %v1738
    %v1755 = vcvt.s32.f32 %v1739
    %v1756 = vcvt.s32.f32 %v1740
    %v1757 = vcvt.s32.f32 %v1741
    %v1758 = vcvt.s32.f32 %v1742
    %v1759 = vcvt.s32.f32 %v1743
    %v1760 = vcvt.s32.f32 %v1744
    %v1761 = vcvt.s32.f32 %v1745
    %v1762 = vcvt.s32.f32 %v1746
    %v1763 = vcvt.s32.f32 %v1747
    %v1764 = vcvt.s32.f32 %v1748
    %v1765 = vmul.f32 %v1329, %v1329
    %v1766 = vmul.f32 %v1330, %v1330
    %v1767 = vmul.f32 %v1331, %v1331
    %v1768 = vmul.f32 %v1332, %v1332
    %v1769 = vmul.f32 %v1333, %v1333
    %v1770 = vmul.f32 %v1334, %v1334
    %v1771 = vmul.f32 %v1335, %v1335
    %v1772 = vmul.f32 %v1336, %v1336
    %v1773 = vmul.f32 %v1337, %v1337
    %v1774 = vmul.f32 %v1338, %v1338
    %v1775 = vmul.f32 %v1339, %v1339
    %v1776 = vmul.f32 %v1340, %v1340
    %v1777 = vmul.f32 %v1341, %v1341
    %v1778 = vmul.f32 %v1342, %v1342
    %v1779 = vmul.f32 %v1343, %v1343
    %v1780 = vmul.f32 %v1344, %v1344
    %v1781 = vmul.f32 %v1749, %v1765
    %v1782 = vmul.f32 %v1750, %v1766
    %v1783 = vmul.f32 %v1751, %v1767
    %v1784 = vmul.f32 %v1752, %v1768
    %v1785 = vmul.f32 %v1753, %v1769
    %v1786 = vmul.f32 %v1754, %v1770
    %v1787 = vmul.f32 %v1755, %v1771
    %v1788 = vmul.f32 %v1756, %v1772
    %v1789 = vmul.f32 %v1757, %v1773
    %v1790 = vmul.f32 %v1758, %v1774
    %v1791 = vmul.f32 %v1759, %v1775
    %v1792 = vmul.f32 %v1760, %v1776
    %v1793 = vmul.f32 %v1761, %v1777
    %v1794 = vmul.f32 %v1762, %v1778
    %v1795 = vmul.f32 %v1763, %v1779
    %v1796 = vmul.f32 %v1764, %v1780
    %v1797 = vand.u32 %v886, 4294901760
    %1798 = vmatpush.msra.mxu0 %v1797
    %v1799 = vand.u32 %v885, 4294901760
    %1800 = vmatpush.msra.mxu0 %v1799
    %v1801 = vand.u32 %v884, 4294901760
    %1802 = vmatpush.msra.mxu0 %v1801
    %v1803 = vand.u32 %v883, 4294901760
    %1804 = vmatpush.msra.mxu0 %v1803
    %v1805 = vand.u32 %v882, 4294901760
    %1806 = vmatpush.msra.mxu0 %v1805
    %v1807 = vand.u32 %v881, 4294901760
    %1808 = vmatpush.msra.mxu0 %v1807
    %v1809 = vand.u32 %v880, 4294901760
    %1810 = vmatpush.msra.mxu0 %v1809
    %v1811 = vand.u32 %v879, 4294901760
    %1812 = vmatpush.msra.mxu0 %v1811
    %v1813 = vand.u32 %v878, 4294901760
    %1814 = vmatpush.msra.mxu0 %v1813
    %v1815 = vand.u32 %v877, 4294901760
    %1816 = vmatpush.msra.mxu0 %v1815
    %v1817 = vand.u32 %v876, 4294901760
    %1818 = vmatpush.msra.mxu0 %v1817
    %v1819 = vand.u32 %v875, 4294901760
    %1820 = vmatpush.msra.mxu0 %v1819
    %v1821 = vand.u32 %v874, 4294901760
    %1822 = vmatpush.msra.mxu0 %v1821
    %v1823 = vand.u32 %v873, 4294901760
    %1824 = vmatpush.msra.mxu0 %v1823
    %v1825 = vand.u32 %v872, 4294901760
    %1826 = vmatpush.msra.mxu0 %v1825
    %v1827 = vand.u32 %v871, 4294901760
    %1828 = vmatpush.msra.mxu0 %v1827
    %v1829 = vand.u32 %v1653, 4294901760
    %v1830 = vsub.f32 %v1653, %v1829
    %v1831 = vand.u32 %v1830, 4294901760
    %v1832 = vsub.f32 %v1830, %v1831
    %v1833 = vand.u32 %v1832, 4294901760
    %1834 = vmatmul.f32.gmra.mxu0 %v1833
    %v1835 = vpop.f32.mrf.mxu0
    %v1836 = vadd.f32 %v1781, %v1835
    %v1837 = vand.u32 %v1657, 4294901760
    %v1838 = vsub.f32 %v1657, %v1837
    %v1839 = vand.u32 %v1838, 4294901760
    %v1840 = vsub.f32 %v1838, %v1839
    %v1841 = vand.u32 %v1840, 4294901760
    %1842 = vmatmul.f32.gmra.mxu0 %v1841
    %v1843 = vpop.f32.mrf.mxu0
    %v1844 = vadd.f32 %v1782, %v1843
    %v1845 = vand.u32 %v1661, 4294901760
    %v1846 = vsub.f32 %v1661, %v1845
    %v1847 = vand.u32 %v1846, 4294901760
    %v1848 = vsub.f32 %v1846, %v1847
    %v1849 = vand.u32 %v1848, 4294901760
    %1850 = vmatmul.f32.gmra.mxu0 %v1849
    %v1851 = vpop.f32.mrf.mxu0
    %v1852 = vadd.f32 %v1783, %v1851
    %v1853 = vand.u32 %v1665, 4294901760
    %v1854 = vsub.f32 %v1665, %v1853
    %v1855 = vand.u32 %v1854, 4294901760
    %v1856 = vsub.f32 %v1854, %v1855
    %v1857 = vand.u32 %v1856, 4294901760
    %1858 = vmatmul.f32.gmra.mxu0 %v1857
    %v1859 = vpop.f32.mrf.mxu0
    %v1860 = vadd.f32 %v1784, %v1859
    %v1861 = vand.u32 %v1669, 4294901760
    %v1862 = vsub.f32 %v1669, %v1861
    %v1863 = vand.u32 %v1862, 4294901760
    %v1864 = vsub.f32 %v1862, %v1863
    %v1865 = vand.u32 %v1864, 4294901760
    %1866 = vmatmul.f32.gmra.mxu0 %v1865
    %v1867 = vpop.f32.mrf.mxu0
    %v1868 = vadd.f32 %v1785, %v1867
    %v1869 = vand.u32 %v1673, 4294901760
    %v1870 = vsub.f32 %v1673, %v1869
    %v1871 = vand.u32 %v1870, 4294901760
    %v1872 = vsub.f32 %v1870, %v1871
    %v1873 = vand.u32 %v1872, 4294901760
    %1874 = vmatmul.f32.gmra.mxu0 %v1873
    %v1875 = vpop.f32.mrf.mxu0
    %v1876 = vadd.f32 %v1786, %v1875
    %v1877 = vand.u32 %v1677, 4294901760
    %v1878 = vsub.f32 %v1677, %v1877
    %v1879 = vand.u32 %v1878, 4294901760
    %v1880 = vsub.f32 %v1878, %v1879
    %v1881 = vand.u32 %v1880, 4294901760
    %1882 = vmatmul.f32.gmra.mxu0 %v1881
    %v1883 = vpop.f32.mrf.mxu0
    %v1884 = vadd.f32 %v1787, %v1883
    %v1885 = vand.u32 %v1681, 4294901760
    %v1886 = vsub.f32 %v1681, %v1885
    %v1887 = vand.u32 %v1886, 4294901760
    %v1888 = vsub.f32 %v1886, %v1887
    %v1889 = vand.u32 %v1888, 4294901760
    %1890 = vmatmul.f32.gmra.mxu0 %v1889
    %v1891 = vpop.f32.mrf.mxu0
    %v1892 = vadd.f32 %v1788, %v1891
    %v1893 = vand.u32 %v1685, 4294901760
    %v1894 = vsub.f32 %v1685, %v1893
    %v1895 = vand.u32 %v1894, 4294901760
    %v1896 = vsub.f32 %v1894, %v1895
    %v1897 = vand.u32 %v1896, 4294901760
    %1898 = vmatmul.f32.gmra.mxu0 %v1897
    %v1899 = vpop.f32.mrf.mxu0
    %v1900 = vadd.f32 %v1789, %v1899
    %v1901 = vand.u32 %v1689, 4294901760
    %v1902 = vsub.f32 %v1689, %v1901
    %v1903 = vand.u32 %v1902, 4294901760
    %v1904 = vsub.f32 %v1902, %v1903
    %v1905 = vand.u32 %v1904, 4294901760
    %1906 = vmatmul.f32.gmra.mxu0 %v1905
    %v1907 = vpop.f32.mrf.mxu0
    %v1908 = vadd.f32 %v1790, %v1907
    %v1909 = vand.u32 %v1693, 4294901760
    %v1910 = vsub.f32 %v1693, %v1909
    %v1911 = vand.u32 %v1910, 4294901760
    %v1912 = vsub.f32 %v1910, %v1911
    %v1913 = vand.u32 %v1912, 4294901760
    %1914 = vmatmul.f32.gmra.mxu0 %v1913
    %v1915 = vpop.f32.mrf.mxu0
    %v1916 = vadd.f32 %v1791, %v1915
    %v1917 = vand.u32 %v1697, 4294901760
    %v1918 = vsub.f32 %v1697, %v1917
    %v1919 = vand.u32 %v1918, 4294901760
    %v1920 = vsub.f32 %v1918, %v1919
    %v1921 = vand.u32 %v1920, 4294901760
    %1922 = vmatmul.f32.gmra.mxu0 %v1921
    %v1923 = vpop.f32.mrf.mxu0
    %v1924 = vadd.f32 %v1792, %v1923
    %v1925 = vand.u32 %v1701, 4294901760
    %v1926 = vsub.f32 %v1701, %v1925
    %v1927 = vand.u32 %v1926, 4294901760
    %v1928 = vsub.f32 %v1926, %v1927
    %v1929 = vand.u32 %v1928, 4294901760
    %1930 = vmatmul.f32.gmra.mxu0 %v1929
    %v1931 = vpop.f32.mrf.mxu0
    %v1932 = vadd.f32 %v1793, %v1931
    %v1933 = vand.u32 %v1705, 4294901760
    %v1934 = vsub.f32 %v1705, %v1933
    %v1935 = vand.u32 %v1934, 4294901760
    %v1936 = vsub.f32 %v1934, %v1935
    %v1937 = vand.u32 %v1936, 4294901760
    %1938 = vmatmul.f32.gmra.mxu0 %v1937
    %v1939 = vpop.f32.mrf.mxu0
    %v1940 = vadd.f32 %v1794, %v1939
    %v1941 = vand.u32 %v1709, 4294901760
    %v1942 = vsub.f32 %v1709, %v1941
    %v1943 = vand.u32 %v1942, 4294901760
    %v1944 = vsub.f32 %v1942, %v1943
    %v1945 = vand.u32 %v1944, 4294901760
    %1946 = vmatmul.f32.gmra.mxu0 %v1945
    %v1947 = vpop.f32.mrf.mxu0
    %v1948 = vadd.f32 %v1795, %v1947
    %v1949 = vand.u32 %v1713, 4294901760
    %v1950 = vsub.f32 %v1713, %v1949
    %v1951 = vand.u32 %v1950, 4294901760
    %v1952 = vsub.f32 %v1950, %v1951
    %v1953 = vand.u32 %v1952, 4294901760
    %1954 = vmatmul.f32.gmra.mxu0 %v1953
    %v1955 = vpop.f32.mrf.mxu0
    %v1956 = vadd.f32 %v1796, %v1955
    %1957 = vdwg.mxu0
    %v1958 = vand.u32 %v886, 4294901760
    %v1959 = vsub.f32 %v886, %v1958
    %v1960 = vand.u32 %v1959, 4294901760
    %v1961 = vsub.f32 %v1959, %v1960
    %v1962 = vand.u32 %v1961, 4294901760
    %1963 = vmatpush.msra.mxu0 %v1962
    %v1964 = vand.u32 %v885, 4294901760
    %v1965 = vsub.f32 %v885, %v1964
    %v1966 = vand.u32 %v1965, 4294901760
    %v1967 = vsub.f32 %v1965, %v1966
    %v1968 = vand.u32 %v1967, 4294901760
    %1969 = vmatpush.msra.mxu0 %v1968
    %v1970 = vand.u32 %v884, 4294901760
    %v1971 = vsub.f32 %v884, %v1970
    %v1972 = vand.u32 %v1971, 4294901760
    %v1973 = vsub.f32 %v1971, %v1972
    %v1974 = vand.u32 %v1973, 4294901760
    %1975 = vmatpush.msra.mxu0 %v1974
    %v1976 = vand.u32 %v883, 4294901760
    %v1977 = vsub.f32 %v883, %v1976
    %v1978 = vand.u32 %v1977, 4294901760
    %v1979 = vsub.f32 %v1977, %v1978
    %v1980 = vand.u32 %v1979, 4294901760
    %1981 = vmatpush.msra.mxu0 %v1980
    %v1982 = vand.u32 %v882, 4294901760
    %v1983 = vsub.f32 %v882, %v1982
    %v1984 = vand.u32 %v1983, 4294901760
    %v1985 = vsub.f32 %v1983, %v1984
    %v1986 = vand.u32 %v1985, 4294901760
    %1987 = vmatpush.msra.mxu0 %v1986
    %v1988 = vand.u32 %v881, 4294901760
    %v1989 = vsub.f32 %v881, %v1988
    %v1990 = vand.u32 %v1989, 4294901760
    %v1991 = vsub.f32 %v1989, %v1990
    %v1992 = vand.u32 %v1991, 4294901760
    %1993 = vmatpush.msra.mxu0 %v1992
    %v1994 = vand.u32 %v880, 4294901760
    %v1995 = vsub.f32 %v880, %v1994
    %v1996 = vand.u32 %v1995, 4294901760
    %v1997 = vsub.f32 %v1995, %v1996
    %v1998 = vand.u32 %v1997, 4294901760
    %1999 = vmatpush.msra.mxu0 %v1998
    %v2000 = vand.u32 %v879, 4294901760
    %v2001 = vsub.f32 %v879, %v2000
    %v2002 = vand.u32 %v2001, 4294901760
    %v2003 = vsub.f32 %v2001, %v2002
    %v2004 = vand.u32 %v2003, 4294901760
    %2005 = vmatpush.msra.mxu0 %v2004
    %v2006 = vand.u32 %v878, 4294901760
    %v2007 = vsub.f32 %v878, %v2006
    %v2008 = vand.u32 %v2007, 4294901760
    %v2009 = vsub.f32 %v2007, %v2008
    %v2010 = vand.u32 %v2009, 4294901760
    %2011 = vmatpush.msra.mxu0 %v2010
    %v2012 = vand.u32 %v877, 4294901760
    %v2013 = vsub.f32 %v877, %v2012
    %v2014 = vand.u32 %v2013, 4294901760
    %v2015 = vsub.f32 %v2013, %v2014
    %v2016 = vand.u32 %v2015, 4294901760
    %2017 = vmatpush.msra.mxu0 %v2016
    %v2018 = vand.u32 %v876, 4294901760
    %v2019 = vsub.f32 %v876, %v2018
    %v2020 = vand.u32 %v2019, 4294901760
    %v2021 = vsub.f32 %v2019, %v2020
    %v2022 = vand.u32 %v2021, 4294901760
    %2023 = vmatpush.msra.mxu0 %v2022
    %v2024 = vand.u32 %v875, 4294901760
    %v2025 = vsub.f32 %v875, %v2024
    %v2026 = vand.u32 %v2025, 4294901760
    %v2027 = vsub.f32 %v2025, %v2026
    %v2028 = vand.u32 %v2027, 4294901760
    %2029 = vmatpush.msra.mxu0 %v2028
    %v2030 = vand.u32 %v874, 4294901760
    %v2031 = vsub.f32 %v874, %v2030
    %v2032 = vand.u32 %v2031, 4294901760
    %v2033 = vsub.f32 %v2031, %v2032
    %v2034 = vand.u32 %v2033, 4294901760
    %2035 = vmatpush.msra.mxu0 %v2034
    %v2036 = vand.u32 %v873, 4294901760
    %v2037 = vsub.f32 %v873, %v2036
    %v2038 = vand.u32 %v2037, 4294901760
    %v2039 = vsub.f32 %v2037, %v2038
    %v2040 = vand.u32 %v2039, 4294901760
    %2041 = vmatpush.msra.mxu0 %v2040
    %v2042 = vand.u32 %v872, 4294901760
    %v2043 = vsub.f32 %v872, %v2042
    %v2044 = vand.u32 %v2043, 4294901760
    %v2045 = vsub.f32 %v2043, %v2044
    %v2046 = vand.u32 %v2045, 4294901760
    %2047 = vmatpush.msra.mxu0 %v2046
    %v2048 = vand.u32 %v871, 4294901760
    %v2049 = vsub.f32 %v871, %v2048
    %v2050 = vand.u32 %v2049, 4294901760
    %v2051 = vsub.f32 %v2049, %v2050
    %v2052 = vand.u32 %v2051, 4294901760
    %2053 = vmatpush.msra.mxu0 %v2052
    %v2054 = vand.u32 %v1653, 4294901760
    %2055 = vmatmul.f32.gmra.mxu0 %v2054
    %v2056 = vpop.f32.mrf.mxu0
    %v2057 = vadd.f32 %v1836, %v2056
    %v2058 = vand.u32 %v1657, 4294901760
    %2059 = vmatmul.f32.gmra.mxu0 %v2058
    %v2060 = vpop.f32.mrf.mxu0
    %v2061 = vadd.f32 %v1844, %v2060
    %v2062 = vand.u32 %v1661, 4294901760
    %2063 = vmatmul.f32.gmra.mxu0 %v2062
    %v2064 = vpop.f32.mrf.mxu0
    %v2065 = vadd.f32 %v1852, %v2064
    %v2066 = vand.u32 %v1665, 4294901760
    %2067 = vmatmul.f32.gmra.mxu0 %v2066
    %v2068 = vpop.f32.mrf.mxu0
    %v2069 = vadd.f32 %v1860, %v2068
    %v2070 = vand.u32 %v1669, 4294901760
    %2071 = vmatmul.f32.gmra.mxu0 %v2070
    %v2072 = vpop.f32.mrf.mxu0
    %v2073 = vadd.f32 %v1868, %v2072
    %v2074 = vand.u32 %v1673, 4294901760
    %2075 = vmatmul.f32.gmra.mxu0 %v2074
    %v2076 = vpop.f32.mrf.mxu0
    %v2077 = vadd.f32 %v1876, %v2076
    %v2078 = vand.u32 %v1677, 4294901760
    %2079 = vmatmul.f32.gmra.mxu0 %v2078
    %v2080 = vpop.f32.mrf.mxu0
    %v2081 = vadd.f32 %v1884, %v2080
    %v2082 = vand.u32 %v1681, 4294901760
    %2083 = vmatmul.f32.gmra.mxu0 %v2082
    %v2084 = vpop.f32.mrf.mxu0
    %v2085 = vadd.f32 %v1892, %v2084
    %v2086 = vand.u32 %v1685, 4294901760
    %2087 = vmatmul.f32.gmra.mxu0 %v2086
    %v2088 = vpop.f32.mrf.mxu0
    %v2089 = vadd.f32 %v1900, %v2088
    %v2090 = vand.u32 %v1689, 4294901760
    %2091 = vmatmul.f32.gmra.mxu0 %v2090
    %v2092 = vpop.f32.mrf.mxu0
    %v2093 = vadd.f32 %v1908, %v2092
    %v2094 = vand.u32 %v1693, 4294901760
    %2095 = vmatmul.f32.gmra.mxu0 %v2094
    %v2096 = vpop.f32.mrf.mxu0
    %v2097 = vadd.f32 %v1916, %v2096
    %v2098 = vand.u32 %v1697, 4294901760
    %2099 = vmatmul.f32.gmra.mxu0 %v2098
    %v2100 = vpop.f32.mrf.mxu0
    %v2101 = vadd.f32 %v1924, %v2100
    %v2102 = vand.u32 %v1701, 4294901760
    %2103 = vmatmul.f32.gmra.mxu0 %v2102
    %v2104 = vpop.f32.mrf.mxu0
    %v2105 = vadd.f32 %v1932, %v2104
    %v2106 = vand.u32 %v1705, 4294901760
    %2107 = vmatmul.f32.gmra.mxu0 %v2106
    %v2108 = vpop.f32.mrf.mxu0
    %v2109 = vadd.f32 %v1940, %v2108
    %v2110 = vand.u32 %v1709, 4294901760
    %2111 = vmatmul.f32.gmra.mxu0 %v2110
    %v2112 = vpop.f32.mrf.mxu0
    %v2113 = vadd.f32 %v1948, %v2112
    %v2114 = vand.u32 %v1713, 4294901760
    %2115 = vmatmul.f32.gmra.mxu0 %v2114
    %v2116 = vpop.f32.mrf.mxu0
    %v2117 = vadd.f32 %v1956, %v2116
    %2118 = vdwg.mxu0
    %v2119 = vand.u32 %v886, 4294901760
    %v2120 = vsub.f32 %v886, %v2119
    %2121 = vmatpush.msra.mxu0 %v2120
    %v2122 = vand.u32 %v885, 4294901760
    %v2123 = vsub.f32 %v885, %v2122
    %2124 = vmatpush.msra.mxu0 %v2123
    %v2125 = vand.u32 %v884, 4294901760
    %v2126 = vsub.f32 %v884, %v2125
    %2127 = vmatpush.msra.mxu0 %v2126
    %v2128 = vand.u32 %v883, 4294901760
    %v2129 = vsub.f32 %v883, %v2128
    %2130 = vmatpush.msra.mxu0 %v2129
    %v2131 = vand.u32 %v882, 4294901760
    %v2132 = vsub.f32 %v882, %v2131
    %2133 = vmatpush.msra.mxu0 %v2132
    %v2134 = vand.u32 %v881, 4294901760
    %v2135 = vsub.f32 %v881, %v2134
    %2136 = vmatpush.msra.mxu0 %v2135
    %v2137 = vand.u32 %v880, 4294901760
    %v2138 = vsub.f32 %v880, %v2137
    %2139 = vmatpush.msra.mxu0 %v2138
    %v2140 = vand.u32 %v879, 4294901760
    %v2141 = vsub.f32 %v879, %v2140
    %2142 = vmatpush.msra.mxu0 %v2141
    %v2143 = vand.u32 %v878, 4294901760
    %v2144 = vsub.f32 %v878, %v2143
    %2145 = vmatpush.msra.mxu0 %v2144
    %v2146 = vand.u32 %v877, 4294901760
    %v2147 = vsub.f32 %v877, %v2146
    %2148 = vmatpush.msra.mxu0 %v2147
    %v2149 = vand.u32 %v876, 4294901760
    %v2150 = vsub.f32 %v876, %v2149
    %2151 = vmatpush.msra.mxu0 %v2150
    %v2152 = vand.u32 %v875, 4294901760
    %v2153 = vsub.f32 %v875, %v2152
    %2154 = vmatpush.msra.mxu0 %v2153
    %v2155 = vand.u32 %v874, 4294901760
    %v2156 = vsub.f32 %v874, %v2155
    %2157 = vmatpush.msra.mxu0 %v2156
    %v2158 = vand.u32 %v873, 4294901760
    %v2159 = vsub.f32 %v873, %v2158
    %2160 = vmatpush.msra.mxu0 %v2159
    %v2161 = vand.u32 %v872, 4294901760
    %v2162 = vsub.f32 %v872, %v2161
    %2163 = vmatpush.msra.mxu0 %v2162
    %v2164 = vand.u32 %v871, 4294901760
    %v2165 = vsub.f32 %v871, %v2164
    %2166 = vmatpush.msra.mxu0 %v2165
    %v2167 = vand.u32 %v1653, 4294901760
    %v2168 = vsub.f32 %v1653, %v2167
    %2169 = vmatmul.f32.gmra.mxu0 %v2168
    %v2170 = vpop.f32.mrf.mxu0
    %v2171 = vadd.f32 %v2057, %v2170
    %v2172 = vand.u32 %v1657, 4294901760
    %v2173 = vsub.f32 %v1657, %v2172
    %2174 = vmatmul.f32.gmra.mxu0 %v2173
    %v2175 = vpop.f32.mrf.mxu0
    %v2176 = vadd.f32 %v2061, %v2175
    %v2177 = vand.u32 %v1661, 4294901760
    %v2178 = vsub.f32 %v1661, %v2177
    %2179 = vmatmul.f32.gmra.mxu0 %v2178
    %v2180 = vpop.f32.mrf.mxu0
    %v2181 = vadd.f32 %v2065, %v2180
    %v2182 = vand.u32 %v1665, 4294901760
    %v2183 = vsub.f32 %v1665, %v2182
    %2184 = vmatmul.f32.gmra.mxu0 %v2183
    %v2185 = vpop.f32.mrf.mxu0
    %v2186 = vadd.f32 %v2069, %v2185
    %v2187 = vand.u32 %v1669, 4294901760
    %v2188 = vsub.f32 %v1669, %v2187
    %2189 = vmatmul.f32.gmra.mxu0 %v2188
    %v2190 = vpop.f32.mrf.mxu0
    %v2191 = vadd.f32 %v2073, %v2190
    %v2192 = vand.u32 %v1673, 4294901760
    %v2193 = vsub.f32 %v1673, %v2192
    %2194 = vmatmul.f32.gmra.mxu0 %v2193
    %v2195 = vpop.f32.mrf.mxu0
    %v2196 = vadd.f32 %v2077, %v2195
    %v2197 = vand.u32 %v1677, 4294901760
    %v2198 = vsub.f32 %v1677, %v2197
    %2199 = vmatmul.f32.gmra.mxu0 %v2198
    %v2200 = vpop.f32.mrf.mxu0
    %v2201 = vadd.f32 %v2081, %v2200
    %v2202 = vand.u32 %v1681, 4294901760
    %v2203 = vsub.f32 %v1681, %v2202
    %2204 = vmatmul.f32.gmra.mxu0 %v2203
    %v2205 = vpop.f32.mrf.mxu0
    %v2206 = vadd.f32 %v2085, %v2205
    %v2207 = vand.u32 %v1685, 4294901760
    %v2208 = vsub.f32 %v1685, %v2207
    %2209 = vmatmul.f32.gmra.mxu0 %v2208
    %v2210 = vpop.f32.mrf.mxu0
    %v2211 = vadd.f32 %v2089, %v2210
    %v2212 = vand.u32 %v1689, 4294901760
    %v2213 = vsub.f32 %v1689, %v2212
    %2214 = vmatmul.f32.gmra.mxu0 %v2213
    %v2215 = vpop.f32.mrf.mxu0
    %v2216 = vadd.f32 %v2093, %v2215
    %v2217 = vand.u32 %v1693, 4294901760
    %v2218 = vsub.f32 %v1693, %v2217
    %2219 = vmatmul.f32.gmra.mxu0 %v2218
    %v2220 = vpop.f32.mrf.mxu0
    %v2221 = vadd.f32 %v2097, %v2220
    %v2222 = vand.u32 %v1697, 4294901760
    %v2223 = vsub.f32 %v1697, %v2222
    %2224 = vmatmul.f32.gmra.mxu0 %v2223
    %v2225 = vpop.f32.mrf.mxu0
    %v2226 = vadd.f32 %v2101, %v2225
    %v2227 = vand.u32 %v1701, 4294901760
    %v2228 = vsub.f32 %v1701, %v2227
    %2229 = vmatmul.f32.gmra.mxu0 %v2228
    %v2230 = vpop.f32.mrf.mxu0
    %v2231 = vadd.f32 %v2105, %v2230
    %v2232 = vand.u32 %v1705, 4294901760
    %v2233 = vsub.f32 %v1705, %v2232
    %2234 = vmatmul.f32.gmra.mxu0 %v2233
    %v2235 = vpop.f32.mrf.mxu0
    %v2236 = vadd.f32 %v2109, %v2235
    %v2237 = vand.u32 %v1709, 4294901760
    %v2238 = vsub.f32 %v1709, %v2237
    %2239 = vmatmul.f32.gmra.mxu0 %v2238
    %v2240 = vpop.f32.mrf.mxu0
    %v2241 = vadd.f32 %v2113, %v2240
    %v2242 = vand.u32 %v1713, 4294901760
    %v2243 = vsub.f32 %v1713, %v2242
    %2244 = vmatmul.f32.gmra.mxu0 %v2243
    %v2245 = vpop.f32.mrf.mxu0
    %v2246 = vadd.f32 %v2117, %v2245
    %2247 = vdwg.mxu0
    %v2248 = vand.u32 %v886, 4294901760
    %2249 = vmatpush.msra.mxu0 %v2248
    %v2250 = vand.u32 %v885, 4294901760
    %2251 = vmatpush.msra.mxu0 %v2250
    %v2252 = vand.u32 %v884, 4294901760
    %2253 = vmatpush.msra.mxu0 %v2252
    %v2254 = vand.u32 %v883, 4294901760
    %2255 = vmatpush.msra.mxu0 %v2254
    %v2256 = vand.u32 %v882, 4294901760
    %2257 = vmatpush.msra.mxu0 %v2256
    %v2258 = vand.u32 %v881, 4294901760
    %2259 = vmatpush.msra.mxu0 %v2258
    %v2260 = vand.u32 %v880, 4294901760
    %2261 = vmatpush.msra.mxu0 %v2260
    %v2262 = vand.u32 %v879, 4294901760
    %2263 = vmatpush.msra.mxu0 %v2262
    %v2264 = vand.u32 %v878, 4294901760
    %2265 = vmatpush.msra.mxu0 %v2264
    %v2266 = vand.u32 %v877, 4294901760
    %2267 = vmatpush.msra.mxu0 %v2266
    %v2268 = vand.u32 %v876, 4294901760
    %2269 = vmatpush.msra.mxu0 %v2268
    %v2270 = vand.u32 %v875, 4294901760
    %2271 = vmatpush.msra.mxu0 %v2270
    %v2272 = vand.u32 %v874, 4294901760
    %2273 = vmatpush.msra.mxu0 %v2272
    %v2274 = vand.u32 %v873, 4294901760
    %2275 = vmatpush.msra.mxu0 %v2274
    %v2276 = vand.u32 %v872, 4294901760
    %2277 = vmatpush.msra.mxu0 %v2276
    %v2278 = vand.u32 %v871, 4294901760
    %2279 = vmatpush.msra.mxu0 %v2278
    %v2280 = vand.u32 %v1653, 4294901760
    %v2281 = vsub.f32 %v1653, %v2280
    %v2282 = vand.u32 %v2281, 4294901760
    %2283 = vmatmul.f32.gmra.mxu0 %v2282
    %v2284 = vpop.f32.mrf.mxu0
    %v2285 = vadd.f32 %v2171, %v2284
    %v2286 = vand.u32 %v1657, 4294901760
    %v2287 = vsub.f32 %v1657, %v2286
    %v2288 = vand.u32 %v2287, 4294901760
    %2289 = vmatmul.f32.gmra.mxu0 %v2288
    %v2290 = vpop.f32.mrf.mxu0
    %v2291 = vadd.f32 %v2176, %v2290
    %v2292 = vand.u32 %v1661, 4294901760
    %v2293 = vsub.f32 %v1661, %v2292
    %v2294 = vand.u32 %v2293, 4294901760
    %2295 = vmatmul.f32.gmra.mxu0 %v2294
    %v2296 = vpop.f32.mrf.mxu0
    %v2297 = vadd.f32 %v2181, %v2296
    %v2298 = vand.u32 %v1665, 4294901760
    %v2299 = vsub.f32 %v1665, %v2298
    %v2300 = vand.u32 %v2299, 4294901760
    %2301 = vmatmul.f32.gmra.mxu0 %v2300
    %v2302 = vpop.f32.mrf.mxu0
    %v2303 = vadd.f32 %v2186, %v2302
    %v2304 = vand.u32 %v1669, 4294901760
    %v2305 = vsub.f32 %v1669, %v2304
    %v2306 = vand.u32 %v2305, 4294901760
    %2307 = vmatmul.f32.gmra.mxu0 %v2306
    %v2308 = vpop.f32.mrf.mxu0
    %v2309 = vadd.f32 %v2191, %v2308
    %v2310 = vand.u32 %v1673, 4294901760
    %v2311 = vsub.f32 %v1673, %v2310
    %v2312 = vand.u32 %v2311, 4294901760
    %2313 = vmatmul.f32.gmra.mxu0 %v2312
    %v2314 = vpop.f32.mrf.mxu0
    %v2315 = vadd.f32 %v2196, %v2314
    %v2316 = vand.u32 %v1677, 4294901760
    %v2317 = vsub.f32 %v1677, %v2316
    %v2318 = vand.u32 %v2317, 4294901760
    %2319 = vmatmul.f32.gmra.mxu0 %v2318
    %v2320 = vpop.f32.mrf.mxu0
    %v2321 = vadd.f32 %v2201, %v2320
    %v2322 = vand.u32 %v1681, 4294901760
    %v2323 = vsub.f32 %v1681, %v2322
    %v2324 = vand.u32 %v2323, 4294901760
    %2325 = vmatmul.f32.gmra.mxu0 %v2324
    %v2326 = vpop.f32.mrf.mxu0
    %v2327 = vadd.f32 %v2206, %v2326
    %v2328 = vand.u32 %v1685, 4294901760
    %v2329 = vsub.f32 %v1685, %v2328
    %v2330 = vand.u32 %v2329, 4294901760
    %2331 = vmatmul.f32.gmra.mxu0 %v2330
    %v2332 = vpop.f32.mrf.mxu0
    %v2333 = vadd.f32 %v2211, %v2332
    %v2334 = vand.u32 %v1689, 4294901760
    %v2335 = vsub.f32 %v1689, %v2334
    %v2336 = vand.u32 %v2335, 4294901760
    %2337 = vmatmul.f32.gmra.mxu0 %v2336
    %v2338 = vpop.f32.mrf.mxu0
    %v2339 = vadd.f32 %v2216, %v2338
    %v2340 = vand.u32 %v1693, 4294901760
    %v2341 = vsub.f32 %v1693, %v2340
    %v2342 = vand.u32 %v2341, 4294901760
    %2343 = vmatmul.f32.gmra.mxu0 %v2342
    %v2344 = vpop.f32.mrf.mxu0
    %v2345 = vadd.f32 %v2221, %v2344
    %v2346 = vand.u32 %v1697, 4294901760
    %v2347 = vsub.f32 %v1697, %v2346
    %v2348 = vand.u32 %v2347, 4294901760
    %2349 = vmatmul.f32.gmra.mxu0 %v2348
    %v2350 = vpop.f32.mrf.mxu0
    %v2351 = vadd.f32 %v2226, %v2350
    %v2352 = vand.u32 %v1701, 4294901760
    %v2353 = vsub.f32 %v1701, %v2352
    %v2354 = vand.u32 %v2353, 4294901760
    %2355 = vmatmul.f32.gmra.mxu0 %v2354
    %v2356 = vpop.f32.mrf.mxu0
    %v2357 = vadd.f32 %v2231, %v2356
    %v2358 = vand.u32 %v1705, 4294901760
    %v2359 = vsub.f32 %v1705, %v2358
    %v2360 = vand.u32 %v2359, 4294901760
    %2361 = vmatmul.f32.gmra.mxu0 %v2360
    %v2362 = vpop.f32.mrf.mxu0
    %v2363 = vadd.f32 %v2236, %v2362
    %v2364 = vand.u32 %v1709, 4294901760
    %v2365 = vsub.f32 %v1709, %v2364
    %v2366 = vand.u32 %v2365, 4294901760
    %2367 = vmatmul.f32.gmra.mxu0 %v2366
    %v2368 = vpop.f32.mrf.mxu0
    %v2369 = vadd.f32 %v2241, %v2368
    %v2370 = vand.u32 %v1713, 4294901760
    %v2371 = vsub.f32 %v1713, %v2370
    %v2372 = vand.u32 %v2371, 4294901760
    %2373 = vmatmul.f32.gmra.mxu0 %v2372
    %v2374 = vpop.f32.mrf.mxu0
    %v2375 = vadd.f32 %v2246, %v2374
    %2376 = vdwg.mxu0
    %v2377 = vand.u32 %v886, 4294901760
    %v2378 = vsub.f32 %v886, %v2377
    %v2379 = vand.u32 %v2378, 4294901760
    %2380 = vmatpush.msra.mxu0 %v2379
    %v2381 = vand.u32 %v885, 4294901760
    %v2382 = vsub.f32 %v885, %v2381
    %v2383 = vand.u32 %v2382, 4294901760
    %2384 = vmatpush.msra.mxu0 %v2383
    %v2385 = vand.u32 %v884, 4294901760
    %v2386 = vsub.f32 %v884, %v2385
    %v2387 = vand.u32 %v2386, 4294901760
    %2388 = vmatpush.msra.mxu0 %v2387
    %v2389 = vand.u32 %v883, 4294901760
    %v2390 = vsub.f32 %v883, %v2389
    %v2391 = vand.u32 %v2390, 4294901760
    %2392 = vmatpush.msra.mxu0 %v2391
    %v2393 = vand.u32 %v882, 4294901760
    %v2394 = vsub.f32 %v882, %v2393
    %v2395 = vand.u32 %v2394, 4294901760
    %2396 = vmatpush.msra.mxu0 %v2395
    %v2397 = vand.u32 %v881, 4294901760
    %v2398 = vsub.f32 %v881, %v2397
    %v2399 = vand.u32 %v2398, 4294901760
    %2400 = vmatpush.msra.mxu0 %v2399
    %v2401 = vand.u32 %v880, 4294901760
    %v2402 = vsub.f32 %v880, %v2401
    %v2403 = vand.u32 %v2402, 4294901760
    %2404 = vmatpush.msra.mxu0 %v2403
    %v2405 = vand.u32 %v879, 4294901760
    %v2406 = vsub.f32 %v879, %v2405
    %v2407 = vand.u32 %v2406, 4294901760
    %2408 = vmatpush.msra.mxu0 %v2407
    %v2409 = vand.u32 %v878, 4294901760
    %v2410 = vsub.f32 %v878, %v2409
    %v2411 = vand.u32 %v2410, 4294901760
    %2412 = vmatpush.msra.mxu0 %v2411
    %v2413 = vand.u32 %v877, 4294901760
    %v2414 = vsub.f32 %v877, %v2413
    %v2415 = vand.u32 %v2414, 4294901760
    %2416 = vmatpush.msra.mxu0 %v2415
    %v2417 = vand.u32 %v876, 4294901760
    %v2418 = vsub.f32 %v876, %v2417
    %v2419 = vand.u32 %v2418, 4294901760
    %2420 = vmatpush.msra.mxu0 %v2419
    %v2421 = vand.u32 %v875, 4294901760
    %v2422 = vsub.f32 %v875, %v2421
    %v2423 = vand.u32 %v2422, 4294901760
    %2424 = vmatpush.msra.mxu0 %v2423
    %v2425 = vand.u32 %v874, 4294901760
    %v2426 = vsub.f32 %v874, %v2425
    %v2427 = vand.u32 %v2426, 4294901760
    %2428 = vmatpush.msra.mxu0 %v2427
    %v2429 = vand.u32 %v873, 4294901760
    %v2430 = vsub.f32 %v873, %v2429
    %v2431 = vand.u32 %v2430, 4294901760
    %2432 = vmatpush.msra.mxu0 %v2431
    %v2433 = vand.u32 %v872, 4294901760
    %v2434 = vsub.f32 %v872, %v2433
    %v2435 = vand.u32 %v2434, 4294901760
    %2436 = vmatpush.msra.mxu0 %v2435
    %v2437 = vand.u32 %v871, 4294901760
    %v2438 = vsub.f32 %v871, %v2437
    %v2439 = vand.u32 %v2438, 4294901760
    %2440 = vmatpush.msra.mxu0 %v2439
    %v2441 = vand.u32 %v1653, 4294901760
    %2442 = vmatmul.f32.gmra.mxu0 %v2441
    %v2443 = vpop.f32.mrf.mxu0
    %v2444 = vadd.f32 %v2285, %v2443
    %v2445 = vand.u32 %v1657, 4294901760
    %2446 = vmatmul.f32.gmra.mxu0 %v2445
    %v2447 = vpop.f32.mrf.mxu0
    %v2448 = vadd.f32 %v2291, %v2447
    %v2449 = vand.u32 %v1661, 4294901760
    %2450 = vmatmul.f32.gmra.mxu0 %v2449
    %v2451 = vpop.f32.mrf.mxu0
    %v2452 = vadd.f32 %v2297, %v2451
    %v2453 = vand.u32 %v1665, 4294901760
    %2454 = vmatmul.f32.gmra.mxu0 %v2453
    %v2455 = vpop.f32.mrf.mxu0
    %v2456 = vadd.f32 %v2303, %v2455
    %v2457 = vand.u32 %v1669, 4294901760
    %2458 = vmatmul.f32.gmra.mxu0 %v2457
    %v2459 = vpop.f32.mrf.mxu0
    %v2460 = vadd.f32 %v2309, %v2459
    %v2461 = vand.u32 %v1673, 4294901760
    %2462 = vmatmul.f32.gmra.mxu0 %v2461
    %v2463 = vpop.f32.mrf.mxu0
    %v2464 = vadd.f32 %v2315, %v2463
    %v2465 = vand.u32 %v1677, 4294901760
    %2466 = vmatmul.f32.gmra.mxu0 %v2465
    %v2467 = vpop.f32.mrf.mxu0
    %v2468 = vadd.f32 %v2321, %v2467
    %v2469 = vand.u32 %v1681, 4294901760
    %2470 = vmatmul.f32.gmra.mxu0 %v2469
    %v2471 = vpop.f32.mrf.mxu0
    %v2472 = vadd.f32 %v2327, %v2471
    %v2473 = vand.u32 %v1685, 4294901760
    %2474 = vmatmul.f32.gmra.mxu0 %v2473
    %v2475 = vpop.f32.mrf.mxu0
    %v2476 = vadd.f32 %v2333, %v2475
    %v2477 = vand.u32 %v1689, 4294901760
    %2478 = vmatmul.f32.gmra.mxu0 %v2477
    %v2479 = vpop.f32.mrf.mxu0
    %v2480 = vadd.f32 %v2339, %v2479
    %v2481 = vand.u32 %v1693, 4294901760
    %2482 = vmatmul.f32.gmra.mxu0 %v2481
    %v2483 = vpop.f32.mrf.mxu0
    %v2484 = vadd.f32 %v2345, %v2483
    %v2485 = vand.u32 %v1697, 4294901760
    %2486 = vmatmul.f32.gmra.mxu0 %v2485
    %v2487 = vpop.f32.mrf.mxu0
    %v2488 = vadd.f32 %v2351, %v2487
    %v2489 = vand.u32 %v1701, 4294901760
    %2490 = vmatmul.f32.gmra.mxu0 %v2489
    %v2491 = vpop.f32.mrf.mxu0
    %v2492 = vadd.f32 %v2357, %v2491
    %v2493 = vand.u32 %v1705, 4294901760
    %2494 = vmatmul.f32.gmra.mxu0 %v2493
    %v2495 = vpop.f32.mrf.mxu0
    %v2496 = vadd.f32 %v2363, %v2495
    %v2497 = vand.u32 %v1709, 4294901760
    %2498 = vmatmul.f32.gmra.mxu0 %v2497
    %v2499 = vpop.f32.mrf.mxu0
    %v2500 = vadd.f32 %v2369, %v2499
    %v2501 = vand.u32 %v1713, 4294901760
    %2502 = vmatmul.f32.gmra.mxu0 %v2501
    %v2503 = vpop.f32.mrf.mxu0
    %v2504 = vadd.f32 %v2375, %v2503
    %2505 = vdwg.mxu0
    %v2506 = vand.u32 %v886, 4294901760
    %2507 = vmatpush.msra.mxu0 %v2506
    %v2508 = vand.u32 %v885, 4294901760
    %2509 = vmatpush.msra.mxu0 %v2508
    %v2510 = vand.u32 %v884, 4294901760
    %2511 = vmatpush.msra.mxu0 %v2510
    %v2512 = vand.u32 %v883, 4294901760
    %2513 = vmatpush.msra.mxu0 %v2512
    %v2514 = vand.u32 %v882, 4294901760
    %2515 = vmatpush.msra.mxu0 %v2514
    %v2516 = vand.u32 %v881, 4294901760
    %2517 = vmatpush.msra.mxu0 %v2516
    %v2518 = vand.u32 %v880, 4294901760
    %2519 = vmatpush.msra.mxu0 %v2518
    %v2520 = vand.u32 %v879, 4294901760
    %2521 = vmatpush.msra.mxu0 %v2520
    %v2522 = vand.u32 %v878, 4294901760
    %2523 = vmatpush.msra.mxu0 %v2522
    %v2524 = vand.u32 %v877, 4294901760
    %2525 = vmatpush.msra.mxu0 %v2524
    %v2526 = vand.u32 %v876, 4294901760
    %2527 = vmatpush.msra.mxu0 %v2526
    %v2528 = vand.u32 %v875, 4294901760
    %2529 = vmatpush.msra.mxu0 %v2528
    %v2530 = vand.u32 %v874, 4294901760
    %2531 = vmatpush.msra.mxu0 %v2530
    %v2532 = vand.u32 %v873, 4294901760
    %2533 = vmatpush.msra.mxu0 %v2532
    %v2534 = vand.u32 %v872, 4294901760
    %2535 = vmatpush.msra.mxu0 %v2534
    %v2536 = vand.u32 %v871, 4294901760
    %2537 = vmatpush.msra.mxu0 %v2536
    %v2538 = vand.u32 %v1653, 4294901760
    %2539 = vmatmul.f32.gmra.mxu0 %v2538
    %v2540 = vpop.f32.mrf.mxu0
    %v2541 = vadd.f32 %v2444, %v2540
    %v2542 = vand.u32 %v1657, 4294901760
    %2543 = vmatmul.f32.gmra.mxu0 %v2542
    %v2544 = vpop.f32.mrf.mxu0
    %v2545 = vadd.f32 %v2448, %v2544
    %v2546 = vand.u32 %v1661, 4294901760
    %2547 = vmatmul.f32.gmra.mxu0 %v2546
    %v2548 = vpop.f32.mrf.mxu0
    %v2549 = vadd.f32 %v2452, %v2548
    %v2550 = vand.u32 %v1665, 4294901760
    %2551 = vmatmul.f32.gmra.mxu0 %v2550
    %v2552 = vpop.f32.mrf.mxu0
    %v2553 = vadd.f32 %v2456, %v2552
    %v2554 = vand.u32 %v1669, 4294901760
    %2555 = vmatmul.f32.gmra.mxu0 %v2554
    %v2556 = vpop.f32.mrf.mxu0
    %v2557 = vadd.f32 %v2460, %v2556
    %v2558 = vand.u32 %v1673, 4294901760
    %2559 = vmatmul.f32.gmra.mxu0 %v2558
    %v2560 = vpop.f32.mrf.mxu0
    %v2561 = vadd.f32 %v2464, %v2560
    %v2562 = vand.u32 %v1677, 4294901760
    %2563 = vmatmul.f32.gmra.mxu0 %v2562
    %v2564 = vpop.f32.mrf.mxu0
    %v2565 = vadd.f32 %v2468, %v2564
    %v2566 = vand.u32 %v1681, 4294901760
    %2567 = vmatmul.f32.gmra.mxu0 %v2566
    %v2568 = vpop.f32.mrf.mxu0
    %v2569 = vadd.f32 %v2472, %v2568
    %v2570 = vand.u32 %v1685, 4294901760
    %2571 = vmatmul.f32.gmra.mxu0 %v2570
    %v2572 = vpop.f32.mrf.mxu0
    %v2573 = vadd.f32 %v2476, %v2572
    %v2574 = vand.u32 %v1689, 4294901760
    %2575 = vmatmul.f32.gmra.mxu0 %v2574
    %v2576 = vpop.f32.mrf.mxu0
    %v2577 = vadd.f32 %v2480, %v2576
    %v2578 = vand.u32 %v1693, 4294901760
    %2579 = vmatmul.f32.gmra.mxu0 %v2578
    %v2580 = vpop.f32.mrf.mxu0
    %v2581 = vadd.f32 %v2484, %v2580
    %v2582 = vand.u32 %v1697, 4294901760
    %2583 = vmatmul.f32.gmra.mxu0 %v2582
    %v2584 = vpop.f32.mrf.mxu0
    %v2585 = vadd.f32 %v2488, %v2584
    %v2586 = vand.u32 %v1701, 4294901760
    %2587 = vmatmul.f32.gmra.mxu0 %v2586
    %v2588 = vpop.f32.mrf.mxu0
    %v2589 = vadd.f32 %v2492, %v2588
    %v2590 = vand.u32 %v1705, 4294901760
    %2591 = vmatmul.f32.gmra.mxu0 %v2590
    %v2592 = vpop.f32.mrf.mxu0
    %v2593 = vadd.f32 %v2496, %v2592
    %v2594 = vand.u32 %v1709, 4294901760
    %2595 = vmatmul.f32.gmra.mxu0 %v2594
    %v2596 = vpop.f32.mrf.mxu0
    %v2597 = vadd.f32 %v2500, %v2596
    %v2598 = vand.u32 %v1713, 4294901760
    %2599 = vmatmul.f32.gmra.mxu0 %v2598
    %v2600 = vpop.f32.mrf.mxu0
    %v2601 = vadd.f32 %v2504, %v2600
    %2602 = vdwg.mxu0
    %v2603 = vand.u32 %v902, 4294901760
    %2604 = vmatpush.msra.mxu0 %v2603
    %v2605 = vand.u32 %v901, 4294901760
    %2606 = vmatpush.msra.mxu0 %v2605
    %v2607 = vand.u32 %v900, 4294901760
    %2608 = vmatpush.msra.mxu0 %v2607
    %v2609 = vand.u32 %v899, 4294901760
    %2610 = vmatpush.msra.mxu0 %v2609
    %v2611 = vand.u32 %v898, 4294901760
    %2612 = vmatpush.msra.mxu0 %v2611
    %v2613 = vand.u32 %v897, 4294901760
    %2614 = vmatpush.msra.mxu0 %v2613
    %v2615 = vand.u32 %v896, 4294901760
    %2616 = vmatpush.msra.mxu0 %v2615
    %v2617 = vand.u32 %v895, 4294901760
    %2618 = vmatpush.msra.mxu0 %v2617
    %v2619 = vand.u32 %v894, 4294901760
    %2620 = vmatpush.msra.mxu0 %v2619
    %v2621 = vand.u32 %v893, 4294901760
    %2622 = vmatpush.msra.mxu0 %v2621
    %v2623 = vand.u32 %v892, 4294901760
    %2624 = vmatpush.msra.mxu0 %v2623
    %v2625 = vand.u32 %v891, 4294901760
    %2626 = vmatpush.msra.mxu0 %v2625
    %v2627 = vand.u32 %v890, 4294901760
    %2628 = vmatpush.msra.mxu0 %v2627
    %v2629 = vand.u32 %v889, 4294901760
    %2630 = vmatpush.msra.mxu0 %v2629
    %v2631 = vand.u32 %v888, 4294901760
    %2632 = vmatpush.msra.mxu0 %v2631
    %v2633 = vand.u32 %v887, 4294901760
    %2634 = vmatpush.msra.mxu0 %v2633
    %v2635 = vand.u32 %v1654, 4294901760
    %v2636 = vsub.f32 %v1654, %v2635
    %v2637 = vand.u32 %v2636, 4294901760
    %v2638 = vsub.f32 %v2636, %v2637
    %v2639 = vand.u32 %v2638, 4294901760
    %2640 = vmatmul.f32.gmra.mxu0 %v2639
    %v2641 = vpop.f32.mrf.mxu0
    %v2642 = vadd.f32 %v2541, %v2641
    %v2643 = vand.u32 %v1658, 4294901760
    %v2644 = vsub.f32 %v1658, %v2643
    %v2645 = vand.u32 %v2644, 4294901760
    %v2646 = vsub.f32 %v2644, %v2645
    %v2647 = vand.u32 %v2646, 4294901760
    %2648 = vmatmul.f32.gmra.mxu0 %v2647
    %v2649 = vpop.f32.mrf.mxu0
    %v2650 = vadd.f32 %v2545, %v2649
    %v2651 = vand.u32 %v1662, 4294901760
    %v2652 = vsub.f32 %v1662, %v2651
    %v2653 = vand.u32 %v2652, 4294901760
    %v2654 = vsub.f32 %v2652, %v2653
    %v2655 = vand.u32 %v2654, 4294901760
    %2656 = vmatmul.f32.gmra.mxu0 %v2655
    %v2657 = vpop.f32.mrf.mxu0
    %v2658 = vadd.f32 %v2549, %v2657
    %v2659 = vand.u32 %v1666, 4294901760
    %v2660 = vsub.f32 %v1666, %v2659
    %v2661 = vand.u32 %v2660, 4294901760
    %v2662 = vsub.f32 %v2660, %v2661
    %v2663 = vand.u32 %v2662, 4294901760
    %2664 = vmatmul.f32.gmra.mxu0 %v2663
    %v2665 = vpop.f32.mrf.mxu0
    %v2666 = vadd.f32 %v2553, %v2665
    %v2667 = vand.u32 %v1670, 4294901760
    %v2668 = vsub.f32 %v1670, %v2667
    %v2669 = vand.u32 %v2668, 4294901760
    %v2670 = vsub.f32 %v2668, %v2669
    %v2671 = vand.u32 %v2670, 4294901760
    %2672 = vmatmul.f32.gmra.mxu0 %v2671
    %v2673 = vpop.f32.mrf.mxu0
    %v2674 = vadd.f32 %v2557, %v2673
    %v2675 = vand.u32 %v1674, 4294901760
    %v2676 = vsub.f32 %v1674, %v2675
    %v2677 = vand.u32 %v2676, 4294901760
    %v2678 = vsub.f32 %v2676, %v2677
    %v2679 = vand.u32 %v2678, 4294901760
    %2680 = vmatmul.f32.gmra.mxu0 %v2679
    %v2681 = vpop.f32.mrf.mxu0
    %v2682 = vadd.f32 %v2561, %v2681
    %v2683 = vand.u32 %v1678, 4294901760
    %v2684 = vsub.f32 %v1678, %v2683
    %v2685 = vand.u32 %v2684, 4294901760
    %v2686 = vsub.f32 %v2684, %v2685
    %v2687 = vand.u32 %v2686, 4294901760
    %2688 = vmatmul.f32.gmra.mxu0 %v2687
    %v2689 = vpop.f32.mrf.mxu0
    %v2690 = vadd.f32 %v2565, %v2689
    %v2691 = vand.u32 %v1682, 4294901760
    %v2692 = vsub.f32 %v1682, %v2691
    %v2693 = vand.u32 %v2692, 4294901760
    %v2694 = vsub.f32 %v2692, %v2693
    %v2695 = vand.u32 %v2694, 4294901760
    %2696 = vmatmul.f32.gmra.mxu0 %v2695
    %v2697 = vpop.f32.mrf.mxu0
    %v2698 = vadd.f32 %v2569, %v2697
    %v2699 = vand.u32 %v1686, 4294901760
    %v2700 = vsub.f32 %v1686, %v2699
    %v2701 = vand.u32 %v2700, 4294901760
    %v2702 = vsub.f32 %v2700, %v2701
    %v2703 = vand.u32 %v2702, 4294901760
    %2704 = vmatmul.f32.gmra.mxu0 %v2703
    %v2705 = vpop.f32.mrf.mxu0
    %v2706 = vadd.f32 %v2573, %v2705
    %v2707 = vand.u32 %v1690, 4294901760
    %v2708 = vsub.f32 %v1690, %v2707
    %v2709 = vand.u32 %v2708, 4294901760
    %v2710 = vsub.f32 %v2708, %v2709
    %v2711 = vand.u32 %v2710, 4294901760
    %2712 = vmatmul.f32.gmra.mxu0 %v2711
    %v2713 = vpop.f32.mrf.mxu0
    %v2714 = vadd.f32 %v2577, %v2713
    %v2715 = vand.u32 %v1694, 4294901760
    %v2716 = vsub.f32 %v1694, %v2715
    %v2717 = vand.u32 %v2716, 4294901760
    %v2718 = vsub.f32 %v2716, %v2717
    %v2719 = vand.u32 %v2718, 4294901760
    %2720 = vmatmul.f32.gmra.mxu0 %v2719
    %v2721 = vpop.f32.mrf.mxu0
    %v2722 = vadd.f32 %v2581, %v2721
    %v2723 = vand.u32 %v1698, 4294901760
    %v2724 = vsub.f32 %v1698, %v2723
    %v2725 = vand.u32 %v2724, 4294901760
    %v2726 = vsub.f32 %v2724, %v2725
    %v2727 = vand.u32 %v2726, 4294901760
    %2728 = vmatmul.f32.gmra.mxu0 %v2727
    %v2729 = vpop.f32.mrf.mxu0
    %v2730 = vadd.f32 %v2585, %v2729
    %v2731 = vand.u32 %v1702, 4294901760
    %v2732 = vsub.f32 %v1702, %v2731
    %v2733 = vand.u32 %v2732, 4294901760
    %v2734 = vsub.f32 %v2732, %v2733
    %v2735 = vand.u32 %v2734, 4294901760
    %2736 = vmatmul.f32.gmra.mxu0 %v2735
    %v2737 = vpop.f32.mrf.mxu0
    %v2738 = vadd.f32 %v2589, %v2737
    %v2739 = vand.u32 %v1706, 4294901760
    %v2740 = vsub.f32 %v1706, %v2739
    %v2741 = vand.u32 %v2740, 4294901760
    %v2742 = vsub.f32 %v2740, %v2741
    %v2743 = vand.u32 %v2742, 4294901760
    %2744 = vmatmul.f32.gmra.mxu0 %v2743
    %v2745 = vpop.f32.mrf.mxu0
    %v2746 = vadd.f32 %v2593, %v2745
    %v2747 = vand.u32 %v1710, 4294901760
    %v2748 = vsub.f32 %v1710, %v2747
    %v2749 = vand.u32 %v2748, 4294901760
    %v2750 = vsub.f32 %v2748, %v2749
    %v2751 = vand.u32 %v2750, 4294901760
    %2752 = vmatmul.f32.gmra.mxu0 %v2751
    %v2753 = vpop.f32.mrf.mxu0
    %v2754 = vadd.f32 %v2597, %v2753
    %v2755 = vand.u32 %v1714, 4294901760
    %v2756 = vsub.f32 %v1714, %v2755
    %v2757 = vand.u32 %v2756, 4294901760
    %v2758 = vsub.f32 %v2756, %v2757
    %v2759 = vand.u32 %v2758, 4294901760
    %2760 = vmatmul.f32.gmra.mxu0 %v2759
    %v2761 = vpop.f32.mrf.mxu0
    %v2762 = vadd.f32 %v2601, %v2761
    %2763 = vdwg.mxu0
    %v2764 = vand.u32 %v902, 4294901760
    %v2765 = vsub.f32 %v902, %v2764
    %v2766 = vand.u32 %v2765, 4294901760
    %v2767 = vsub.f32 %v2765, %v2766
    %v2768 = vand.u32 %v2767, 4294901760
    %2769 = vmatpush.msra.mxu0 %v2768
    %v2770 = vand.u32 %v901, 4294901760
    %v2771 = vsub.f32 %v901, %v2770
    %v2772 = vand.u32 %v2771, 4294901760
    %v2773 = vsub.f32 %v2771, %v2772
    %v2774 = vand.u32 %v2773, 4294901760
    %2775 = vmatpush.msra.mxu0 %v2774
    %v2776 = vand.u32 %v900, 4294901760
    %v2777 = vsub.f32 %v900, %v2776
    %v2778 = vand.u32 %v2777, 4294901760
    %v2779 = vsub.f32 %v2777, %v2778
    %v2780 = vand.u32 %v2779, 4294901760
    %2781 = vmatpush.msra.mxu0 %v2780
    %v2782 = vand.u32 %v899, 4294901760
    %v2783 = vsub.f32 %v899, %v2782
    %v2784 = vand.u32 %v2783, 4294901760
    %v2785 = vsub.f32 %v2783, %v2784
    %v2786 = vand.u32 %v2785, 4294901760
    %2787 = vmatpush.msra.mxu0 %v2786
    %v2788 = vand.u32 %v898, 4294901760
    %v2789 = vsub.f32 %v898, %v2788
    %v2790 = vand.u32 %v2789, 4294901760
    %v2791 = vsub.f32 %v2789, %v2790
    %v2792 = vand.u32 %v2791, 4294901760
    %2793 = vmatpush.msra.mxu0 %v2792
    %v2794 = vand.u32 %v897, 4294901760
    %v2795 = vsub.f32 %v897, %v2794
    %v2796 = vand.u32 %v2795, 4294901760
    %v2797 = vsub.f32 %v2795, %v2796
    %v2798 = vand.u32 %v2797, 4294901760
    %2799 = vmatpush.msra.mxu0 %v2798
    %v2800 = vand.u32 %v896, 4294901760
    %v2801 = vsub.f32 %v896, %v2800
    %v2802 = vand.u32 %v2801, 4294901760
    %v2803 = vsub.f32 %v2801, %v2802
    %v2804 = vand.u32 %v2803, 4294901760
    %2805 = vmatpush.msra.mxu0 %v2804
    %v2806 = vand.u32 %v895, 4294901760
    %v2807 = vsub.f32 %v895, %v2806
    %v2808 = vand.u32 %v2807, 4294901760
    %v2809 = vsub.f32 %v2807, %v2808
    %v2810 = vand.u32 %v2809, 4294901760
    %2811 = vmatpush.msra.mxu0 %v2810
    %v2812 = vand.u32 %v894, 4294901760
    %v2813 = vsub.f32 %v894, %v2812
    %v2814 = vand.u32 %v2813, 4294901760
    %v2815 = vsub.f32 %v2813, %v2814
    %v2816 = vand.u32 %v2815, 4294901760
    %2817 = vmatpush.msra.mxu0 %v2816
    %v2818 = vand.u32 %v893, 4294901760
    %v2819 = vsub.f32 %v893, %v2818
    %v2820 = vand.u32 %v2819, 4294901760
    %v2821 = vsub.f32 %v2819, %v2820
    %v2822 = vand.u32 %v2821, 4294901760
    %2823 = vmatpush.msra.mxu0 %v2822
    %v2824 = vand.u32 %v892, 4294901760
    %v2825 = vsub.f32 %v892, %v2824
    %v2826 = vand.u32 %v2825, 4294901760
    %v2827 = vsub.f32 %v2825, %v2826
    %v2828 = vand.u32 %v2827, 4294901760
    %2829 = vmatpush.msra.mxu0 %v2828
    %v2830 = vand.u32 %v891, 4294901760
    %v2831 = vsub.f32 %v891, %v2830
    %v2832 = vand.u32 %v2831, 4294901760
    %v2833 = vsub.f32 %v2831, %v2832
    %v2834 = vand.u32 %v2833, 4294901760
    %2835 = vmatpush.msra.mxu0 %v2834
    %v2836 = vand.u32 %v890, 4294901760
    %v2837 = vsub.f32 %v890, %v2836
    %v2838 = vand.u32 %v2837, 4294901760
    %v2839 = vsub.f32 %v2837, %v2838
    %v2840 = vand.u32 %v2839, 4294901760
    %2841 = vmatpush.msra.mxu0 %v2840
    %v2842 = vand.u32 %v889, 4294901760
    %v2843 = vsub.f32 %v889, %v2842
    %v2844 = vand.u32 %v2843, 4294901760
    %v2845 = vsub.f32 %v2843, %v2844
    %v2846 = vand.u32 %v2845, 4294901760
    %2847 = vmatpush.msra.mxu0 %v2846
    %v2848 = vand.u32 %v888, 4294901760
    %v2849 = vsub.f32 %v888, %v2848
    %v2850 = vand.u32 %v2849, 4294901760
    %v2851 = vsub.f32 %v2849, %v2850
    %v2852 = vand.u32 %v2851, 4294901760
    %2853 = vmatpush.msra.mxu0 %v2852
    %v2854 = vand.u32 %v887, 4294901760
    %v2855 = vsub.f32 %v887, %v2854
    %v2856 = vand.u32 %v2855, 4294901760
    %v2857 = vsub.f32 %v2855, %v2856
    %v2858 = vand.u32 %v2857, 4294901760
    %2859 = vmatpush.msra.mxu0 %v2858
    %v2860 = vand.u32 %v1654, 4294901760
    %2861 = vmatmul.f32.gmra.mxu0 %v2860
    %v2862 = vpop.f32.mrf.mxu0
    %v2863 = vadd.f32 %v2642, %v2862
    %v2864 = vand.u32 %v1658, 4294901760
    %2865 = vmatmul.f32.gmra.mxu0 %v2864
    %v2866 = vpop.f32.mrf.mxu0
    %v2867 = vadd.f32 %v2650, %v2866
    %v2868 = vand.u32 %v1662, 4294901760
    %2869 = vmatmul.f32.gmra.mxu0 %v2868
    %v2870 = vpop.f32.mrf.mxu0
    %v2871 = vadd.f32 %v2658, %v2870
    %v2872 = vand.u32 %v1666, 4294901760
    %2873 = vmatmul.f32.gmra.mxu0 %v2872
    %v2874 = vpop.f32.mrf.mxu0
    %v2875 = vadd.f32 %v2666, %v2874
    %v2876 = vand.u32 %v1670, 4294901760
    %2877 = vmatmul.f32.gmra.mxu0 %v2876
    %v2878 = vpop.f32.mrf.mxu0
    %v2879 = vadd.f32 %v2674, %v2878
    %v2880 = vand.u32 %v1674, 4294901760
    %2881 = vmatmul.f32.gmra.mxu0 %v2880
    %v2882 = vpop.f32.mrf.mxu0
    %v2883 = vadd.f32 %v2682, %v2882
    %v2884 = vand.u32 %v1678, 4294901760
    %2885 = vmatmul.f32.gmra.mxu0 %v2884
    %v2886 = vpop.f32.mrf.mxu0
    %v2887 = vadd.f32 %v2690, %v2886
    %v2888 = vand.u32 %v1682, 4294901760
    %2889 = vmatmul.f32.gmra.mxu0 %v2888
    %v2890 = vpop.f32.mrf.mxu0
    %v2891 = vadd.f32 %v2698, %v2890
    %v2892 = vand.u32 %v1686, 4294901760
    %2893 = vmatmul.f32.gmra.mxu0 %v2892
    %v2894 = vpop.f32.mrf.mxu0
    %v2895 = vadd.f32 %v2706, %v2894
    %v2896 = vand.u32 %v1690, 4294901760
    %2897 = vmatmul.f32.gmra.mxu0 %v2896
    %v2898 = vpop.f32.mrf.mxu0
    %v2899 = vadd.f32 %v2714, %v2898
    %v2900 = vand.u32 %v1694, 4294901760
    %2901 = vmatmul.f32.gmra.mxu0 %v2900
    %v2902 = vpop.f32.mrf.mxu0
    %v2903 = vadd.f32 %v2722, %v2902
    %v2904 = vand.u32 %v1698, 4294901760
    %2905 = vmatmul.f32.gmra.mxu0 %v2904
    %v2906 = vpop.f32.mrf.mxu0
    %v2907 = vadd.f32 %v2730, %v2906
    %v2908 = vand.u32 %v1702, 4294901760
    %2909 = vmatmul.f32.gmra.mxu0 %v2908
    %v2910 = vpop.f32.mrf.mxu0
    %v2911 = vadd.f32 %v2738, %v2910
    %v2912 = vand.u32 %v1706, 4294901760
    %2913 = vmatmul.f32.gmra.mxu0 %v2912
    %v2914 = vpop.f32.mrf.mxu0
    %v2915 = vadd.f32 %v2746, %v2914
    %v2916 = vand.u32 %v1710, 4294901760
    %2917 = vmatmul.f32.gmra.mxu0 %v2916
    %v2918 = vpop.f32.mrf.mxu0
    %v2919 = vadd.f32 %v2754, %v2918
    %v2920 = vand.u32 %v1714, 4294901760
    %2921 = vmatmul.f32.gmra.mxu0 %v2920
    %v2922 = vpop.f32.mrf.mxu0
    %v2923 = vadd.f32 %v2762, %v2922
    %2924 = vdwg.mxu0
    %v2925 = vand.u32 %v902, 4294901760
    %v2926 = vsub.f32 %v902, %v2925
    %2927 = vmatpush.msra.mxu0 %v2926
    %v2928 = vand.u32 %v901, 4294901760
    %v2929 = vsub.f32 %v901, %v2928
    %2930 = vmatpush.msra.mxu0 %v2929
    %v2931 = vand.u32 %v900, 4294901760
    %v2932 = vsub.f32 %v900, %v2931
    %2933 = vmatpush.msra.mxu0 %v2932
    %v2934 = vand.u32 %v899, 4294901760
    %v2935 = vsub.f32 %v899, %v2934
    %2936 = vmatpush.msra.mxu0 %v2935
    %v2937 = vand.u32 %v898, 4294901760
    %v2938 = vsub.f32 %v898, %v2937
    %2939 = vmatpush.msra.mxu0 %v2938
    %v2940 = vand.u32 %v897, 4294901760
    %v2941 = vsub.f32 %v897, %v2940
    %2942 = vmatpush.msra.mxu0 %v2941
    %v2943 = vand.u32 %v896, 4294901760
    %v2944 = vsub.f32 %v896, %v2943
    %2945 = vmatpush.msra.mxu0 %v2944
    %v2946 = vand.u32 %v895, 4294901760
    %v2947 = vsub.f32 %v895, %v2946
    %2948 = vmatpush.msra.mxu0 %v2947
    %v2949 = vand.u32 %v894, 4294901760
    %v2950 = vsub.f32 %v894, %v2949
    %2951 = vmatpush.msra.mxu0 %v2950
    %v2952 = vand.u32 %v893, 4294901760
    %v2953 = vsub.f32 %v893, %v2952
    %2954 = vmatpush.msra.mxu0 %v2953
    %v2955 = vand.u32 %v892, 4294901760
    %v2956 = vsub.f32 %v892, %v2955
    %2957 = vmatpush.msra.mxu0 %v2956
    %v2958 = vand.u32 %v891, 4294901760
    %v2959 = vsub.f32 %v891, %v2958
    %2960 = vmatpush.msra.mxu0 %v2959
    %v2961 = vand.u32 %v890, 4294901760
    %v2962 = vsub.f32 %v890, %v2961
    %2963 = vmatpush.msra.mxu0 %v2962
    %v2964 = vand.u32 %v889, 4294901760
    %v2965 = vsub.f32 %v889, %v2964
    %2966 = vmatpush.msra.mxu0 %v2965
    %v2967 = vand.u32 %v888, 4294901760
    %v2968 = vsub.f32 %v888, %v2967
    %2969 = vmatpush.msra.mxu0 %v2968
    %v2970 = vand.u32 %v887, 4294901760
    %v2971 = vsub.f32 %v887, %v2970
    %2972 = vmatpush.msra.mxu0 %v2971
    %v2973 = vand.u32 %v1654, 4294901760
    %v2974 = vsub.f32 %v1654, %v2973
    %2975 = vmatmul.f32.gmra.mxu0 %v2974
    %v2976 = vpop.f32.mrf.mxu0
    %v2977 = vadd.f32 %v2863, %v2976
    %v2978 = vand.u32 %v1658, 4294901760
    %v2979 = vsub.f32 %v1658, %v2978
    %2980 = vmatmul.f32.gmra.mxu0 %v2979
    %v2981 = vpop.f32.mrf.mxu0
    %v2982 = vadd.f32 %v2867, %v2981
    %v2983 = vand.u32 %v1662, 4294901760
    %v2984 = vsub.f32 %v1662, %v2983
    %2985 = vmatmul.f32.gmra.mxu0 %v2984
    %v2986 = vpop.f32.mrf.mxu0
    %v2987 = vadd.f32 %v2871, %v2986
    %v2988 = vand.u32 %v1666, 4294901760
    %v2989 = vsub.f32 %v1666, %v2988
    %2990 = vmatmul.f32.gmra.mxu0 %v2989
    %v2991 = vpop.f32.mrf.mxu0
    %v2992 = vadd.f32 %v2875, %v2991
    %v2993 = vand.u32 %v1670, 4294901760
    %v2994 = vsub.f32 %v1670, %v2993
    %2995 = vmatmul.f32.gmra.mxu0 %v2994
    %v2996 = vpop.f32.mrf.mxu0
    %v2997 = vadd.f32 %v2879, %v2996
    %v2998 = vand.u32 %v1674, 4294901760
    %v2999 = vsub.f32 %v1674, %v2998
    %3000 = vmatmul.f32.gmra.mxu0 %v2999
    %v3001 = vpop.f32.mrf.mxu0
    %v3002 = vadd.f32 %v2883, %v3001
    %v3003 = vand.u32 %v1678, 4294901760
    %v3004 = vsub.f32 %v1678, %v3003
    %3005 = vmatmul.f32.gmra.mxu0 %v3004
    %v3006 = vpop.f32.mrf.mxu0
    %v3007 = vadd.f32 %v2887, %v3006
    %v3008 = vand.u32 %v1682, 4294901760
    %v3009 = vsub.f32 %v1682, %v3008
    %3010 = vmatmul.f32.gmra.mxu0 %v3009
    %v3011 = vpop.f32.mrf.mxu0
    %v3012 = vadd.f32 %v2891, %v3011
    %v3013 = vand.u32 %v1686, 4294901760
    %v3014 = vsub.f32 %v1686, %v3013
    %3015 = vmatmul.f32.gmra.mxu0 %v3014
    %v3016 = vpop.f32.mrf.mxu0
    %v3017 = vadd.f32 %v2895, %v3016
    %v3018 = vand.u32 %v1690, 4294901760
    %v3019 = vsub.f32 %v1690, %v3018
    %3020 = vmatmul.f32.gmra.mxu0 %v3019
    %v3021 = vpop.f32.mrf.mxu0
    %v3022 = vadd.f32 %v2899, %v3021
    %v3023 = vand.u32 %v1694, 4294901760
    %v3024 = vsub.f32 %v1694, %v3023
    %3025 = vmatmul.f32.gmra.mxu0 %v3024
    %v3026 = vpop.f32.mrf.mxu0
    %v3027 = vadd.f32 %v2903, %v3026
    %v3028 = vand.u32 %v1698, 4294901760
    %v3029 = vsub.f32 %v1698, %v3028
    %3030 = vmatmul.f32.gmra.mxu0 %v3029
    %v3031 = vpop.f32.mrf.mxu0
    %v3032 = vadd.f32 %v2907, %v3031
    %v3033 = vand.u32 %v1702, 4294901760
    %v3034 = vsub.f32 %v1702, %v3033
    %3035 = vmatmul.f32.gmra.mxu0 %v3034
    %v3036 = vpop.f32.mrf.mxu0
    %v3037 = vadd.f32 %v2911, %v3036
    %v3038 = vand.u32 %v1706, 4294901760
    %v3039 = vsub.f32 %v1706, %v3038
    %3040 = vmatmul.f32.gmra.mxu0 %v3039
    %v3041 = vpop.f32.mrf.mxu0
    %v3042 = vadd.f32 %v2915, %v3041
    %v3043 = vand.u32 %v1710, 4294901760
    %v3044 = vsub.f32 %v1710, %v3043
    %3045 = vmatmul.f32.gmra.mxu0 %v3044
    %v3046 = vpop.f32.mrf.mxu0
    %v3047 = vadd.f32 %v2919, %v3046
    %v3048 = vand.u32 %v1714, 4294901760
    %v3049 = vsub.f32 %v1714, %v3048
    %3050 = vmatmul.f32.gmra.mxu0 %v3049
    %v3051 = vpop.f32.mrf.mxu0
    %v3052 = vadd.f32 %v2923, %v3051
    %3053 = vdwg.mxu0
    %v3054 = vand.u32 %v902, 4294901760
    %3055 = vmatpush.msra.mxu0 %v3054
    %v3056 = vand.u32 %v901, 4294901760
    %3057 = vmatpush.msra.mxu0 %v3056
    %v3058 = vand.u32 %v900, 4294901760
    %3059 = vmatpush.msra.mxu0 %v3058
    %v3060 = vand.u32 %v899, 4294901760
    %3061 = vmatpush.msra.mxu0 %v3060
    %v3062 = vand.u32 %v898, 4294901760
    %3063 = vmatpush.msra.mxu0 %v3062
    %v3064 = vand.u32 %v897, 4294901760
    %3065 = vmatpush.msra.mxu0 %v3064
    %v3066 = vand.u32 %v896, 4294901760
    %3067 = vmatpush.msra.mxu0 %v3066
    %v3068 = vand.u32 %v895, 4294901760
    %3069 = vmatpush.msra.mxu0 %v3068
    %v3070 = vand.u32 %v894, 4294901760
    %3071 = vmatpush.msra.mxu0 %v3070
    %v3072 = vand.u32 %v893, 4294901760
    %3073 = vmatpush.msra.mxu0 %v3072
    %v3074 = vand.u32 %v892, 4294901760
    %3075 = vmatpush.msra.mxu0 %v3074
    %v3076 = vand.u32 %v891, 4294901760
    %3077 = vmatpush.msra.mxu0 %v3076
    %v3078 = vand.u32 %v890, 4294901760
    %3079 = vmatpush.msra.mxu0 %v3078
    %v3080 = vand.u32 %v889, 4294901760
    %3081 = vmatpush.msra.mxu0 %v3080
    %v3082 = vand.u32 %v888, 4294901760
    %3083 = vmatpush.msra.mxu0 %v3082
    %v3084 = vand.u32 %v887, 4294901760
    %3085 = vmatpush.msra.mxu0 %v3084
    %v3086 = vand.u32 %v1654, 4294901760
    %v3087 = vsub.f32 %v1654, %v3086
    %v3088 = vand.u32 %v3087, 4294901760
    %3089 = vmatmul.f32.gmra.mxu0 %v3088
    %v3090 = vpop.f32.mrf.mxu0
    %v3091 = vadd.f32 %v2977, %v3090
    %v3092 = vand.u32 %v1658, 4294901760
    %v3093 = vsub.f32 %v1658, %v3092
    %v3094 = vand.u32 %v3093, 4294901760
    %3095 = vmatmul.f32.gmra.mxu0 %v3094
    %v3096 = vpop.f32.mrf.mxu0
    %v3097 = vadd.f32 %v2982, %v3096
    %v3098 = vand.u32 %v1662, 4294901760
    %v3099 = vsub.f32 %v1662, %v3098
    %v3100 = vand.u32 %v3099, 4294901760
    %3101 = vmatmul.f32.gmra.mxu0 %v3100
    %v3102 = vpop.f32.mrf.mxu0
    %v3103 = vadd.f32 %v2987, %v3102
    %v3104 = vand.u32 %v1666, 4294901760
    %v3105 = vsub.f32 %v1666, %v3104
    %v3106 = vand.u32 %v3105, 4294901760
    %3107 = vmatmul.f32.gmra.mxu0 %v3106
    %v3108 = vpop.f32.mrf.mxu0
    %v3109 = vadd.f32 %v2992, %v3108
    %v3110 = vand.u32 %v1670, 4294901760
    %v3111 = vsub.f32 %v1670, %v3110
    %v3112 = vand.u32 %v3111, 4294901760
    %3113 = vmatmul.f32.gmra.mxu0 %v3112
    %v3114 = vpop.f32.mrf.mxu0
    %v3115 = vadd.f32 %v2997, %v3114
    %v3116 = vand.u32 %v1674, 4294901760
    %v3117 = vsub.f32 %v1674, %v3116
    %v3118 = vand.u32 %v3117, 4294901760
    %3119 = vmatmul.f32.gmra.mxu0 %v3118
    %v3120 = vpop.f32.mrf.mxu0
    %v3121 = vadd.f32 %v3002, %v3120
    %v3122 = vand.u32 %v1678, 4294901760
    %v3123 = vsub.f32 %v1678, %v3122
    %v3124 = vand.u32 %v3123, 4294901760
    %3125 = vmatmul.f32.gmra.mxu0 %v3124
    %v3126 = vpop.f32.mrf.mxu0
    %v3127 = vadd.f32 %v3007, %v3126
    %v3128 = vand.u32 %v1682, 4294901760
    %v3129 = vsub.f32 %v1682, %v3128
    %v3130 = vand.u32 %v3129, 4294901760
    %3131 = vmatmul.f32.gmra.mxu0 %v3130
    %v3132 = vpop.f32.mrf.mxu0
    %v3133 = vadd.f32 %v3012, %v3132
    %v3134 = vand.u32 %v1686, 4294901760
    %v3135 = vsub.f32 %v1686, %v3134
    %v3136 = vand.u32 %v3135, 4294901760
    %3137 = vmatmul.f32.gmra.mxu0 %v3136
    %v3138 = vpop.f32.mrf.mxu0
    %v3139 = vadd.f32 %v3017, %v3138
    %v3140 = vand.u32 %v1690, 4294901760
    %v3141 = vsub.f32 %v1690, %v3140
    %v3142 = vand.u32 %v3141, 4294901760
    %3143 = vmatmul.f32.gmra.mxu0 %v3142
    %v3144 = vpop.f32.mrf.mxu0
    %v3145 = vadd.f32 %v3022, %v3144
    %v3146 = vand.u32 %v1694, 4294901760
    %v3147 = vsub.f32 %v1694, %v3146
    %v3148 = vand.u32 %v3147, 4294901760
    %3149 = vmatmul.f32.gmra.mxu0 %v3148
    %v3150 = vpop.f32.mrf.mxu0
    %v3151 = vadd.f32 %v3027, %v3150
    %v3152 = vand.u32 %v1698, 4294901760
    %v3153 = vsub.f32 %v1698, %v3152
    %v3154 = vand.u32 %v3153, 4294901760
    %3155 = vmatmul.f32.gmra.mxu0 %v3154
    %v3156 = vpop.f32.mrf.mxu0
    %v3157 = vadd.f32 %v3032, %v3156
    %v3158 = vand.u32 %v1702, 4294901760
    %v3159 = vsub.f32 %v1702, %v3158
    %v3160 = vand.u32 %v3159, 4294901760
    %3161 = vmatmul.f32.gmra.mxu0 %v3160
    %v3162 = vpop.f32.mrf.mxu0
    %v3163 = vadd.f32 %v3037, %v3162
    %v3164 = vand.u32 %v1706, 4294901760
    %v3165 = vsub.f32 %v1706, %v3164
    %v3166 = vand.u32 %v3165, 4294901760
    %3167 = vmatmul.f32.gmra.mxu0 %v3166
    %v3168 = vpop.f32.mrf.mxu0
    %v3169 = vadd.f32 %v3042, %v3168
    %v3170 = vand.u32 %v1710, 4294901760
    %v3171 = vsub.f32 %v1710, %v3170
    %v3172 = vand.u32 %v3171, 4294901760
    %3173 = vmatmul.f32.gmra.mxu0 %v3172
    %v3174 = vpop.f32.mrf.mxu0
    %v3175 = vadd.f32 %v3047, %v3174
    %v3176 = vand.u32 %v1714, 4294901760
    %v3177 = vsub.f32 %v1714, %v3176
    %v3178 = vand.u32 %v3177, 4294901760
    %3179 = vmatmul.f32.gmra.mxu0 %v3178
    %v3180 = vpop.f32.mrf.mxu0
    %v3181 = vadd.f32 %v3052, %v3180
    %3182 = vdwg.mxu0
    %v3183 = vand.u32 %v902, 4294901760
    %v3184 = vsub.f32 %v902, %v3183
    %v3185 = vand.u32 %v3184, 4294901760
    %3186 = vmatpush.msra.mxu0 %v3185
    %v3187 = vand.u32 %v901, 4294901760
    %v3188 = vsub.f32 %v901, %v3187
    %v3189 = vand.u32 %v3188, 4294901760
    %3190 = vmatpush.msra.mxu0 %v3189
    %v3191 = vand.u32 %v900, 4294901760
    %v3192 = vsub.f32 %v900, %v3191
    %v3193 = vand.u32 %v3192, 4294901760
    %3194 = vmatpush.msra.mxu0 %v3193
    %v3195 = vand.u32 %v899, 4294901760
    %v3196 = vsub.f32 %v899, %v3195
    %v3197 = vand.u32 %v3196, 4294901760
    %3198 = vmatpush.msra.mxu0 %v3197
    %v3199 = vand.u32 %v898, 4294901760
    %v3200 = vsub.f32 %v898, %v3199
    %v3201 = vand.u32 %v3200, 4294901760
    %3202 = vmatpush.msra.mxu0 %v3201
    %v3203 = vand.u32 %v897, 4294901760
    %v3204 = vsub.f32 %v897, %v3203
    %v3205 = vand.u32 %v3204, 4294901760
    %3206 = vmatpush.msra.mxu0 %v3205
    %v3207 = vand.u32 %v896, 4294901760
    %v3208 = vsub.f32 %v896, %v3207
    %v3209 = vand.u32 %v3208, 4294901760
    %3210 = vmatpush.msra.mxu0 %v3209
    %v3211 = vand.u32 %v895, 4294901760
    %v3212 = vsub.f32 %v895, %v3211
    %v3213 = vand.u32 %v3212, 4294901760
    %3214 = vmatpush.msra.mxu0 %v3213
    %v3215 = vand.u32 %v894, 4294901760
    %v3216 = vsub.f32 %v894, %v3215
    %v3217 = vand.u32 %v3216, 4294901760
    %3218 = vmatpush.msra.mxu0 %v3217
    %v3219 = vand.u32 %v893, 4294901760
    %v3220 = vsub.f32 %v893, %v3219
    %v3221 = vand.u32 %v3220, 4294901760
    %3222 = vmatpush.msra.mxu0 %v3221
    %v3223 = vand.u32 %v892, 4294901760
    %v3224 = vsub.f32 %v892, %v3223
    %v3225 = vand.u32 %v3224, 4294901760
    %3226 = vmatpush.msra.mxu0 %v3225
    %v3227 = vand.u32 %v891, 4294901760
    %v3228 = vsub.f32 %v891, %v3227
    %v3229 = vand.u32 %v3228, 4294901760
    %3230 = vmatpush.msra.mxu0 %v3229
    %v3231 = vand.u32 %v890, 4294901760
    %v3232 = vsub.f32 %v890, %v3231
    %v3233 = vand.u32 %v3232, 4294901760
    %3234 = vmatpush.msra.mxu0 %v3233
    %v3235 = vand.u32 %v889, 4294901760
    %v3236 = vsub.f32 %v889, %v3235
    %v3237 = vand.u32 %v3236, 4294901760
    %3238 = vmatpush.msra.mxu0 %v3237
    %v3239 = vand.u32 %v888, 4294901760
    %v3240 = vsub.f32 %v888, %v3239
    %v3241 = vand.u32 %v3240, 4294901760
    %3242 = vmatpush.msra.mxu0 %v3241
    %v3243 = vand.u32 %v887, 4294901760
    %v3244 = vsub.f32 %v887, %v3243
    %v3245 = vand.u32 %v3244, 4294901760
    %3246 = vmatpush.msra.mxu0 %v3245
    %v3247 = vand.u32 %v1654, 4294901760
    %3248 = vmatmul.f32.gmra.mxu0 %v3247
    %v3249 = vpop.f32.mrf.mxu0
    %v3250 = vadd.f32 %v3091, %v3249
    %v3251 = vand.u32 %v1658, 4294901760
    %3252 = vmatmul.f32.gmra.mxu0 %v3251
    %v3253 = vpop.f32.mrf.mxu0
    %v3254 = vadd.f32 %v3097, %v3253
    %v3255 = vand.u32 %v1662, 4294901760
    %3256 = vmatmul.f32.gmra.mxu0 %v3255
    %v3257 = vpop.f32.mrf.mxu0
    %v3258 = vadd.f32 %v3103, %v3257
    %v3259 = vand.u32 %v1666, 4294901760
    %3260 = vmatmul.f32.gmra.mxu0 %v3259
    %v3261 = vpop.f32.mrf.mxu0
    %v3262 = vadd.f32 %v3109, %v3261
    %v3263 = vand.u32 %v1670, 4294901760
    %3264 = vmatmul.f32.gmra.mxu0 %v3263
    %v3265 = vpop.f32.mrf.mxu0
    %v3266 = vadd.f32 %v3115, %v3265
    %v3267 = vand.u32 %v1674, 4294901760
    %3268 = vmatmul.f32.gmra.mxu0 %v3267
    %v3269 = vpop.f32.mrf.mxu0
    %v3270 = vadd.f32 %v3121, %v3269
    %v3271 = vand.u32 %v1678, 4294901760
    %3272 = vmatmul.f32.gmra.mxu0 %v3271
    %v3273 = vpop.f32.mrf.mxu0
    %v3274 = vadd.f32 %v3127, %v3273
    %v3275 = vand.u32 %v1682, 4294901760
    %3276 = vmatmul.f32.gmra.mxu0 %v3275
    %v3277 = vpop.f32.mrf.mxu0
    %v3278 = vadd.f32 %v3133, %v3277
    %v3279 = vand.u32 %v1686, 4294901760
    %3280 = vmatmul.f32.gmra.mxu0 %v3279
    %v3281 = vpop.f32.mrf.mxu0
    %v3282 = vadd.f32 %v3139, %v3281
    %v3283 = vand.u32 %v1690, 4294901760
    %3284 = vmatmul.f32.gmra.mxu0 %v3283
    %v3285 = vpop.f32.mrf.mxu0
    %v3286 = vadd.f32 %v3145, %v3285
    %v3287 = vand.u32 %v1694, 4294901760
    %3288 = vmatmul.f32.gmra.mxu0 %v3287
    %v3289 = vpop.f32.mrf.mxu0
    %v3290 = vadd.f32 %v3151, %v3289
    %v3291 = vand.u32 %v1698, 4294901760
    %3292 = vmatmul.f32.gmra.mxu0 %v3291
    %v3293 = vpop.f32.mrf.mxu0
    %v3294 = vadd.f32 %v3157, %v3293
    %v3295 = vand.u32 %v1702, 4294901760
    %3296 = vmatmul.f32.gmra.mxu0 %v3295
    %v3297 = vpop.f32.mrf.mxu0
    %v3298 = vadd.f32 %v3163, %v3297
    %v3299 = vand.u32 %v1706, 4294901760
    %3300 = vmatmul.f32.gmra.mxu0 %v3299
    %v3301 = vpop.f32.mrf.mxu0
    %v3302 = vadd.f32 %v3169, %v3301
    %v3303 = vand.u32 %v1710, 4294901760
    %3304 = vmatmul.f32.gmra.mxu0 %v3303
    %v3305 = vpop.f32.mrf.mxu0
    %v3306 = vadd.f32 %v3175, %v3305
    %v3307 = vand.u32 %v1714, 4294901760
    %3308 = vmatmul.f32.gmra.mxu0 %v3307
    %v3309 = vpop.f32.mrf.mxu0
    %v3310 = vadd.f32 %v3181, %v3309
    %3311 = vdwg.mxu0
    %v3312 = vand.u32 %v902, 4294901760
    %3313 = vmatpush.msra.mxu0 %v3312
    %v3314 = vand.u32 %v901, 4294901760
    %3315 = vmatpush.msra.mxu0 %v3314
    %v3316 = vand.u32 %v900, 4294901760
    %3317 = vmatpush.msra.mxu0 %v3316
    %v3318 = vand.u32 %v899, 4294901760
    %3319 = vmatpush.msra.mxu0 %v3318
    %v3320 = vand.u32 %v898, 4294901760
    %3321 = vmatpush.msra.mxu0 %v3320
    %v3322 = vand.u32 %v897, 4294901760
    %3323 = vmatpush.msra.mxu0 %v3322
    %v3324 = vand.u32 %v896, 4294901760
    %3325 = vmatpush.msra.mxu0 %v3324
    %v3326 = vand.u32 %v895, 4294901760
    %3327 = vmatpush.msra.mxu0 %v3326
    %v3328 = vand.u32 %v894, 4294901760
    %3329 = vmatpush.msra.mxu0 %v3328
    %v3330 = vand.u32 %v893, 4294901760
    %3331 = vmatpush.msra.mxu0 %v3330
    %v3332 = vand.u32 %v892, 4294901760
    %3333 = vmatpush.msra.mxu0 %v3332
    %v3334 = vand.u32 %v891, 4294901760
    %3335 = vmatpush.msra.mxu0 %v3334
    %v3336 = vand.u32 %v890, 4294901760
    %3337 = vmatpush.msra.mxu0 %v3336
    %v3338 = vand.u32 %v889, 4294901760
    %3339 = vmatpush.msra.mxu0 %v3338
    %v3340 = vand.u32 %v888, 4294901760
    %3341 = vmatpush.msra.mxu0 %v3340
    %v3342 = vand.u32 %v887, 4294901760
    %3343 = vmatpush.msra.mxu0 %v3342
    %v3344 = vand.u32 %v1654, 4294901760
    %3345 = vmatmul.f32.gmra.mxu0 %v3344
    %v3346 = vpop.f32.mrf.mxu0
    %v3347 = vadd.f32 %v3250, %v3346
    %v3348 = vand.u32 %v1658, 4294901760
    %3349 = vmatmul.f32.gmra.mxu0 %v3348
    %v3350 = vpop.f32.mrf.mxu0
    %v3351 = vadd.f32 %v3254, %v3350
    %v3352 = vand.u32 %v1662, 4294901760
    %3353 = vmatmul.f32.gmra.mxu0 %v3352
    %v3354 = vpop.f32.mrf.mxu0
    %v3355 = vadd.f32 %v3258, %v3354
    %v3356 = vand.u32 %v1666, 4294901760
    %3357 = vmatmul.f32.gmra.mxu0 %v3356
    %v3358 = vpop.f32.mrf.mxu0
    %v3359 = vadd.f32 %v3262, %v3358
    %v3360 = vand.u32 %v1670, 4294901760
    %3361 = vmatmul.f32.gmra.mxu0 %v3360
    %v3362 = vpop.f32.mrf.mxu0
    %v3363 = vadd.f32 %v3266, %v3362
    %v3364 = vand.u32 %v1674, 4294901760
    %3365 = vmatmul.f32.gmra.mxu0 %v3364
    %v3366 = vpop.f32.mrf.mxu0
    %v3367 = vadd.f32 %v3270, %v3366
    %v3368 = vand.u32 %v1678, 4294901760
    %3369 = vmatmul.f32.gmra.mxu0 %v3368
    %v3370 = vpop.f32.mrf.mxu0
    %v3371 = vadd.f32 %v3274, %v3370
    %v3372 = vand.u32 %v1682, 4294901760
    %3373 = vmatmul.f32.gmra.mxu0 %v3372
    %v3374 = vpop.f32.mrf.mxu0
    %v3375 = vadd.f32 %v3278, %v3374
    %v3376 = vand.u32 %v1686, 4294901760
    %3377 = vmatmul.f32.gmra.mxu0 %v3376
    %v3378 = vpop.f32.mrf.mxu0
    %v3379 = vadd.f32 %v3282, %v3378
    %v3380 = vand.u32 %v1690, 4294901760
    %3381 = vmatmul.f32.gmra.mxu0 %v3380
    %v3382 = vpop.f32.mrf.mxu0
    %v3383 = vadd.f32 %v3286, %v3382
    %v3384 = vand.u32 %v1694, 4294901760
    %3385 = vmatmul.f32.gmra.mxu0 %v3384
    %v3386 = vpop.f32.mrf.mxu0
    %v3387 = vadd.f32 %v3290, %v3386
    %v3388 = vand.u32 %v1698, 4294901760
    %3389 = vmatmul.f32.gmra.mxu0 %v3388
    %v3390 = vpop.f32.mrf.mxu0
    %v3391 = vadd.f32 %v3294, %v3390
    %v3392 = vand.u32 %v1702, 4294901760
    %3393 = vmatmul.f32.gmra.mxu0 %v3392
    %v3394 = vpop.f32.mrf.mxu0
    %v3395 = vadd.f32 %v3298, %v3394
    %v3396 = vand.u32 %v1706, 4294901760
    %3397 = vmatmul.f32.gmra.mxu0 %v3396
    %v3398 = vpop.f32.mrf.mxu0
    %v3399 = vadd.f32 %v3302, %v3398
    %v3400 = vand.u32 %v1710, 4294901760
    %3401 = vmatmul.f32.gmra.mxu0 %v3400
    %v3402 = vpop.f32.mrf.mxu0
    %v3403 = vadd.f32 %v3306, %v3402
    %v3404 = vand.u32 %v1714, 4294901760
    %3405 = vmatmul.f32.gmra.mxu0 %v3404
    %v3406 = vpop.f32.mrf.mxu0
    %v3407 = vadd.f32 %v3310, %v3406
    %3408 = vdwg.mxu0
    %v3409 = vand.u32 %v918, 4294901760
    %3410 = vmatpush.msra.mxu0 %v3409
    %v3411 = vand.u32 %v917, 4294901760
    %3412 = vmatpush.msra.mxu0 %v3411
    %v3413 = vand.u32 %v916, 4294901760
    %3414 = vmatpush.msra.mxu0 %v3413
    %v3415 = vand.u32 %v915, 4294901760
    %3416 = vmatpush.msra.mxu0 %v3415
    %v3417 = vand.u32 %v914, 4294901760
    %3418 = vmatpush.msra.mxu0 %v3417
    %v3419 = vand.u32 %v913, 4294901760
    %3420 = vmatpush.msra.mxu0 %v3419
    %v3421 = vand.u32 %v912, 4294901760
    %3422 = vmatpush.msra.mxu0 %v3421
    %v3423 = vand.u32 %v911, 4294901760
    %3424 = vmatpush.msra.mxu0 %v3423
    %v3425 = vand.u32 %v910, 4294901760
    %3426 = vmatpush.msra.mxu0 %v3425
    %v3427 = vand.u32 %v909, 4294901760
    %3428 = vmatpush.msra.mxu0 %v3427
    %v3429 = vand.u32 %v908, 4294901760
    %3430 = vmatpush.msra.mxu0 %v3429
    %v3431 = vand.u32 %v907, 4294901760
    %3432 = vmatpush.msra.mxu0 %v3431
    %v3433 = vand.u32 %v906, 4294901760
    %3434 = vmatpush.msra.mxu0 %v3433
    %v3435 = vand.u32 %v905, 4294901760
    %3436 = vmatpush.msra.mxu0 %v3435
    %v3437 = vand.u32 %v904, 4294901760
    %3438 = vmatpush.msra.mxu0 %v3437
    %v3439 = vand.u32 %v903, 4294901760
    %3440 = vmatpush.msra.mxu0 %v3439
    %v3441 = vand.u32 %v1655, 4294901760
    %v3442 = vsub.f32 %v1655, %v3441
    %v3443 = vand.u32 %v3442, 4294901760
    %v3444 = vsub.f32 %v3442, %v3443
    %v3445 = vand.u32 %v3444, 4294901760
    %3446 = vmatmul.f32.gmra.mxu0 %v3445
    %v3447 = vpop.f32.mrf.mxu0
    %v3448 = vadd.f32 %v3347, %v3447
    %v3449 = vand.u32 %v1659, 4294901760
    %v3450 = vsub.f32 %v1659, %v3449
    %v3451 = vand.u32 %v3450, 4294901760
    %v3452 = vsub.f32 %v3450, %v3451
    %v3453 = vand.u32 %v3452, 4294901760
    %3454 = vmatmul.f32.gmra.mxu0 %v3453
    %v3455 = vpop.f32.mrf.mxu0
    %v3456 = vadd.f32 %v3351, %v3455
    %v3457 = vand.u32 %v1663, 4294901760
    %v3458 = vsub.f32 %v1663, %v3457
    %v3459 = vand.u32 %v3458, 4294901760
    %v3460 = vsub.f32 %v3458, %v3459
    %v3461 = vand.u32 %v3460, 4294901760
    %3462 = vmatmul.f32.gmra.mxu0 %v3461
    %v3463 = vpop.f32.mrf.mxu0
    %v3464 = vadd.f32 %v3355, %v3463
    %v3465 = vand.u32 %v1667, 4294901760
    %v3466 = vsub.f32 %v1667, %v3465
    %v3467 = vand.u32 %v3466, 4294901760
    %v3468 = vsub.f32 %v3466, %v3467
    %v3469 = vand.u32 %v3468, 4294901760
    %3470 = vmatmul.f32.gmra.mxu0 %v3469
    %v3471 = vpop.f32.mrf.mxu0
    %v3472 = vadd.f32 %v3359, %v3471
    %v3473 = vand.u32 %v1671, 4294901760
    %v3474 = vsub.f32 %v1671, %v3473
    %v3475 = vand.u32 %v3474, 4294901760
    %v3476 = vsub.f32 %v3474, %v3475
    %v3477 = vand.u32 %v3476, 4294901760
    %3478 = vmatmul.f32.gmra.mxu0 %v3477
    %v3479 = vpop.f32.mrf.mxu0
    %v3480 = vadd.f32 %v3363, %v3479
    %v3481 = vand.u32 %v1675, 4294901760
    %v3482 = vsub.f32 %v1675, %v3481
    %v3483 = vand.u32 %v3482, 4294901760
    %v3484 = vsub.f32 %v3482, %v3483
    %v3485 = vand.u32 %v3484, 4294901760
    %3486 = vmatmul.f32.gmra.mxu0 %v3485
    %v3487 = vpop.f32.mrf.mxu0
    %v3488 = vadd.f32 %v3367, %v3487
    %v3489 = vand.u32 %v1679, 4294901760
    %v3490 = vsub.f32 %v1679, %v3489
    %v3491 = vand.u32 %v3490, 4294901760
    %v3492 = vsub.f32 %v3490, %v3491
    %v3493 = vand.u32 %v3492, 4294901760
    %3494 = vmatmul.f32.gmra.mxu0 %v3493
    %v3495 = vpop.f32.mrf.mxu0
    %v3496 = vadd.f32 %v3371, %v3495
    %v3497 = vand.u32 %v1683, 4294901760
    %v3498 = vsub.f32 %v1683, %v3497
    %v3499 = vand.u32 %v3498, 4294901760
    %v3500 = vsub.f32 %v3498, %v3499
    %v3501 = vand.u32 %v3500, 4294901760
    %3502 = vmatmul.f32.gmra.mxu0 %v3501
    %v3503 = vpop.f32.mrf.mxu0
    %v3504 = vadd.f32 %v3375, %v3503
    %v3505 = vand.u32 %v1687, 4294901760
    %v3506 = vsub.f32 %v1687, %v3505
    %v3507 = vand.u32 %v3506, 4294901760
    %v3508 = vsub.f32 %v3506, %v3507
    %v3509 = vand.u32 %v3508, 4294901760
    %3510 = vmatmul.f32.gmra.mxu0 %v3509
    %v3511 = vpop.f32.mrf.mxu0
    %v3512 = vadd.f32 %v3379, %v3511
    %v3513 = vand.u32 %v1691, 4294901760
    %v3514 = vsub.f32 %v1691, %v3513
    %v3515 = vand.u32 %v3514, 4294901760
    %v3516 = vsub.f32 %v3514, %v3515
    %v3517 = vand.u32 %v3516, 4294901760
    %3518 = vmatmul.f32.gmra.mxu0 %v3517
    %v3519 = vpop.f32.mrf.mxu0
    %v3520 = vadd.f32 %v3383, %v3519
    %v3521 = vand.u32 %v1695, 4294901760
    %v3522 = vsub.f32 %v1695, %v3521
    %v3523 = vand.u32 %v3522, 4294901760
    %v3524 = vsub.f32 %v3522, %v3523
    %v3525 = vand.u32 %v3524, 4294901760
    %3526 = vmatmul.f32.gmra.mxu0 %v3525
    %v3527 = vpop.f32.mrf.mxu0
    %v3528 = vadd.f32 %v3387, %v3527
    %v3529 = vand.u32 %v1699, 4294901760
    %v3530 = vsub.f32 %v1699, %v3529
    %v3531 = vand.u32 %v3530, 4294901760
    %v3532 = vsub.f32 %v3530, %v3531
    %v3533 = vand.u32 %v3532, 4294901760
    %3534 = vmatmul.f32.gmra.mxu0 %v3533
    %v3535 = vpop.f32.mrf.mxu0
    %v3536 = vadd.f32 %v3391, %v3535
    %v3537 = vand.u32 %v1703, 4294901760
    %v3538 = vsub.f32 %v1703, %v3537
    %v3539 = vand.u32 %v3538, 4294901760
    %v3540 = vsub.f32 %v3538, %v3539
    %v3541 = vand.u32 %v3540, 4294901760
    %3542 = vmatmul.f32.gmra.mxu0 %v3541
    %v3543 = vpop.f32.mrf.mxu0
    %v3544 = vadd.f32 %v3395, %v3543
    %v3545 = vand.u32 %v1707, 4294901760
    %v3546 = vsub.f32 %v1707, %v3545
    %v3547 = vand.u32 %v3546, 4294901760
    %v3548 = vsub.f32 %v3546, %v3547
    %v3549 = vand.u32 %v3548, 4294901760
    %3550 = vmatmul.f32.gmra.mxu0 %v3549
    %v3551 = vpop.f32.mrf.mxu0
    %v3552 = vadd.f32 %v3399, %v3551
    %v3553 = vand.u32 %v1711, 4294901760
    %v3554 = vsub.f32 %v1711, %v3553
    %v3555 = vand.u32 %v3554, 4294901760
    %v3556 = vsub.f32 %v3554, %v3555
    %v3557 = vand.u32 %v3556, 4294901760
    %3558 = vmatmul.f32.gmra.mxu0 %v3557
    %v3559 = vpop.f32.mrf.mxu0
    %v3560 = vadd.f32 %v3403, %v3559
    %v3561 = vand.u32 %v1715, 4294901760
    %v3562 = vsub.f32 %v1715, %v3561
    %v3563 = vand.u32 %v3562, 4294901760
    %v3564 = vsub.f32 %v3562, %v3563
    %v3565 = vand.u32 %v3564, 4294901760
    %3566 = vmatmul.f32.gmra.mxu0 %v3565
    %v3567 = vpop.f32.mrf.mxu0
    %v3568 = vadd.f32 %v3407, %v3567
    %3569 = vdwg.mxu0
    %v3570 = vand.u32 %v918, 4294901760
    %v3571 = vsub.f32 %v918, %v3570
    %v3572 = vand.u32 %v3571, 4294901760
    %v3573 = vsub.f32 %v3571, %v3572
    %v3574 = vand.u32 %v3573, 4294901760
    %3575 = vmatpush.msra.mxu0 %v3574
    %v3576 = vand.u32 %v917, 4294901760
    %v3577 = vsub.f32 %v917, %v3576
    %v3578 = vand.u32 %v3577, 4294901760
    %v3579 = vsub.f32 %v3577, %v3578
    %v3580 = vand.u32 %v3579, 4294901760
    %3581 = vmatpush.msra.mxu0 %v3580
    %v3582 = vand.u32 %v916, 4294901760
    %v3583 = vsub.f32 %v916, %v3582
    %v3584 = vand.u32 %v3583, 4294901760
    %v3585 = vsub.f32 %v3583, %v3584
    %v3586 = vand.u32 %v3585, 4294901760
    %3587 = vmatpush.msra.mxu0 %v3586
    %v3588 = vand.u32 %v915, 4294901760
    %v3589 = vsub.f32 %v915, %v3588
    %v3590 = vand.u32 %v3589, 4294901760
    %v3591 = vsub.f32 %v3589, %v3590
    %v3592 = vand.u32 %v3591, 4294901760
    %3593 = vmatpush.msra.mxu0 %v3592
    %v3594 = vand.u32 %v914, 4294901760
    %v3595 = vsub.f32 %v914, %v3594
    %v3596 = vand.u32 %v3595, 4294901760
    %v3597 = vsub.f32 %v3595, %v3596
    %v3598 = vand.u32 %v3597, 4294901760
    %3599 = vmatpush.msra.mxu0 %v3598
    %v3600 = vand.u32 %v913, 4294901760
    %v3601 = vsub.f32 %v913, %v3600
    %v3602 = vand.u32 %v3601, 4294901760
    %v3603 = vsub.f32 %v3601, %v3602
    %v3604 = vand.u32 %v3603, 4294901760
    %3605 = vmatpush.msra.mxu0 %v3604
    %v3606 = vand.u32 %v912, 4294901760
    %v3607 = vsub.f32 %v912, %v3606
    %v3608 = vand.u32 %v3607, 4294901760
    %v3609 = vsub.f32 %v3607, %v3608
    %v3610 = vand.u32 %v3609, 4294901760
    %3611 = vmatpush.msra.mxu0 %v3610
    %v3612 = vand.u32 %v911, 4294901760
    %v3613 = vsub.f32 %v911, %v3612
    %v3614 = vand.u32 %v3613, 4294901760
    %v3615 = vsub.f32 %v3613, %v3614
    %v3616 = vand.u32 %v3615, 4294901760
    %3617 = vmatpush.msra.mxu0 %v3616
    %v3618 = vand.u32 %v910, 4294901760
    %v3619 = vsub.f32 %v910, %v3618
    %v3620 = vand.u32 %v3619, 4294901760
    %v3621 = vsub.f32 %v3619, %v3620
    %v3622 = vand.u32 %v3621, 4294901760
    %3623 = vmatpush.msra.mxu0 %v3622
    %v3624 = vand.u32 %v909, 4294901760
    %v3625 = vsub.f32 %v909, %v3624
    %v3626 = vand.u32 %v3625, 4294901760
    %v3627 = vsub.f32 %v3625, %v3626
    %v3628 = vand.u32 %v3627, 4294901760
    %3629 = vmatpush.msra.mxu0 %v3628
    %v3630 = vand.u32 %v908, 4294901760
    %v3631 = vsub.f32 %v908, %v3630
    %v3632 = vand.u32 %v3631, 4294901760
    %v3633 = vsub.f32 %v3631, %v3632
    %v3634 = vand.u32 %v3633, 4294901760
    %3635 = vmatpush.msra.mxu0 %v3634
    %v3636 = vand.u32 %v907, 4294901760
    %v3637 = vsub.f32 %v907, %v3636
    %v3638 = vand.u32 %v3637, 4294901760
    %v3639 = vsub.f32 %v3637, %v3638
    %v3640 = vand.u32 %v3639, 4294901760
    %3641 = vmatpush.msra.mxu0 %v3640
    %v3642 = vand.u32 %v906, 4294901760
    %v3643 = vsub.f32 %v906, %v3642
    %v3644 = vand.u32 %v3643, 4294901760
    %v3645 = vsub.f32 %v3643, %v3644
    %v3646 = vand.u32 %v3645, 4294901760
    %3647 = vmatpush.msra.mxu0 %v3646
    %v3648 = vand.u32 %v905, 4294901760
    %v3649 = vsub.f32 %v905, %v3648
    %v3650 = vand.u32 %v3649, 4294901760
    %v3651 = vsub.f32 %v3649, %v3650
    %v3652 = vand.u32 %v3651, 4294901760
    %3653 = vmatpush.msra.mxu0 %v3652
    %v3654 = vand.u32 %v904, 4294901760
    %v3655 = vsub.f32 %v904, %v3654
    %v3656 = vand.u32 %v3655, 4294901760
    %v3657 = vsub.f32 %v3655, %v3656
    %v3658 = vand.u32 %v3657, 4294901760
    %3659 = vmatpush.msra.mxu0 %v3658
    %v3660 = vand.u32 %v903, 4294901760
    %v3661 = vsub.f32 %v903, %v3660
    %v3662 = vand.u32 %v3661, 4294901760
    %v3663 = vsub.f32 %v3661, %v3662
    %v3664 = vand.u32 %v3663, 4294901760
    %3665 = vmatpush.msra.mxu0 %v3664
    %v3666 = vand.u32 %v1655, 4294901760
    %3667 = vmatmul.f32.gmra.mxu0 %v3666
    %v3668 = vpop.f32.mrf.mxu0
    %v3669 = vadd.f32 %v3448, %v3668
    %v3670 = vand.u32 %v1659, 4294901760
    %3671 = vmatmul.f32.gmra.mxu0 %v3670
    %v3672 = vpop.f32.mrf.mxu0
    %v3673 = vadd.f32 %v3456, %v3672
    %v3674 = vand.u32 %v1663, 4294901760
    %3675 = vmatmul.f32.gmra.mxu0 %v3674
    %v3676 = vpop.f32.mrf.mxu0
    %v3677 = vadd.f32 %v3464, %v3676
    %v3678 = vand.u32 %v1667, 4294901760
    %3679 = vmatmul.f32.gmra.mxu0 %v3678
    %v3680 = vpop.f32.mrf.mxu0
    %v3681 = vadd.f32 %v3472, %v3680
    %v3682 = vand.u32 %v1671, 4294901760
    %3683 = vmatmul.f32.gmra.mxu0 %v3682
    %v3684 = vpop.f32.mrf.mxu0
    %v3685 = vadd.f32 %v3480, %v3684
    %v3686 = vand.u32 %v1675, 4294901760
    %3687 = vmatmul.f32.gmra.mxu0 %v3686
    %v3688 = vpop.f32.mrf.mxu0
    %v3689 = vadd.f32 %v3488, %v3688
    %v3690 = vand.u32 %v1679, 4294901760
    %3691 = vmatmul.f32.gmra.mxu0 %v3690
    %v3692 = vpop.f32.mrf.mxu0
    %v3693 = vadd.f32 %v3496, %v3692
    %v3694 = vand.u32 %v1683, 4294901760
    %3695 = vmatmul.f32.gmra.mxu0 %v3694
    %v3696 = vpop.f32.mrf.mxu0
    %v3697 = vadd.f32 %v3504, %v3696
    %v3698 = vand.u32 %v1687, 4294901760
    %3699 = vmatmul.f32.gmra.mxu0 %v3698
    %v3700 = vpop.f32.mrf.mxu0
    %v3701 = vadd.f32 %v3512, %v3700
    %v3702 = vand.u32 %v1691, 4294901760
    %3703 = vmatmul.f32.gmra.mxu0 %v3702
    %v3704 = vpop.f32.mrf.mxu0
    %v3705 = vadd.f32 %v3520, %v3704
    %v3706 = vand.u32 %v1695, 4294901760
    %3707 = vmatmul.f32.gmra.mxu0 %v3706
    %v3708 = vpop.f32.mrf.mxu0
    %v3709 = vadd.f32 %v3528, %v3708
    %v3710 = vand.u32 %v1699, 4294901760
    %3711 = vmatmul.f32.gmra.mxu0 %v3710
    %v3712 = vpop.f32.mrf.mxu0
    %v3713 = vadd.f32 %v3536, %v3712
    %v3714 = vand.u32 %v1703, 4294901760
    %3715 = vmatmul.f32.gmra.mxu0 %v3714
    %v3716 = vpop.f32.mrf.mxu0
    %v3717 = vadd.f32 %v3544, %v3716
    %v3718 = vand.u32 %v1707, 4294901760
    %3719 = vmatmul.f32.gmra.mxu0 %v3718
    %v3720 = vpop.f32.mrf.mxu0
    %v3721 = vadd.f32 %v3552, %v3720
    %v3722 = vand.u32 %v1711, 4294901760
    %3723 = vmatmul.f32.gmra.mxu0 %v3722
    %v3724 = vpop.f32.mrf.mxu0
    %v3725 = vadd.f32 %v3560, %v3724
    %v3726 = vand.u32 %v1715, 4294901760
    %3727 = vmatmul.f32.gmra.mxu0 %v3726
    %v3728 = vpop.f32.mrf.mxu0
    %v3729 = vadd.f32 %v3568, %v3728
    %3730 = vdwg.mxu0
    %v3731 = vand.u32 %v918, 4294901760
    %v3732 = vsub.f32 %v918, %v3731
    %3733 = vmatpush.msra.mxu0 %v3732
    %v3734 = vand.u32 %v917, 4294901760
    %v3735 = vsub.f32 %v917, %v3734
    %3736 = vmatpush.msra.mxu0 %v3735
    %v3737 = vand.u32 %v916, 4294901760
    %v3738 = vsub.f32 %v916, %v3737
    %3739 = vmatpush.msra.mxu0 %v3738
    %v3740 = vand.u32 %v915, 4294901760
    %v3741 = vsub.f32 %v915, %v3740
    %3742 = vmatpush.msra.mxu0 %v3741
    %v3743 = vand.u32 %v914, 4294901760
    %v3744 = vsub.f32 %v914, %v3743
    %3745 = vmatpush.msra.mxu0 %v3744
    %v3746 = vand.u32 %v913, 4294901760
    %v3747 = vsub.f32 %v913, %v3746
    %3748 = vmatpush.msra.mxu0 %v3747
    %v3749 = vand.u32 %v912, 4294901760
    %v3750 = vsub.f32 %v912, %v3749
    %3751 = vmatpush.msra.mxu0 %v3750
    %v3752 = vand.u32 %v911, 4294901760
    %v3753 = vsub.f32 %v911, %v3752
    %3754 = vmatpush.msra.mxu0 %v3753
    %v3755 = vand.u32 %v910, 4294901760
    %v3756 = vsub.f32 %v910, %v3755
    %3757 = vmatpush.msra.mxu0 %v3756
    %v3758 = vand.u32 %v909, 4294901760
    %v3759 = vsub.f32 %v909, %v3758
    %3760 = vmatpush.msra.mxu0 %v3759
    %v3761 = vand.u32 %v908, 4294901760
    %v3762 = vsub.f32 %v908, %v3761
    %3763 = vmatpush.msra.mxu0 %v3762
    %v3764 = vand.u32 %v907, 4294901760
    %v3765 = vsub.f32 %v907, %v3764
    %3766 = vmatpush.msra.mxu0 %v3765
    %v3767 = vand.u32 %v906, 4294901760
    %v3768 = vsub.f32 %v906, %v3767
    %3769 = vmatpush.msra.mxu0 %v3768
    %v3770 = vand.u32 %v905, 4294901760
    %v3771 = vsub.f32 %v905, %v3770
    %3772 = vmatpush.msra.mxu0 %v3771
    %v3773 = vand.u32 %v904, 4294901760
    %v3774 = vsub.f32 %v904, %v3773
    %3775 = vmatpush.msra.mxu0 %v3774
    %v3776 = vand.u32 %v903, 4294901760
    %v3777 = vsub.f32 %v903, %v3776
    %3778 = vmatpush.msra.mxu0 %v3777
    %v3779 = vand.u32 %v1655, 4294901760
    %v3780 = vsub.f32 %v1655, %v3779
    %3781 = vmatmul.f32.gmra.mxu0 %v3780
    %v3782 = vpop.f32.mrf.mxu0
    %v3783 = vadd.f32 %v3669, %v3782
    %v3784 = vand.u32 %v1659, 4294901760
    %v3785 = vsub.f32 %v1659, %v3784
    %3786 = vmatmul.f32.gmra.mxu0 %v3785
    %v3787 = vpop.f32.mrf.mxu0
    %v3788 = vadd.f32 %v3673, %v3787
    %v3789 = vand.u32 %v1663, 4294901760
    %v3790 = vsub.f32 %v1663, %v3789
    %3791 = vmatmul.f32.gmra.mxu0 %v3790
    %v3792 = vpop.f32.mrf.mxu0
    %v3793 = vadd.f32 %v3677, %v3792
    %v3794 = vand.u32 %v1667, 4294901760
    %v3795 = vsub.f32 %v1667, %v3794
    %3796 = vmatmul.f32.gmra.mxu0 %v3795
    %v3797 = vpop.f32.mrf.mxu0
    %v3798 = vadd.f32 %v3681, %v3797
    %v3799 = vand.u32 %v1671, 4294901760
    %v3800 = vsub.f32 %v1671, %v3799
    %3801 = vmatmul.f32.gmra.mxu0 %v3800
    %v3802 = vpop.f32.mrf.mxu0
    %v3803 = vadd.f32 %v3685, %v3802
    %v3804 = vand.u32 %v1675, 4294901760
    %v3805 = vsub.f32 %v1675, %v3804
    %3806 = vmatmul.f32.gmra.mxu0 %v3805
    %v3807 = vpop.f32.mrf.mxu0
    %v3808 = vadd.f32 %v3689, %v3807
    %v3809 = vand.u32 %v1679, 4294901760
    %v3810 = vsub.f32 %v1679, %v3809
    %3811 = vmatmul.f32.gmra.mxu0 %v3810
    %v3812 = vpop.f32.mrf.mxu0
    %v3813 = vadd.f32 %v3693, %v3812
    %v3814 = vand.u32 %v1683, 4294901760
    %v3815 = vsub.f32 %v1683, %v3814
    %3816 = vmatmul.f32.gmra.mxu0 %v3815
    %v3817 = vpop.f32.mrf.mxu0
    %v3818 = vadd.f32 %v3697, %v3817
    %v3819 = vand.u32 %v1687, 4294901760
    %v3820 = vsub.f32 %v1687, %v3819
    %3821 = vmatmul.f32.gmra.mxu0 %v3820
    %v3822 = vpop.f32.mrf.mxu0
    %v3823 = vadd.f32 %v3701, %v3822
    %v3824 = vand.u32 %v1691, 4294901760
    %v3825 = vsub.f32 %v1691, %v3824
    %3826 = vmatmul.f32.gmra.mxu0 %v3825
    %v3827 = vpop.f32.mrf.mxu0
    %v3828 = vadd.f32 %v3705, %v3827
    %v3829 = vand.u32 %v1695, 4294901760
    %v3830 = vsub.f32 %v1695, %v3829
    %3831 = vmatmul.f32.gmra.mxu0 %v3830
    %v3832 = vpop.f32.mrf.mxu0
    %v3833 = vadd.f32 %v3709, %v3832
    %v3834 = vand.u32 %v1699, 4294901760
    %v3835 = vsub.f32 %v1699, %v3834
    %3836 = vmatmul.f32.gmra.mxu0 %v3835
    %v3837 = vpop.f32.mrf.mxu0
    %v3838 = vadd.f32 %v3713, %v3837
    %v3839 = vand.u32 %v1703, 4294901760
    %v3840 = vsub.f32 %v1703, %v3839
    %3841 = vmatmul.f32.gmra.mxu0 %v3840
    %v3842 = vpop.f32.mrf.mxu0
    %v3843 = vadd.f32 %v3717, %v3842
    %v3844 = vand.u32 %v1707, 4294901760
    %v3845 = vsub.f32 %v1707, %v3844
    %3846 = vmatmul.f32.gmra.mxu0 %v3845
    %v3847 = vpop.f32.mrf.mxu0
    %v3848 = vadd.f32 %v3721, %v3847
    %v3849 = vand.u32 %v1711, 4294901760
    %v3850 = vsub.f32 %v1711, %v3849
    %3851 = vmatmul.f32.gmra.mxu0 %v3850
    %v3852 = vpop.f32.mrf.mxu0
    %v3853 = vadd.f32 %v3725, %v3852
    %v3854 = vand.u32 %v1715, 4294901760
    %v3855 = vsub.f32 %v1715, %v3854
    %3856 = vmatmul.f32.gmra.mxu0 %v3855
    %v3857 = vpop.f32.mrf.mxu0
    %v3858 = vadd.f32 %v3729, %v3857
    %3859 = vdwg.mxu0
    %v3860 = vand.u32 %v918, 4294901760
    %3861 = vmatpush.msra.mxu0 %v3860
    %v3862 = vand.u32 %v917, 4294901760
    %3863 = vmatpush.msra.mxu0 %v3862
    %v3864 = vand.u32 %v916, 4294901760
    %3865 = vmatpush.msra.mxu0 %v3864
    %v3866 = vand.u32 %v915, 4294901760
    %3867 = vmatpush.msra.mxu0 %v3866
    %v3868 = vand.u32 %v914, 4294901760
    %3869 = vmatpush.msra.mxu0 %v3868
    %v3870 = vand.u32 %v913, 4294901760
    %3871 = vmatpush.msra.mxu0 %v3870
    %v3872 = vand.u32 %v912, 4294901760
    %3873 = vmatpush.msra.mxu0 %v3872
    %v3874 = vand.u32 %v911, 4294901760
    %3875 = vmatpush.msra.mxu0 %v3874
    %v3876 = vand.u32 %v910, 4294901760
    %3877 = vmatpush.msra.mxu0 %v3876
    %v3878 = vand.u32 %v909, 4294901760
    %3879 = vmatpush.msra.mxu0 %v3878
    %v3880 = vand.u32 %v908, 4294901760
    %3881 = vmatpush.msra.mxu0 %v3880
    %v3882 = vand.u32 %v907, 4294901760
    %3883 = vmatpush.msra.mxu0 %v3882
    %v3884 = vand.u32 %v906, 4294901760
    %3885 = vmatpush.msra.mxu0 %v3884
    %v3886 = vand.u32 %v905, 4294901760
    %3887 = vmatpush.msra.mxu0 %v3886
    %v3888 = vand.u32 %v904, 4294901760
    %3889 = vmatpush.msra.mxu0 %v3888
    %v3890 = vand.u32 %v903, 4294901760
    %3891 = vmatpush.msra.mxu0 %v3890
    %v3892 = vand.u32 %v1655, 4294901760
    %v3893 = vsub.f32 %v1655, %v3892
    %v3894 = vand.u32 %v3893, 4294901760
    %3895 = vmatmul.f32.gmra.mxu0 %v3894
    %v3896 = vpop.f32.mrf.mxu0
    %v3897 = vadd.f32 %v3783, %v3896
    %v3898 = vand.u32 %v1659, 4294901760
    %v3899 = vsub.f32 %v1659, %v3898
    %v3900 = vand.u32 %v3899, 4294901760
    %3901 = vmatmul.f32.gmra.mxu0 %v3900
    %v3902 = vpop.f32.mrf.mxu0
    %v3903 = vadd.f32 %v3788, %v3902
    %v3904 = vand.u32 %v1663, 4294901760
    %v3905 = vsub.f32 %v1663, %v3904
    %v3906 = vand.u32 %v3905, 4294901760
    %3907 = vmatmul.f32.gmra.mxu0 %v3906
    %v3908 = vpop.f32.mrf.mxu0
    %v3909 = vadd.f32 %v3793, %v3908
    %v3910 = vand.u32 %v1667, 4294901760
    %v3911 = vsub.f32 %v1667, %v3910
    %v3912 = vand.u32 %v3911, 4294901760
    %3913 = vmatmul.f32.gmra.mxu0 %v3912
    %v3914 = vpop.f32.mrf.mxu0
    %v3915 = vadd.f32 %v3798, %v3914
    %v3916 = vand.u32 %v1671, 4294901760
    %v3917 = vsub.f32 %v1671, %v3916
    %v3918 = vand.u32 %v3917, 4294901760
    %3919 = vmatmul.f32.gmra.mxu0 %v3918
    %v3920 = vpop.f32.mrf.mxu0
    %v3921 = vadd.f32 %v3803, %v3920
    %v3922 = vand.u32 %v1675, 4294901760
    %v3923 = vsub.f32 %v1675, %v3922
    %v3924 = vand.u32 %v3923, 4294901760
    %3925 = vmatmul.f32.gmra.mxu0 %v3924
    %v3926 = vpop.f32.mrf.mxu0
    %v3927 = vadd.f32 %v3808, %v3926
    %v3928 = vand.u32 %v1679, 4294901760
    %v3929 = vsub.f32 %v1679, %v3928
    %v3930 = vand.u32 %v3929, 4294901760
    %3931 = vmatmul.f32.gmra.mxu0 %v3930
    %v3932 = vpop.f32.mrf.mxu0
    %v3933 = vadd.f32 %v3813, %v3932
    %v3934 = vand.u32 %v1683, 4294901760
    %v3935 = vsub.f32 %v1683, %v3934
    %v3936 = vand.u32 %v3935, 4294901760
    %3937 = vmatmul.f32.gmra.mxu0 %v3936
    %v3938 = vpop.f32.mrf.mxu0
    %v3939 = vadd.f32 %v3818, %v3938
    %v3940 = vand.u32 %v1687, 4294901760
    %v3941 = vsub.f32 %v1687, %v3940
    %v3942 = vand.u32 %v3941, 4294901760
    %3943 = vmatmul.f32.gmra.mxu0 %v3942
    %v3944 = vpop.f32.mrf.mxu0
    %v3945 = vadd.f32 %v3823, %v3944
    %v3946 = vand.u32 %v1691, 4294901760
    %v3947 = vsub.f32 %v1691, %v3946
    %v3948 = vand.u32 %v3947, 4294901760
    %3949 = vmatmul.f32.gmra.mxu0 %v3948
    %v3950 = vpop.f32.mrf.mxu0
    %v3951 = vadd.f32 %v3828, %v3950
    %v3952 = vand.u32 %v1695, 4294901760
    %v3953 = vsub.f32 %v1695, %v3952
    %v3954 = vand.u32 %v3953, 4294901760
    %3955 = vmatmul.f32.gmra.mxu0 %v3954
    %v3956 = vpop.f32.mrf.mxu0
    %v3957 = vadd.f32 %v3833, %v3956
    %v3958 = vand.u32 %v1699, 4294901760
    %v3959 = vsub.f32 %v1699, %v3958
    %v3960 = vand.u32 %v3959, 4294901760
    %3961 = vmatmul.f32.gmra.mxu0 %v3960
    %v3962 = vpop.f32.mrf.mxu0
    %v3963 = vadd.f32 %v3838, %v3962
    %v3964 = vand.u32 %v1703, 4294901760
    %v3965 = vsub.f32 %v1703, %v3964
    %v3966 = vand.u32 %v3965, 4294901760
    %3967 = vmatmul.f32.gmra.mxu0 %v3966
    %v3968 = vpop.f32.mrf.mxu0
    %v3969 = vadd.f32 %v3843, %v3968
    %v3970 = vand.u32 %v1707, 4294901760
    %v3971 = vsub.f32 %v1707, %v3970
    %v3972 = vand.u32 %v3971, 4294901760
    %3973 = vmatmul.f32.gmra.mxu0 %v3972
    %v3974 = vpop.f32.mrf.mxu0
    %v3975 = vadd.f32 %v3848, %v3974
    %v3976 = vand.u32 %v1711, 4294901760
    %v3977 = vsub.f32 %v1711, %v3976
    %v3978 = vand.u32 %v3977, 4294901760
    %3979 = vmatmul.f32.gmra.mxu0 %v3978
    %v3980 = vpop.f32.mrf.mxu0
    %v3981 = vadd.f32 %v3853, %v3980
    %v3982 = vand.u32 %v1715, 4294901760
    %v3983 = vsub.f32 %v1715, %v3982
    %v3984 = vand.u32 %v3983, 4294901760
    %3985 = vmatmul.f32.gmra.mxu0 %v3984
    %v3986 = vpop.f32.mrf.mxu0
    %v3987 = vadd.f32 %v3858, %v3986
    %3988 = vdwg.mxu0
    %v3989 = vand.u32 %v918, 4294901760
    %v3990 = vsub.f32 %v918, %v3989
    %v3991 = vand.u32 %v3990, 4294901760
    %3992 = vmatpush.msra.mxu0 %v3991
    %v3993 = vand.u32 %v917, 4294901760
    %v3994 = vsub.f32 %v917, %v3993
    %v3995 = vand.u32 %v3994, 4294901760
    %3996 = vmatpush.msra.mxu0 %v3995
    %v3997 = vand.u32 %v916, 4294901760
    %v3998 = vsub.f32 %v916, %v3997
    %v3999 = vand.u32 %v3998, 4294901760
    %4000 = vmatpush.msra.mxu0 %v3999
    %v4001 = vand.u32 %v915, 4294901760
    %v4002 = vsub.f32 %v915, %v4001
    %v4003 = vand.u32 %v4002, 4294901760
    %4004 = vmatpush.msra.mxu0 %v4003
    %v4005 = vand.u32 %v914, 4294901760
    %v4006 = vsub.f32 %v914, %v4005
    %v4007 = vand.u32 %v4006, 4294901760
    %4008 = vmatpush.msra.mxu0 %v4007
    %v4009 = vand.u32 %v913, 4294901760
    %v4010 = vsub.f32 %v913, %v4009
    %v4011 = vand.u32 %v4010, 4294901760
    %4012 = vmatpush.msra.mxu0 %v4011
    %v4013 = vand.u32 %v912, 4294901760
    %v4014 = vsub.f32 %v912, %v4013
    %v4015 = vand.u32 %v4014, 4294901760
    %4016 = vmatpush.msra.mxu0 %v4015
    %v4017 = vand.u32 %v911, 4294901760
    %v4018 = vsub.f32 %v911, %v4017
    %v4019 = vand.u32 %v4018, 4294901760
    %4020 = vmatpush.msra.mxu0 %v4019
    %v4021 = vand.u32 %v910, 4294901760
    %v4022 = vsub.f32 %v910, %v4021
    %v4023 = vand.u32 %v4022, 4294901760
    %4024 = vmatpush.msra.mxu0 %v4023
    %v4025 = vand.u32 %v909, 4294901760
    %v4026 = vsub.f32 %v909, %v4025
    %v4027 = vand.u32 %v4026, 4294901760
    %4028 = vmatpush.msra.mxu0 %v4027
    %v4029 = vand.u32 %v908, 4294901760
    %v4030 = vsub.f32 %v908, %v4029
    %v4031 = vand.u32 %v4030, 4294901760
    %4032 = vmatpush.msra.mxu0 %v4031
    %v4033 = vand.u32 %v907, 4294901760
    %v4034 = vsub.f32 %v907, %v4033
    %v4035 = vand.u32 %v4034, 4294901760
    %4036 = vmatpush.msra.mxu0 %v4035
    %v4037 = vand.u32 %v906, 4294901760
    %v4038 = vsub.f32 %v906, %v4037
    %v4039 = vand.u32 %v4038, 4294901760
    %4040 = vmatpush.msra.mxu0 %v4039
    %v4041 = vand.u32 %v905, 4294901760
    %v4042 = vsub.f32 %v905, %v4041
    %v4043 = vand.u32 %v4042, 4294901760
    %4044 = vmatpush.msra.mxu0 %v4043
    %v4045 = vand.u32 %v904, 4294901760
    %v4046 = vsub.f32 %v904, %v4045
    %v4047 = vand.u32 %v4046, 4294901760
    %4048 = vmatpush.msra.mxu0 %v4047
    %v4049 = vand.u32 %v903, 4294901760
    %v4050 = vsub.f32 %v903, %v4049
    %v4051 = vand.u32 %v4050, 4294901760
    %4052 = vmatpush.msra.mxu0 %v4051
    %v4053 = vand.u32 %v1655, 4294901760
    %4054 = vmatmul.f32.gmra.mxu0 %v4053
    %v4055 = vpop.f32.mrf.mxu0
    %v4056 = vadd.f32 %v3897, %v4055
    %v4057 = vand.u32 %v1659, 4294901760
    %4058 = vmatmul.f32.gmra.mxu0 %v4057
    %v4059 = vpop.f32.mrf.mxu0
    %v4060 = vadd.f32 %v3903, %v4059
    %v4061 = vand.u32 %v1663, 4294901760
    %4062 = vmatmul.f32.gmra.mxu0 %v4061
    %v4063 = vpop.f32.mrf.mxu0
    %v4064 = vadd.f32 %v3909, %v4063
    %v4065 = vand.u32 %v1667, 4294901760
    %4066 = vmatmul.f32.gmra.mxu0 %v4065
    %v4067 = vpop.f32.mrf.mxu0
    %v4068 = vadd.f32 %v3915, %v4067
    %v4069 = vand.u32 %v1671, 4294901760
    %4070 = vmatmul.f32.gmra.mxu0 %v4069
    %v4071 = vpop.f32.mrf.mxu0
    %v4072 = vadd.f32 %v3921, %v4071
    %v4073 = vand.u32 %v1675, 4294901760
    %4074 = vmatmul.f32.gmra.mxu0 %v4073
    %v4075 = vpop.f32.mrf.mxu0
    %v4076 = vadd.f32 %v3927, %v4075
    %v4077 = vand.u32 %v1679, 4294901760
    %4078 = vmatmul.f32.gmra.mxu0 %v4077
    %v4079 = vpop.f32.mrf.mxu0
    %v4080 = vadd.f32 %v3933, %v4079
    %v4081 = vand.u32 %v1683, 4294901760
    %4082 = vmatmul.f32.gmra.mxu0 %v4081
    %v4083 = vpop.f32.mrf.mxu0
    %v4084 = vadd.f32 %v3939, %v4083
    %v4085 = vand.u32 %v1687, 4294901760
    %4086 = vmatmul.f32.gmra.mxu0 %v4085
    %v4087 = vpop.f32.mrf.mxu0
    %v4088 = vadd.f32 %v3945, %v4087
    %v4089 = vand.u32 %v1691, 4294901760
    %4090 = vmatmul.f32.gmra.mxu0 %v4089
    %v4091 = vpop.f32.mrf.mxu0
    %v4092 = vadd.f32 %v3951, %v4091
    %v4093 = vand.u32 %v1695, 4294901760
    %4094 = vmatmul.f32.gmra.mxu0 %v4093
    %v4095 = vpop.f32.mrf.mxu0
    %v4096 = vadd.f32 %v3957, %v4095
    %v4097 = vand.u32 %v1699, 4294901760
    %4098 = vmatmul.f32.gmra.mxu0 %v4097
    %v4099 = vpop.f32.mrf.mxu0
    %v4100 = vadd.f32 %v3963, %v4099
    %v4101 = vand.u32 %v1703, 4294901760
    %4102 = vmatmul.f32.gmra.mxu0 %v4101
    %v4103 = vpop.f32.mrf.mxu0
    %v4104 = vadd.f32 %v3969, %v4103
    %v4105 = vand.u32 %v1707, 4294901760
    %4106 = vmatmul.f32.gmra.mxu0 %v4105
    %v4107 = vpop.f32.mrf.mxu0
    %v4108 = vadd.f32 %v3975, %v4107
    %v4109 = vand.u32 %v1711, 4294901760
    %4110 = vmatmul.f32.gmra.mxu0 %v4109
    %v4111 = vpop.f32.mrf.mxu0
    %v4112 = vadd.f32 %v3981, %v4111
    %v4113 = vand.u32 %v1715, 4294901760
    %4114 = vmatmul.f32.gmra.mxu0 %v4113
    %v4115 = vpop.f32.mrf.mxu0
    %v4116 = vadd.f32 %v3987, %v4115
    %4117 = vdwg.mxu0
    %v4118 = vand.u32 %v918, 4294901760
    %4119 = vmatpush.msra.mxu0 %v4118
    %v4120 = vand.u32 %v917, 4294901760
    %4121 = vmatpush.msra.mxu0 %v4120
    %v4122 = vand.u32 %v916, 4294901760
    %4123 = vmatpush.msra.mxu0 %v4122
    %v4124 = vand.u32 %v915, 4294901760
    %4125 = vmatpush.msra.mxu0 %v4124
    %v4126 = vand.u32 %v914, 4294901760
    %4127 = vmatpush.msra.mxu0 %v4126
    %v4128 = vand.u32 %v913, 4294901760
    %4129 = vmatpush.msra.mxu0 %v4128
    %v4130 = vand.u32 %v912, 4294901760
    %4131 = vmatpush.msra.mxu0 %v4130
    %v4132 = vand.u32 %v911, 4294901760
    %4133 = vmatpush.msra.mxu0 %v4132
    %v4134 = vand.u32 %v910, 4294901760
    %4135 = vmatpush.msra.mxu0 %v4134
    %v4136 = vand.u32 %v909, 4294901760
    %4137 = vmatpush.msra.mxu0 %v4136
    %v4138 = vand.u32 %v908, 4294901760
    %4139 = vmatpush.msra.mxu0 %v4138
    %v4140 = vand.u32 %v907, 4294901760
    %4141 = vmatpush.msra.mxu0 %v4140
    %v4142 = vand.u32 %v906, 4294901760
    %4143 = vmatpush.msra.mxu0 %v4142
    %v4144 = vand.u32 %v905, 4294901760
    %4145 = vmatpush.msra.mxu0 %v4144
    %v4146 = vand.u32 %v904, 4294901760
    %4147 = vmatpush.msra.mxu0 %v4146
    %v4148 = vand.u32 %v903, 4294901760
    %4149 = vmatpush.msra.mxu0 %v4148
    %v4150 = vand.u32 %v1655, 4294901760
    %4151 = vmatmul.f32.gmra.mxu0 %v4150
    %v4152 = vpop.f32.mrf.mxu0
    %v4153 = vadd.f32 %v4056, %v4152
    %v4154 = vand.u32 %v1659, 4294901760
    %4155 = vmatmul.f32.gmra.mxu0 %v4154
    %v4156 = vpop.f32.mrf.mxu0
    %v4157 = vadd.f32 %v4060, %v4156
    %v4158 = vand.u32 %v1663, 4294901760
    %4159 = vmatmul.f32.gmra.mxu0 %v4158
    %v4160 = vpop.f32.mrf.mxu0
    %v4161 = vadd.f32 %v4064, %v4160
    %v4162 = vand.u32 %v1667, 4294901760
    %4163 = vmatmul.f32.gmra.mxu0 %v4162
    %v4164 = vpop.f32.mrf.mxu0
    %v4165 = vadd.f32 %v4068, %v4164
    %v4166 = vand.u32 %v1671, 4294901760
    %4167 = vmatmul.f32.gmra.mxu0 %v4166
    %v4168 = vpop.f32.mrf.mxu0
    %v4169 = vadd.f32 %v4072, %v4168
    %v4170 = vand.u32 %v1675, 4294901760
    %4171 = vmatmul.f32.gmra.mxu0 %v4170
    %v4172 = vpop.f32.mrf.mxu0
    %v4173 = vadd.f32 %v4076, %v4172
    %v4174 = vand.u32 %v1679, 4294901760
    %4175 = vmatmul.f32.gmra.mxu0 %v4174
    %v4176 = vpop.f32.mrf.mxu0
    %v4177 = vadd.f32 %v4080, %v4176
    %v4178 = vand.u32 %v1683, 4294901760
    %4179 = vmatmul.f32.gmra.mxu0 %v4178
    %v4180 = vpop.f32.mrf.mxu0
    %v4181 = vadd.f32 %v4084, %v4180
    %v4182 = vand.u32 %v1687, 4294901760
    %4183 = vmatmul.f32.gmra.mxu0 %v4182
    %v4184 = vpop.f32.mrf.mxu0
    %v4185 = vadd.f32 %v4088, %v4184
    %v4186 = vand.u32 %v1691, 4294901760
    %4187 = vmatmul.f32.gmra.mxu0 %v4186
    %v4188 = vpop.f32.mrf.mxu0
    %v4189 = vadd.f32 %v4092, %v4188
    %v4190 = vand.u32 %v1695, 4294901760
    %4191 = vmatmul.f32.gmra.mxu0 %v4190
    %v4192 = vpop.f32.mrf.mxu0
    %v4193 = vadd.f32 %v4096, %v4192
    %v4194 = vand.u32 %v1699, 4294901760
    %4195 = vmatmul.f32.gmra.mxu0 %v4194
    %v4196 = vpop.f32.mrf.mxu0
    %v4197 = vadd.f32 %v4100, %v4196
    %v4198 = vand.u32 %v1703, 4294901760
    %4199 = vmatmul.f32.gmra.mxu0 %v4198
    %v4200 = vpop.f32.mrf.mxu0
    %v4201 = vadd.f32 %v4104, %v4200
    %v4202 = vand.u32 %v1707, 4294901760
    %4203 = vmatmul.f32.gmra.mxu0 %v4202
    %v4204 = vpop.f32.mrf.mxu0
    %v4205 = vadd.f32 %v4108, %v4204
    %v4206 = vand.u32 %v1711, 4294901760
    %4207 = vmatmul.f32.gmra.mxu0 %v4206
    %v4208 = vpop.f32.mrf.mxu0
    %v4209 = vadd.f32 %v4112, %v4208
    %v4210 = vand.u32 %v1715, 4294901760
    %4211 = vmatmul.f32.gmra.mxu0 %v4210
    %v4212 = vpop.f32.mrf.mxu0
    %v4213 = vadd.f32 %v4116, %v4212
    %4214 = vdwg.mxu0
    %v4215 = vand.u32 %v934, 4294901760
    %4216 = vmatpush.msra.mxu0 %v4215
    %v4217 = vand.u32 %v933, 4294901760
    %4218 = vmatpush.msra.mxu0 %v4217
    %v4219 = vand.u32 %v932, 4294901760
    %4220 = vmatpush.msra.mxu0 %v4219
    %v4221 = vand.u32 %v931, 4294901760
    %4222 = vmatpush.msra.mxu0 %v4221
    %v4223 = vand.u32 %v930, 4294901760
    %4224 = vmatpush.msra.mxu0 %v4223
    %v4225 = vand.u32 %v929, 4294901760
    %4226 = vmatpush.msra.mxu0 %v4225
    %v4227 = vand.u32 %v928, 4294901760
    %4228 = vmatpush.msra.mxu0 %v4227
    %v4229 = vand.u32 %v927, 4294901760
    %4230 = vmatpush.msra.mxu0 %v4229
    %v4231 = vand.u32 %v926, 4294901760
    %4232 = vmatpush.msra.mxu0 %v4231
    %v4233 = vand.u32 %v925, 4294901760
    %4234 = vmatpush.msra.mxu0 %v4233
    %v4235 = vand.u32 %v924, 4294901760
    %4236 = vmatpush.msra.mxu0 %v4235
    %v4237 = vand.u32 %v923, 4294901760
    %4238 = vmatpush.msra.mxu0 %v4237
    %v4239 = vand.u32 %v922, 4294901760
    %4240 = vmatpush.msra.mxu0 %v4239
    %v4241 = vand.u32 %v921, 4294901760
    %4242 = vmatpush.msra.mxu0 %v4241
    %v4243 = vand.u32 %v920, 4294901760
    %4244 = vmatpush.msra.mxu0 %v4243
    %v4245 = vand.u32 %v919, 4294901760
    %4246 = vmatpush.msra.mxu0 %v4245
    %v4247 = vand.u32 %v1656, 4294901760
    %v4248 = vsub.f32 %v1656, %v4247
    %v4249 = vand.u32 %v4248, 4294901760
    %v4250 = vsub.f32 %v4248, %v4249
    %v4251 = vand.u32 %v4250, 4294901760
    %4252 = vmatmul.f32.gmra.mxu0 %v4251
    %v4253 = vpop.f32.mrf.mxu0
    %v4254 = vadd.f32 %v4153, %v4253
    %v4255 = vand.u32 %v1660, 4294901760
    %v4256 = vsub.f32 %v1660, %v4255
    %v4257 = vand.u32 %v4256, 4294901760
    %v4258 = vsub.f32 %v4256, %v4257
    %v4259 = vand.u32 %v4258, 4294901760
    %4260 = vmatmul.f32.gmra.mxu0 %v4259
    %v4261 = vpop.f32.mrf.mxu0
    %v4262 = vadd.f32 %v4157, %v4261
    %v4263 = vand.u32 %v1664, 4294901760
    %v4264 = vsub.f32 %v1664, %v4263
    %v4265 = vand.u32 %v4264, 4294901760
    %v4266 = vsub.f32 %v4264, %v4265
    %v4267 = vand.u32 %v4266, 4294901760
    %4268 = vmatmul.f32.gmra.mxu0 %v4267
    %v4269 = vpop.f32.mrf.mxu0
    %v4270 = vadd.f32 %v4161, %v4269
    %v4271 = vand.u32 %v1668, 4294901760
    %v4272 = vsub.f32 %v1668, %v4271
    %v4273 = vand.u32 %v4272, 4294901760
    %v4274 = vsub.f32 %v4272, %v4273
    %v4275 = vand.u32 %v4274, 4294901760
    %4276 = vmatmul.f32.gmra.mxu0 %v4275
    %v4277 = vpop.f32.mrf.mxu0
    %v4278 = vadd.f32 %v4165, %v4277
    %v4279 = vand.u32 %v1672, 4294901760
    %v4280 = vsub.f32 %v1672, %v4279
    %v4281 = vand.u32 %v4280, 4294901760
    %v4282 = vsub.f32 %v4280, %v4281
    %v4283 = vand.u32 %v4282, 4294901760
    %4284 = vmatmul.f32.gmra.mxu0 %v4283
    %v4285 = vpop.f32.mrf.mxu0
    %v4286 = vadd.f32 %v4169, %v4285
    %v4287 = vand.u32 %v1676, 4294901760
    %v4288 = vsub.f32 %v1676, %v4287
    %v4289 = vand.u32 %v4288, 4294901760
    %v4290 = vsub.f32 %v4288, %v4289
    %v4291 = vand.u32 %v4290, 4294901760
    %4292 = vmatmul.f32.gmra.mxu0 %v4291
    %v4293 = vpop.f32.mrf.mxu0
    %v4294 = vadd.f32 %v4173, %v4293
    %v4295 = vand.u32 %v1680, 4294901760
    %v4296 = vsub.f32 %v1680, %v4295
    %v4297 = vand.u32 %v4296, 4294901760
    %v4298 = vsub.f32 %v4296, %v4297
    %v4299 = vand.u32 %v4298, 4294901760
    %4300 = vmatmul.f32.gmra.mxu0 %v4299
    %v4301 = vpop.f32.mrf.mxu0
    %v4302 = vadd.f32 %v4177, %v4301
    %v4303 = vand.u32 %v1684, 4294901760
    %v4304 = vsub.f32 %v1684, %v4303
    %v4305 = vand.u32 %v4304, 4294901760
    %v4306 = vsub.f32 %v4304, %v4305
    %v4307 = vand.u32 %v4306, 4294901760
    %4308 = vmatmul.f32.gmra.mxu0 %v4307
    %v4309 = vpop.f32.mrf.mxu0
    %v4310 = vadd.f32 %v4181, %v4309
    %v4311 = vand.u32 %v1688, 4294901760
    %v4312 = vsub.f32 %v1688, %v4311
    %v4313 = vand.u32 %v4312, 4294901760
    %v4314 = vsub.f32 %v4312, %v4313
    %v4315 = vand.u32 %v4314, 4294901760
    %4316 = vmatmul.f32.gmra.mxu0 %v4315
    %v4317 = vpop.f32.mrf.mxu0
    %v4318 = vadd.f32 %v4185, %v4317
    %v4319 = vand.u32 %v1692, 4294901760
    %v4320 = vsub.f32 %v1692, %v4319
    %v4321 = vand.u32 %v4320, 4294901760
    %v4322 = vsub.f32 %v4320, %v4321
    %v4323 = vand.u32 %v4322, 4294901760
    %4324 = vmatmul.f32.gmra.mxu0 %v4323
    %v4325 = vpop.f32.mrf.mxu0
    %v4326 = vadd.f32 %v4189, %v4325
    %v4327 = vand.u32 %v1696, 4294901760
    %v4328 = vsub.f32 %v1696, %v4327
    %v4329 = vand.u32 %v4328, 4294901760
    %v4330 = vsub.f32 %v4328, %v4329
    %v4331 = vand.u32 %v4330, 4294901760
    %4332 = vmatmul.f32.gmra.mxu0 %v4331
    %v4333 = vpop.f32.mrf.mxu0
    %v4334 = vadd.f32 %v4193, %v4333
    %v4335 = vand.u32 %v1700, 4294901760
    %v4336 = vsub.f32 %v1700, %v4335
    %v4337 = vand.u32 %v4336, 4294901760
    %v4338 = vsub.f32 %v4336, %v4337
    %v4339 = vand.u32 %v4338, 4294901760
    %4340 = vmatmul.f32.gmra.mxu0 %v4339
    %v4341 = vpop.f32.mrf.mxu0
    %v4342 = vadd.f32 %v4197, %v4341
    %v4343 = vand.u32 %v1704, 4294901760
    %v4344 = vsub.f32 %v1704, %v4343
    %v4345 = vand.u32 %v4344, 4294901760
    %v4346 = vsub.f32 %v4344, %v4345
    %v4347 = vand.u32 %v4346, 4294901760
    %4348 = vmatmul.f32.gmra.mxu0 %v4347
    %v4349 = vpop.f32.mrf.mxu0
    %v4350 = vadd.f32 %v4201, %v4349
    %v4351 = vand.u32 %v1708, 4294901760
    %v4352 = vsub.f32 %v1708, %v4351
    %v4353 = vand.u32 %v4352, 4294901760
    %v4354 = vsub.f32 %v4352, %v4353
    %v4355 = vand.u32 %v4354, 4294901760
    %4356 = vmatmul.f32.gmra.mxu0 %v4355
    %v4357 = vpop.f32.mrf.mxu0
    %v4358 = vadd.f32 %v4205, %v4357
    %v4359 = vand.u32 %v1712, 4294901760
    %v4360 = vsub.f32 %v1712, %v4359
    %v4361 = vand.u32 %v4360, 4294901760
    %v4362 = vsub.f32 %v4360, %v4361
    %v4363 = vand.u32 %v4362, 4294901760
    %4364 = vmatmul.f32.gmra.mxu0 %v4363
    %v4365 = vpop.f32.mrf.mxu0
    %v4366 = vadd.f32 %v4209, %v4365
    %v4367 = vand.u32 %v1716, 4294901760
    %v4368 = vsub.f32 %v1716, %v4367
    %v4369 = vand.u32 %v4368, 4294901760
    %v4370 = vsub.f32 %v4368, %v4369
    %v4371 = vand.u32 %v4370, 4294901760
    %4372 = vmatmul.f32.gmra.mxu0 %v4371
    %v4373 = vpop.f32.mrf.mxu0
    %v4374 = vadd.f32 %v4213, %v4373
    %4375 = vdwg.mxu0
    %v4376 = vand.u32 %v934, 4294901760
    %v4377 = vsub.f32 %v934, %v4376
    %v4378 = vand.u32 %v4377, 4294901760
    %v4379 = vsub.f32 %v4377, %v4378
    %v4380 = vand.u32 %v4379, 4294901760
    %4381 = vmatpush.msra.mxu0 %v4380
    %v4382 = vand.u32 %v933, 4294901760
    %v4383 = vsub.f32 %v933, %v4382
    %v4384 = vand.u32 %v4383, 4294901760
    %v4385 = vsub.f32 %v4383, %v4384
    %v4386 = vand.u32 %v4385, 4294901760
    %4387 = vmatpush.msra.mxu0 %v4386
    %v4388 = vand.u32 %v932, 4294901760
    %v4389 = vsub.f32 %v932, %v4388
    %v4390 = vand.u32 %v4389, 4294901760
    %v4391 = vsub.f32 %v4389, %v4390
    %v4392 = vand.u32 %v4391, 4294901760
    %4393 = vmatpush.msra.mxu0 %v4392
    %v4394 = vand.u32 %v931, 4294901760
    %v4395 = vsub.f32 %v931, %v4394
    %v4396 = vand.u32 %v4395, 4294901760
    %v4397 = vsub.f32 %v4395, %v4396
    %v4398 = vand.u32 %v4397, 4294901760
    %4399 = vmatpush.msra.mxu0 %v4398
    %v4400 = vand.u32 %v930, 4294901760
    %v4401 = vsub.f32 %v930, %v4400
    %v4402 = vand.u32 %v4401, 4294901760
    %v4403 = vsub.f32 %v4401, %v4402
    %v4404 = vand.u32 %v4403, 4294901760
    %4405 = vmatpush.msra.mxu0 %v4404
    %v4406 = vand.u32 %v929, 4294901760
    %v4407 = vsub.f32 %v929, %v4406
    %v4408 = vand.u32 %v4407, 4294901760
    %v4409 = vsub.f32 %v4407, %v4408
    %v4410 = vand.u32 %v4409, 4294901760
    %4411 = vmatpush.msra.mxu0 %v4410
    %v4412 = vand.u32 %v928, 4294901760
    %v4413 = vsub.f32 %v928, %v4412
    %v4414 = vand.u32 %v4413, 4294901760
    %v4415 = vsub.f32 %v4413, %v4414
    %v4416 = vand.u32 %v4415, 4294901760
    %4417 = vmatpush.msra.mxu0 %v4416
    %v4418 = vand.u32 %v927, 4294901760
    %v4419 = vsub.f32 %v927, %v4418
    %v4420 = vand.u32 %v4419, 4294901760
    %v4421 = vsub.f32 %v4419, %v4420
    %v4422 = vand.u32 %v4421, 4294901760
    %4423 = vmatpush.msra.mxu0 %v4422
    %v4424 = vand.u32 %v926, 4294901760
    %v4425 = vsub.f32 %v926, %v4424
    %v4426 = vand.u32 %v4425, 4294901760
    %v4427 = vsub.f32 %v4425, %v4426
    %v4428 = vand.u32 %v4427, 4294901760
    %4429 = vmatpush.msra.mxu0 %v4428
    %v4430 = vand.u32 %v925, 4294901760
    %v4431 = vsub.f32 %v925, %v4430
    %v4432 = vand.u32 %v4431, 4294901760
    %v4433 = vsub.f32 %v4431, %v4432
    %v4434 = vand.u32 %v4433, 4294901760
    %4435 = vmatpush.msra.mxu0 %v4434
    %v4436 = vand.u32 %v924, 4294901760
    %v4437 = vsub.f32 %v924, %v4436
    %v4438 = vand.u32 %v4437, 4294901760
    %v4439 = vsub.f32 %v4437, %v4438
    %v4440 = vand.u32 %v4439, 4294901760
    %4441 = vmatpush.msra.mxu0 %v4440
    %v4442 = vand.u32 %v923, 4294901760
    %v4443 = vsub.f32 %v923, %v4442
    %v4444 = vand.u32 %v4443, 4294901760
    %v4445 = vsub.f32 %v4443, %v4444
    %v4446 = vand.u32 %v4445, 4294901760
    %4447 = vmatpush.msra.mxu0 %v4446
    %v4448 = vand.u32 %v922, 4294901760
    %v4449 = vsub.f32 %v922, %v4448
    %v4450 = vand.u32 %v4449, 4294901760
    %v4451 = vsub.f32 %v4449, %v4450
    %v4452 = vand.u32 %v4451, 4294901760
    %4453 = vmatpush.msra.mxu0 %v4452
    %v4454 = vand.u32 %v921, 4294901760
    %v4455 = vsub.f32 %v921, %v4454
    %v4456 = vand.u32 %v4455, 4294901760
    %v4457 = vsub.f32 %v4455, %v4456
    %v4458 = vand.u32 %v4457, 4294901760
    %4459 = vmatpush.msra.mxu0 %v4458
    %v4460 = vand.u32 %v920, 4294901760
    %v4461 = vsub.f32 %v920, %v4460
    %v4462 = vand.u32 %v4461, 4294901760
    %v4463 = vsub.f32 %v4461, %v4462
    %v4464 = vand.u32 %v4463, 4294901760
    %4465 = vmatpush.msra.mxu0 %v4464
    %v4466 = vand.u32 %v919, 4294901760
    %v4467 = vsub.f32 %v919, %v4466
    %v4468 = vand.u32 %v4467, 4294901760
    %v4469 = vsub.f32 %v4467, %v4468
    %v4470 = vand.u32 %v4469, 4294901760
    %4471 = vmatpush.msra.mxu0 %v4470
    %v4472 = vand.u32 %v1656, 4294901760
    %4473 = vmatmul.f32.gmra.mxu0 %v4472
    %v4474 = vpop.f32.mrf.mxu0
    %v4475 = vadd.f32 %v4254, %v4474
    %v4476 = vand.u32 %v1660, 4294901760
    %4477 = vmatmul.f32.gmra.mxu0 %v4476
    %v4478 = vpop.f32.mrf.mxu0
    %v4479 = vadd.f32 %v4262, %v4478
    %v4480 = vand.u32 %v1664, 4294901760
    %4481 = vmatmul.f32.gmra.mxu0 %v4480
    %v4482 = vpop.f32.mrf.mxu0
    %v4483 = vadd.f32 %v4270, %v4482
    %v4484 = vand.u32 %v1668, 4294901760
    %4485 = vmatmul.f32.gmra.mxu0 %v4484
    %v4486 = vpop.f32.mrf.mxu0
    %v4487 = vadd.f32 %v4278, %v4486
    %v4488 = vand.u32 %v1672, 4294901760
    %4489 = vmatmul.f32.gmra.mxu0 %v4488
    %v4490 = vpop.f32.mrf.mxu0
    %v4491 = vadd.f32 %v4286, %v4490
    %v4492 = vand.u32 %v1676, 4294901760
    %4493 = vmatmul.f32.gmra.mxu0 %v4492
    %v4494 = vpop.f32.mrf.mxu0
    %v4495 = vadd.f32 %v4294, %v4494
    %v4496 = vand.u32 %v1680, 4294901760
    %4497 = vmatmul.f32.gmra.mxu0 %v4496
    %v4498 = vpop.f32.mrf.mxu0
    %v4499 = vadd.f32 %v4302, %v4498
    %v4500 = vand.u32 %v1684, 4294901760
    %4501 = vmatmul.f32.gmra.mxu0 %v4500
    %v4502 = vpop.f32.mrf.mxu0
    %v4503 = vadd.f32 %v4310, %v4502
    %v4504 = vand.u32 %v1688, 4294901760
    %4505 = vmatmul.f32.gmra.mxu0 %v4504
    %v4506 = vpop.f32.mrf.mxu0
    %v4507 = vadd.f32 %v4318, %v4506
    %v4508 = vand.u32 %v1692, 4294901760
    %4509 = vmatmul.f32.gmra.mxu0 %v4508
    %v4510 = vpop.f32.mrf.mxu0
    %v4511 = vadd.f32 %v4326, %v4510
    %v4512 = vand.u32 %v1696, 4294901760
    %4513 = vmatmul.f32.gmra.mxu0 %v4512
    %v4514 = vpop.f32.mrf.mxu0
    %v4515 = vadd.f32 %v4334, %v4514
    %v4516 = vand.u32 %v1700, 4294901760
    %4517 = vmatmul.f32.gmra.mxu0 %v4516
    %v4518 = vpop.f32.mrf.mxu0
    %v4519 = vadd.f32 %v4342, %v4518
    %v4520 = vand.u32 %v1704, 4294901760
    %4521 = vmatmul.f32.gmra.mxu0 %v4520
    %v4522 = vpop.f32.mrf.mxu0
    %v4523 = vadd.f32 %v4350, %v4522
    %v4524 = vand.u32 %v1708, 4294901760
    %4525 = vmatmul.f32.gmra.mxu0 %v4524
    %v4526 = vpop.f32.mrf.mxu0
    %v4527 = vadd.f32 %v4358, %v4526
    %v4528 = vand.u32 %v1712, 4294901760
    %4529 = vmatmul.f32.gmra.mxu0 %v4528
    %v4530 = vpop.f32.mrf.mxu0
    %v4531 = vadd.f32 %v4366, %v4530
    %v4532 = vand.u32 %v1716, 4294901760
    %4533 = vmatmul.f32.gmra.mxu0 %v4532
    %v4534 = vpop.f32.mrf.mxu0
    %v4535 = vadd.f32 %v4374, %v4534
    %4536 = vdwg.mxu0
    %v4537 = vand.u32 %v934, 4294901760
    %v4538 = vsub.f32 %v934, %v4537
    %4539 = vmatpush.msra.mxu0 %v4538
    %v4540 = vand.u32 %v933, 4294901760
    %v4541 = vsub.f32 %v933, %v4540
    %4542 = vmatpush.msra.mxu0 %v4541
    %v4543 = vand.u32 %v932, 4294901760
    %v4544 = vsub.f32 %v932, %v4543
    %4545 = vmatpush.msra.mxu0 %v4544
    %v4546 = vand.u32 %v931, 4294901760
    %v4547 = vsub.f32 %v931, %v4546
    %4548 = vmatpush.msra.mxu0 %v4547
    %v4549 = vand.u32 %v930, 4294901760
    %v4550 = vsub.f32 %v930, %v4549
    %4551 = vmatpush.msra.mxu0 %v4550
    %v4552 = vand.u32 %v929, 4294901760
    %v4553 = vsub.f32 %v929, %v4552
    %4554 = vmatpush.msra.mxu0 %v4553
    %v4555 = vand.u32 %v928, 4294901760
    %v4556 = vsub.f32 %v928, %v4555
    %4557 = vmatpush.msra.mxu0 %v4556
    %v4558 = vand.u32 %v927, 4294901760
    %v4559 = vsub.f32 %v927, %v4558
    %4560 = vmatpush.msra.mxu0 %v4559
    %v4561 = vand.u32 %v926, 4294901760
    %v4562 = vsub.f32 %v926, %v4561
    %4563 = vmatpush.msra.mxu0 %v4562
    %v4564 = vand.u32 %v925, 4294901760
    %v4565 = vsub.f32 %v925, %v4564
    %4566 = vmatpush.msra.mxu0 %v4565
    %v4567 = vand.u32 %v924, 4294901760
    %v4568 = vsub.f32 %v924, %v4567
    %4569 = vmatpush.msra.mxu0 %v4568
    %v4570 = vand.u32 %v923, 4294901760
    %v4571 = vsub.f32 %v923, %v4570
    %4572 = vmatpush.msra.mxu0 %v4571
    %v4573 = vand.u32 %v922, 4294901760
    %v4574 = vsub.f32 %v922, %v4573
    %4575 = vmatpush.msra.mxu0 %v4574
    %v4576 = vand.u32 %v921, 4294901760
    %v4577 = vsub.f32 %v921, %v4576
    %4578 = vmatpush.msra.mxu0 %v4577
    %v4579 = vand.u32 %v920, 4294901760
    %v4580 = vsub.f32 %v920, %v4579
    %4581 = vmatpush.msra.mxu0 %v4580
    %v4582 = vand.u32 %v919, 4294901760
    %v4583 = vsub.f32 %v919, %v4582
    %4584 = vmatpush.msra.mxu0 %v4583
    %v4585 = vand.u32 %v1656, 4294901760
    %v4586 = vsub.f32 %v1656, %v4585
    %4587 = vmatmul.f32.gmra.mxu0 %v4586
    %v4588 = vpop.f32.mrf.mxu0
    %v4589 = vadd.f32 %v4475, %v4588
    %v4590 = vand.u32 %v1660, 4294901760
    %v4591 = vsub.f32 %v1660, %v4590
    %4592 = vmatmul.f32.gmra.mxu0 %v4591
    %v4593 = vpop.f32.mrf.mxu0
    %v4594 = vadd.f32 %v4479, %v4593
    %v4595 = vand.u32 %v1664, 4294901760
    %v4596 = vsub.f32 %v1664, %v4595
    %4597 = vmatmul.f32.gmra.mxu0 %v4596
    %v4598 = vpop.f32.mrf.mxu0
    %v4599 = vadd.f32 %v4483, %v4598
    %v4600 = vand.u32 %v1668, 4294901760
    %v4601 = vsub.f32 %v1668, %v4600
    %4602 = vmatmul.f32.gmra.mxu0 %v4601
    %v4603 = vpop.f32.mrf.mxu0
    %v4604 = vadd.f32 %v4487, %v4603
    %v4605 = vand.u32 %v1672, 4294901760
    %v4606 = vsub.f32 %v1672, %v4605
    %4607 = vmatmul.f32.gmra.mxu0 %v4606
    %v4608 = vpop.f32.mrf.mxu0
    %v4609 = vadd.f32 %v4491, %v4608
    %v4610 = vand.u32 %v1676, 4294901760
    %v4611 = vsub.f32 %v1676, %v4610
    %4612 = vmatmul.f32.gmra.mxu0 %v4611
    %v4613 = vpop.f32.mrf.mxu0
    %v4614 = vadd.f32 %v4495, %v4613
    %v4615 = vand.u32 %v1680, 4294901760
    %v4616 = vsub.f32 %v1680, %v4615
    %4617 = vmatmul.f32.gmra.mxu0 %v4616
    %v4618 = vpop.f32.mrf.mxu0
    %v4619 = vadd.f32 %v4499, %v4618
    %v4620 = vand.u32 %v1684, 4294901760
    %v4621 = vsub.f32 %v1684, %v4620
    %4622 = vmatmul.f32.gmra.mxu0 %v4621
    %v4623 = vpop.f32.mrf.mxu0
    %v4624 = vadd.f32 %v4503, %v4623
    %v4625 = vand.u32 %v1688, 4294901760
    %v4626 = vsub.f32 %v1688, %v4625
    %4627 = vmatmul.f32.gmra.mxu0 %v4626
    %v4628 = vpop.f32.mrf.mxu0
    %v4629 = vadd.f32 %v4507, %v4628
    %v4630 = vand.u32 %v1692, 4294901760
    %v4631 = vsub.f32 %v1692, %v4630
    %4632 = vmatmul.f32.gmra.mxu0 %v4631
    %v4633 = vpop.f32.mrf.mxu0
    %v4634 = vadd.f32 %v4511, %v4633
    %v4635 = vand.u32 %v1696, 4294901760
    %v4636 = vsub.f32 %v1696, %v4635
    %4637 = vmatmul.f32.gmra.mxu0 %v4636
    %v4638 = vpop.f32.mrf.mxu0
    %v4639 = vadd.f32 %v4515, %v4638
    %v4640 = vand.u32 %v1700, 4294901760
    %v4641 = vsub.f32 %v1700, %v4640
    %4642 = vmatmul.f32.gmra.mxu0 %v4641
    %v4643 = vpop.f32.mrf.mxu0
    %v4644 = vadd.f32 %v4519, %v4643
    %v4645 = vand.u32 %v1704, 4294901760
    %v4646 = vsub.f32 %v1704, %v4645
    %4647 = vmatmul.f32.gmra.mxu0 %v4646
    %v4648 = vpop.f32.mrf.mxu0
    %v4649 = vadd.f32 %v4523, %v4648
    %v4650 = vand.u32 %v1708, 4294901760
    %v4651 = vsub.f32 %v1708, %v4650
    %4652 = vmatmul.f32.gmra.mxu0 %v4651
    %v4653 = vpop.f32.mrf.mxu0
    %v4654 = vadd.f32 %v4527, %v4653
    %v4655 = vand.u32 %v1712, 4294901760
    %v4656 = vsub.f32 %v1712, %v4655
    %4657 = vmatmul.f32.gmra.mxu0 %v4656
    %v4658 = vpop.f32.mrf.mxu0
    %v4659 = vadd.f32 %v4531, %v4658
    %v4660 = vand.u32 %v1716, 4294901760
    %v4661 = vsub.f32 %v1716, %v4660
    %4662 = vmatmul.f32.gmra.mxu0 %v4661
    %v4663 = vpop.f32.mrf.mxu0
    %v4664 = vadd.f32 %v4535, %v4663
    %4665 = vdwg.mxu0
    %v4666 = vand.u32 %v934, 4294901760
    %4667 = vmatpush.msra.mxu0 %v4666
    %v4668 = vand.u32 %v933, 4294901760
    %4669 = vmatpush.msra.mxu0 %v4668
    %v4670 = vand.u32 %v932, 4294901760
    %4671 = vmatpush.msra.mxu0 %v4670
    %v4672 = vand.u32 %v931, 4294901760
    %4673 = vmatpush.msra.mxu0 %v4672
    %v4674 = vand.u32 %v930, 4294901760
    %4675 = vmatpush.msra.mxu0 %v4674
    %v4676 = vand.u32 %v929, 4294901760
    %4677 = vmatpush.msra.mxu0 %v4676
    %v4678 = vand.u32 %v928, 4294901760
    %4679 = vmatpush.msra.mxu0 %v4678
    %v4680 = vand.u32 %v927, 4294901760
    %4681 = vmatpush.msra.mxu0 %v4680
    %v4682 = vand.u32 %v926, 4294901760
    %4683 = vmatpush.msra.mxu0 %v4682
    %v4684 = vand.u32 %v925, 4294901760
    %4685 = vmatpush.msra.mxu0 %v4684
    %v4686 = vand.u32 %v924, 4294901760
    %4687 = vmatpush.msra.mxu0 %v4686
    %v4688 = vand.u32 %v923, 4294901760
    %4689 = vmatpush.msra.mxu0 %v4688
    %v4690 = vand.u32 %v922, 4294901760
    %4691 = vmatpush.msra.mxu0 %v4690
    %v4692 = vand.u32 %v921, 4294901760
    %4693 = vmatpush.msra.mxu0 %v4692
    %v4694 = vand.u32 %v920, 4294901760
    %4695 = vmatpush.msra.mxu0 %v4694
    %v4696 = vand.u32 %v919, 4294901760
    %4697 = vmatpush.msra.mxu0 %v4696
    %v4698 = vand.u32 %v1656, 4294901760
    %v4699 = vsub.f32 %v1656, %v4698
    %v4700 = vand.u32 %v4699, 4294901760
    %4701 = vmatmul.f32.gmra.mxu0 %v4700
    %v4702 = vpop.f32.mrf.mxu0
    %v4703 = vadd.f32 %v4589, %v4702
    %v4704 = vand.u32 %v1660, 4294901760
    %v4705 = vsub.f32 %v1660, %v4704
    %v4706 = vand.u32 %v4705, 4294901760
    %4707 = vmatmul.f32.gmra.mxu0 %v4706
    %v4708 = vpop.f32.mrf.mxu0
    %v4709 = vadd.f32 %v4594, %v4708
    %v4710 = vand.u32 %v1664, 4294901760
    %v4711 = vsub.f32 %v1664, %v4710
    %v4712 = vand.u32 %v4711, 4294901760
    %4713 = vmatmul.f32.gmra.mxu0 %v4712
    %v4714 = vpop.f32.mrf.mxu0
    %v4715 = vadd.f32 %v4599, %v4714
    %v4716 = vand.u32 %v1668, 4294901760
    %v4717 = vsub.f32 %v1668, %v4716
    %v4718 = vand.u32 %v4717, 4294901760
    %4719 = vmatmul.f32.gmra.mxu0 %v4718
    %v4720 = vpop.f32.mrf.mxu0
    %v4721 = vadd.f32 %v4604, %v4720
    %v4722 = vand.u32 %v1672, 4294901760
    %v4723 = vsub.f32 %v1672, %v4722
    %v4724 = vand.u32 %v4723, 4294901760
    %4725 = vmatmul.f32.gmra.mxu0 %v4724
    %v4726 = vpop.f32.mrf.mxu0
    %v4727 = vadd.f32 %v4609, %v4726
    %v4728 = vand.u32 %v1676, 4294901760
    %v4729 = vsub.f32 %v1676, %v4728
    %v4730 = vand.u32 %v4729, 4294901760
    %4731 = vmatmul.f32.gmra.mxu0 %v4730
    %v4732 = vpop.f32.mrf.mxu0
    %v4733 = vadd.f32 %v4614, %v4732
    %v4734 = vand.u32 %v1680, 4294901760
    %v4735 = vsub.f32 %v1680, %v4734
    %v4736 = vand.u32 %v4735, 4294901760
    %4737 = vmatmul.f32.gmra.mxu0 %v4736
    %v4738 = vpop.f32.mrf.mxu0
    %v4739 = vadd.f32 %v4619, %v4738
    %v4740 = vand.u32 %v1684, 4294901760
    %v4741 = vsub.f32 %v1684, %v4740
    %v4742 = vand.u32 %v4741, 4294901760
    %4743 = vmatmul.f32.gmra.mxu0 %v4742
    %v4744 = vpop.f32.mrf.mxu0
    %v4745 = vadd.f32 %v4624, %v4744
    %v4746 = vand.u32 %v1688, 4294901760
    %v4747 = vsub.f32 %v1688, %v4746
    %v4748 = vand.u32 %v4747, 4294901760
    %4749 = vmatmul.f32.gmra.mxu0 %v4748
    %v4750 = vpop.f32.mrf.mxu0
    %v4751 = vadd.f32 %v4629, %v4750
    %v4752 = vand.u32 %v1692, 4294901760
    %v4753 = vsub.f32 %v1692, %v4752
    %v4754 = vand.u32 %v4753, 4294901760
    %4755 = vmatmul.f32.gmra.mxu0 %v4754
    %v4756 = vpop.f32.mrf.mxu0
    %v4757 = vadd.f32 %v4634, %v4756
    %v4758 = vand.u32 %v1696, 4294901760
    %v4759 = vsub.f32 %v1696, %v4758
    %v4760 = vand.u32 %v4759, 4294901760
    %4761 = vmatmul.f32.gmra.mxu0 %v4760
    %v4762 = vpop.f32.mrf.mxu0
    %v4763 = vadd.f32 %v4639, %v4762
    %v4764 = vand.u32 %v1700, 4294901760
    %v4765 = vsub.f32 %v1700, %v4764
    %v4766 = vand.u32 %v4765, 4294901760
    %4767 = vmatmul.f32.gmra.mxu0 %v4766
    %v4768 = vpop.f32.mrf.mxu0
    %v4769 = vadd.f32 %v4644, %v4768
    %v4770 = vand.u32 %v1704, 4294901760
    %v4771 = vsub.f32 %v1704, %v4770
    %v4772 = vand.u32 %v4771, 4294901760
    %4773 = vmatmul.f32.gmra.mxu0 %v4772
    %v4774 = vpop.f32.mrf.mxu0
    %v4775 = vadd.f32 %v4649, %v4774
    %v4776 = vand.u32 %v1708, 4294901760
    %v4777 = vsub.f32 %v1708, %v4776
    %v4778 = vand.u32 %v4777, 4294901760
    %4779 = vmatmul.f32.gmra.mxu0 %v4778
    %v4780 = vpop.f32.mrf.mxu0
    %v4781 = vadd.f32 %v4654, %v4780
    %v4782 = vand.u32 %v1712, 4294901760
    %v4783 = vsub.f32 %v1712, %v4782
    %v4784 = vand.u32 %v4783, 4294901760
    %4785 = vmatmul.f32.gmra.mxu0 %v4784
    %v4786 = vpop.f32.mrf.mxu0
    %v4787 = vadd.f32 %v4659, %v4786
    %v4788 = vand.u32 %v1716, 4294901760
    %v4789 = vsub.f32 %v1716, %v4788
    %v4790 = vand.u32 %v4789, 4294901760
    %4791 = vmatmul.f32.gmra.mxu0 %v4790
    %v4792 = vpop.f32.mrf.mxu0
    %v4793 = vadd.f32 %v4664, %v4792
    %4794 = vdwg.mxu0
    %v4795 = vand.u32 %v934, 4294901760
    %v4796 = vsub.f32 %v934, %v4795
    %v4797 = vand.u32 %v4796, 4294901760
    %4798 = vmatpush.msra.mxu0 %v4797
    %v4799 = vand.u32 %v933, 4294901760
    %v4800 = vsub.f32 %v933, %v4799
    %v4801 = vand.u32 %v4800, 4294901760
    %4802 = vmatpush.msra.mxu0 %v4801
    %v4803 = vand.u32 %v932, 4294901760
    %v4804 = vsub.f32 %v932, %v4803
    %v4805 = vand.u32 %v4804, 4294901760
    %4806 = vmatpush.msra.mxu0 %v4805
    %v4807 = vand.u32 %v931, 4294901760
    %v4808 = vsub.f32 %v931, %v4807
    %v4809 = vand.u32 %v4808, 4294901760
    %4810 = vmatpush.msra.mxu0 %v4809
    %v4811 = vand.u32 %v930, 4294901760
    %v4812 = vsub.f32 %v930, %v4811
    %v4813 = vand.u32 %v4812, 4294901760
    %4814 = vmatpush.msra.mxu0 %v4813
    %v4815 = vand.u32 %v929, 4294901760
    %v4816 = vsub.f32 %v929, %v4815
    %v4817 = vand.u32 %v4816, 4294901760
    %4818 = vmatpush.msra.mxu0 %v4817
    %v4819 = vand.u32 %v928, 4294901760
    %v4820 = vsub.f32 %v928, %v4819
    %v4821 = vand.u32 %v4820, 4294901760
    %4822 = vmatpush.msra.mxu0 %v4821
    %v4823 = vand.u32 %v927, 4294901760
    %v4824 = vsub.f32 %v927, %v4823
    %v4825 = vand.u32 %v4824, 4294901760
    %4826 = vmatpush.msra.mxu0 %v4825
    %v4827 = vand.u32 %v926, 4294901760
    %v4828 = vsub.f32 %v926, %v4827
    %v4829 = vand.u32 %v4828, 4294901760
    %4830 = vmatpush.msra.mxu0 %v4829
    %v4831 = vand.u32 %v925, 4294901760
    %v4832 = vsub.f32 %v925, %v4831
    %v4833 = vand.u32 %v4832, 4294901760
    %4834 = vmatpush.msra.mxu0 %v4833
    %v4835 = vand.u32 %v924, 4294901760
    %v4836 = vsub.f32 %v924, %v4835
    %v4837 = vand.u32 %v4836, 4294901760
    %4838 = vmatpush.msra.mxu0 %v4837
    %v4839 = vand.u32 %v923, 4294901760
    %v4840 = vsub.f32 %v923, %v4839
    %v4841 = vand.u32 %v4840, 4294901760
    %4842 = vmatpush.msra.mxu0 %v4841
    %v4843 = vand.u32 %v922, 4294901760
    %v4844 = vsub.f32 %v922, %v4843
    %v4845 = vand.u32 %v4844, 4294901760
    %4846 = vmatpush.msra.mxu0 %v4845
    %v4847 = vand.u32 %v921, 4294901760
    %v4848 = vsub.f32 %v921, %v4847
    %v4849 = vand.u32 %v4848, 4294901760
    %4850 = vmatpush.msra.mxu0 %v4849
    %v4851 = vand.u32 %v920, 4294901760
    %v4852 = vsub.f32 %v920, %v4851
    %v4853 = vand.u32 %v4852, 4294901760
    %4854 = vmatpush.msra.mxu0 %v4853
    %v4855 = vand.u32 %v919, 4294901760
    %v4856 = vsub.f32 %v919, %v4855
    %v4857 = vand.u32 %v4856, 4294901760
    %4858 = vmatpush.msra.mxu0 %v4857
    %v4859 = vand.u32 %v1656, 4294901760
    %4860 = vmatmul.f32.gmra.mxu0 %v4859
    %v4861 = vpop.f32.mrf.mxu0
    %v4862 = vadd.f32 %v4703, %v4861
    %v4863 = vand.u32 %v1660, 4294901760
    %4864 = vmatmul.f32.gmra.mxu0 %v4863
    %v4865 = vpop.f32.mrf.mxu0
    %v4866 = vadd.f32 %v4709, %v4865
    %v4867 = vand.u32 %v1664, 4294901760
    %4868 = vmatmul.f32.gmra.mxu0 %v4867
    %v4869 = vpop.f32.mrf.mxu0
    %v4870 = vadd.f32 %v4715, %v4869
    %v4871 = vand.u32 %v1668, 4294901760
    %4872 = vmatmul.f32.gmra.mxu0 %v4871
    %v4873 = vpop.f32.mrf.mxu0
    %v4874 = vadd.f32 %v4721, %v4873
    %v4875 = vand.u32 %v1672, 4294901760
    %4876 = vmatmul.f32.gmra.mxu0 %v4875
    %v4877 = vpop.f32.mrf.mxu0
    %v4878 = vadd.f32 %v4727, %v4877
    %v4879 = vand.u32 %v1676, 4294901760
    %4880 = vmatmul.f32.gmra.mxu0 %v4879
    %v4881 = vpop.f32.mrf.mxu0
    %v4882 = vadd.f32 %v4733, %v4881
    %v4883 = vand.u32 %v1680, 4294901760
    %4884 = vmatmul.f32.gmra.mxu0 %v4883
    %v4885 = vpop.f32.mrf.mxu0
    %v4886 = vadd.f32 %v4739, %v4885
    %v4887 = vand.u32 %v1684, 4294901760
    %4888 = vmatmul.f32.gmra.mxu0 %v4887
    %v4889 = vpop.f32.mrf.mxu0
    %v4890 = vadd.f32 %v4745, %v4889
    %v4891 = vand.u32 %v1688, 4294901760
    %4892 = vmatmul.f32.gmra.mxu0 %v4891
    %v4893 = vpop.f32.mrf.mxu0
    %v4894 = vadd.f32 %v4751, %v4893
    %v4895 = vand.u32 %v1692, 4294901760
    %4896 = vmatmul.f32.gmra.mxu0 %v4895
    %v4897 = vpop.f32.mrf.mxu0
    %v4898 = vadd.f32 %v4757, %v4897
    %v4899 = vand.u32 %v1696, 4294901760
    %4900 = vmatmul.f32.gmra.mxu0 %v4899
    %v4901 = vpop.f32.mrf.mxu0
    %v4902 = vadd.f32 %v4763, %v4901
    %v4903 = vand.u32 %v1700, 4294901760
    %4904 = vmatmul.f32.gmra.mxu0 %v4903
    %v4905 = vpop.f32.mrf.mxu0
    %v4906 = vadd.f32 %v4769, %v4905
    %v4907 = vand.u32 %v1704, 4294901760
    %4908 = vmatmul.f32.gmra.mxu0 %v4907
    %v4909 = vpop.f32.mrf.mxu0
    %v4910 = vadd.f32 %v4775, %v4909
    %v4911 = vand.u32 %v1708, 4294901760
    %4912 = vmatmul.f32.gmra.mxu0 %v4911
    %v4913 = vpop.f32.mrf.mxu0
    %v4914 = vadd.f32 %v4781, %v4913
    %v4915 = vand.u32 %v1712, 4294901760
    %4916 = vmatmul.f32.gmra.mxu0 %v4915
    %v4917 = vpop.f32.mrf.mxu0
    %v4918 = vadd.f32 %v4787, %v4917
    %v4919 = vand.u32 %v1716, 4294901760
    %4920 = vmatmul.f32.gmra.mxu0 %v4919
    %v4921 = vpop.f32.mrf.mxu0
    %v4922 = vadd.f32 %v4793, %v4921
    %4923 = vdwg.mxu0
    %v4924 = vand.u32 %v934, 4294901760
    %4925 = vmatpush.msra.mxu0 %v4924
    %v4926 = vand.u32 %v933, 4294901760
    %4927 = vmatpush.msra.mxu0 %v4926
    %v4928 = vand.u32 %v932, 4294901760
    %4929 = vmatpush.msra.mxu0 %v4928
    %v4930 = vand.u32 %v931, 4294901760
    %4931 = vmatpush.msra.mxu0 %v4930
    %v4932 = vand.u32 %v930, 4294901760
    %4933 = vmatpush.msra.mxu0 %v4932
    %v4934 = vand.u32 %v929, 4294901760
    %4935 = vmatpush.msra.mxu0 %v4934
    %v4936 = vand.u32 %v928, 4294901760
    %4937 = vmatpush.msra.mxu0 %v4936
    %v4938 = vand.u32 %v927, 4294901760
    %4939 = vmatpush.msra.mxu0 %v4938
    %v4940 = vand.u32 %v926, 4294901760
    %4941 = vmatpush.msra.mxu0 %v4940
    %v4942 = vand.u32 %v925, 4294901760
    %4943 = vmatpush.msra.mxu0 %v4942
    %v4944 = vand.u32 %v924, 4294901760
    %4945 = vmatpush.msra.mxu0 %v4944
    %v4946 = vand.u32 %v923, 4294901760
    %4947 = vmatpush.msra.mxu0 %v4946
    %v4948 = vand.u32 %v922, 4294901760
    %4949 = vmatpush.msra.mxu0 %v4948
    %v4950 = vand.u32 %v921, 4294901760
    %4951 = vmatpush.msra.mxu0 %v4950
    %v4952 = vand.u32 %v920, 4294901760
    %4953 = vmatpush.msra.mxu0 %v4952
    %v4954 = vand.u32 %v919, 4294901760
    %4955 = vmatpush.msra.mxu0 %v4954
    %v4956 = vand.u32 %v1656, 4294901760
    %4957 = vmatmul.f32.gmra.mxu0 %v4956
    %v4958 = vpop.f32.mrf.mxu0
    %v4959 = vadd.f32 %v4862, %v4958
    %v4960 = vand.u32 %v1660, 4294901760
    %4961 = vmatmul.f32.gmra.mxu0 %v4960
    %v4962 = vpop.f32.mrf.mxu0
    %v4963 = vadd.f32 %v4866, %v4962
    %v4964 = vand.u32 %v1664, 4294901760
    %4965 = vmatmul.f32.gmra.mxu0 %v4964
    %v4966 = vpop.f32.mrf.mxu0
    %v4967 = vadd.f32 %v4870, %v4966
    %v4968 = vand.u32 %v1668, 4294901760
    %4969 = vmatmul.f32.gmra.mxu0 %v4968
    %v4970 = vpop.f32.mrf.mxu0
    %v4971 = vadd.f32 %v4874, %v4970
    %v4972 = vand.u32 %v1672, 4294901760
    %4973 = vmatmul.f32.gmra.mxu0 %v4972
    %v4974 = vpop.f32.mrf.mxu0
    %v4975 = vadd.f32 %v4878, %v4974
    %v4976 = vand.u32 %v1676, 4294901760
    %4977 = vmatmul.f32.gmra.mxu0 %v4976
    %v4978 = vpop.f32.mrf.mxu0
    %v4979 = vadd.f32 %v4882, %v4978
    %v4980 = vand.u32 %v1680, 4294901760
    %4981 = vmatmul.f32.gmra.mxu0 %v4980
    %v4982 = vpop.f32.mrf.mxu0
    %v4983 = vadd.f32 %v4886, %v4982
    %v4984 = vand.u32 %v1684, 4294901760
    %4985 = vmatmul.f32.gmra.mxu0 %v4984
    %v4986 = vpop.f32.mrf.mxu0
    %v4987 = vadd.f32 %v4890, %v4986
    %v4988 = vand.u32 %v1688, 4294901760
    %4989 = vmatmul.f32.gmra.mxu0 %v4988
    %v4990 = vpop.f32.mrf.mxu0
    %v4991 = vadd.f32 %v4894, %v4990
    %v4992 = vand.u32 %v1692, 4294901760
    %4993 = vmatmul.f32.gmra.mxu0 %v4992
    %v4994 = vpop.f32.mrf.mxu0
    %v4995 = vadd.f32 %v4898, %v4994
    %v4996 = vand.u32 %v1696, 4294901760
    %4997 = vmatmul.f32.gmra.mxu0 %v4996
    %v4998 = vpop.f32.mrf.mxu0
    %v4999 = vadd.f32 %v4902, %v4998
    %v5000 = vand.u32 %v1700, 4294901760
    %5001 = vmatmul.f32.gmra.mxu0 %v5000
    %v5002 = vpop.f32.mrf.mxu0
    %v5003 = vadd.f32 %v4906, %v5002
    %v5004 = vand.u32 %v1704, 4294901760
    %5005 = vmatmul.f32.gmra.mxu0 %v5004
    %v5006 = vpop.f32.mrf.mxu0
    %v5007 = vadd.f32 %v4910, %v5006
    %v5008 = vand.u32 %v1708, 4294901760
    %5009 = vmatmul.f32.gmra.mxu0 %v5008
    %v5010 = vpop.f32.mrf.mxu0
    %v5011 = vadd.f32 %v4914, %v5010
    %v5012 = vand.u32 %v1712, 4294901760
    %5013 = vmatmul.f32.gmra.mxu0 %v5012
    %v5014 = vpop.f32.mrf.mxu0
    %v5015 = vadd.f32 %v4918, %v5014
    %v5016 = vand.u32 %v1716, 4294901760
    %5017 = vmatmul.f32.gmra.mxu0 %v5016
    %v5018 = vpop.f32.mrf.mxu0
    %v5019 = vadd.f32 %v4922, %v5018
    %5020 = vdwg.mxu0
    %v5021 = vpack.c.bf16 %v4963, %v4959
    %v5022 = vpack.c.bf16 %v4971, %v4967
    %v5023 = vpack.c.bf16 %v4979, %v4975
    %v5024 = vpack.c.bf16 %v4987, %v4983
    %v5025 = vpack.c.bf16 %v4995, %v4991
    %v5026 = vpack.c.bf16 %v5003, %v4999
    %v5027 = vpack.c.bf16 %v5011, %v5007
    %v5028 = vpack.c.bf16 %v5019, %v5015
    %v5029 = vld [vmem:[%s4] sm:$0xff]
    %v5030 = vld [vmem:[%s4 + $0x8] sm:$0xff]
    %v5031 = vld [vmem:[%s4 + $0x10] sm:$0xff]
    %v5032 = vld [vmem:[%s4 + $0x18] sm:$0xff]
    %v5033 = vld [vmem:[%s4 + $0x20] sm:$0xff]
    %v5034 = vld [vmem:[%s4 + $0x28] sm:$0xff]
    %v5035 = vld [vmem:[%s4 + $0x30] sm:$0xff]
    %v5036 = vld [vmem:[%s4 + $0x38] sm:$0xff]
    %v5037 = vld [vmem:[%s4 + $0x40] sm:$0xff]
    %v5038 = vld [vmem:[%s4 + $0x48] sm:$0xff]
    %v5039 = vld [vmem:[%s4 + $0x50] sm:$0xff]
    %v5040 = vld [vmem:[%s4 + $0x58] sm:$0xff]
    %v5041 = vld [vmem:[%s4 + $0x60] sm:$0xff]
    %v5042 = vld [vmem:[%s4 + $0x68] sm:$0xff]
    %v5043 = vld [vmem:[%s4 + $0x70] sm:$0xff]
    %v5044 = vld [vmem:[%s4 + $0x78] sm:$0xff]
    %v5045 = vpack.c.bf16 %v5030, %v5029
    %v5046 = vpack.c.bf16 %v5032, %v5031
    %v5047 = vpack.c.bf16 %v5034, %v5033
    %v5048 = vpack.c.bf16 %v5036, %v5035
    %v5049 = vpack.c.bf16 %v5038, %v5037
    %v5050 = vpack.c.bf16 %v5040, %v5039
    %v5051 = vpack.c.bf16 %v5042, %v5041
    %v5052 = vpack.c.bf16 %v5044, %v5043
    %v5053 = vld [vmem:[%s5] sm:$0xf]
    %v5054 = vld [vmem:[%s5 + $0x4] sm:$0xf]
    %v5055 = vld [vmem:[%s5 + $0x8] sm:$0xf]
    %v5056 = vld [vmem:[%s5 + $0xc] sm:$0xf]
    %v5057 = vld [vmem:[%s5 + $0x10] sm:$0xf]
    %v5058 = vld [vmem:[%s5 + $0x14] sm:$0xf]
    %v5059 = vld [vmem:[%s5 + $0x18] sm:$0xf]
    %v5060 = vld [vmem:[%s5 + $0x1c] sm:$0xf]
    %v5061 = vld [vmem:[%s5 + $0x20] sm:$0xf]
    %v5062 = vld [vmem:[%s5 + $0x24] sm:$0xf]
    %v5063 = vld [vmem:[%s5 + $0x28] sm:$0xf]
    %v5064 = vld [vmem:[%s5 + $0x2c] sm:$0xf]
    %v5065 = vld [vmem:[%s5 + $0x30] sm:$0xf]
    %v5066 = vld [vmem:[%s5 + $0x34] sm:$0xf]
    %v5067 = vld [vmem:[%s5 + $0x38] sm:$0xf]
    %v5068 = vld [vmem:[%s5 + $0x3c] sm:$0xf]
    %v5085 = vunpack.c.l.b16 %v5053
    %v5086 = vunpack.c.l.b16 %v5054
    %v5087 = vunpack.c.l.b16 %v5055
    %v5088 = vunpack.c.l.b16 %v5056
    %v5089 = vunpack.c.l.b16 %v5057
    %v5090 = vunpack.c.l.b16 %v5058
    %v5091 = vunpack.c.l.b16 %v5059
    %v5092 = vunpack.c.l.b16 %v5060
    %v5093 = vunpack.c.l.b16 %v5061
    %v5094 = vunpack.c.l.b16 %v5062
    %v5095 = vunpack.c.l.b16 %v5063
    %v5096 = vunpack.c.l.b16 %v5064
    %v5097 = vunpack.c.l.b16 %v5065
    %v5098 = vunpack.c.l.b16 %v5066
    %v5099 = vunpack.c.l.b16 %v5067
    %v5100 = vunpack.c.l.b16 %v5068
    %v5101 = vpack.c.b16 %v5086, %v5085
    %v5102 = vpack.c.b16 %v5088, %v5087
    %v5103 = vpack.c.b16 %v5090, %v5089
    %v5104 = vpack.c.b16 %v5092, %v5091
    %v5105 = vpack.c.b16 %v5094, %v5093
    %v5106 = vpack.c.b16 %v5096, %v5095
    %v5107 = vpack.c.b16 %v5098, %v5097
    %v5108 = vpack.c.b16 %v5100, %v5099
    %5117 = vmatpush.bf16.msra.mxu0 %v5108
    %5118 = vmatpush.bf16.msra.mxu0 %v5107
    %5119 = vmatpush.bf16.msra.mxu0 %v5106
    %5120 = vmatpush.bf16.msra.mxu0 %v5105
    %5121 = vmatpush.bf16.msra.mxu0 %v5104
    %5122 = vmatpush.bf16.msra.mxu0 %v5103
    %5123 = vmatpush.bf16.msra.mxu0 %v5102
    %5124 = vmatpush.bf16.msra.mxu0 %v5101
    %5125 = vmatmul.bf16.gmra.mxu0 %v5045
    %v5126 = vpop.f32.mrf.mxu0
    %v5127 = vadd.f32 0.0, %v5126
    %v5128 = vpop.f32.mrf.mxu0
    %v5129 = vadd.f32 0.0, %v5128
    %5130 = vmatmul.bf16.gmra.mxu0 %v5046
    %v5131 = vpop.f32.mrf.mxu0
    %v5132 = vadd.f32 0.0, %v5131
    %v5133 = vpop.f32.mrf.mxu0
    %v5134 = vadd.f32 0.0, %v5133
    %5135 = vmatmul.bf16.gmra.mxu0 %v5047
    %v5136 = vpop.f32.mrf.mxu0
    %v5137 = vadd.f32 0.0, %v5136
    %v5138 = vpop.f32.mrf.mxu0
    %v5139 = vadd.f32 0.0, %v5138
    %5140 = vmatmul.bf16.gmra.mxu0 %v5048
    %v5141 = vpop.f32.mrf.mxu0
    %v5142 = vadd.f32 0.0, %v5141
    %v5143 = vpop.f32.mrf.mxu0
    %v5144 = vadd.f32 0.0, %v5143
    %5145 = vmatmul.bf16.gmra.mxu0 %v5049
    %v5146 = vpop.f32.mrf.mxu0
    %v5147 = vadd.f32 0.0, %v5146
    %v5148 = vpop.f32.mrf.mxu0
    %v5149 = vadd.f32 0.0, %v5148
    %5150 = vmatmul.bf16.gmra.mxu0 %v5050
    %v5151 = vpop.f32.mrf.mxu0
    %v5152 = vadd.f32 0.0, %v5151
    %v5153 = vpop.f32.mrf.mxu0
    %v5154 = vadd.f32 0.0, %v5153
    %5155 = vmatmul.bf16.gmra.mxu0 %v5051
    %v5156 = vpop.f32.mrf.mxu0
    %v5157 = vadd.f32 0.0, %v5156
    %v5158 = vpop.f32.mrf.mxu0
    %v5159 = vadd.f32 0.0, %v5158
    %5160 = vmatmul.bf16.gmra.mxu0 %v5052
    %v5161 = vpop.f32.mrf.mxu0
    %v5162 = vadd.f32 0.0, %v5161
    %v5163 = vpop.f32.mrf.mxu0
    %v5164 = vadd.f32 0.0, %v5163
    %5165 = vdwg.mxu0
    %v5166 = vpack.c.bf16 %v5129, %v5127
    %v5167 = vpack.c.bf16 %v5134, %v5132
    %v5168 = vpack.c.bf16 %v5139, %v5137
    %v5169 = vpack.c.bf16 %v5144, %v5142
    %v5170 = vpack.c.bf16 %v5149, %v5147
    %v5171 = vpack.c.bf16 %v5154, %v5152
    %v5172 = vpack.c.bf16 %v5159, %v5157
    %v5173 = vpack.c.bf16 %v5164, %v5162
    %v5174 = vld [vmem:[%s6] sm:$0x1]
    %v5176 = vperm.slane %v5174, 0
    %5178 = vmatpush.bf16.msra.mxu0 %v5173
    %5179 = vmatpush.bf16.msra.mxu0 %v5172
    %5180 = vmatpush.bf16.msra.mxu0 %v5171
    %5181 = vmatpush.bf16.msra.mxu0 %v5170
    %5182 = vmatpush.bf16.msra.mxu0 %v5169
    %5183 = vmatpush.bf16.msra.mxu0 %v5168
    %5184 = vmatpush.bf16.msra.mxu0 %v5167
    %5185 = vmatpush.bf16.msra.mxu0 %v5166
    %5186 = vmatmul.bf16.gmra.mxu0 %v5021
    %v5187 = vpop.f32.mrf.mxu0
    %v5188 = vadd.f32 %v5176, %v5187
    %v5189 = vpop.f32.mrf.mxu0
    %v5190 = vadd.f32 %v5176, %v5189
    %5191 = vmatmul.bf16.gmra.mxu0 %v5022
    %v5192 = vpop.f32.mrf.mxu0
    %v5193 = vadd.f32 %v5176, %v5192
    %v5194 = vpop.f32.mrf.mxu0
    %v5195 = vadd.f32 %v5176, %v5194
    %5196 = vmatmul.bf16.gmra.mxu0 %v5023
    %v5197 = vpop.f32.mrf.mxu0
    %v5198 = vadd.f32 %v5176, %v5197
    %v5199 = vpop.f32.mrf.mxu0
    %v5200 = vadd.f32 %v5176, %v5199
    %5201 = vmatmul.bf16.gmra.mxu0 %v5024
    %v5202 = vpop.f32.mrf.mxu0
    %v5203 = vadd.f32 %v5176, %v5202
    %v5204 = vpop.f32.mrf.mxu0
    %v5205 = vadd.f32 %v5176, %v5204
    %5206 = vmatmul.bf16.gmra.mxu0 %v5025
    %v5207 = vpop.f32.mrf.mxu0
    %v5208 = vadd.f32 %v5176, %v5207
    %v5209 = vpop.f32.mrf.mxu0
    %v5210 = vadd.f32 %v5176, %v5209
    %5211 = vmatmul.bf16.gmra.mxu0 %v5026
    %v5212 = vpop.f32.mrf.mxu0
    %v5213 = vadd.f32 %v5176, %v5212
    %v5214 = vpop.f32.mrf.mxu0
    %v5215 = vadd.f32 %v5176, %v5214
    %5216 = vmatmul.bf16.gmra.mxu0 %v5027
    %v5217 = vpop.f32.mrf.mxu0
    %v5218 = vadd.f32 %v5176, %v5217
    %v5219 = vpop.f32.mrf.mxu0
    %v5220 = vadd.f32 %v5176, %v5219
    %5221 = vmatmul.bf16.gmra.mxu0 %v5028
    %v5222 = vpop.f32.mrf.mxu0
    %v5223 = vadd.f32 %v5176, %v5222
    %v5224 = vpop.f32.mrf.mxu0
    %v5225 = vadd.f32 %v5176, %v5224
    %5226 = vdwg.mxu0
    %v5227 = vmax.f32 %v5188, 0.0
    %v5228 = vmax.f32 %v5190, 0.0
    %v5229 = vmax.f32 %v5193, 0.0
    %v5230 = vmax.f32 %v5195, 0.0
    %v5231 = vmax.f32 %v5198, 0.0
    %v5232 = vmax.f32 %v5200, 0.0
    %v5233 = vmax.f32 %v5203, 0.0
    %v5234 = vmax.f32 %v5205, 0.0
    %v5235 = vmax.f32 %v5208, 0.0
    %v5236 = vmax.f32 %v5210, 0.0
    %v5237 = vmax.f32 %v5213, 0.0
    %v5238 = vmax.f32 %v5215, 0.0
    %v5239 = vmax.f32 %v5218, 0.0
    %v5240 = vmax.f32 %v5220, 0.0
    %v5241 = vmax.f32 %v5223, 0.0
    %v5242 = vmax.f32 %v5225, 0.0
    %v5243 = vpack.c.bf16 %v5228, %v5227
    %v5244 = vpack.c.bf16 %v5230, %v5229
    %v5245 = vpack.c.bf16 %v5232, %v5231
    %v5246 = vpack.c.bf16 %v5234, %v5233
    %v5247 = vpack.c.bf16 %v5236, %v5235
    %v5248 = vpack.c.bf16 %v5238, %v5237
    %v5249 = vpack.c.bf16 %v5240, %v5239
    %v5250 = vpack.c.bf16 %v5242, %v5241
    %v5251 = vld [vmem:[%s7] sm:$0xf]
    %v5252 = vld [vmem:[%s7 + $0x4] sm:$0xf]
    %v5253 = vld [vmem:[%s7 + $0x8] sm:$0xf]
    %v5254 = vld [vmem:[%s7 + $0xc] sm:$0xf]
    %v5255 = vld [vmem:[%s7 + $0x10] sm:$0xf]
    %v5256 = vld [vmem:[%s7 + $0x14] sm:$0xf]
    %v5257 = vld [vmem:[%s7 + $0x18] sm:$0xf]
    %v5258 = vld [vmem:[%s7 + $0x1c] sm:$0xf]
    %v5267 = vunpack.c.l.b16 %v5251
    %v5268 = vunpack.c.l.b16 %v5252
    %v5269 = vunpack.c.l.b16 %v5253
    %v5270 = vunpack.c.l.b16 %v5254
    %v5271 = vunpack.c.l.b16 %v5255
    %v5272 = vunpack.c.l.b16 %v5256
    %v5273 = vunpack.c.l.b16 %v5257
    %v5274 = vunpack.c.l.b16 %v5258
    %v5275 = vpack.c.b16 %v5268, %v5267
    %v5276 = vpack.c.b16 %v5270, %v5269
    %v5277 = vpack.c.b16 %v5272, %v5271
    %v5278 = vpack.c.b16 %v5274, %v5273
    %vm5283 = vcmask 523264
    %v5285 = vsel %vm5283, %v5243, 0
    %v5288 = vsel %vm5283, %v5244, 0
    %v5291 = vsel %vm5283, %v5245, 0
    %v5294 = vsel %vm5283, %v5246, 0
    %v5297 = vsel %vm5283, %v5247, 0
    %v5300 = vsel %vm5283, %v5248, 0
    %v5303 = vsel %vm5283, %v5249, 0
    %v5306 = vsel %vm5283, %v5250, 0
    %5308 = vmatpush.bf16.msra.mxu0 0
    %5309 = vmatpush.bf16.msra.mxu0 0
    %5310 = vmatpush.bf16.msra.mxu0 0
    %5311 = vmatpush.bf16.msra.mxu0 0
    %5312 = vmatpush.bf16.msra.mxu0 %v5278
    %5313 = vmatpush.bf16.msra.mxu0 %v5277
    %5314 = vmatpush.bf16.msra.mxu0 %v5276
    %5315 = vmatpush.bf16.msra.mxu0 %v5275
    %5316 = vmatmul.bf16.gmra.mxu0 %v5285
    %v5317 = vpop.f32.mrf.mxu0
    %v5318 = vadd.f32 0.0, %v5317
    %v5319 = vpop.f32.mrf.mxu0
    %v5320 = vadd.f32 0.0, %v5319
    %5321 = vmatmul.bf16.gmra.mxu0 %v5288
    %v5322 = vpop.f32.mrf.mxu0
    %v5323 = vadd.f32 0.0, %v5322
    %v5324 = vpop.f32.mrf.mxu0
    %v5325 = vadd.f32 0.0, %v5324
    %5326 = vmatmul.bf16.gmra.mxu0 %v5291
    %v5327 = vpop.f32.mrf.mxu0
    %v5328 = vadd.f32 0.0, %v5327
    %v5329 = vpop.f32.mrf.mxu0
    %v5330 = vadd.f32 0.0, %v5329
    %5331 = vmatmul.bf16.gmra.mxu0 %v5294
    %v5332 = vpop.f32.mrf.mxu0
    %v5333 = vadd.f32 0.0, %v5332
    %v5334 = vpop.f32.mrf.mxu0
    %v5335 = vadd.f32 0.0, %v5334
    %5336 = vmatmul.bf16.gmra.mxu0 %v5297
    %v5337 = vpop.f32.mrf.mxu0
    %v5338 = vadd.f32 0.0, %v5337
    %v5339 = vpop.f32.mrf.mxu0
    %v5340 = vadd.f32 0.0, %v5339
    %5341 = vmatmul.bf16.gmra.mxu0 %v5300
    %v5342 = vpop.f32.mrf.mxu0
    %v5343 = vadd.f32 0.0, %v5342
    %v5344 = vpop.f32.mrf.mxu0
    %v5345 = vadd.f32 0.0, %v5344
    %5346 = vmatmul.bf16.gmra.mxu0 %v5303
    %v5347 = vpop.f32.mrf.mxu0
    %v5348 = vadd.f32 0.0, %v5347
    %v5349 = vpop.f32.mrf.mxu0
    %v5350 = vadd.f32 0.0, %v5349
    %5351 = vmatmul.bf16.gmra.mxu0 %v5306
    %v5352 = vpop.f32.mrf.mxu0
    %v5353 = vadd.f32 0.0, %v5352
    %v5354 = vpop.f32.mrf.mxu0
    %v5355 = vadd.f32 0.0, %v5354
    %5356 = vdwg.mxu0
    %v5357 = vpack.c.bf16 %v5320, %v5318
    %v5358 = vpack.c.bf16 %v5325, %v5323
    %v5359 = vpack.c.bf16 %v5330, %v5328
    %v5360 = vpack.c.bf16 %v5335, %v5333
    %v5361 = vpack.c.bf16 %v5340, %v5338
    %v5362 = vpack.c.bf16 %v5345, %v5343
    %v5363 = vpack.c.bf16 %v5350, %v5348
    %v5364 = vpack.c.bf16 %v5355, %v5353
    %v5365 = vld [vmem:[%s8] sm:$0x1]
    %v5367 = vperm.slane %v5365, 0
    %5369 = vmatpush.bf16.msra.mxu0 %v5364
    %5370 = vmatpush.bf16.msra.mxu0 %v5363
    %5371 = vmatpush.bf16.msra.mxu0 %v5362
    %5372 = vmatpush.bf16.msra.mxu0 %v5361
    %5373 = vmatpush.bf16.msra.mxu0 %v5360
    %5374 = vmatpush.bf16.msra.mxu0 %v5359
    %5375 = vmatpush.bf16.msra.mxu0 %v5358
    %5376 = vmatpush.bf16.msra.mxu0 %v5357
    %5377 = vmatmul.bf16.gmra.mxu0 %v5021
    %v5378 = vpop.f32.mrf.mxu0
    %v5379 = vadd.f32 %v5367, %v5378
    %v5380 = vpop.f32.mrf.mxu0
    %v5381 = vadd.f32 %v5367, %v5380
    %5382 = vmatmul.bf16.gmra.mxu0 %v5022
    %v5383 = vpop.f32.mrf.mxu0
    %v5384 = vadd.f32 %v5367, %v5383
    %v5385 = vpop.f32.mrf.mxu0
    %v5386 = vadd.f32 %v5367, %v5385
    %5387 = vmatmul.bf16.gmra.mxu0 %v5023
    %v5388 = vpop.f32.mrf.mxu0
    %v5389 = vadd.f32 %v5367, %v5388
    %v5390 = vpop.f32.mrf.mxu0
    %v5391 = vadd.f32 %v5367, %v5390
    %5392 = vmatmul.bf16.gmra.mxu0 %v5024
    %v5393 = vpop.f32.mrf.mxu0
    %v5394 = vadd.f32 %v5367, %v5393
    %v5395 = vpop.f32.mrf.mxu0
    %v5396 = vadd.f32 %v5367, %v5395
    %5397 = vmatmul.bf16.gmra.mxu0 %v5025
    %v5398 = vpop.f32.mrf.mxu0
    %v5399 = vadd.f32 %v5367, %v5398
    %v5400 = vpop.f32.mrf.mxu0
    %v5401 = vadd.f32 %v5367, %v5400
    %5402 = vmatmul.bf16.gmra.mxu0 %v5026
    %v5403 = vpop.f32.mrf.mxu0
    %v5404 = vadd.f32 %v5367, %v5403
    %v5405 = vpop.f32.mrf.mxu0
    %v5406 = vadd.f32 %v5367, %v5405
    %5407 = vmatmul.bf16.gmra.mxu0 %v5027
    %v5408 = vpop.f32.mrf.mxu0
    %v5409 = vadd.f32 %v5367, %v5408
    %v5410 = vpop.f32.mrf.mxu0
    %v5411 = vadd.f32 %v5367, %v5410
    %5412 = vmatmul.bf16.gmra.mxu0 %v5028
    %v5413 = vpop.f32.mrf.mxu0
    %v5414 = vadd.f32 %v5367, %v5413
    %v5415 = vpop.f32.mrf.mxu0
    %v5416 = vadd.f32 %v5367, %v5415
    %5417 = vdwg.mxu0
    %v5418 = vmax.f32 %v5379, 0.0
    %v5419 = vmax.f32 %v5381, 0.0
    %v5420 = vmax.f32 %v5384, 0.0
    %v5421 = vmax.f32 %v5386, 0.0
    %v5422 = vmax.f32 %v5389, 0.0
    %v5423 = vmax.f32 %v5391, 0.0
    %v5424 = vmax.f32 %v5394, 0.0
    %v5425 = vmax.f32 %v5396, 0.0
    %v5426 = vmax.f32 %v5399, 0.0
    %v5427 = vmax.f32 %v5401, 0.0
    %v5428 = vmax.f32 %v5404, 0.0
    %v5429 = vmax.f32 %v5406, 0.0
    %v5430 = vmax.f32 %v5409, 0.0
    %v5431 = vmax.f32 %v5411, 0.0
    %v5432 = vmax.f32 %v5414, 0.0
    %v5433 = vmax.f32 %v5416, 0.0
    %v5434 = vpack.c.bf16 %v5419, %v5418
    %v5435 = vpack.c.bf16 %v5421, %v5420
    %v5436 = vpack.c.bf16 %v5423, %v5422
    %v5437 = vpack.c.bf16 %v5425, %v5424
    %v5438 = vpack.c.bf16 %v5427, %v5426
    %v5439 = vpack.c.bf16 %v5429, %v5428
    %v5440 = vpack.c.bf16 %v5431, %v5430
    %v5441 = vpack.c.bf16 %v5433, %v5432
    %v5442 = vld [vmem:[%s9] sm:$0xff]
    %v5443 = vld [vmem:[%s9 + $0x8] sm:$0xff]
    %v5444 = vld [vmem:[%s9 + $0x10] sm:$0xff]
    %v5445 = vld [vmem:[%s9 + $0x18] sm:$0xff]
    %v5446 = vld [vmem:[%s9 + $0x20] sm:$0xff]
    %v5447 = vld [vmem:[%s9 + $0x28] sm:$0xff]
    %v5448 = vld [vmem:[%s9 + $0x30] sm:$0xff]
    %v5449 = vld [vmem:[%s9 + $0x38] sm:$0xff]
    %v5450 = vld [vmem:[%s9 + $0x40] sm:$0xff]
    %v5451 = vld [vmem:[%s9 + $0x48] sm:$0xff]
    %v5452 = vld [vmem:[%s9 + $0x50] sm:$0xff]
    %v5453 = vld [vmem:[%s9 + $0x58] sm:$0xff]
    %v5454 = vld [vmem:[%s9 + $0x60] sm:$0xff]
    %v5455 = vld [vmem:[%s9 + $0x68] sm:$0xff]
    %v5456 = vld [vmem:[%s9 + $0x70] sm:$0xff]
    %v5457 = vld [vmem:[%s9 + $0x78] sm:$0xff]
    %v5474 = vunpack.c.l.b16 %v5442
    %v5475 = vunpack.c.h.b16 %v5442
    %v5476 = vunpack.c.l.b16 %v5443
    %v5477 = vunpack.c.h.b16 %v5443
    %v5478 = vunpack.c.l.b16 %v5444
    %v5479 = vunpack.c.h.b16 %v5444
    %v5480 = vunpack.c.l.b16 %v5445
    %v5481 = vunpack.c.h.b16 %v5445
    %v5482 = vunpack.c.l.b16 %v5446
    %v5483 = vunpack.c.h.b16 %v5446
    %v5484 = vunpack.c.l.b16 %v5447
    %v5485 = vunpack.c.h.b16 %v5447
    %v5486 = vunpack.c.l.b16 %v5448
    %v5487 = vunpack.c.h.b16 %v5448
    %v5488 = vunpack.c.l.b16 %v5449
    %v5489 = vunpack.c.h.b16 %v5449
    %v5490 = vunpack.c.l.b16 %v5450
    %v5491 = vunpack.c.h.b16 %v5450
    %v5492 = vunpack.c.l.b16 %v5451
    %v5493 = vunpack.c.h.b16 %v5451
    %v5494 = vunpack.c.l.b16 %v5452
    %v5495 = vunpack.c.h.b16 %v5452
    %v5496 = vunpack.c.l.b16 %v5453
    %v5497 = vunpack.c.h.b16 %v5453
    %v5498 = vunpack.c.l.b16 %v5454
    %v5499 = vunpack.c.h.b16 %v5454
    %v5500 = vunpack.c.l.b16 %v5455
    %v5501 = vunpack.c.h.b16 %v5455
    %v5502 = vunpack.c.l.b16 %v5456
    %v5503 = vunpack.c.h.b16 %v5456
    %v5504 = vunpack.c.l.b16 %v5457
    %v5505 = vunpack.c.h.b16 %v5457
    %v5506 = vpack.c.b16 %v5476, %v5474
    %v5507 = vpack.c.b16 %v5477, %v5475
    %v5508 = vpack.c.b16 %v5480, %v5478
    %v5509 = vpack.c.b16 %v5481, %v5479
    %v5510 = vpack.c.b16 %v5484, %v5482
    %v5511 = vpack.c.b16 %v5485, %v5483
    %v5512 = vpack.c.b16 %v5488, %v5486
    %v5513 = vpack.c.b16 %v5489, %v5487
    %v5514 = vpack.c.b16 %v5492, %v5490
    %v5515 = vpack.c.b16 %v5493, %v5491
    %v5516 = vpack.c.b16 %v5496, %v5494
    %v5517 = vpack.c.b16 %v5497, %v5495
    %v5518 = vpack.c.b16 %v5500, %v5498
    %v5519 = vpack.c.b16 %v5501, %v5499
    %v5520 = vpack.c.b16 %v5504, %v5502
    %v5521 = vpack.c.b16 %v5505, %v5503
    %5538 = vmatpush.bf16.msra.mxu0 %v5520
    %5539 = vmatpush.bf16.msra.mxu0 %v5518
    %5540 = vmatpush.bf16.msra.mxu0 %v5516
    %5541 = vmatpush.bf16.msra.mxu0 %v5514
    %5542 = vmatpush.bf16.msra.mxu0 %v5512
    %5543 = vmatpush.bf16.msra.mxu0 %v5510
    %5544 = vmatpush.bf16.msra.mxu0 %v5508
    %5545 = vmatpush.bf16.msra.mxu0 %v5506
    %5546 = vmatmul.bf16.gmra.mxu0 %v5434
    %v5547 = vpop.f32.mrf.mxu0
    %v5548 = vadd.f32 0.0, %v5547
    %v5549 = vpop.f32.mrf.mxu0
    %v5550 = vadd.f32 0.0, %v5549
    %5551 = vmatmul.bf16.gmra.mxu0 %v5435
    %v5552 = vpop.f32.mrf.mxu0
    %v5553 = vadd.f32 0.0, %v5552
    %v5554 = vpop.f32.mrf.mxu0
    %v5555 = vadd.f32 0.0, %v5554
    %5556 = vmatmul.bf16.gmra.mxu0 %v5436
    %v5557 = vpop.f32.mrf.mxu0
    %v5558 = vadd.f32 0.0, %v5557
    %v5559 = vpop.f32.mrf.mxu0
    %v5560 = vadd.f32 0.0, %v5559
    %5561 = vmatmul.bf16.gmra.mxu0 %v5437
    %v5562 = vpop.f32.mrf.mxu0
    %v5563 = vadd.f32 0.0, %v5562
    %v5564 = vpop.f32.mrf.mxu0
    %v5565 = vadd.f32 0.0, %v5564
    %5566 = vmatmul.bf16.gmra.mxu0 %v5438
    %v5567 = vpop.f32.mrf.mxu0
    %v5568 = vadd.f32 0.0, %v5567
    %v5569 = vpop.f32.mrf.mxu0
    %v5570 = vadd.f32 0.0, %v5569
    %5571 = vmatmul.bf16.gmra.mxu0 %v5439
    %v5572 = vpop.f32.mrf.mxu0
    %v5573 = vadd.f32 0.0, %v5572
    %v5574 = vpop.f32.mrf.mxu0
    %v5575 = vadd.f32 0.0, %v5574
    %5576 = vmatmul.bf16.gmra.mxu0 %v5440
    %v5577 = vpop.f32.mrf.mxu0
    %v5578 = vadd.f32 0.0, %v5577
    %v5579 = vpop.f32.mrf.mxu0
    %v5580 = vadd.f32 0.0, %v5579
    %5581 = vmatmul.bf16.gmra.mxu0 %v5441
    %v5582 = vpop.f32.mrf.mxu0
    %v5583 = vadd.f32 0.0, %v5582
    %v5584 = vpop.f32.mrf.mxu0
    %v5585 = vadd.f32 0.0, %v5584
    %5586 = vdwg.mxu0
    %5587 = vmatpush.bf16.msra.mxu0 %v5521
    %5588 = vmatpush.bf16.msra.mxu0 %v5519
    %5589 = vmatpush.bf16.msra.mxu0 %v5517
    %5590 = vmatpush.bf16.msra.mxu0 %v5515
    %5591 = vmatpush.bf16.msra.mxu0 %v5513
    %5592 = vmatpush.bf16.msra.mxu0 %v5511
    %5593 = vmatpush.bf16.msra.mxu0 %v5509
    %5594 = vmatpush.bf16.msra.mxu0 %v5507
    %5595 = vmatmul.bf16.gmra.mxu0 %v5434
    %v5596 = vpop.f32.mrf.mxu0
    %v5597 = vadd.f32 0.0, %v5596
    %v5598 = vpop.f32.mrf.mxu0
    %v5599 = vadd.f32 0.0, %v5598
    %5600 = vmatmul.bf16.gmra.mxu0 %v5435
    %v5601 = vpop.f32.mrf.mxu0
    %v5602 = vadd.f32 0.0, %v5601
    %v5603 = vpop.f32.mrf.mxu0
    %v5604 = vadd.f32 0.0, %v5603
    %5605 = vmatmul.bf16.gmra.mxu0 %v5436
    %v5606 = vpop.f32.mrf.mxu0
    %v5607 = vadd.f32 0.0, %v5606
    %v5608 = vpop.f32.mrf.mxu0
    %v5609 = vadd.f32 0.0, %v5608
    %5610 = vmatmul.bf16.gmra.mxu0 %v5437
    %v5611 = vpop.f32.mrf.mxu0
    %v5612 = vadd.f32 0.0, %v5611
    %v5613 = vpop.f32.mrf.mxu0
    %v5614 = vadd.f32 0.0, %v5613
    %5615 = vmatmul.bf16.gmra.mxu0 %v5438
    %v5616 = vpop.f32.mrf.mxu0
    %v5617 = vadd.f32 0.0, %v5616
    %v5618 = vpop.f32.mrf.mxu0
    %v5619 = vadd.f32 0.0, %v5618
    %5620 = vmatmul.bf16.gmra.mxu0 %v5439
    %v5621 = vpop.f32.mrf.mxu0
    %v5622 = vadd.f32 0.0, %v5621
    %v5623 = vpop.f32.mrf.mxu0
    %v5624 = vadd.f32 0.0, %v5623
    %5625 = vmatmul.bf16.gmra.mxu0 %v5440
    %v5626 = vpop.f32.mrf.mxu0
    %v5627 = vadd.f32 0.0, %v5626
    %v5628 = vpop.f32.mrf.mxu0
    %v5629 = vadd.f32 0.0, %v5628
    %5630 = vmatmul.bf16.gmra.mxu0 %v5441
    %v5631 = vpop.f32.mrf.mxu0
    %v5632 = vadd.f32 0.0, %v5631
    %v5633 = vpop.f32.mrf.mxu0
    %v5634 = vadd.f32 0.0, %v5633
    %5635 = vdwg.mxu0
    %v5636 = vpack.c.bf16 %v5550, %v5548
    %v5637 = vpack.c.bf16 %v5599, %v5597
    %v5638 = vpack.c.bf16 %v5555, %v5553
    %v5639 = vpack.c.bf16 %v5604, %v5602
    %v5640 = vpack.c.bf16 %v5560, %v5558
    %v5641 = vpack.c.bf16 %v5609, %v5607
    %v5642 = vpack.c.bf16 %v5565, %v5563
    %v5643 = vpack.c.bf16 %v5614, %v5612
    %v5644 = vpack.c.bf16 %v5570, %v5568
    %v5645 = vpack.c.bf16 %v5619, %v5617
    %v5646 = vpack.c.bf16 %v5575, %v5573
    %v5647 = vpack.c.bf16 %v5624, %v5622
    %v5648 = vpack.c.bf16 %v5580, %v5578
    %v5649 = vpack.c.bf16 %v5629, %v5627
    %v5650 = vpack.c.bf16 %v5585, %v5583
    %v5651 = vpack.c.bf16 %v5634, %v5632
    %v5652 = vld [vmem:[%s10] sm:$0x3]
    %v5654 = vperm.slane %v5652, 0
    %v5655 = vperm.slane %v5652, 1
    %5658 = vmatpush.bf16.msra.mxu0 %v5650
    %5659 = vmatpush.bf16.msra.mxu0 %v5648
    %5660 = vmatpush.bf16.msra.mxu0 %v5646
    %5661 = vmatpush.bf16.msra.mxu0 %v5644
    %5662 = vmatpush.bf16.msra.mxu0 %v5642
    %5663 = vmatpush.bf16.msra.mxu0 %v5640
    %5664 = vmatpush.bf16.msra.mxu0 %v5638
    %5665 = vmatpush.bf16.msra.mxu0 %v5636
    %5666 = vmatmul.bf16.gmra.mxu0 %v5021
    %v5667 = vpop.f32.mrf.mxu0
    %v5668 = vadd.f32 %v5654, %v5667
    %v5669 = vpop.f32.mrf.mxu0
    %v5670 = vadd.f32 %v5654, %v5669
    %5671 = vmatmul.bf16.gmra.mxu0 %v5022
    %v5672 = vpop.f32.mrf.mxu0
    %v5673 = vadd.f32 %v5654, %v5672
    %v5674 = vpop.f32.mrf.mxu0
    %v5675 = vadd.f32 %v5654, %v5674
    %5676 = vmatmul.bf16.gmra.mxu0 %v5023
    %v5677 = vpop.f32.mrf.mxu0
    %v5678 = vadd.f32 %v5654, %v5677
    %v5679 = vpop.f32.mrf.mxu0
    %v5680 = vadd.f32 %v5654, %v5679
    %5681 = vmatmul.bf16.gmra.mxu0 %v5024
    %v5682 = vpop.f32.mrf.mxu0
    %v5683 = vadd.f32 %v5654, %v5682
    %v5684 = vpop.f32.mrf.mxu0
    %v5685 = vadd.f32 %v5654, %v5684
    %5686 = vmatmul.bf16.gmra.mxu0 %v5025
    %v5687 = vpop.f32.mrf.mxu0
    %v5688 = vadd.f32 %v5654, %v5687
    %v5689 = vpop.f32.mrf.mxu0
    %v5690 = vadd.f32 %v5654, %v5689
    %5691 = vmatmul.bf16.gmra.mxu0 %v5026
    %v5692 = vpop.f32.mrf.mxu0
    %v5693 = vadd.f32 %v5654, %v5692
    %v5694 = vpop.f32.mrf.mxu0
    %v5695 = vadd.f32 %v5654, %v5694
    %5696 = vmatmul.bf16.gmra.mxu0 %v5027
    %v5697 = vpop.f32.mrf.mxu0
    %v5698 = vadd.f32 %v5654, %v5697
    %v5699 = vpop.f32.mrf.mxu0
    %v5700 = vadd.f32 %v5654, %v5699
    %5701 = vmatmul.bf16.gmra.mxu0 %v5028
    %v5702 = vpop.f32.mrf.mxu0
    %v5703 = vadd.f32 %v5654, %v5702
    %v5704 = vpop.f32.mrf.mxu0
    %v5705 = vadd.f32 %v5654, %v5704
    %5706 = vdwg.mxu0
    %5707 = vmatpush.bf16.msra.mxu0 %v5651
    %5708 = vmatpush.bf16.msra.mxu0 %v5649
    %5709 = vmatpush.bf16.msra.mxu0 %v5647
    %5710 = vmatpush.bf16.msra.mxu0 %v5645
    %5711 = vmatpush.bf16.msra.mxu0 %v5643
    %5712 = vmatpush.bf16.msra.mxu0 %v5641
    %5713 = vmatpush.bf16.msra.mxu0 %v5639
    %5714 = vmatpush.bf16.msra.mxu0 %v5637
    %5715 = vmatmul.bf16.gmra.mxu0 %v5021
    %v5716 = vpop.f32.mrf.mxu0
    %v5717 = vadd.f32 %v5655, %v5716
    %v5718 = vpop.f32.mrf.mxu0
    %v5719 = vadd.f32 %v5655, %v5718
    %5720 = vmatmul.bf16.gmra.mxu0 %v5022
    %v5721 = vpop.f32.mrf.mxu0
    %v5722 = vadd.f32 %v5655, %v5721
    %v5723 = vpop.f32.mrf.mxu0
    %v5724 = vadd.f32 %v5655, %v5723
    %5725 = vmatmul.bf16.gmra.mxu0 %v5023
    %v5726 = vpop.f32.mrf.mxu0
    %v5727 = vadd.f32 %v5655, %v5726
    %v5728 = vpop.f32.mrf.mxu0
    %v5729 = vadd.f32 %v5655, %v5728
    %5730 = vmatmul.bf16.gmra.mxu0 %v5024
    %v5731 = vpop.f32.mrf.mxu0
    %v5732 = vadd.f32 %v5655, %v5731
    %v5733 = vpop.f32.mrf.mxu0
    %v5734 = vadd.f32 %v5655, %v5733
    %5735 = vmatmul.bf16.gmra.mxu0 %v5025
    %v5736 = vpop.f32.mrf.mxu0
    %v5737 = vadd.f32 %v5655, %v5736
    %v5738 = vpop.f32.mrf.mxu0
    %v5739 = vadd.f32 %v5655, %v5738
    %5740 = vmatmul.bf16.gmra.mxu0 %v5026
    %v5741 = vpop.f32.mrf.mxu0
    %v5742 = vadd.f32 %v5655, %v5741
    %v5743 = vpop.f32.mrf.mxu0
    %v5744 = vadd.f32 %v5655, %v5743
    %5745 = vmatmul.bf16.gmra.mxu0 %v5027
    %v5746 = vpop.f32.mrf.mxu0
    %v5747 = vadd.f32 %v5655, %v5746
    %v5748 = vpop.f32.mrf.mxu0
    %v5749 = vadd.f32 %v5655, %v5748
    %5750 = vmatmul.bf16.gmra.mxu0 %v5028
    %v5751 = vpop.f32.mrf.mxu0
    %v5752 = vadd.f32 %v5655, %v5751
    %v5753 = vpop.f32.mrf.mxu0
    %v5754 = vadd.f32 %v5655, %v5753
    %5755 = vdwg.mxu0
    %v5756 = vmax.f32 %v5668, 0.0
    %v5757 = vmax.f32 %v5717, 0.0
    %v5758 = vmax.f32 %v5670, 0.0
    %v5759 = vmax.f32 %v5719, 0.0
    %v5760 = vmax.f32 %v5673, 0.0
    %v5761 = vmax.f32 %v5722, 0.0
    %v5762 = vmax.f32 %v5675, 0.0
    %v5763 = vmax.f32 %v5724, 0.0
    %v5764 = vmax.f32 %v5678, 0.0
    %v5765 = vmax.f32 %v5727, 0.0
    %v5766 = vmax.f32 %v5680, 0.0
    %v5767 = vmax.f32 %v5729, 0.0
    %v5768 = vmax.f32 %v5683, 0.0
    %v5769 = vmax.f32 %v5732, 0.0
    %v5770 = vmax.f32 %v5685, 0.0
    %v5771 = vmax.f32 %v5734, 0.0
    %v5772 = vmax.f32 %v5688, 0.0
    %v5773 = vmax.f32 %v5737, 0.0
    %v5774 = vmax.f32 %v5690, 0.0
    %v5775 = vmax.f32 %v5739, 0.0
    %v5776 = vmax.f32 %v5693, 0.0
    %v5777 = vmax.f32 %v5742, 0.0
    %v5778 = vmax.f32 %v5695, 0.0
    %v5779 = vmax.f32 %v5744, 0.0
    %v5780 = vmax.f32 %v5698, 0.0
    %v5781 = vmax.f32 %v5747, 0.0
    %v5782 = vmax.f32 %v5700, 0.0
    %v5783 = vmax.f32 %v5749, 0.0
    %v5784 = vmax.f32 %v5703, 0.0
    %v5785 = vmax.f32 %v5752, 0.0
    %v5786 = vmax.f32 %v5705, 0.0
    %v5787 = vmax.f32 %v5754, 0.0
    %v5788 = vmul.f32 %v5756, %v968
    %v5789 = vmul.f32 %v5757, %v968
    %v5790 = vmul.f32 %v5758, %v969
    %v5791 = vmul.f32 %v5759, %v969
    %v5792 = vmul.f32 %v5760, %v970
    %v5793 = vmul.f32 %v5761, %v970
    %v5794 = vmul.f32 %v5762, %v971
    %v5795 = vmul.f32 %v5763, %v971
    %v5796 = vmul.f32 %v5764, %v972
    %v5797 = vmul.f32 %v5765, %v972
    %v5798 = vmul.f32 %v5766, %v973
    %v5799 = vmul.f32 %v5767, %v973
    %v5800 = vmul.f32 %v5768, %v974
    %v5801 = vmul.f32 %v5769, %v974
    %v5802 = vmul.f32 %v5770, %v975
    %v5803 = vmul.f32 %v5771, %v975
    %v5804 = vmul.f32 %v5772, %v976
    %v5805 = vmul.f32 %v5773, %v976
    %v5806 = vmul.f32 %v5774, %v977
    %v5807 = vmul.f32 %v5775, %v977
    %v5808 = vmul.f32 %v5776, %v978
    %v5809 = vmul.f32 %v5777, %v978
    %v5810 = vmul.f32 %v5778, %v979
    %v5811 = vmul.f32 %v5779, %v979
    %v5812 = vmul.f32 %v5780, %v980
    %v5813 = vmul.f32 %v5781, %v980
    %v5814 = vmul.f32 %v5782, %v981
    %v5815 = vmul.f32 %v5783, %v981
    %v5816 = vmul.f32 %v5784, %v982
    %v5817 = vmul.f32 %v5785, %v982
    %v5818 = vmul.f32 %v5786, %v983
    %v5819 = vmul.f32 %v5787, %v983
    %v5820 = vadd.f32 %v5788, %v5790
    %v5821 = vadd.f32 %v5820, %v5792
    %v5822 = vadd.f32 %v5821, %v5794
    %v5823 = vadd.f32 %v5822, %v5796
    %v5824 = vadd.f32 %v5823, %v5798
    %v5825 = vadd.f32 %v5824, %v5800
    %v5826 = vadd.f32 %v5825, %v5802
    %v5827 = vadd.f32 %v5826, %v5804
    %v5828 = vadd.f32 %v5827, %v5806
    %v5829 = vadd.f32 %v5828, %v5808
    %v5830 = vadd.f32 %v5829, %v5810
    %v5831 = vadd.f32 %v5830, %v5812
    %v5832 = vadd.f32 %v5831, %v5814
    %v5833 = vadd.f32 %v5832, %v5816
    %v5834 = vadd.f32 %v5833, %v5818
    %v5835 = vrot.slane %v5834, 4
    %v5836 = vadd.f32 %v5834, %v5835
    %v5837 = vrot.slane %v5836, 2
    %v5838 = vadd.f32 %v5836, %v5837
    %v5839 = vrot.slane %v5838, 1
    %v5840 = vadd.f32 %v5838, %v5839
    %v5841 = vadd.f32 %v5789, %v5791
    %v5842 = vadd.f32 %v5841, %v5793
    %v5843 = vadd.f32 %v5842, %v5795
    %v5844 = vadd.f32 %v5843, %v5797
    %v5845 = vadd.f32 %v5844, %v5799
    %v5846 = vadd.f32 %v5845, %v5801
    %v5847 = vadd.f32 %v5846, %v5803
    %v5848 = vadd.f32 %v5847, %v5805
    %v5849 = vadd.f32 %v5848, %v5807
    %v5850 = vadd.f32 %v5849, %v5809
    %v5851 = vadd.f32 %v5850, %v5811
    %v5852 = vadd.f32 %v5851, %v5813
    %v5853 = vadd.f32 %v5852, %v5815
    %v5854 = vadd.f32 %v5853, %v5817
    %v5855 = vadd.f32 %v5854, %v5819
    %v5856 = vrot.slane %v5855, 4
    %v5857 = vadd.f32 %v5855, %v5856
    %v5858 = vrot.slane %v5857, 2
    %v5859 = vadd.f32 %v5857, %v5858
    %v5860 = vrot.slane %v5859, 1
    %v5861 = vadd.f32 %v5859, %v5860
    %v5862 = vmul.f32 %v5840, 0.01
    %v5863 = vmul.f32 %v5861, 0.01
    %v5864 = vmul.f32 %v5788, %v5756
    %v5865 = vmul.f32 %v5789, %v5757
    %v5866 = vmul.f32 %v5790, %v5758
    %v5867 = vmul.f32 %v5791, %v5759
    %v5868 = vmul.f32 %v5792, %v5760
    %v5869 = vmul.f32 %v5793, %v5761
    %v5870 = vmul.f32 %v5794, %v5762
    %v5871 = vmul.f32 %v5795, %v5763
    %v5872 = vmul.f32 %v5796, %v5764
    %v5873 = vmul.f32 %v5797, %v5765
    %v5874 = vmul.f32 %v5798, %v5766
    %v5875 = vmul.f32 %v5799, %v5767
    %v5876 = vmul.f32 %v5800, %v5768
    %v5877 = vmul.f32 %v5801, %v5769
    %v5878 = vmul.f32 %v5802, %v5770
    %v5879 = vmul.f32 %v5803, %v5771
    %v5880 = vmul.f32 %v5804, %v5772
    %v5881 = vmul.f32 %v5805, %v5773
    %v5882 = vmul.f32 %v5806, %v5774
    %v5883 = vmul.f32 %v5807, %v5775
    %v5884 = vmul.f32 %v5808, %v5776
    %v5885 = vmul.f32 %v5809, %v5777
    %v5886 = vmul.f32 %v5810, %v5778
    %v5887 = vmul.f32 %v5811, %v5779
    %v5888 = vmul.f32 %v5812, %v5780
    %v5889 = vmul.f32 %v5813, %v5781
    %v5890 = vmul.f32 %v5814, %v5782
    %v5891 = vmul.f32 %v5815, %v5783
    %v5892 = vmul.f32 %v5816, %v5784
    %v5893 = vmul.f32 %v5817, %v5785
    %v5894 = vmul.f32 %v5818, %v5786
    %v5895 = vmul.f32 %v5819, %v5787
    %v5896 = vadd.f32 %v5864, %v5866
    %v5897 = vadd.f32 %v5896, %v5868
    %v5898 = vadd.f32 %v5897, %v5870
    %v5899 = vadd.f32 %v5898, %v5872
    %v5900 = vadd.f32 %v5899, %v5874
    %v5901 = vadd.f32 %v5900, %v5876
    %v5902 = vadd.f32 %v5901, %v5878
    %v5903 = vadd.f32 %v5902, %v5880
    %v5904 = vadd.f32 %v5903, %v5882
    %v5905 = vadd.f32 %v5904, %v5884
    %v5906 = vadd.f32 %v5905, %v5886
    %v5907 = vadd.f32 %v5906, %v5888
    %v5908 = vadd.f32 %v5907, %v5890
    %v5909 = vadd.f32 %v5908, %v5892
    %v5910 = vadd.f32 %v5909, %v5894
    %v5911 = vrot.slane %v5910, 4
    %v5912 = vadd.f32 %v5910, %v5911
    %v5913 = vrot.slane %v5912, 2
    %v5914 = vadd.f32 %v5912, %v5913
    %v5915 = vrot.slane %v5914, 1
    %v5916 = vadd.f32 %v5914, %v5915
    %v5917 = vadd.f32 %v5865, %v5867
    %v5918 = vadd.f32 %v5917, %v5869
    %v5919 = vadd.f32 %v5918, %v5871
    %v5920 = vadd.f32 %v5919, %v5873
    %v5921 = vadd.f32 %v5920, %v5875
    %v5922 = vadd.f32 %v5921, %v5877
    %v5923 = vadd.f32 %v5922, %v5879
    %v5924 = vadd.f32 %v5923, %v5881
    %v5925 = vadd.f32 %v5924, %v5883
    %v5926 = vadd.f32 %v5925, %v5885
    %v5927 = vadd.f32 %v5926, %v5887
    %v5928 = vadd.f32 %v5927, %v5889
    %v5929 = vadd.f32 %v5928, %v5891
    %v5930 = vadd.f32 %v5929, %v5893
    %v5931 = vadd.f32 %v5930, %v5895
    %v5932 = vrot.slane %v5931, 4
    %v5933 = vadd.f32 %v5931, %v5932
    %v5934 = vrot.slane %v5933, 2
    %v5935 = vadd.f32 %v5933, %v5934
    %v5936 = vrot.slane %v5935, 1
    %v5937 = vadd.f32 %v5935, %v5936
    %v5938 = vmul.f32 %v5916, 0.01
    %v5939 = vmul.f32 %v5937, 0.01
    %v5940 = vmul.f32 %v5862, %v5862
    %v5941 = vmul.f32 %v5863, %v5863
    %v5942 = vsub.f32 %v5938, %v5940
    %v5943 = vsub.f32 %v5939, %v5941
    %v5944 = vld [vmem:[%s11] sm:$0x3]
    %v5945 = vadd.f32 %v5942, 1e-05
    %v5946 = vadd.f32 %v5943, 1e-05
    %v5947 = vrsqrt.pop %v5945
    %v5948 = vmul.f32 %v5947, %v5945
    %v5949 = vmul.f32 %v5948, %v5947
    %v5950 = vmul.f32 0.5, %v5949
    %v5951 = vsub.f32 1.5, %v5950
    %v5952 = vmul.f32 %v5947, %v5951
    %vm5953 = vweird.f32 %v5945
    %vm5954 = vweird.f32 %v5947
    %vm5955 = vmor %vm5953, %vm5954
    %v5956 = vsel %vm5955, %v5947, %v5952
    %v5957 = vrsqrt.pop %v5946
    %v5958 = vmul.f32 %v5957, %v5946
    %v5959 = vmul.f32 %v5958, %v5957
    %v5960 = vmul.f32 0.5, %v5959
    %v5961 = vsub.f32 1.5, %v5960
    %v5962 = vmul.f32 %v5957, %v5961
    %vm5963 = vweird.f32 %v5946
    %vm5964 = vweird.f32 %v5957
    %vm5965 = vmor %vm5963, %vm5964
    %v5966 = vsel %vm5965, %v5957, %v5962
    %v5969 = vrot.slane %v5966, 7
    %vm5970 = vcmask 1040384
    %v5971 = vsel %vm5970, %v5956, %v5969
    %v5973 = vmul.f32 %v5944, %v5971
    %v5974 = vld [vmem:[%s12] sm:$0x3]
    %v5976 = vperm.slane %v5973, 0
    %v5977 = vperm.slane %v5973, 1
    %v5980 = vmul.f32 %v5862, %v5976
    %v5981 = vmul.f32 %v5863, %v5977
    %v5984 = vrot.slane %v5981, 7
    %v5985 = vsel %vm5970, %v5980, %v5984
    %v5987 = vsub.f32 %v5974, %v5985
    %v5988 = vmul.f32 %v5756, %v5976
    %v5989 = vmul.f32 %v5757, %v5977
    %v5990 = vmul.f32 %v5758, %v5976
    %v5991 = vmul.f32 %v5759, %v5977
    %v5992 = vmul.f32 %v5760, %v5976
    %v5993 = vmul.f32 %v5761, %v5977
    %v5994 = vmul.f32 %v5762, %v5976
    %v5995 = vmul.f32 %v5763, %v5977
    %v5996 = vmul.f32 %v5764, %v5976
    %v5997 = vmul.f32 %v5765, %v5977
    %v5998 = vmul.f32 %v5766, %v5976
    %v5999 = vmul.f32 %v5767, %v5977
    %v6000 = vmul.f32 %v5768, %v5976
    %v6001 = vmul.f32 %v5769, %v5977
    %v6002 = vmul.f32 %v5770, %v5976
    %v6003 = vmul.f32 %v5771, %v5977
    %v6004 = vmul.f32 %v5772, %v5976
    %v6005 = vmul.f32 %v5773, %v5977
    %v6006 = vmul.f32 %v5774, %v5976
    %v6007 = vmul.f32 %v5775, %v5977
    %v6008 = vmul.f32 %v5776, %v5976
    %v6009 = vmul.f32 %v5777, %v5977
    %v6010 = vmul.f32 %v5778, %v5976
    %v6011 = vmul.f32 %v5779, %v5977
    %v6012 = vmul.f32 %v5780, %v5976
    %v6013 = vmul.f32 %v5781, %v5977
    %v6014 = vmul.f32 %v5782, %v5976
    %v6015 = vmul.f32 %v5783, %v5977
    %v6016 = vmul.f32 %v5784, %v5976
    %v6017 = vmul.f32 %v5785, %v5977
    %v6018 = vmul.f32 %v5786, %v5976
    %v6019 = vmul.f32 %v5787, %v5977
    %v6021 = vperm.slane %v5987, 0
    %v6022 = vperm.slane %v5987, 1
    %v6025 = vadd.f32 %v5988, %v6021
    %v6026 = vadd.f32 %v5989, %v6022
    %v6027 = vadd.f32 %v5990, %v6021
    %v6028 = vadd.f32 %v5991, %v6022
    %v6029 = vadd.f32 %v5992, %v6021
    %v6030 = vadd.f32 %v5993, %v6022
    %v6031 = vadd.f32 %v5994, %v6021
    %v6032 = vadd.f32 %v5995, %v6022
    %v6033 = vadd.f32 %v5996, %v6021
    %v6034 = vadd.f32 %v5997, %v6022
    %v6035 = vadd.f32 %v5998, %v6021
    %v6036 = vadd.f32 %v5999, %v6022
    %v6037 = vadd.f32 %v6000, %v6021
    %v6038 = vadd.f32 %v6001, %v6022
    %v6039 = vadd.f32 %v6002, %v6021
    %v6040 = vadd.f32 %v6003, %v6022
    %v6041 = vadd.f32 %v6004, %v6021
    %v6042 = vadd.f32 %v6005, %v6022
    %v6043 = vadd.f32 %v6006, %v6021
    %v6044 = vadd.f32 %v6007, %v6022
    %v6045 = vadd.f32 %v6008, %v6021
    %v6046 = vadd.f32 %v6009, %v6022
    %v6047 = vadd.f32 %v6010, %v6021
    %v6048 = vadd.f32 %v6011, %v6022
    %v6049 = vadd.f32 %v6012, %v6021
    %v6050 = vadd.f32 %v6013, %v6022
    %v6051 = vadd.f32 %v6014, %v6021
    %v6052 = vadd.f32 %v6015, %v6022
    %v6053 = vadd.f32 %v6016, %v6021
    %v6054 = vadd.f32 %v6017, %v6022
    %v6055 = vadd.f32 %v6018, %v6021
    %v6056 = vadd.f32 %v6019, %v6022
    %v6057 = vpack.c.bf16 %v6027, %v6025
    %v6058 = vpack.c.bf16 %v6028, %v6026
    %v6059 = vpack.c.bf16 %v6031, %v6029
    %v6060 = vpack.c.bf16 %v6032, %v6030
    %v6061 = vpack.c.bf16 %v6035, %v6033
    %v6062 = vpack.c.bf16 %v6036, %v6034
    %v6063 = vpack.c.bf16 %v6039, %v6037
    %v6064 = vpack.c.bf16 %v6040, %v6038
    %v6065 = vpack.c.bf16 %v6043, %v6041
    %v6066 = vpack.c.bf16 %v6044, %v6042
    %v6067 = vpack.c.bf16 %v6047, %v6045
    %v6068 = vpack.c.bf16 %v6048, %v6046
    %v6069 = vpack.c.bf16 %v6051, %v6049
    %v6070 = vpack.c.bf16 %v6052, %v6050
    %v6071 = vpack.c.bf16 %v6055, %v6053
    %v6072 = vpack.c.bf16 %v6056, %v6054
    %v6073 = vld [vmem:[%s13] sm:$0xf]
    %v6074 = vld [vmem:[%s13 + $0x4] sm:$0xf]
    %v6075 = vld [vmem:[%s13 + $0x8] sm:$0xf]
    %v6076 = vld [vmem:[%s13 + $0xc] sm:$0xf]
    %v6077 = vld [vmem:[%s13 + $0x10] sm:$0xf]
    %v6078 = vld [vmem:[%s13 + $0x14] sm:$0xf]
    %v6079 = vld [vmem:[%s13 + $0x18] sm:$0xf]
    %v6080 = vld [vmem:[%s13 + $0x1c] sm:$0xf]
    %v6081 = vld [vmem:[%s13 + $0x20] sm:$0xf]
    %v6082 = vld [vmem:[%s13 + $0x24] sm:$0xf]
    %v6083 = vld [vmem:[%s13 + $0x28] sm:$0xf]
    %v6084 = vld [vmem:[%s13 + $0x2c] sm:$0xf]
    %v6085 = vld [vmem:[%s13 + $0x30] sm:$0xf]
    %v6086 = vld [vmem:[%s13 + $0x34] sm:$0xf]
    %v6087 = vld [vmem:[%s13 + $0x38] sm:$0xf]
    %v6088 = vld [vmem:[%s13 + $0x3c] sm:$0xf]
    %v6089 = vld [vmem:[%s13 + $0x40] sm:$0xf]
    %v6090 = vld [vmem:[%s13 + $0x44] sm:$0xf]
    %v6091 = vld [vmem:[%s13 + $0x48] sm:$0xf]
    %v6092 = vld [vmem:[%s13 + $0x4c] sm:$0xf]
    %v6093 = vld [vmem:[%s13 + $0x50] sm:$0xf]
    %v6094 = vld [vmem:[%s13 + $0x54] sm:$0xf]
    %v6095 = vld [vmem:[%s13 + $0x58] sm:$0xf]
    %v6096 = vld [vmem:[%s13 + $0x5c] sm:$0xf]
    %v6097 = vld [vmem:[%s13 + $0x60] sm:$0xf]
    %v6098 = vld [vmem:[%s13 + $0x64] sm:$0xf]
    %v6099 = vld [vmem:[%s13 + $0x68] sm:$0xf]
    %v6100 = vld [vmem:[%s13 + $0x6c] sm:$0xf]
    %v6101 = vld [vmem:[%s13 + $0x70] sm:$0xf]
    %v6102 = vld [vmem:[%s13 + $0x74] sm:$0xf]
    %v6103 = vld [vmem:[%s13 + $0x78] sm:$0xf]
    %v6104 = vld [vmem:[%s13 + $0x7c] sm:$0xf]
    %v6105 = vld [vmem:[%s14] sm:$0x1]
    %v6107 = vperm.slane %v6105, 0
    %v6141 = vunpack.c.l.b16 %v6073
    %v6142 = vunpack.c.l.b16 %v6074
    %v6143 = vunpack.c.l.b16 %v6075
    %v6144 = vunpack.c.l.b16 %v6076
    %v6145 = vunpack.c.l.b16 %v6077
    %v6146 = vunpack.c.l.b16 %v6078
    %v6147 = vunpack.c.l.b16 %v6079
    %v6148 = vunpack.c.l.b16 %v6080
    %v6149 = vunpack.c.l.b16 %v6081
    %v6150 = vunpack.c.l.b16 %v6082
    %v6151 = vunpack.c.l.b16 %v6083
    %v6152 = vunpack.c.l.b16 %v6084
    %v6153 = vunpack.c.l.b16 %v6085
    %v6154 = vunpack.c.l.b16 %v6086
    %v6155 = vunpack.c.l.b16 %v6087
    %v6156 = vunpack.c.l.b16 %v6088
    %v6157 = vunpack.c.l.b16 %v6089
    %v6158 = vunpack.c.l.b16 %v6090
    %v6159 = vunpack.c.l.b16 %v6091
    %v6160 = vunpack.c.l.b16 %v6092
    %v6161 = vunpack.c.l.b16 %v6093
    %v6162 = vunpack.c.l.b16 %v6094
    %v6163 = vunpack.c.l.b16 %v6095
    %v6164 = vunpack.c.l.b16 %v6096
    %v6165 = vunpack.c.l.b16 %v6097
    %v6166 = vunpack.c.l.b16 %v6098
    %v6167 = vunpack.c.l.b16 %v6099
    %v6168 = vunpack.c.l.b16 %v6100
    %v6169 = vunpack.c.l.b16 %v6101
    %v6170 = vunpack.c.l.b16 %v6102
    %v6171 = vunpack.c.l.b16 %v6103
    %v6172 = vunpack.c.l.b16 %v6104
    %v6173 = vpack.c.b16 %v6142, %v6141
    %v6174 = vpack.c.b16 %v6144, %v6143
    %v6175 = vpack.c.b16 %v6146, %v6145
    %v6176 = vpack.c.b16 %v6148, %v6147
    %v6177 = vpack.c.b16 %v6150, %v6149
    %v6178 = vpack.c.b16 %v6152, %v6151
    %v6179 = vpack.c.b16 %v6154, %v6153
    %v6180 = vpack.c.b16 %v6156, %v6155
    %v6181 = vpack.c.b16 %v6158, %v6157
    %v6182 = vpack.c.b16 %v6160, %v6159
    %v6183 = vpack.c.b16 %v6162, %v6161
    %v6184 = vpack.c.b16 %v6164, %v6163
    %v6185 = vpack.c.b16 %v6166, %v6165
    %v6186 = vpack.c.b16 %v6168, %v6167
    %v6187 = vpack.c.b16 %v6170, %v6169
    %v6188 = vpack.c.b16 %v6172, %v6171
    %6205 = vmatpush.bf16.msra.mxu0 %v6180
    %6206 = vmatpush.bf16.msra.mxu0 %v6179
    %6207 = vmatpush.bf16.msra.mxu0 %v6178
    %6208 = vmatpush.bf16.msra.mxu0 %v6177
    %6209 = vmatpush.bf16.msra.mxu0 %v6176
    %6210 = vmatpush.bf16.msra.mxu0 %v6175
    %6211 = vmatpush.bf16.msra.mxu0 %v6174
    %6212 = vmatpush.bf16.msra.mxu0 %v6173
    %6213 = vmatmul.bf16.gmra.mxu0 %v6057
    %v6214 = vpop.f32.mrf.mxu0
    %v6215 = vadd.f32 %v6107, %v6214
    %v6216 = vpop.f32.mrf.mxu0
    %v6217 = vadd.f32 %v6107, %v6216
    %6218 = vmatmul.bf16.gmra.mxu0 %v6059
    %v6219 = vpop.f32.mrf.mxu0
    %v6220 = vadd.f32 %v6107, %v6219
    %v6221 = vpop.f32.mrf.mxu0
    %v6222 = vadd.f32 %v6107, %v6221
    %6223 = vmatmul.bf16.gmra.mxu0 %v6061
    %v6224 = vpop.f32.mrf.mxu0
    %v6225 = vadd.f32 %v6107, %v6224
    %v6226 = vpop.f32.mrf.mxu0
    %v6227 = vadd.f32 %v6107, %v6226
    %6228 = vmatmul.bf16.gmra.mxu0 %v6063
    %v6229 = vpop.f32.mrf.mxu0
    %v6230 = vadd.f32 %v6107, %v6229
    %v6231 = vpop.f32.mrf.mxu0
    %v6232 = vadd.f32 %v6107, %v6231
    %6233 = vmatmul.bf16.gmra.mxu0 %v6065
    %v6234 = vpop.f32.mrf.mxu0
    %v6235 = vadd.f32 %v6107, %v6234
    %v6236 = vpop.f32.mrf.mxu0
    %v6237 = vadd.f32 %v6107, %v6236
    %6238 = vmatmul.bf16.gmra.mxu0 %v6067
    %v6239 = vpop.f32.mrf.mxu0
    %v6240 = vadd.f32 %v6107, %v6239
    %v6241 = vpop.f32.mrf.mxu0
    %v6242 = vadd.f32 %v6107, %v6241
    %6243 = vmatmul.bf16.gmra.mxu0 %v6069
    %v6244 = vpop.f32.mrf.mxu0
    %v6245 = vadd.f32 %v6107, %v6244
    %v6246 = vpop.f32.mrf.mxu0
    %v6247 = vadd.f32 %v6107, %v6246
    %6248 = vmatmul.bf16.gmra.mxu0 %v6071
    %v6249 = vpop.f32.mrf.mxu0
    %v6250 = vadd.f32 %v6107, %v6249
    %v6251 = vpop.f32.mrf.mxu0
    %v6252 = vadd.f32 %v6107, %v6251
    %6253 = vdwg.mxu0
    %6254 = vmatpush.bf16.msra.mxu0 %v6188
    %6255 = vmatpush.bf16.msra.mxu0 %v6187
    %6256 = vmatpush.bf16.msra.mxu0 %v6186
    %6257 = vmatpush.bf16.msra.mxu0 %v6185
    %6258 = vmatpush.bf16.msra.mxu0 %v6184
    %6259 = vmatpush.bf16.msra.mxu0 %v6183
    %6260 = vmatpush.bf16.msra.mxu0 %v6182
    %6261 = vmatpush.bf16.msra.mxu0 %v6181
    %6262 = vmatmul.bf16.gmra.mxu0 %v6058
    %v6263 = vpop.f32.mrf.mxu0
    %v6264 = vadd.f32 %v6215, %v6263
    %v6265 = vpop.f32.mrf.mxu0
    %v6266 = vadd.f32 %v6217, %v6265
    %6267 = vmatmul.bf16.gmra.mxu0 %v6060
    %v6268 = vpop.f32.mrf.mxu0
    %v6269 = vadd.f32 %v6220, %v6268
    %v6270 = vpop.f32.mrf.mxu0
    %v6271 = vadd.f32 %v6222, %v6270
    %6272 = vmatmul.bf16.gmra.mxu0 %v6062
    %v6273 = vpop.f32.mrf.mxu0
    %v6274 = vadd.f32 %v6225, %v6273
    %v6275 = vpop.f32.mrf.mxu0
    %v6276 = vadd.f32 %v6227, %v6275
    %6277 = vmatmul.bf16.gmra.mxu0 %v6064
    %v6278 = vpop.f32.mrf.mxu0
    %v6279 = vadd.f32 %v6230, %v6278
    %v6280 = vpop.f32.mrf.mxu0
    %v6281 = vadd.f32 %v6232, %v6280
    %6282 = vmatmul.bf16.gmra.mxu0 %v6066
    %v6283 = vpop.f32.mrf.mxu0
    %v6284 = vadd.f32 %v6235, %v6283
    %v6285 = vpop.f32.mrf.mxu0
    %v6286 = vadd.f32 %v6237, %v6285
    %6287 = vmatmul.bf16.gmra.mxu0 %v6068
    %v6288 = vpop.f32.mrf.mxu0
    %v6289 = vadd.f32 %v6240, %v6288
    %v6290 = vpop.f32.mrf.mxu0
    %v6291 = vadd.f32 %v6242, %v6290
    %6292 = vmatmul.bf16.gmra.mxu0 %v6070
    %v6293 = vpop.f32.mrf.mxu0
    %v6294 = vadd.f32 %v6245, %v6293
    %v6295 = vpop.f32.mrf.mxu0
    %v6296 = vadd.f32 %v6247, %v6295
    %6297 = vmatmul.bf16.gmra.mxu0 %v6072
    %v6298 = vpop.f32.mrf.mxu0
    %v6299 = vadd.f32 %v6250, %v6298
    %v6300 = vpop.f32.mrf.mxu0
    %v6301 = vadd.f32 %v6252, %v6300
    %6302 = vdwg.mxu0
    %v6303 = vmax.f32 %v6264, 0.0
    %v6304 = vmax.f32 %v6266, 0.0
    %v6305 = vmax.f32 %v6269, 0.0
    %v6306 = vmax.f32 %v6271, 0.0
    %v6307 = vmax.f32 %v6274, 0.0
    %v6308 = vmax.f32 %v6276, 0.0
    %v6309 = vmax.f32 %v6279, 0.0
    %v6310 = vmax.f32 %v6281, 0.0
    %v6311 = vmax.f32 %v6284, 0.0
    %v6312 = vmax.f32 %v6286, 0.0
    %v6313 = vmax.f32 %v6289, 0.0
    %v6314 = vmax.f32 %v6291, 0.0
    %v6315 = vmax.f32 %v6294, 0.0
    %v6316 = vmax.f32 %v6296, 0.0
    %v6317 = vmax.f32 %v6299, 0.0
    %v6318 = vmax.f32 %v6301, 0.0
    %v6319 = vld [vmem:[#allocation2] sm:$0xff]
    %v6320 = vld [vmem:[#allocation2 + $0x8] sm:$0xff]
    %v6321 = vld [vmem:[#allocation2 + $0x10] sm:$0xff]
    %v6322 = vld [vmem:[#allocation2 + $0x18] sm:$0xff]
    %v6323 = vld [vmem:[#allocation2 + $0x20] sm:$0xff]
    %v6324 = vld [vmem:[#allocation2 + $0x28] sm:$0xff]
    %v6325 = vld [vmem:[#allocation2 + $0x30] sm:$0xff]
    %v6326 = vld [vmem:[#allocation2 + $0x38] sm:$0xff]
    %v6327 = vld [vmem:[#allocation2 + $0x40] sm:$0xff]
    %v6328 = vld [vmem:[#allocation2 + $0x48] sm:$0xff]
    %v6329 = vld [vmem:[#allocation2 + $0x50] sm:$0xff]
    %v6330 = vld [vmem:[#allocation2 + $0x58] sm:$0xff]
    %v6331 = vld [vmem:[#allocation2 + $0x60] sm:$0xff]
    %v6332 = vld [vmem:[#allocation2 + $0x68] sm:$0xff]
    %v6333 = vld [vmem:[#allocation2 + $0x70] sm:$0xff]
    %v6334 = vld [vmem:[#allocation2 + $0x78] sm:$0xff]
    %6336 = vset.pattern.permute.xlu0 0
    %6337 = vperm.xlu0 %6336, %v6303
    %v6338 = vpop.permute.xlu0 %6337
    %6341 = vset.pattern.permute.xlu0 0
    %6342 = vperm.xlu0 %6341, %v6304
    %v6343 = vpop.permute.xlu0 %6342
    %6346 = vset.pattern.permute.xlu0 0
    %6347 = vperm.xlu0 %6346, %v6305
    %v6348 = vpop.permute.xlu0 %6347
    %6351 = vset.pattern.permute.xlu0 0
    %6352 = vperm.xlu0 %6351, %v6306
    %v6353 = vpop.permute.xlu0 %6352
    %6356 = vset.pattern.permute.xlu0 0
    %6357 = vperm.xlu0 %6356, %v6307
    %v6358 = vpop.permute.xlu0 %6357
    %6361 = vset.pattern.permute.xlu0 0
    %6362 = vperm.xlu0 %6361, %v6308
    %v6363 = vpop.permute.xlu0 %6362
    %6366 = vset.pattern.permute.xlu0 0
    %6367 = vperm.xlu0 %6366, %v6309
    %v6368 = vpop.permute.xlu0 %6367
    %6371 = vset.pattern.permute.xlu0 0
    %6372 = vperm.xlu0 %6371, %v6310
    %v6373 = vpop.permute.xlu0 %6372
    %6376 = vset.pattern.permute.xlu0 0
    %6377 = vperm.xlu0 %6376, %v6311
    %v6378 = vpop.permute.xlu0 %6377
    %6381 = vset.pattern.permute.xlu0 0
    %6382 = vperm.xlu0 %6381, %v6312
    %v6383 = vpop.permute.xlu0 %6382
    %6386 = vset.pattern.permute.xlu0 0
    %6387 = vperm.xlu0 %6386, %v6313
    %v6388 = vpop.permute.xlu0 %6387
    %6391 = vset.pattern.permute.xlu0 0
    %6392 = vperm.xlu0 %6391, %v6314
    %v6393 = vpop.permute.xlu0 %6392
    %6396 = vset.pattern.permute.xlu0 0
    %6397 = vperm.xlu0 %6396, %v6315
    %v6398 = vpop.permute.xlu0 %6397
    %6401 = vset.pattern.permute.xlu0 0
    %6402 = vperm.xlu0 %6401, %v6316
    %v6403 = vpop.permute.xlu0 %6402
    %6406 = vset.pattern.permute.xlu0 0
    %6407 = vperm.xlu0 %6406, %v6317
    %v6408 = vpop.permute.xlu0 %6407
    %6411 = vset.pattern.permute.xlu0 0
    %6412 = vperm.xlu0 %6411, %v6318
    %v6413 = vpop.permute.xlu0 %6412
    %v6415 = vmul.f32 %v6338, %v6319
    %v6416 = vmul.f32 %v6343, %v6320
    %v6417 = vmul.f32 %v6348, %v6321
    %v6418 = vmul.f32 %v6353, %v6322
    %v6419 = vmul.f32 %v6358, %v6323
    %v6420 = vmul.f32 %v6363, %v6324
    %v6421 = vmul.f32 %v6368, %v6325
    %v6422 = vmul.f32 %v6373, %v6326
    %v6423 = vmul.f32 %v6378, %v6327
    %v6424 = vmul.f32 %v6383, %v6328
    %v6425 = vmul.f32 %v6388, %v6329
    %v6426 = vmul.f32 %v6393, %v6330
    %v6427 = vmul.f32 %v6398, %v6331
    %v6428 = vmul.f32 %v6403, %v6332
    %v6429 = vmul.f32 %v6408, %v6333
    %v6430 = vmul.f32 %v6413, %v6334
    %s6431 = scalar_lea.vmem [#allocation2], 128
    %v6432 = vld [vmem:[%s6431] sm:$0xff]
    %v6433 = vld [vmem:[%s6431 + $0x8] sm:$0xff]
    %v6434 = vld [vmem:[%s6431 + $0x10] sm:$0xff]
    %v6435 = vld [vmem:[%s6431 + $0x18] sm:$0xff]
    %v6436 = vld [vmem:[%s6431 + $0x20] sm:$0xff]
    %v6437 = vld [vmem:[%s6431 + $0x28] sm:$0xff]
    %v6438 = vld [vmem:[%s6431 + $0x30] sm:$0xff]
    %v6439 = vld [vmem:[%s6431 + $0x38] sm:$0xff]
    %v6440 = vld [vmem:[%s6431 + $0x40] sm:$0xff]
    %v6441 = vld [vmem:[%s6431 + $0x48] sm:$0xff]
    %v6442 = vld [vmem:[%s6431 + $0x50] sm:$0xff]
    %v6443 = vld [vmem:[%s6431 + $0x58] sm:$0xff]
    %v6444 = vld [vmem:[%s6431 + $0x60] sm:$0xff]
    %v6445 = vld [vmem:[%s6431 + $0x68] sm:$0xff]
    %v6446 = vld [vmem:[%s6431 + $0x70] sm:$0xff]
    %v6447 = vld [vmem:[%s6431 + $0x78] sm:$0xff]
    %6448 = vset.pattern.permute.xlu0 1
    %6449 = vperm.xlu0 %6448, %v6303
    %v6450 = vpop.permute.xlu0 %6449
    %6452 = vset.pattern.permute.xlu0 1
    %6453 = vperm.xlu0 %6452, %v6304
    %v6454 = vpop.permute.xlu0 %6453
    %6456 = vset.pattern.permute.xlu0 1
    %6457 = vperm.xlu0 %6456, %v6305
    %v6458 = vpop.permute.xlu0 %6457
    %6460 = vset.pattern.permute.xlu0 1
    %6461 = vperm.xlu0 %6460, %v6306
    %v6462 = vpop.permute.xlu0 %6461
    %6464 = vset.pattern.permute.xlu0 1
    %6465 = vperm.xlu0 %6464, %v6307
    %v6466 = vpop.permute.xlu0 %6465
    %6468 = vset.pattern.permute.xlu0 1
    %6469 = vperm.xlu0 %6468, %v6308
    %v6470 = vpop.permute.xlu0 %6469
    %6472 = vset.pattern.permute.xlu0 1
    %6473 = vperm.xlu0 %6472, %v6309
    %v6474 = vpop.permute.xlu0 %6473
    %6476 = vset.pattern.permute.xlu0 1
    %6477 = vperm.xlu0 %6476, %v6310
    %v6478 = vpop.permute.xlu0 %6477
    %6480 = vset.pattern.permute.xlu0 1
    %6481 = vperm.xlu0 %6480, %v6311
    %v6482 = vpop.permute.xlu0 %6481
    %6484 = vset.pattern.permute.xlu0 1
    %6485 = vperm.xlu0 %6484, %v6312
    %v6486 = vpop.permute.xlu0 %6485
    %6488 = vset.pattern.permute.xlu0 1
    %6489 = vperm.xlu0 %6488, %v6313
    %v6490 = vpop.permute.xlu0 %6489
    %6492 = vset.pattern.permute.xlu0 1
    %6493 = vperm.xlu0 %6492, %v6314
    %v6494 = vpop.permute.xlu0 %6493
    %6496 = vset.pattern.permute.xlu0 1
    %6497 = vperm.xlu0 %6496, %v6315
    %v6498 = vpop.permute.xlu0 %6497
    %6500 = vset.pattern.permute.xlu0 1
    %6501 = vperm.xlu0 %6500, %v6316
    %v6502 = vpop.permute.xlu0 %6501
    %6504 = vset.pattern.permute.xlu0 1
    %6505 = vperm.xlu0 %6504, %v6317
    %v6506 = vpop.permute.xlu0 %6505
    %6508 = vset.pattern.permute.xlu0 1
    %6509 = vperm.xlu0 %6508, %v6318
    %v6510 = vpop.permute.xlu0 %6509
    %v6512 = vmul.f32 %v6450, %v6432
    %v6513 = vmul.f32 %v6454, %v6433
    %v6514 = vmul.f32 %v6458, %v6434
    %v6515 = vmul.f32 %v6462, %v6435
    %v6516 = vmul.f32 %v6466, %v6436
    %v6517 = vmul.f32 %v6470, %v6437
    %v6518 = vmul.f32 %v6474, %v6438
    %v6519 = vmul.f32 %v6478, %v6439
    %v6520 = vmul.f32 %v6482, %v6440
    %v6521 = vmul.f32 %v6486, %v6441
    %v6522 = vmul.f32 %v6490, %v6442
    %v6523 = vmul.f32 %v6494, %v6443
    %v6524 = vmul.f32 %v6498, %v6444
    %v6525 = vmul.f32 %v6502, %v6445
    %v6526 = vmul.f32 %v6506, %v6446
    %v6527 = vmul.f32 %v6510, %v6447
    %v6528 = vadd.f32 %v6415, %v6512
    %v6529 = vadd.f32 %v6416, %v6513
    %v6530 = vadd.f32 %v6417, %v6514
    %v6531 = vadd.f32 %v6418, %v6515
    %v6532 = vadd.f32 %v6419, %v6516
    %v6533 = vadd.f32 %v6420, %v6517
    %v6534 = vadd.f32 %v6421, %v6518
    %v6535 = vadd.f32 %v6422, %v6519
    %v6536 = vadd.f32 %v6423, %v6520
    %v6537 = vadd.f32 %v6424, %v6521
    %v6538 = vadd.f32 %v6425, %v6522
    %v6539 = vadd.f32 %v6426, %v6523
    %v6540 = vadd.f32 %v6427, %v6524
    %v6541 = vadd.f32 %v6428, %v6525
    %v6542 = vadd.f32 %v6429, %v6526
    %v6543 = vadd.f32 %v6430, %v6527
    %s6544 = scalar_lea.vmem [#allocation2], 256
    %v6545 = vld [vmem:[%s6544] sm:$0xff]
    %v6546 = vld [vmem:[%s6544 + $0x8] sm:$0xff]
    %v6547 = vld [vmem:[%s6544 + $0x10] sm:$0xff]
    %v6548 = vld [vmem:[%s6544 + $0x18] sm:$0xff]
    %v6549 = vld [vmem:[%s6544 + $0x20] sm:$0xff]
    %v6550 = vld [vmem:[%s6544 + $0x28] sm:$0xff]
    %v6551 = vld [vmem:[%s6544 + $0x30] sm:$0xff]
    %v6552 = vld [vmem:[%s6544 + $0x38] sm:$0xff]
    %v6553 = vld [vmem:[%s6544 + $0x40] sm:$0xff]
    %v6554 = vld [vmem:[%s6544 + $0x48] sm:$0xff]
    %v6555 = vld [vmem:[%s6544 + $0x50] sm:$0xff]
    %v6556 = vld [vmem:[%s6544 + $0x58] sm:$0xff]
    %v6557 = vld [vmem:[%s6544 + $0x60] sm:$0xff]
    %v6558 = vld [vmem:[%s6544 + $0x68] sm:$0xff]
    %v6559 = vld [vmem:[%s6544 + $0x70] sm:$0xff]
    %v6560 = vld [vmem:[%s6544 + $0x78] sm:$0xff]
    %6561 = vset.pattern.permute.xlu0 2
    %6562 = vperm.xlu0 %6561, %v6303
    %v6563 = vpop.permute.xlu0 %6562
    %6565 = vset.pattern.permute.xlu0 2
    %6566 = vperm.xlu0 %6565, %v6304
    %v6567 = vpop.permute.xlu0 %6566
    %6569 = vset.pattern.permute.xlu0 2
    %6570 = vperm.xlu0 %6569, %v6305
    %v6571 = vpop.permute.xlu0 %6570
    %6573 = vset.pattern.permute.xlu0 2
    %6574 = vperm.xlu0 %6573, %v6306
    %v6575 = vpop.permute.xlu0 %6574
    %6577 = vset.pattern.permute.xlu0 2
    %6578 = vperm.xlu0 %6577, %v6307
    %v6579 = vpop.permute.xlu0 %6578
    %6581 = vset.pattern.permute.xlu0 2
    %6582 = vperm.xlu0 %6581, %v6308
    %v6583 = vpop.permute.xlu0 %6582
    %6585 = vset.pattern.permute.xlu0 2
    %6586 = vperm.xlu0 %6585, %v6309
    %v6587 = vpop.permute.xlu0 %6586
    %6589 = vset.pattern.permute.xlu0 2
    %6590 = vperm.xlu0 %6589, %v6310
    %v6591 = vpop.permute.xlu0 %6590
    %6593 = vset.pattern.permute.xlu0 2
    %6594 = vperm.xlu0 %6593, %v6311
    %v6595 = vpop.permute.xlu0 %6594
    %6597 = vset.pattern.permute.xlu0 2
    %6598 = vperm.xlu0 %6597, %v6312
    %v6599 = vpop.permute.xlu0 %6598
    %6601 = vset.pattern.permute.xlu0 2
    %6602 = vperm.xlu0 %6601, %v6313
    %v6603 = vpop.permute.xlu0 %6602
    %6605 = vset.pattern.permute.xlu0 2
    %6606 = vperm.xlu0 %6605, %v6314
    %v6607 = vpop.permute.xlu0 %6606
    %6609 = vset.pattern.permute.xlu0 2
    %6610 = vperm.xlu0 %6609, %v6315
    %v6611 = vpop.permute.xlu0 %6610
    %6613 = vset.pattern.permute.xlu0 2
    %6614 = vperm.xlu0 %6613, %v6316
    %v6615 = vpop.permute.xlu0 %6614
    %6617 = vset.pattern.permute.xlu0 2
    %6618 = vperm.xlu0 %6617, %v6317
    %v6619 = vpop.permute.xlu0 %6618
    %6621 = vset.pattern.permute.xlu0 2
    %6622 = vperm.xlu0 %6621, %v6318
    %v6623 = vpop.permute.xlu0 %6622
    %v6625 = vmul.f32 %v6563, %v6545
    %v6626 = vmul.f32 %v6567, %v6546
    %v6627 = vmul.f32 %v6571, %v6547
    %v6628 = vmul.f32 %v6575, %v6548
    %v6629 = vmul.f32 %v6579, %v6549
    %v6630 = vmul.f32 %v6583, %v6550
    %v6631 = vmul.f32 %v6587, %v6551
    %v6632 = vmul.f32 %v6591, %v6552
    %v6633 = vmul.f32 %v6595, %v6553
    %v6634 = vmul.f32 %v6599, %v6554
    %v6635 = vmul.f32 %v6603, %v6555
    %v6636 = vmul.f32 %v6607, %v6556
    %v6637 = vmul.f32 %v6611, %v6557
    %v6638 = vmul.f32 %v6615, %v6558
    %v6639 = vmul.f32 %v6619, %v6559
    %v6640 = vmul.f32 %v6623, %v6560
    %v6641 = vadd.f32 %v6528, %v6625
    %v6642 = vadd.f32 %v6529, %v6626
    %v6643 = vadd.f32 %v6530, %v6627
    %v6644 = vadd.f32 %v6531, %v6628
    %v6645 = vadd.f32 %v6532, %v6629
    %v6646 = vadd.f32 %v6533, %v6630
    %v6647 = vadd.f32 %v6534, %v6631
    %v6648 = vadd.f32 %v6535, %v6632
    %v6649 = vadd.f32 %v6536, %v6633
    %v6650 = vadd.f32 %v6537, %v6634
    %v6651 = vadd.f32 %v6538, %v6635
    %v6652 = vadd.f32 %v6539, %v6636
    %v6653 = vadd.f32 %v6540, %v6637
    %v6654 = vadd.f32 %v6541, %v6638
    %v6655 = vadd.f32 %v6542, %v6639
    %v6656 = vadd.f32 %v6543, %v6640
    %s6657 = scalar_lea.vmem [#allocation2], 384
    %v6658 = vld [vmem:[%s6657] sm:$0xff]
    %v6659 = vld [vmem:[%s6657 + $0x8] sm:$0xff]
    %v6660 = vld [vmem:[%s6657 + $0x10] sm:$0xff]
    %v6661 = vld [vmem:[%s6657 + $0x18] sm:$0xff]
    %v6662 = vld [vmem:[%s6657 + $0x20] sm:$0xff]
    %v6663 = vld [vmem:[%s6657 + $0x28] sm:$0xff]
    %v6664 = vld [vmem:[%s6657 + $0x30] sm:$0xff]
    %v6665 = vld [vmem:[%s6657 + $0x38] sm:$0xff]
    %v6666 = vld [vmem:[%s6657 + $0x40] sm:$0xff]
    %v6667 = vld [vmem:[%s6657 + $0x48] sm:$0xff]
    %v6668 = vld [vmem:[%s6657 + $0x50] sm:$0xff]
    %v6669 = vld [vmem:[%s6657 + $0x58] sm:$0xff]
    %v6670 = vld [vmem:[%s6657 + $0x60] sm:$0xff]
    %v6671 = vld [vmem:[%s6657 + $0x68] sm:$0xff]
    %v6672 = vld [vmem:[%s6657 + $0x70] sm:$0xff]
    %v6673 = vld [vmem:[%s6657 + $0x78] sm:$0xff]
    %6674 = vset.pattern.permute.xlu0 3
    %6675 = vperm.xlu0 %6674, %v6303
    %v6676 = vpop.permute.xlu0 %6675
    %6678 = vset.pattern.permute.xlu0 3
    %6679 = vperm.xlu0 %6678, %v6304
    %v6680 = vpop.permute.xlu0 %6679
    %6682 = vset.pattern.permute.xlu0 3
    %6683 = vperm.xlu0 %6682, %v6305
    %v6684 = vpop.permute.xlu0 %6683
    %6686 = vset.pattern.permute.xlu0 3
    %6687 = vperm.xlu0 %6686, %v6306
    %v6688 = vpop.permute.xlu0 %6687
    %6690 = vset.pattern.permute.xlu0 3
    %6691 = vperm.xlu0 %6690, %v6307
    %v6692 = vpop.permute.xlu0 %6691
    %6694 = vset.pattern.permute.xlu0 3
    %6695 = vperm.xlu0 %6694, %v6308
    %v6696 = vpop.permute.xlu0 %6695
    %6698 = vset.pattern.permute.xlu0 3
    %6699 = vperm.xlu0 %6698, %v6309
    %v6700 = vpop.permute.xlu0 %6699
    %6702 = vset.pattern.permute.xlu0 3
    %6703 = vperm.xlu0 %6702, %v6310
    %v6704 = vpop.permute.xlu0 %6703
    %6706 = vset.pattern.permute.xlu0 3
    %6707 = vperm.xlu0 %6706, %v6311
    %v6708 = vpop.permute.xlu0 %6707
    %6710 = vset.pattern.permute.xlu0 3
    %6711 = vperm.xlu0 %6710, %v6312
    %v6712 = vpop.permute.xlu0 %6711
    %6714 = vset.pattern.permute.xlu0 3
    %6715 = vperm.xlu0 %6714, %v6313
    %v6716 = vpop.permute.xlu0 %6715
    %6718 = vset.pattern.permute.xlu0 3
    %6719 = vperm.xlu0 %6718, %v6314
    %v6720 = vpop.permute.xlu0 %6719
    %6722 = vset.pattern.permute.xlu0 3
    %6723 = vperm.xlu0 %6722, %v6315
    %v6724 = vpop.permute.xlu0 %6723
    %6726 = vset.pattern.permute.xlu0 3
    %6727 = vperm.xlu0 %6726, %v6316
    %v6728 = vpop.permute.xlu0 %6727
    %6730 = vset.pattern.permute.xlu0 3
    %6731 = vperm.xlu0 %6730, %v6317
    %v6732 = vpop.permute.xlu0 %6731
    %6734 = vset.pattern.permute.xlu0 3
    %6735 = vperm.xlu0 %6734, %v6318
    %v6736 = vpop.permute.xlu0 %6735
    %v6738 = vmul.f32 %v6676, %v6658
    %v6739 = vmul.f32 %v6680, %v6659
    %v6740 = vmul.f32 %v6684, %v6660
    %v6741 = vmul.f32 %v6688, %v6661
    %v6742 = vmul.f32 %v6692, %v6662
    %v6743 = vmul.f32 %v6696, %v6663
    %v6744 = vmul.f32 %v6700, %v6664
    %v6745 = vmul.f32 %v6704, %v6665
    %v6746 = vmul.f32 %v6708, %v6666
    %v6747 = vmul.f32 %v6712, %v6667
    %v6748 = vmul.f32 %v6716, %v6668
    %v6749 = vmul.f32 %v6720, %v6669
    %v6750 = vmul.f32 %v6724, %v6670
    %v6751 = vmul.f32 %v6728, %v6671
    %v6752 = vmul.f32 %v6732, %v6672
    %v6753 = vmul.f32 %v6736, %v6673
    %v6754 = vadd.f32 %v6641, %v6738
    %v6755 = vadd.f32 %v6642, %v6739
    %v6756 = vadd.f32 %v6643, %v6740
    %v6757 = vadd.f32 %v6644, %v6741
    %v6758 = vadd.f32 %v6645, %v6742
    %v6759 = vadd.f32 %v6646, %v6743
    %v6760 = vadd.f32 %v6647, %v6744
    %v6761 = vadd.f32 %v6648, %v6745
    %v6762 = vadd.f32 %v6649, %v6746
    %v6763 = vadd.f32 %v6650, %v6747
    %v6764 = vadd.f32 %v6651, %v6748
    %v6765 = vadd.f32 %v6652, %v6749
    %v6766 = vadd.f32 %v6653, %v6750
    %v6767 = vadd.f32 %v6654, %v6751
    %v6768 = vadd.f32 %v6655, %v6752
    %v6769 = vadd.f32 %v6656, %v6753
    %s6770 = scalar_lea.vmem [#allocation2], 512
    %v6771 = vld [vmem:[%s6770] sm:$0xff]
    %v6772 = vld [vmem:[%s6770 + $0x8] sm:$0xff]
    %v6773 = vld [vmem:[%s6770 + $0x10] sm:$0xff]
    %v6774 = vld [vmem:[%s6770 + $0x18] sm:$0xff]
    %v6775 = vld [vmem:[%s6770 + $0x20] sm:$0xff]
    %v6776 = vld [vmem:[%s6770 + $0x28] sm:$0xff]
    %v6777 = vld [vmem:[%s6770 + $0x30] sm:$0xff]
    %v6778 = vld [vmem:[%s6770 + $0x38] sm:$0xff]
    %v6779 = vld [vmem:[%s6770 + $0x40] sm:$0xff]
    %v6780 = vld [vmem:[%s6770 + $0x48] sm:$0xff]
    %v6781 = vld [vmem:[%s6770 + $0x50] sm:$0xff]
    %v6782 = vld [vmem:[%s6770 + $0x58] sm:$0xff]
    %v6783 = vld [vmem:[%s6770 + $0x60] sm:$0xff]
    %v6784 = vld [vmem:[%s6770 + $0x68] sm:$0xff]
    %v6785 = vld [vmem:[%s6770 + $0x70] sm:$0xff]
    %v6786 = vld [vmem:[%s6770 + $0x78] sm:$0xff]
    %6787 = vset.pattern.permute.xlu0 4
    %6788 = vperm.xlu0 %6787, %v6303
    %v6789 = vpop.permute.xlu0 %6788
    %6791 = vset.pattern.permute.xlu0 4
    %6792 = vperm.xlu0 %6791, %v6304
    %v6793 = vpop.permute.xlu0 %6792
    %6795 = vset.pattern.permute.xlu0 4
    %6796 = vperm.xlu0 %6795, %v6305
    %v6797 = vpop.permute.xlu0 %6796
    %6799 = vset.pattern.permute.xlu0 4
    %6800 = vperm.xlu0 %6799, %v6306
    %v6801 = vpop.permute.xlu0 %6800
    %6803 = vset.pattern.permute.xlu0 4
    %6804 = vperm.xlu0 %6803, %v6307
    %v6805 = vpop.permute.xlu0 %6804
    %6807 = vset.pattern.permute.xlu0 4
    %6808 = vperm.xlu0 %6807, %v6308
    %v6809 = vpop.permute.xlu0 %6808
    %6811 = vset.pattern.permute.xlu0 4
    %6812 = vperm.xlu0 %6811, %v6309
    %v6813 = vpop.permute.xlu0 %6812
    %6815 = vset.pattern.permute.xlu0 4
    %6816 = vperm.xlu0 %6815, %v6310
    %v6817 = vpop.permute.xlu0 %6816
    %6819 = vset.pattern.permute.xlu0 4
    %6820 = vperm.xlu0 %6819, %v6311
    %v6821 = vpop.permute.xlu0 %6820
    %6823 = vset.pattern.permute.xlu0 4
    %6824 = vperm.xlu0 %6823, %v6312
    %v6825 = vpop.permute.xlu0 %6824
    %6827 = vset.pattern.permute.xlu0 4
    %6828 = vperm.xlu0 %6827, %v6313
    %v6829 = vpop.permute.xlu0 %6828
    %6831 = vset.pattern.permute.xlu0 4
    %6832 = vperm.xlu0 %6831, %v6314
    %v6833 = vpop.permute.xlu0 %6832
    %6835 = vset.pattern.permute.xlu0 4
    %6836 = vperm.xlu0 %6835, %v6315
    %v6837 = vpop.permute.xlu0 %6836
    %6839 = vset.pattern.permute.xlu0 4
    %6840 = vperm.xlu0 %6839, %v6316
    %v6841 = vpop.permute.xlu0 %6840
    %6843 = vset.pattern.permute.xlu0 4
    %6844 = vperm.xlu0 %6843, %v6317
    %v6845 = vpop.permute.xlu0 %6844
    %6847 = vset.pattern.permute.xlu0 4
    %6848 = vperm.xlu0 %6847, %v6318
    %v6849 = vpop.permute.xlu0 %6848
    %v6851 = vmul.f32 %v6789, %v6771
    %v6852 = vmul.f32 %v6793, %v6772
    %v6853 = vmul.f32 %v6797, %v6773
    %v6854 = vmul.f32 %v6801, %v6774
    %v6855 = vmul.f32 %v6805, %v6775
    %v6856 = vmul.f32 %v6809, %v6776
    %v6857 = vmul.f32 %v6813, %v6777
    %v6858 = vmul.f32 %v6817, %v6778
    %v6859 = vmul.f32 %v6821, %v6779
    %v6860 = vmul.f32 %v6825, %v6780
    %v6861 = vmul.f32 %v6829, %v6781
    %v6862 = vmul.f32 %v6833, %v6782
    %v6863 = vmul.f32 %v6837, %v6783
    %v6864 = vmul.f32 %v6841, %v6784
    %v6865 = vmul.f32 %v6845, %v6785
    %v6866 = vmul.f32 %v6849, %v6786
    %v6867 = vadd.f32 %v6754, %v6851
    %v6868 = vadd.f32 %v6755, %v6852
    %v6869 = vadd.f32 %v6756, %v6853
    %v6870 = vadd.f32 %v6757, %v6854
    %v6871 = vadd.f32 %v6758, %v6855
    %v6872 = vadd.f32 %v6759, %v6856
    %v6873 = vadd.f32 %v6760, %v6857
    %v6874 = vadd.f32 %v6761, %v6858
    %v6875 = vadd.f32 %v6762, %v6859
    %v6876 = vadd.f32 %v6763, %v6860
    %v6877 = vadd.f32 %v6764, %v6861
    %v6878 = vadd.f32 %v6765, %v6862
    %v6879 = vadd.f32 %v6766, %v6863
    %v6880 = vadd.f32 %v6767, %v6864
    %v6881 = vadd.f32 %v6768, %v6865
    %v6882 = vadd.f32 %v6769, %v6866
    %s6883 = scalar_lea.vmem [#allocation2], 640
    %v6884 = vld [vmem:[%s6883] sm:$0xff]
    %v6885 = vld [vmem:[%s6883 + $0x8] sm:$0xff]
    %v6886 = vld [vmem:[%s6883 + $0x10] sm:$0xff]
    %v6887 = vld [vmem:[%s6883 + $0x18] sm:$0xff]
    %v6888 = vld [vmem:[%s6883 + $0x20] sm:$0xff]
    %v6889 = vld [vmem:[%s6883 + $0x28] sm:$0xff]
    %v6890 = vld [vmem:[%s6883 + $0x30] sm:$0xff]
    %v6891 = vld [vmem:[%s6883 + $0x38] sm:$0xff]
    %v6892 = vld [vmem:[%s6883 + $0x40] sm:$0xff]
    %v6893 = vld [vmem:[%s6883 + $0x48] sm:$0xff]
    %v6894 = vld [vmem:[%s6883 + $0x50] sm:$0xff]
    %v6895 = vld [vmem:[%s6883 + $0x58] sm:$0xff]
    %v6896 = vld [vmem:[%s6883 + $0x60] sm:$0xff]
    %v6897 = vld [vmem:[%s6883 + $0x68] sm:$0xff]
    %v6898 = vld [vmem:[%s6883 + $0x70] sm:$0xff]
    %v6899 = vld [vmem:[%s6883 + $0x78] sm:$0xff]
    %6900 = vset.pattern.permute.xlu0 5
    %6901 = vperm.xlu0 %6900, %v6303
    %v6902 = vpop.permute.xlu0 %6901
    %6904 = vset.pattern.permute.xlu0 5
    %6905 = vperm.xlu0 %6904, %v6304
    %v6906 = vpop.permute.xlu0 %6905
    %6908 = vset.pattern.permute.xlu0 5
    %6909 = vperm.xlu0 %6908, %v6305
    %v6910 = vpop.permute.xlu0 %6909
    %6912 = vset.pattern.permute.xlu0 5
    %6913 = vperm.xlu0 %6912, %v6306
    %v6914 = vpop.permute.xlu0 %6913
    %6916 = vset.pattern.permute.xlu0 5
    %6917 = vperm.xlu0 %6916, %v6307
    %v6918 = vpop.permute.xlu0 %6917
    %6920 = vset.pattern.permute.xlu0 5
    %6921 = vperm.xlu0 %6920, %v6308
    %v6922 = vpop.permute.xlu0 %6921
    %6924 = vset.pattern.permute.xlu0 5
    %6925 = vperm.xlu0 %6924, %v6309
    %v6926 = vpop.permute.xlu0 %6925
    %6928 = vset.pattern.permute.xlu0 5
    %6929 = vperm.xlu0 %6928, %v6310
    %v6930 = vpop.permute.xlu0 %6929
    %6932 = vset.pattern.permute.xlu0 5
    %6933 = vperm.xlu0 %6932, %v6311
    %v6934 = vpop.permute.xlu0 %6933
    %6936 = vset.pattern.permute.xlu0 5
    %6937 = vperm.xlu0 %6936, %v6312
    %v6938 = vpop.permute.xlu0 %6937
    %6940 = vset.pattern.permute.xlu0 5
    %6941 = vperm.xlu0 %6940, %v6313
    %v6942 = vpop.permute.xlu0 %6941
    %6944 = vset.pattern.permute.xlu0 5
    %6945 = vperm.xlu0 %6944, %v6314
    %v6946 = vpop.permute.xlu0 %6945
    %6948 = vset.pattern.permute.xlu0 5
    %6949 = vperm.xlu0 %6948, %v6315
    %v6950 = vpop.permute.xlu0 %6949
    %6952 = vset.pattern.permute.xlu0 5
    %6953 = vperm.xlu0 %6952, %v6316
    %v6954 = vpop.permute.xlu0 %6953
    %6956 = vset.pattern.permute.xlu0 5
    %6957 = vperm.xlu0 %6956, %v6317
    %v6958 = vpop.permute.xlu0 %6957
    %6960 = vset.pattern.permute.xlu0 5
    %6961 = vperm.xlu0 %6960, %v6318
    %v6962 = vpop.permute.xlu0 %6961
    %v6964 = vmul.f32 %v6902, %v6884
    %v6965 = vmul.f32 %v6906, %v6885
    %v6966 = vmul.f32 %v6910, %v6886
    %v6967 = vmul.f32 %v6914, %v6887
    %v6968 = vmul.f32 %v6918, %v6888
    %v6969 = vmul.f32 %v6922, %v6889
    %v6970 = vmul.f32 %v6926, %v6890
    %v6971 = vmul.f32 %v6930, %v6891
    %v6972 = vmul.f32 %v6934, %v6892
    %v6973 = vmul.f32 %v6938, %v6893
    %v6974 = vmul.f32 %v6942, %v6894
    %v6975 = vmul.f32 %v6946, %v6895
    %v6976 = vmul.f32 %v6950, %v6896
    %v6977 = vmul.f32 %v6954, %v6897
    %v6978 = vmul.f32 %v6958, %v6898
    %v6979 = vmul.f32 %v6962, %v6899
    %v6980 = vadd.f32 %v6867, %v6964
    %v6981 = vadd.f32 %v6868, %v6965
    %v6982 = vadd.f32 %v6869, %v6966
    %v6983 = vadd.f32 %v6870, %v6967
    %v6984 = vadd.f32 %v6871, %v6968
    %v6985 = vadd.f32 %v6872, %v6969
    %v6986 = vadd.f32 %v6873, %v6970
    %v6987 = vadd.f32 %v6874, %v6971
    %v6988 = vadd.f32 %v6875, %v6972
    %v6989 = vadd.f32 %v6876, %v6973
    %v6990 = vadd.f32 %v6877, %v6974
    %v6991 = vadd.f32 %v6878, %v6975
    %v6992 = vadd.f32 %v6879, %v6976
    %v6993 = vadd.f32 %v6880, %v6977
    %v6994 = vadd.f32 %v6881, %v6978
    %v6995 = vadd.f32 %v6882, %v6979
    %s6996 = scalar_lea.vmem [#allocation2], 768
    %v6997 = vld [vmem:[%s6996] sm:$0xff]
    %v6998 = vld [vmem:[%s6996 + $0x8] sm:$0xff]
    %v6999 = vld [vmem:[%s6996 + $0x10] sm:$0xff]
    %v7000 = vld [vmem:[%s6996 + $0x18] sm:$0xff]
    %v7001 = vld [vmem:[%s6996 + $0x20] sm:$0xff]
    %v7002 = vld [vmem:[%s6996 + $0x28] sm:$0xff]
    %v7003 = vld [vmem:[%s6996 + $0x30] sm:$0xff]
    %v7004 = vld [vmem:[%s6996 + $0x38] sm:$0xff]
    %v7005 = vld [vmem:[%s6996 + $0x40] sm:$0xff]
    %v7006 = vld [vmem:[%s6996 + $0x48] sm:$0xff]
    %v7007 = vld [vmem:[%s6996 + $0x50] sm:$0xff]
    %v7008 = vld [vmem:[%s6996 + $0x58] sm:$0xff]
    %v7009 = vld [vmem:[%s6996 + $0x60] sm:$0xff]
    %v7010 = vld [vmem:[%s6996 + $0x68] sm:$0xff]
    %v7011 = vld [vmem:[%s6996 + $0x70] sm:$0xff]
    %v7012 = vld [vmem:[%s6996 + $0x78] sm:$0xff]
    %7013 = vset.pattern.permute.xlu0 6
    %7014 = vperm.xlu0 %7013, %v6303
    %v7015 = vpop.permute.xlu0 %7014
    %7017 = vset.pattern.permute.xlu0 6
    %7018 = vperm.xlu0 %7017, %v6304
    %v7019 = vpop.permute.xlu0 %7018
    %7021 = vset.pattern.permute.xlu0 6
    %7022 = vperm.xlu0 %7021, %v6305
    %v7023 = vpop.permute.xlu0 %7022
    %7025 = vset.pattern.permute.xlu0 6
    %7026 = vperm.xlu0 %7025, %v6306
    %v7027 = vpop.permute.xlu0 %7026
    %7029 = vset.pattern.permute.xlu0 6
    %7030 = vperm.xlu0 %7029, %v6307
    %v7031 = vpop.permute.xlu0 %7030
    %7033 = vset.pattern.permute.xlu0 6
    %7034 = vperm.xlu0 %7033, %v6308
    %v7035 = vpop.permute.xlu0 %7034
    %7037 = vset.pattern.permute.xlu0 6
    %7038 = vperm.xlu0 %7037, %v6309
    %v7039 = vpop.permute.xlu0 %7038
    %7041 = vset.pattern.permute.xlu0 6
    %7042 = vperm.xlu0 %7041, %v6310
    %v7043 = vpop.permute.xlu0 %7042
    %7045 = vset.pattern.permute.xlu0 6
    %7046 = vperm.xlu0 %7045, %v6311
    %v7047 = vpop.permute.xlu0 %7046
    %7049 = vset.pattern.permute.xlu0 6
    %7050 = vperm.xlu0 %7049, %v6312
    %v7051 = vpop.permute.xlu0 %7050
    %7053 = vset.pattern.permute.xlu0 6
    %7054 = vperm.xlu0 %7053, %v6313
    %v7055 = vpop.permute.xlu0 %7054
    %7057 = vset.pattern.permute.xlu0 6
    %7058 = vperm.xlu0 %7057, %v6314
    %v7059 = vpop.permute.xlu0 %7058
    %7061 = vset.pattern.permute.xlu0 6
    %7062 = vperm.xlu0 %7061, %v6315
    %v7063 = vpop.permute.xlu0 %7062
    %7065 = vset.pattern.permute.xlu0 6
    %7066 = vperm.xlu0 %7065, %v6316
    %v7067 = vpop.permute.xlu0 %7066
    %7069 = vset.pattern.permute.xlu0 6
    %7070 = vperm.xlu0 %7069, %v6317
    %v7071 = vpop.permute.xlu0 %7070
    %7073 = vset.pattern.permute.xlu0 6
    %7074 = vperm.xlu0 %7073, %v6318
    %v7075 = vpop.permute.xlu0 %7074
    %v7077 = vmul.f32 %v7015, %v6997
    %v7078 = vmul.f32 %v7019, %v6998
    %v7079 = vmul.f32 %v7023, %v6999
    %v7080 = vmul.f32 %v7027, %v7000
    %v7081 = vmul.f32 %v7031, %v7001
    %v7082 = vmul.f32 %v7035, %v7002
    %v7083 = vmul.f32 %v7039, %v7003
    %v7084 = vmul.f32 %v7043, %v7004
    %v7085 = vmul.f32 %v7047, %v7005
    %v7086 = vmul.f32 %v7051, %v7006
    %v7087 = vmul.f32 %v7055, %v7007
    %v7088 = vmul.f32 %v7059, %v7008
    %v7089 = vmul.f32 %v7063, %v7009
    %v7090 = vmul.f32 %v7067, %v7010
    %v7091 = vmul.f32 %v7071, %v7011
    %v7092 = vmul.f32 %v7075, %v7012
    %v7093 = vadd.f32 %v6980, %v7077
    %v7094 = vadd.f32 %v6981, %v7078
    %v7095 = vadd.f32 %v6982, %v7079
    %v7096 = vadd.f32 %v6983, %v7080
    %v7097 = vadd.f32 %v6984, %v7081
    %v7098 = vadd.f32 %v6985, %v7082
    %v7099 = vadd.f32 %v6986, %v7083
    %v7100 = vadd.f32 %v6987, %v7084
    %v7101 = vadd.f32 %v6988, %v7085
    %v7102 = vadd.f32 %v6989, %v7086
    %v7103 = vadd.f32 %v6990, %v7087
    %v7104 = vadd.f32 %v6991, %v7088
    %v7105 = vadd.f32 %v6992, %v7089
    %v7106 = vadd.f32 %v6993, %v7090
    %v7107 = vadd.f32 %v6994, %v7091
    %v7108 = vadd.f32 %v6995, %v7092
    %s7109 = scalar_lea.vmem [#allocation2], 896
    %v7110 = vld [vmem:[%s7109] sm:$0xff]
    %v7111 = vld [vmem:[%s7109 + $0x8] sm:$0xff]
    %v7112 = vld [vmem:[%s7109 + $0x10] sm:$0xff]
    %v7113 = vld [vmem:[%s7109 + $0x18] sm:$0xff]
    %v7114 = vld [vmem:[%s7109 + $0x20] sm:$0xff]
    %v7115 = vld [vmem:[%s7109 + $0x28] sm:$0xff]
    %v7116 = vld [vmem:[%s7109 + $0x30] sm:$0xff]
    %v7117 = vld [vmem:[%s7109 + $0x38] sm:$0xff]
    %v7118 = vld [vmem:[%s7109 + $0x40] sm:$0xff]
    %v7119 = vld [vmem:[%s7109 + $0x48] sm:$0xff]
    %v7120 = vld [vmem:[%s7109 + $0x50] sm:$0xff]
    %v7121 = vld [vmem:[%s7109 + $0x58] sm:$0xff]
    %v7122 = vld [vmem:[%s7109 + $0x60] sm:$0xff]
    %v7123 = vld [vmem:[%s7109 + $0x68] sm:$0xff]
    %v7124 = vld [vmem:[%s7109 + $0x70] sm:$0xff]
    %v7125 = vld [vmem:[%s7109 + $0x78] sm:$0xff]
    %7126 = vset.pattern.permute.xlu0 7
    %7127 = vperm.xlu0 %7126, %v6303
    %v7128 = vpop.permute.xlu0 %7127
    %7130 = vset.pattern.permute.xlu0 7
    %7131 = vperm.xlu0 %7130, %v6304
    %v7132 = vpop.permute.xlu0 %7131
    %7134 = vset.pattern.permute.xlu0 7
    %7135 = vperm.xlu0 %7134, %v6305
    %v7136 = vpop.permute.xlu0 %7135
    %7138 = vset.pattern.permute.xlu0 7
    %7139 = vperm.xlu0 %7138, %v6306
    %v7140 = vpop.permute.xlu0 %7139
    %7142 = vset.pattern.permute.xlu0 7
    %7143 = vperm.xlu0 %7142, %v6307
    %v7144 = vpop.permute.xlu0 %7143
    %7146 = vset.pattern.permute.xlu0 7
    %7147 = vperm.xlu0 %7146, %v6308
    %v7148 = vpop.permute.xlu0 %7147
    %7150 = vset.pattern.permute.xlu0 7
    %7151 = vperm.xlu0 %7150, %v6309
    %v7152 = vpop.permute.xlu0 %7151
    %7154 = vset.pattern.permute.xlu0 7
    %7155 = vperm.xlu0 %7154, %v6310
    %v7156 = vpop.permute.xlu0 %7155
    %7158 = vset.pattern.permute.xlu0 7
    %7159 = vperm.xlu0 %7158, %v6311
    %v7160 = vpop.permute.xlu0 %7159
    %7162 = vset.pattern.permute.xlu0 7
    %7163 = vperm.xlu0 %7162, %v6312
    %v7164 = vpop.permute.xlu0 %7163
    %7166 = vset.pattern.permute.xlu0 7
    %7167 = vperm.xlu0 %7166, %v6313
    %v7168 = vpop.permute.xlu0 %7167
    %7170 = vset.pattern.permute.xlu0 7
    %7171 = vperm.xlu0 %7170, %v6314
    %v7172 = vpop.permute.xlu0 %7171
    %7174 = vset.pattern.permute.xlu0 7
    %7175 = vperm.xlu0 %7174, %v6315
    %v7176 = vpop.permute.xlu0 %7175
    %7178 = vset.pattern.permute.xlu0 7
    %7179 = vperm.xlu0 %7178, %v6316
    %v7180 = vpop.permute.xlu0 %7179
    %7182 = vset.pattern.permute.xlu0 7
    %7183 = vperm.xlu0 %7182, %v6317
    %v7184 = vpop.permute.xlu0 %7183
    %7186 = vset.pattern.permute.xlu0 7
    %7187 = vperm.xlu0 %7186, %v6318
    %v7188 = vpop.permute.xlu0 %7187
    %v7190 = vmul.f32 %v7128, %v7110
    %v7191 = vmul.f32 %v7132, %v7111
    %v7192 = vmul.f32 %v7136, %v7112
    %v7193 = vmul.f32 %v7140, %v7113
    %v7194 = vmul.f32 %v7144, %v7114
    %v7195 = vmul.f32 %v7148, %v7115
    %v7196 = vmul.f32 %v7152, %v7116
    %v7197 = vmul.f32 %v7156, %v7117
    %v7198 = vmul.f32 %v7160, %v7118
    %v7199 = vmul.f32 %v7164, %v7119
    %v7200 = vmul.f32 %v7168, %v7120
    %v7201 = vmul.f32 %v7172, %v7121
    %v7202 = vmul.f32 %v7176, %v7122
    %v7203 = vmul.f32 %v7180, %v7123
    %v7204 = vmul.f32 %v7184, %v7124
    %v7205 = vmul.f32 %v7188, %v7125
    %v7206 = vadd.f32 %v7093, %v7190
    %v7207 = vadd.f32 %v7094, %v7191
    %v7208 = vadd.f32 %v7095, %v7192
    %v7209 = vadd.f32 %v7096, %v7193
    %v7210 = vadd.f32 %v7097, %v7194
    %v7211 = vadd.f32 %v7098, %v7195
    %v7212 = vadd.f32 %v7099, %v7196
    %v7213 = vadd.f32 %v7100, %v7197
    %v7214 = vadd.f32 %v7101, %v7198
    %v7215 = vadd.f32 %v7102, %v7199
    %v7216 = vadd.f32 %v7103, %v7200
    %v7217 = vadd.f32 %v7104, %v7201
    %v7218 = vadd.f32 %v7105, %v7202
    %v7219 = vadd.f32 %v7106, %v7203
    %v7220 = vadd.f32 %v7107, %v7204
    %v7221 = vadd.f32 %v7108, %v7205
    %s7222 = scalar_lea.vmem [#allocation2], 1024
    %v7223 = vld [vmem:[%s7222] sm:$0xff]
    %v7224 = vld [vmem:[%s7222 + $0x8] sm:$0xff]
    %v7225 = vld [vmem:[%s7222 + $0x10] sm:$0xff]
    %v7226 = vld [vmem:[%s7222 + $0x18] sm:$0xff]
    %v7227 = vld [vmem:[%s7222 + $0x20] sm:$0xff]
    %v7228 = vld [vmem:[%s7222 + $0x28] sm:$0xff]
    %v7229 = vld [vmem:[%s7222 + $0x30] sm:$0xff]
    %v7230 = vld [vmem:[%s7222 + $0x38] sm:$0xff]
    %v7231 = vld [vmem:[%s7222 + $0x40] sm:$0xff]
    %v7232 = vld [vmem:[%s7222 + $0x48] sm:$0xff]
    %v7233 = vld [vmem:[%s7222 + $0x50] sm:$0xff]
    %v7234 = vld [vmem:[%s7222 + $0x58] sm:$0xff]
    %v7235 = vld [vmem:[%s7222 + $0x60] sm:$0xff]
    %v7236 = vld [vmem:[%s7222 + $0x68] sm:$0xff]
    %v7237 = vld [vmem:[%s7222 + $0x70] sm:$0xff]
    %v7238 = vld [vmem:[%s7222 + $0x78] sm:$0xff]
    %7239 = vset.pattern.permute.xlu0 8
    %7240 = vperm.xlu0 %7239, %v6303
    %v7241 = vpop.permute.xlu0 %7240
    %7243 = vset.pattern.permute.xlu0 8
    %7244 = vperm.xlu0 %7243, %v6304
    %v7245 = vpop.permute.xlu0 %7244
    %7247 = vset.pattern.permute.xlu0 8
    %7248 = vperm.xlu0 %7247, %v6305
    %v7249 = vpop.permute.xlu0 %7248
    %7251 = vset.pattern.permute.xlu0 8
    %7252 = vperm.xlu0 %7251, %v6306
    %v7253 = vpop.permute.xlu0 %7252
    %7255 = vset.pattern.permute.xlu0 8
    %7256 = vperm.xlu0 %7255, %v6307
    %v7257 = vpop.permute.xlu0 %7256
    %7259 = vset.pattern.permute.xlu0 8
    %7260 = vperm.xlu0 %7259, %v6308
    %v7261 = vpop.permute.xlu0 %7260
    %7263 = vset.pattern.permute.xlu0 8
    %7264 = vperm.xlu0 %7263, %v6309
    %v7265 = vpop.permute.xlu0 %7264
    %7267 = vset.pattern.permute.xlu0 8
    %7268 = vperm.xlu0 %7267, %v6310
    %v7269 = vpop.permute.xlu0 %7268
    %7271 = vset.pattern.permute.xlu0 8
    %7272 = vperm.xlu0 %7271, %v6311
    %v7273 = vpop.permute.xlu0 %7272
    %7275 = vset.pattern.permute.xlu0 8
    %7276 = vperm.xlu0 %7275, %v6312
    %v7277 = vpop.permute.xlu0 %7276
    %7279 = vset.pattern.permute.xlu0 8
    %7280 = vperm.xlu0 %7279, %v6313
    %v7281 = vpop.permute.xlu0 %7280
    %7283 = vset.pattern.permute.xlu0 8
    %7284 = vperm.xlu0 %7283, %v6314
    %v7285 = vpop.permute.xlu0 %7284
    %7287 = vset.pattern.permute.xlu0 8
    %7288 = vperm.xlu0 %7287, %v6315
    %v7289 = vpop.permute.xlu0 %7288
    %7291 = vset.pattern.permute.xlu0 8
    %7292 = vperm.xlu0 %7291, %v6316
    %v7293 = vpop.permute.xlu0 %7292
    %7295 = vset.pattern.permute.xlu0 8
    %7296 = vperm.xlu0 %7295, %v6317
    %v7297 = vpop.permute.xlu0 %7296
    %7299 = vset.pattern.permute.xlu0 8
    %7300 = vperm.xlu0 %7299, %v6318
    %v7301 = vpop.permute.xlu0 %7300
    %v7303 = vmul.f32 %v7241, %v7223
    %v7304 = vmul.f32 %v7245, %v7224
    %v7305 = vmul.f32 %v7249, %v7225
    %v7306 = vmul.f32 %v7253, %v7226
    %v7307 = vmul.f32 %v7257, %v7227
    %v7308 = vmul.f32 %v7261, %v7228
    %v7309 = vmul.f32 %v7265, %v7229
    %v7310 = vmul.f32 %v7269, %v7230
    %v7311 = vmul.f32 %v7273, %v7231
    %v7312 = vmul.f32 %v7277, %v7232
    %v7313 = vmul.f32 %v7281, %v7233
    %v7314 = vmul.f32 %v7285, %v7234
    %v7315 = vmul.f32 %v7289, %v7235
    %v7316 = vmul.f32 %v7293, %v7236
    %v7317 = vmul.f32 %v7297, %v7237
    %v7318 = vmul.f32 %v7301, %v7238
    %v7319 = vadd.f32 %v7206, %v7303
    %v7320 = vadd.f32 %v7207, %v7304
    %v7321 = vadd.f32 %v7208, %v7305
    %v7322 = vadd.f32 %v7209, %v7306
    %v7323 = vadd.f32 %v7210, %v7307
    %v7324 = vadd.f32 %v7211, %v7308
    %v7325 = vadd.f32 %v7212, %v7309
    %v7326 = vadd.f32 %v7213, %v7310
    %v7327 = vadd.f32 %v7214, %v7311
    %v7328 = vadd.f32 %v7215, %v7312
    %v7329 = vadd.f32 %v7216, %v7313
    %v7330 = vadd.f32 %v7217, %v7314
    %v7331 = vadd.f32 %v7218, %v7315
    %v7332 = vadd.f32 %v7219, %v7316
    %v7333 = vadd.f32 %v7220, %v7317
    %v7334 = vadd.f32 %v7221, %v7318
    %s7335 = scalar_lea.vmem [#allocation2], 1152
    %v7336 = vld [vmem:[%s7335] sm:$0xff]
    %v7337 = vld [vmem:[%s7335 + $0x8] sm:$0xff]
    %v7338 = vld [vmem:[%s7335 + $0x10] sm:$0xff]
    %v7339 = vld [vmem:[%s7335 + $0x18] sm:$0xff]
    %v7340 = vld [vmem:[%s7335 + $0x20] sm:$0xff]
    %v7341 = vld [vmem:[%s7335 + $0x28] sm:$0xff]
    %v7342 = vld [vmem:[%s7335 + $0x30] sm:$0xff]
    %v7343 = vld [vmem:[%s7335 + $0x38] sm:$0xff]
    %v7344 = vld [vmem:[%s7335 + $0x40] sm:$0xff]
    %v7345 = vld [vmem:[%s7335 + $0x48] sm:$0xff]
    %v7346 = vld [vmem:[%s7335 + $0x50] sm:$0xff]
    %v7347 = vld [vmem:[%s7335 + $0x58] sm:$0xff]
    %v7348 = vld [vmem:[%s7335 + $0x60] sm:$0xff]
    %v7349 = vld [vmem:[%s7335 + $0x68] sm:$0xff]
    %v7350 = vld [vmem:[%s7335 + $0x70] sm:$0xff]
    %v7351 = vld [vmem:[%s7335 + $0x78] sm:$0xff]
    %7352 = vset.pattern.permute.xlu0 9
    %7353 = vperm.xlu0 %7352, %v6303
    %v7354 = vpop.permute.xlu0 %7353
    %7356 = vset.pattern.permute.xlu0 9
    %7357 = vperm.xlu0 %7356, %v6304
    %v7358 = vpop.permute.xlu0 %7357
    %7360 = vset.pattern.permute.xlu0 9
    %7361 = vperm.xlu0 %7360, %v6305
    %v7362 = vpop.permute.xlu0 %7361
    %7364 = vset.pattern.permute.xlu0 9
    %7365 = vperm.xlu0 %7364, %v6306
    %v7366 = vpop.permute.xlu0 %7365
    %7368 = vset.pattern.permute.xlu0 9
    %7369 = vperm.xlu0 %7368, %v6307
    %v7370 = vpop.permute.xlu0 %7369
    %7372 = vset.pattern.permute.xlu0 9
    %7373 = vperm.xlu0 %7372, %v6308
    %v7374 = vpop.permute.xlu0 %7373
    %7376 = vset.pattern.permute.xlu0 9
    %7377 = vperm.xlu0 %7376, %v6309
    %v7378 = vpop.permute.xlu0 %7377
    %7380 = vset.pattern.permute.xlu0 9
    %7381 = vperm.xlu0 %7380, %v6310
    %v7382 = vpop.permute.xlu0 %7381
    %7384 = vset.pattern.permute.xlu0 9
    %7385 = vperm.xlu0 %7384, %v6311
    %v7386 = vpop.permute.xlu0 %7385
    %7388 = vset.pattern.permute.xlu0 9
    %7389 = vperm.xlu0 %7388, %v6312
    %v7390 = vpop.permute.xlu0 %7389
    %7392 = vset.pattern.permute.xlu0 9
    %7393 = vperm.xlu0 %7392, %v6313
    %v7394 = vpop.permute.xlu0 %7393
    %7396 = vset.pattern.permute.xlu0 9
    %7397 = vperm.xlu0 %7396, %v6314
    %v7398 = vpop.permute.xlu0 %7397
    %7400 = vset.pattern.permute.xlu0 9
    %7401 = vperm.xlu0 %7400, %v6315
    %v7402 = vpop.permute.xlu0 %7401
    %7404 = vset.pattern.permute.xlu0 9
    %7405 = vperm.xlu0 %7404, %v6316
    %v7406 = vpop.permute.xlu0 %7405
    %7408 = vset.pattern.permute.xlu0 9
    %7409 = vperm.xlu0 %7408, %v6317
    %v7410 = vpop.permute.xlu0 %7409
    %7412 = vset.pattern.permute.xlu0 9
    %7413 = vperm.xlu0 %7412, %v6318
    %v7414 = vpop.permute.xlu0 %7413
    %v7416 = vmul.f32 %v7354, %v7336
    %v7417 = vmul.f32 %v7358, %v7337
    %v7418 = vmul.f32 %v7362, %v7338
    %v7419 = vmul.f32 %v7366, %v7339
    %v7420 = vmul.f32 %v7370, %v7340
    %v7421 = vmul.f32 %v7374, %v7341
    %v7422 = vmul.f32 %v7378, %v7342
    %v7423 = vmul.f32 %v7382, %v7343
    %v7424 = vmul.f32 %v7386, %v7344
    %v7425 = vmul.f32 %v7390, %v7345
    %v7426 = vmul.f32 %v7394, %v7346
    %v7427 = vmul.f32 %v7398, %v7347
    %v7428 = vmul.f32 %v7402, %v7348
    %v7429 = vmul.f32 %v7406, %v7349
    %v7430 = vmul.f32 %v7410, %v7350
    %v7431 = vmul.f32 %v7414, %v7351
    %v7432 = vadd.f32 %v7319, %v7416
    %v7433 = vadd.f32 %v7320, %v7417
    %v7434 = vadd.f32 %v7321, %v7418
    %v7435 = vadd.f32 %v7322, %v7419
    %v7436 = vadd.f32 %v7323, %v7420
    %v7437 = vadd.f32 %v7324, %v7421
    %v7438 = vadd.f32 %v7325, %v7422
    %v7439 = vadd.f32 %v7326, %v7423
    %v7440 = vadd.f32 %v7327, %v7424
    %v7441 = vadd.f32 %v7328, %v7425
    %v7442 = vadd.f32 %v7329, %v7426
    %v7443 = vadd.f32 %v7330, %v7427
    %v7444 = vadd.f32 %v7331, %v7428
    %v7445 = vadd.f32 %v7332, %v7429
    %v7446 = vadd.f32 %v7333, %v7430
    %v7447 = vadd.f32 %v7334, %v7431
    %v7448 = vadd.f32 %v7432, %v7433
    %v7449 = vadd.f32 %v7448, %v7434
    %v7450 = vadd.f32 %v7449, %v7435
    %v7451 = vadd.f32 %v7450, %v7436
    %v7452 = vadd.f32 %v7451, %v7437
    %v7453 = vadd.f32 %v7452, %v7438
    %v7454 = vadd.f32 %v7453, %v7439
    %v7455 = vadd.f32 %v7454, %v7440
    %v7456 = vadd.f32 %v7455, %v7441
    %v7457 = vadd.f32 %v7456, %v7442
    %v7458 = vadd.f32 %v7457, %v7443
    %v7459 = vadd.f32 %v7458, %v7444
    %v7460 = vadd.f32 %v7459, %v7445
    %v7461 = vadd.f32 %v7460, %v7446
    %v7462 = vadd.f32 %v7461, %v7447
    %v7463 = vrot.slane %v7462, 4
    %v7464 = vadd.f32 %v7462, %v7463
    %v7465 = vrot.slane %v7464, 2
    %v7466 = vadd.f32 %v7464, %v7465
    %v7467 = vrot.slane %v7466, 1
    %v7468 = vadd.f32 %v7466, %v7467
    %v7469 = vld [vmem:[%s16] sm:$0x1]
    %v7470 = vadd.f32 %v7468, %v7469
    %7471 = vst [vmem:[#allocation5] sm:$0x1] %v7470
    // Predicated region
    $region74: #{graph_encoder_forward.1} parent=1 // pred_check
      _
    $region75: #{graph_encoder_forward.1} parent=1 // pred_check_branch
      %7473 = sbr.rel (0) target = $region77
    $region76: #{graph_encoder_forward.1} parent=1 // pred_region
      %7475 = vsyncadd [#allocation4], 0
      %s7477 = sshll.u32 [#allocation5], 4
      %s7478 = int_to_ptr.vmem [resolvable:$true] %s7477
      %s7479 = sshll.u32 %s17, 4
      %s7480 = int_to_ptr.hbm [resolvable:$true] %s7479
      %7482 = dma.vmem_to_hbm [thread:$0]  %s7478, 16, %s7480, [#allocation4]
    $region77: #{graph_encoder_forward.1} parent=1 // pred_fallthru
      _
    // Predicated region
    $region78: #{graph_encoder_forward.1} parent=1 // pred_check
      _
    $region79: #{graph_encoder_forward.1} parent=1 // pred_check_branch
      %7484 = sbr.rel (0) target = $region81
    $region80: #{graph_encoder_forward.1} parent=1 // pred_region
      %7486 = dma.done [#allocation4], 16
    $region81: #{graph_encoder_forward.1} parent=1 // pred_fallthru
      _
    %7487 = vsyncpa [#allocation3], 1
    %7488 = vsyncpa [#allocation4], 1

</llo_original>
